<compile_context>
chip_gen: v6e
topology: v6e:2x2x1
jax: 0.10.0
libtpu: 0.0.40
codegen_flags: <defaults>
</compile_context>

<pallas_src>
import functools

import jax
import jax.numpy as jnp
import numpy as np
from jax.experimental import pallas as pl
from jax.experimental.pallas import tpu as pltpu  # noqa: F401  (TPU backend)


def _round_up(x, m):
    return ((x + m - 1) // m) * m


# ----------------------------------------------------------------------------
# Fused decoder kernel (single invocation, no grid, everything in VMEM)
# ----------------------------------------------------------------------------
def _decoder_fused_kernel(x_ref, wih1_ref, whh1_ref, b1_ref,
                          w2_ref, b2_ref, wout_ref, bout_ref, out_ref, *,
                          seq_len, n_rnn2_layers, hp):
    """Shapes (HP = padded hidden, FP = padded feature dim):
    x_ref    : (B, D)            decoder input (one row per batch element)
    wih1_ref : (D, 4*HP)         rnn1 input weights, transposed, gate-padded
    whh1_ref : (HP, 4*HP)        rnn1 hidden weights, transposed, padded
    b1_ref   : (1, 4*HP)         rnn1 combined bias (b_ih + b_hh), gate-padded
    w2_ref   : (L, 2*HP, 4*HP)   rnn2 fused [Wih^T ; Whh^T] per layer
    b2_ref   : (L, 1, 4*HP)      rnn2 combined biases
    wout_ref : (HP, FP)          output Linear weight, transposed, lane-padded
    bout_ref : (1, FP)           output Linear bias, lane-padded
    out_ref  : (T*B, FP)         lane-dense output slab (row = t*B + b)
    """
    f32 = jnp.float32
    B = x_ref.shape[0]
    H = hp

    def cell(gates, c):
        # PyTorch gate order i, f, g, o; every slice is 128-lane aligned.
        i = jax.nn.sigmoid(gates[:, 0 * H:1 * H])
        f = jax.nn.sigmoid(gates[:, 1 * H:2 * H])
        g = jnp.tanh(gates[:, 2 * H:3 * H])
        o = jax.nn.sigmoid(gates[:, 3 * H:4 * H])
        c_new = f * c + i * g
        return o * jnp.tanh(c_new), c_new

    # Hoisted, time-invariant rnn1 input projection (the input is tiled
    # over the sequence, so this is identical for every step).
    xproj1 = (jnp.dot(x_ref[...], wih1_ref[...],
                      preferred_element_type=f32) + b1_ref[...])   # (B, 4H)

    zeros = jnp.zeros((B, H), f32)
    h = [zeros] * (1 + n_rnn2_layers)
    c = [zeros] * (1 + n_rnn2_layers)

    outs = []
    # Fully unrolled time loop (seq_len is small and static); h/c states live
    # in registers/VMEM for the whole recurrence.
    for _ in range(seq_len):
        # rnn1: one matmul per step (input projection already hoisted).
        gates1 = xproj1 + jnp.dot(h[0], whh1_ref[...],
                                  preferred_element_type=f32)
        h[0], c[0] = cell(gates1, c[0])
        x_t = h[0]

        # rnn2 stacked layers: one fused [x_t, h] matmul per layer per step.
        for l in range(n_rnn2_layers):
            xh = jnp.concatenate([x_t, h[l + 1]], axis=-1)           # (B, 2H)
            gates = (jnp.dot(xh, w2_ref[l], preferred_element_type=f32)
                     + b2_ref[l])
            h[l + 1], c[l + 1] = cell(gates, c[l + 1])
            x_t = h[l + 1]
        outs.append(x_t)

    # TimeDistributed Linear applied once to the whole slab (lane-padded out).
    hist = jnp.concatenate(outs, axis=0)                             # (T*B, H)
    y = (jnp.dot(hist, wout_ref[...], preferred_element_type=f32)
         + bout_ref[...])
    out_ref[...] = y.astype(out_ref.dtype)


# ----------------------------------------------------------------------------
# Weight-prep helpers (all padding is zero-fill; padded LSTM state stays 0)
# ----------------------------------------------------------------------------
def _pad_gate_cols(w_t, h, hp):
    """(rows, 4h) -> (rows, 4hp): each gate block zero-padded from h to hp."""
    if h == hp:
        return w_t
    rows = w_t.shape[0]
    w4 = w_t.reshape(rows, 4, h)
    w4 = jnp.pad(w4, ((0, 0), (0, 0), (0, hp - h)))
    return w4.reshape(rows, 4 * hp)


def _pad_gate_bias(b, h, hp):
    if h == hp:
        return b
    b4 = b.reshape(4, h)
    b4 = jnp.pad(b4, ((0, 0), (0, hp - h)))
    return b4.reshape(4 * hp)


def _pad_rows(w, rows_to):
    pad = rows_to - w.shape[0]
    return w if pad == 0 else jnp.pad(w, ((0, pad), (0, 0)))


# ----------------------------------------------------------------------------
# Parameter construction (mirrors nn.LSTM / nn.Linear shapes, PyTorch layout)
# ----------------------------------------------------------------------------
def init_decoder_params(key, seq_len, input_dim, n_features):
    hidden_dim = 2 * input_dim
    params = {}

    def uni(key, shape, bound):
        return jax.random.uniform(key, shape, jnp.float32, -bound, bound)

    keys = iter(jax.random.split(key, 32))

    # rnn1: 1 layer, hidden = input_dim
    k = 1.0 / np.sqrt(input_dim)
    params["rnn1"] = [dict(
        w_ih=uni(next(keys), (4 * input_dim, input_dim), k),
        w_hh=uni(next(keys), (4 * input_dim, input_dim), k),
        b_ih=uni(next(keys), (4 * input_dim,), k),
        b_hh=uni(next(keys), (4 * input_dim,), k),
    )]

    # rnn2: 3 layers, hidden = 2*input_dim
    k2 = 1.0 / np.sqrt(hidden_dim)
    rnn2 = []
    for layer in range(3):
        in_sz = input_dim if layer == 0 else hidden_dim
        rnn2.append(dict(
            w_ih=uni(next(keys), (4 * hidden_dim, in_sz), k2),
            w_hh=uni(next(keys), (4 * hidden_dim, hidden_dim), k2),
            b_ih=uni(next(keys), (4 * hidden_dim,), k2),
            b_hh=uni(next(keys), (4 * hidden_dim,), k2),
        ))
    params["rnn2"] = rnn2

    # output Linear(hidden_dim -> n_features)
    kl = 1.0 / np.sqrt(hidden_dim)
    params["out_w"] = uni(next(keys), (n_features, hidden_dim), kl)
    params["out_b"] = uni(next(keys), (n_features,), kl)
    return params


# ----------------------------------------------------------------------------
# Decoder forward: weight prep in plain JAX, everything else in one kernel
# ----------------------------------------------------------------------------
def decoder_forward(params, x, seq_len, input_dim, n_features):
    hidden_dim = 2 * input_dim
    HP = _round_up(hidden_dim, 128)      # shared padded hidden for all layers
    FP = _round_up(max(n_features, 1), 128)

    x2 = x.reshape(-1, input_dim).astype(jnp.float32)      # (B, D)
    B = x2.shape[0]

    # ---- rnn1 (hidden = input_dim, zero-padded to HP) ----
    p1 = params["rnn1"][0]
    h1 = input_dim
    wih1_t = _pad_gate_cols(jnp.transpose(p1["w_ih"]).astype(jnp.float32),
                            h1, HP)                          # (D, 4HP)
    whh1_t = _pad_rows(
        _pad_gate_cols(jnp.transpose(p1["w_hh"]).astype(jnp.float32), h1, HP),
        HP)                                                  # (HP, 4HP)
    b1 = _pad_gate_bias((p1["b_ih"] + p1["b_hh"]).astype(jnp.float32),
                        h1, HP).reshape(1, 4 * HP)

    # ---- rnn2 (stacked layers, hidden = 2*input_dim, padded to HP) ----
    w2_list, b2_list = [], []
    for p in params["rnn2"]:
        wih_t = _pad_rows(
            _pad_gate_cols(jnp.transpose(p["w_ih"]).astype(jnp.float32),
                           hidden_dim, HP), HP)              # (HP, 4HP)
        whh_t = _pad_rows(
            _pad_gate_cols(jnp.transpose(p["w_hh"]).astype(jnp.float32),
                           hidden_dim, HP), HP)              # (HP, 4HP)
        w2_list.append(jnp.concatenate([wih_t, whh_t], axis=0))  # (2HP, 4HP)
        b2_list.append(
            _pad_gate_bias((p["b_ih"] + p["b_hh"]).astype(jnp.float32),
                           hidden_dim, HP).reshape(1, 4 * HP))
    w2 = jnp.stack(w2_list)                                  # (L, 2HP, 4HP)
    b2 = jnp.stack(b2_list)                                  # (L, 1, 4HP)

    # ---- output Linear (lane-padded columns) ----
    wout_t = jnp.zeros((HP, FP), jnp.float32)
    wout_t = wout_t.at[:hidden_dim, :n_features].set(
        jnp.transpose(params["out_w"]).astype(jnp.float32))
    bout = jnp.zeros((1, FP), jnp.float32)
    bout = bout.at[0, :n_features].set(params["out_b"].astype(jnp.float32))

    kernel = functools.partial(_decoder_fused_kernel, seq_len=seq_len,
                               n_rnn2_layers=len(params["rnn2"]), hp=HP)

    # Single fused pallas_call: no grid, whole-array VMEM blocks (defaults).
    out = pl.pallas_call(
        kernel,
        out_shape=jax.ShapeDtypeStruct((seq_len * B, FP), jnp.float32),
    )(x2, wih1_t, whh1_t, b1, w2, b2, wout_t, bout)

    # Rows are ordered t*B + b (time-major). Slice padding, go batch-first.
    y = out[:, :n_features].reshape(seq_len, B, n_features)
    return jnp.transpose(y, (1, 0, 2))                       # (B, T, F)


# ----------------------------------------------------------------------------
# Pure-JAX reference (for correctness verification)
# ----------------------------------------------------------------------------
def _lstm_layer_ref(x_tbd, w_ih, w_hh, b_ih, b_hh):
    T, B, _ = x_tbd.shape
    H = w_hh.shape[1]

    def step(carry, x_t):
        h, c = carry
        gates = x_t @ w_ih.T + h @ w_hh.T + b_ih + b_hh
        i, f, g, o = jnp.split(gates, 4, axis=-1)
        i, f, o = jax.nn.sigmoid(i), jax.nn.sigmoid(f), jax.nn.sigmoid(o)
        g = jnp.tanh(g)
        c = f * c + i * g
        h = o * jnp.tanh(c)
        return (h, c), h

    init = (jnp.zeros((B, H), jnp.float32), jnp.zeros((B, H), jnp.float32))
    _, ys = jax.lax.scan(step, init, x_tbd)
    return ys


def decoder_forward_ref(params, x, seq_len, input_dim, n_features):
    x2 = x.reshape(-1, input_dim)
    B = x2.shape[0]
    x_tbd = jnp.tile(x2[None, :, :], (seq_len, 1, 1)).astype(jnp.float32)
    p = params["rnn1"][0]
    x_tbd = _lstm_layer_ref(x_tbd, p["w_ih"], p["w_hh"], p["b_ih"], p["b_hh"])
    for p in params["rnn2"]:
        x_tbd = _lstm_layer_ref(x_tbd, p["w_ih"], p["w_hh"], p["b_ih"],
                                p["b_hh"])
    x_bth = jnp.transpose(x_tbd, (1, 0, 2))
    y = x_bth.reshape(B * seq_len, -1) @ params["out_w"].T + params["out_b"]
    return y.reshape(B, seq_len, n_features)


# ----------------------------------------------------------------------------
if __name__ == "__main__":
    seq_len = 8
    input_dim = 64
    n_features = 1
    batch = 2

    key = jax.random.PRNGKey(0)
    kp, kx = jax.random.split(key)
    params = init_decoder_params(kp, seq_len, input_dim, n_features)
    x = jax.random.normal(kx, (batch, input_dim), jnp.float32)

    fwd = jax.jit(decoder_forward, static_argnums=(2, 3, 4))
    out = jax.block_until_ready(fwd(params, x, seq_len, input_dim, n_features))

    ref = jax.block_until_ready(
        decoder_forward_ref(params, x, seq_len, input_dim, n_features))

    assert out.shape == (batch, seq_len, n_features), out.shape
    np.testing.assert_allclose(np.asarray(out), np.asarray(ref),
                               rtol=1e-4, atol=1e-4)
    print("KERNEL_OK")
</pallas_src>

<mosaic_0001>
module attributes {stable_mosaic.version = 11 : i64} {
  func.func @_decoder_fused_kernel(%arg0: memref<2x64xf32, #tpu.memory_space<vmem>>, %arg1: memref<64x512xf32, #tpu.memory_space<vmem>>, %arg2: memref<128x512xf32, #tpu.memory_space<vmem>>, %arg3: memref<1x512xf32, #tpu.memory_space<vmem>>, %arg4: memref<3x256x512xf32, #tpu.memory_space<vmem>>, %arg5: memref<3x1x512xf32, #tpu.memory_space<vmem>>, %arg6: memref<128x128xf32, #tpu.memory_space<vmem>>, %arg7: memref<1x128xf32, #tpu.memory_space<vmem>>, %arg8: memref<16x128xf32, #tpu.memory_space<vmem>>) attributes {dimension_semantics = [], scalar_prefetch = 0 : i64, scratch_operands = 0 : i64, tpu.core_type = #tpu.core_type<tc>} {
    %c0 = arith.constant 0 : index
    %c0_0 = arith.constant 0 : index
    %0 = vector.load %arg0[%c0, %c0_0] : memref<2x64xf32, #tpu.memory_space<vmem>>, vector<2x64xf32>
    %c0_1 = arith.constant 0 : index
    %c0_2 = arith.constant 0 : index
    %1 = vector.load %arg1[%c0_1, %c0_2] : memref<64x512xf32, #tpu.memory_space<vmem>>, vector<64x512xf32>
    %cst = arith.constant dense<0.000000e+00> : vector<2x512xf32>
    %2 = tpu.matmul %0, %1, %cst {dimension_numbers = #tpu.dot_dimension_numbers<[1], [0], [0], [1], [0, 0, 1, 1], [], []>} : vector<2x64xf32>, vector<64x512xf32>, vector<2x512xf32> -> vector<2x512xf32>
    %c0_3 = arith.constant 0 : index
    %c0_4 = arith.constant 0 : index
    %3 = vector.load %arg3[%c0_3, %c0_4] : memref<1x512xf32, #tpu.memory_space<vmem>>, vector<1x512xf32>
    %4 = vector.broadcast %3 : vector<1x512xf32> to vector<2x512xf32>
    %5 = arith.addf %2, %4 : vector<2x512xf32>
    %cst_5 = arith.constant 0.000000e+00 : f32
    %6 = vector.broadcast %cst_5 : f32 to vector<2x128xf32>
    %c0_6 = arith.constant 0 : index
    %c0_7 = arith.constant 0 : index
    %7 = vector.load %arg2[%c0_6, %c0_7] : memref<128x512xf32, #tpu.memory_space<vmem>>, vector<128x512xf32>
    %cst_8 = arith.constant dense<0.000000e+00> : vector<2x512xf32>
    %8 = tpu.matmul %6, %7, %cst_8 {dimension_numbers = #tpu.dot_dimension_numbers<[1], [0], [0], [1], [0, 0, 1, 1], [], []>} : vector<2x128xf32>, vector<128x512xf32>, vector<2x512xf32> -> vector<2x512xf32>
    %9 = arith.addf %5, %8 : vector<2x512xf32>
    %10 = vector.extract_strided_slice %9 {offsets = [0, 0], sizes = [2, 128], strides = [1, 1]} : vector<2x512xf32> to vector<2x128xf32>
    %11 = arith.negf %10 : vector<2x128xf32>
    %12 = math.exp %11 : vector<2x128xf32>
    %cst_9 = arith.constant 1.000000e+00 : f32
    %13 = vector.broadcast %cst_9 : f32 to vector<2x128xf32>
    %14 = arith.addf %13, %12 : vector<2x128xf32>
    %15 = arith.divf %13, %14 : vector<2x128xf32>
    %16 = vector.extract_strided_slice %9 {offsets = [0, 128], sizes = [2, 128], strides = [1, 1]} : vector<2x512xf32> to vector<2x128xf32>
    %17 = arith.negf %16 : vector<2x128xf32>
    %18 = math.exp %17 : vector<2x128xf32>
    %cst_10 = arith.constant 1.000000e+00 : f32
    %19 = vector.broadcast %cst_10 : f32 to vector<2x128xf32>
    %20 = arith.addf %19, %18 : vector<2x128xf32>
    %21 = arith.divf %19, %20 : vector<2x128xf32>
    %22 = vector.extract_strided_slice %9 {offsets = [0, 256], sizes = [2, 128], strides = [1, 1]} : vector<2x512xf32> to vector<2x128xf32>
    %23 = math.tanh %22 : vector<2x128xf32>
    %24 = vector.extract_strided_slice %9 {offsets = [0, 384], sizes = [2, 128], strides = [1, 1]} : vector<2x512xf32> to vector<2x128xf32>
    %25 = arith.negf %24 : vector<2x128xf32>
    %26 = math.exp %25 : vector<2x128xf32>
    %cst_11 = arith.constant 1.000000e+00 : f32
    %27 = vector.broadcast %cst_11 : f32 to vector<2x128xf32>
    %28 = arith.addf %27, %26 : vector<2x128xf32>
    %29 = arith.divf %27, %28 : vector<2x128xf32>
    %30 = arith.mulf %21, %6 : vector<2x128xf32>
    %31 = arith.mulf %15, %23 : vector<2x128xf32>
    %32 = arith.addf %30, %31 : vector<2x128xf32>
    %33 = math.tanh %32 : vector<2x128xf32>
    %34 = arith.mulf %29, %33 : vector<2x128xf32>
    %35 = tpu.concatenate %34, %6 in 1 : vector<2x128xf32>, vector<2x128xf32> -> vector<2x256xf32>
    %c0_12 = arith.constant 0 : index
    %c0_13 = arith.constant 0 : index
    %c0_14 = arith.constant 0 : index
    %36 = vector.load %arg4[%c0_12, %c0_13, %c0_14] : memref<3x256x512xf32, #tpu.memory_space<vmem>>, vector<1x256x512xf32>
    %37 = vector.shape_cast %36 : vector<1x256x512xf32> to vector<256x512xf32>
    %cst_15 = arith.constant dense<0.000000e+00> : vector<2x512xf32>
    %38 = tpu.matmul %35, %37, %cst_15 {dimension_numbers = #tpu.dot_dimension_numbers<[1], [0], [0], [1], [0, 0, 1, 1], [], []>} : vector<2x256xf32>, vector<256x512xf32>, vector<2x512xf32> -> vector<2x512xf32>
    %c0_16 = arith.constant 0 : index
    %c0_17 = arith.constant 0 : index
    %c0_18 = arith.constant 0 : index
    %39 = vector.load %arg5[%c0_16, %c0_17, %c0_18] : memref<3x1x512xf32, #tpu.memory_space<vmem>>, vector<1x1x512xf32>
    %40 = vector.shape_cast %39 : vector<1x1x512xf32> to vector<1x512xf32>
    %41 = vector.broadcast %40 : vector<1x512xf32> to vector<2x512xf32>
    %42 = arith.addf %38, %41 : vector<2x512xf32>
    %43 = vector.extract_strided_slice %42 {offsets = [0, 0], sizes = [2, 128], strides = [1, 1]} : vector<2x512xf32> to vector<2x128xf32>
    %44 = arith.negf %43 : vector<2x128xf32>
    %45 = math.exp %44 : vector<2x128xf32>
    %cst_19 = arith.constant 1.000000e+00 : f32
    %46 = vector.broadcast %cst_19 : f32 to vector<2x128xf32>
    %47 = arith.addf %46, %45 : vector<2x128xf32>
    %48 = arith.divf %46, %47 : vector<2x128xf32>
    %49 = vector.extract_strided_slice %42 {offsets = [0, 128], sizes = [2, 128], strides = [1, 1]} : vector<2x512xf32> to vector<2x128xf32>
    %50 = arith.negf %49 : vector<2x128xf32>
    %51 = math.exp %50 : vector<2x128xf32>
    %cst_20 = arith.constant 1.000000e+00 : f32
    %52 = vector.broadcast %cst_20 : f32 to vector<2x128xf32>
    %53 = arith.addf %52, %51 : vector<2x128xf32>
    %54 = arith.divf %52, %53 : vector<2x128xf32>
    %55 = vector.extract_strided_slice %42 {offsets = [0, 256], sizes = [2, 128], strides = [1, 1]} : vector<2x512xf32> to vector<2x128xf32>
    %56 = math.tanh %55 : vector<2x128xf32>
    %57 = vector.extract_strided_slice %42 {offsets = [0, 384], sizes = [2, 128], strides = [1, 1]} : vector<2x512xf32> to vector<2x128xf32>
    %58 = arith.negf %57 : vector<2x128xf32>
    %59 = math.exp %58 : vector<2x128xf32>
    %cst_21 = arith.constant 1.000000e+00 : f32
    %60 = vector.broadcast %cst_21 : f32 to vector<2x128xf32>
    %61 = arith.addf %60, %59 : vector<2x128xf32>
    %62 = arith.divf %60, %61 : vector<2x128xf32>
    %63 = arith.mulf %54, %6 : vector<2x128xf32>
    %64 = arith.mulf %48, %56 : vector<2x128xf32>
    %65 = arith.addf %63, %64 : vector<2x128xf32>
    %66 = math.tanh %65 : vector<2x128xf32>
    %67 = arith.mulf %62, %66 : vector<2x128xf32>
    %68 = tpu.concatenate %67, %6 in 1 : vector<2x128xf32>, vector<2x128xf32> -> vector<2x256xf32>
    %c1 = arith.constant 1 : index
    %c0_22 = arith.constant 0 : index
    %c0_23 = arith.constant 0 : index
    %69 = vector.load %arg4[%c1, %c0_22, %c0_23] : memref<3x256x512xf32, #tpu.memory_space<vmem>>, vector<1x256x512xf32>
    %70 = vector.shape_cast %69 : vector<1x256x512xf32> to vector<256x512xf32>
    %cst_24 = arith.constant dense<0.000000e+00> : vector<2x512xf32>
    %71 = tpu.matmul %68, %70, %cst_24 {dimension_numbers = #tpu.dot_dimension_numbers<[1], [0], [0], [1], [0, 0, 1, 1], [], []>} : vector<2x256xf32>, vector<256x512xf32>, vector<2x512xf32> -> vector<2x512xf32>
    %c1_25 = arith.constant 1 : index
    %c0_26 = arith.constant 0 : index
    %c0_27 = arith.constant 0 : index
    %72 = vector.load %arg5[%c1_25, %c0_26, %c0_27] : memref<3x1x512xf32, #tpu.memory_space<vmem>>, vector<1x1x512xf32>
    %73 = vector.shape_cast %72 : vector<1x1x512xf32> to vector<1x512xf32>
    %74 = vector.broadcast %73 : vector<1x512xf32> to vector<2x512xf32>
    %75 = arith.addf %71, %74 : vector<2x512xf32>
    %76 = vector.extract_strided_slice %75 {offsets = [0, 0], sizes = [2, 128], strides = [1, 1]} : vector<2x512xf32> to vector<2x128xf32>
    %77 = arith.negf %76 : vector<2x128xf32>
    %78 = math.exp %77 : vector<2x128xf32>
    %cst_28 = arith.constant 1.000000e+00 : f32
    %79 = vector.broadcast %cst_28 : f32 to vector<2x128xf32>
    %80 = arith.addf %79, %78 : vector<2x128xf32>
    %81 = arith.divf %79, %80 : vector<2x128xf32>
    %82 = vector.extract_strided_slice %75 {offsets = [0, 128], sizes = [2, 128], strides = [1, 1]} : vector<2x512xf32> to vector<2x128xf32>
    %83 = arith.negf %82 : vector<2x128xf32>
    %84 = math.exp %83 : vector<2x128xf32>
    %cst_29 = arith.constant 1.000000e+00 : f32
    %85 = vector.broadcast %cst_29 : f32 to vector<2x128xf32>
    %86 = arith.addf %85, %84 : vector<2x128xf32>
    %87 = arith.divf %85, %86 : vector<2x128xf32>
    %88 = vector.extract_strided_slice %75 {offsets = [0, 256], sizes = [2, 128], strides = [1, 1]} : vector<2x512xf32> to vector<2x128xf32>
    %89 = math.tanh %88 : vector<2x128xf32>
    %90 = vector.extract_strided_slice %75 {offsets = [0, 384], sizes = [2, 128], strides = [1, 1]} : vector<2x512xf32> to vector<2x128xf32>
    %91 = arith.negf %90 : vector<2x128xf32>
    %92 = math.exp %91 : vector<2x128xf32>
    %cst_30 = arith.constant 1.000000e+00 : f32
    %93 = vector.broadcast %cst_30 : f32 to vector<2x128xf32>
    %94 = arith.addf %93, %92 : vector<2x128xf32>
    %95 = arith.divf %93, %94 : vector<2x128xf32>
    %96 = arith.mulf %87, %6 : vector<2x128xf32>
    %97 = arith.mulf %81, %89 : vector<2x128xf32>
    %98 = arith.addf %96, %97 : vector<2x128xf32>
    %99 = math.tanh %98 : vector<2x128xf32>
    %100 = arith.mulf %95, %99 : vector<2x128xf32>
    %101 = tpu.concatenate %100, %6 in 1 : vector<2x128xf32>, vector<2x128xf32> -> vector<2x256xf32>
    %c2 = arith.constant 2 : index
    %c0_31 = arith.constant 0 : index
    %c0_32 = arith.constant 0 : index
    %102 = vector.load %arg4[%c2, %c0_31, %c0_32] : memref<3x256x512xf32, #tpu.memory_space<vmem>>, vector<1x256x512xf32>
    %103 = vector.shape_cast %102 : vector<1x256x512xf32> to vector<256x512xf32>
    %cst_33 = arith.constant dense<0.000000e+00> : vector<2x512xf32>
    %104 = tpu.matmul %101, %103, %cst_33 {dimension_numbers = #tpu.dot_dimension_numbers<[1], [0], [0], [1], [0, 0, 1, 1], [], []>} : vector<2x256xf32>, vector<256x512xf32>, vector<2x512xf32> -> vector<2x512xf32>
    %c2_34 = arith.constant 2 : index
    %c0_35 = arith.constant 0 : index
    %c0_36 = arith.constant 0 : index
    %105 = vector.load %arg5[%c2_34, %c0_35, %c0_36] : memref<3x1x512xf32, #tpu.memory_space<vmem>>, vector<1x1x512xf32>
    %106 = vector.shape_cast %105 : vector<1x1x512xf32> to vector<1x512xf32>
    %107 = vector.broadcast %106 : vector<1x512xf32> to vector<2x512xf32>
    %108 = arith.addf %104, %107 : vector<2x512xf32>
    %109 = vector.extract_strided_slice %108 {offsets = [0, 0], sizes = [2, 128], strides = [1, 1]} : vector<2x512xf32> to vector<2x128xf32>
    %110 = arith.negf %109 : vector<2x128xf32>
    %111 = math.exp %110 : vector<2x128xf32>
    %cst_37 = arith.constant 1.000000e+00 : f32
    %112 = vector.broadcast %cst_37 : f32 to vector<2x128xf32>
    %113 = arith.addf %112, %111 : vector<2x128xf32>
    %114 = arith.divf %112, %113 : vector<2x128xf32>
    %115 = vector.extract_strided_slice %108 {offsets = [0, 128], sizes = [2, 128], strides = [1, 1]} : vector<2x512xf32> to vector<2x128xf32>
    %116 = arith.negf %115 : vector<2x128xf32>
    %117 = math.exp %116 : vector<2x128xf32>
    %cst_38 = arith.constant 1.000000e+00 : f32
    %118 = vector.broadcast %cst_38 : f32 to vector<2x128xf32>
    %119 = arith.addf %118, %117 : vector<2x128xf32>
    %120 = arith.divf %118, %119 : vector<2x128xf32>
    %121 = vector.extract_strided_slice %108 {offsets = [0, 256], sizes = [2, 128], strides = [1, 1]} : vector<2x512xf32> to vector<2x128xf32>
    %122 = math.tanh %121 : vector<2x128xf32>
    %123 = vector.extract_strided_slice %108 {offsets = [0, 384], sizes = [2, 128], strides = [1, 1]} : vector<2x512xf32> to vector<2x128xf32>
    %124 = arith.negf %123 : vector<2x128xf32>
    %125 = math.exp %124 : vector<2x128xf32>
    %cst_39 = arith.constant 1.000000e+00 : f32
    %126 = vector.broadcast %cst_39 : f32 to vector<2x128xf32>
    %127 = arith.addf %126, %125 : vector<2x128xf32>
    %128 = arith.divf %126, %127 : vector<2x128xf32>
    %129 = arith.mulf %120, %6 : vector<2x128xf32>
    %130 = arith.mulf %114, %122 : vector<2x128xf32>
    %131 = arith.addf %129, %130 : vector<2x128xf32>
    %132 = math.tanh %131 : vector<2x128xf32>
    %133 = arith.mulf %128, %132 : vector<2x128xf32>
    %c0_40 = arith.constant 0 : index
    %c0_41 = arith.constant 0 : index
    %134 = vector.load %arg2[%c0_40, %c0_41] : memref<128x512xf32, #tpu.memory_space<vmem>>, vector<128x512xf32>
    %cst_42 = arith.constant dense<0.000000e+00> : vector<2x512xf32>
    %135 = tpu.matmul %34, %134, %cst_42 {dimension_numbers = #tpu.dot_dimension_numbers<[1], [0], [0], [1], [0, 0, 1, 1], [], []>} : vector<2x128xf32>, vector<128x512xf32>, vector<2x512xf32> -> vector<2x512xf32>
    %136 = arith.addf %5, %135 : vector<2x512xf32>
    %137 = vector.extract_strided_slice %136 {offsets = [0, 0], sizes = [2, 128], strides = [1, 1]} : vector<2x512xf32> to vector<2x128xf32>
    %138 = arith.negf %137 : vector<2x128xf32>
    %139 = math.exp %138 : vector<2x128xf32>
    %cst_43 = arith.constant 1.000000e+00 : f32
    %140 = vector.broadcast %cst_43 : f32 to vector<2x128xf32>
    %141 = arith.addf %140, %139 : vector<2x128xf32>
    %142 = arith.divf %140, %141 : vector<2x128xf32>
    %143 = vector.extract_strided_slice %136 {offsets = [0, 128], sizes = [2, 128], strides = [1, 1]} : vector<2x512xf32> to vector<2x128xf32>
    %144 = arith.negf %143 : vector<2x128xf32>
    %145 = math.exp %144 : vector<2x128xf32>
    %cst_44 = arith.constant 1.000000e+00 : f32
    %146 = vector.broadcast %cst_44 : f32 to vector<2x128xf32>
    %147 = arith.addf %146, %145 : vector<2x128xf32>
    %148 = arith.divf %146, %147 : vector<2x128xf32>
    %149 = vector.extract_strided_slice %136 {offsets = [0, 256], sizes = [2, 128], strides = [1, 1]} : vector<2x512xf32> to vector<2x128xf32>
    %150 = math.tanh %149 : vector<2x128xf32>
    %151 = vector.extract_strided_slice %136 {offsets = [0, 384], sizes = [2, 128], strides = [1, 1]} : vector<2x512xf32> to vector<2x128xf32>
    %152 = arith.negf %151 : vector<2x128xf32>
    %153 = math.exp %152 : vector<2x128xf32>
    %cst_45 = arith.constant 1.000000e+00 : f32
    %154 = vector.broadcast %cst_45 : f32 to vector<2x128xf32>
    %155 = arith.addf %154, %153 : vector<2x128xf32>
    %156 = arith.divf %154, %155 : vector<2x128xf32>
    %157 = arith.mulf %148, %32 : vector<2x128xf32>
    %158 = arith.mulf %142, %150 : vector<2x128xf32>
    %159 = arith.addf %157, %158 : vector<2x128xf32>
    %160 = math.tanh %159 : vector<2x128xf32>
    %161 = arith.mulf %156, %160 : vector<2x128xf32>
    %162 = tpu.concatenate %161, %67 in 1 : vector<2x128xf32>, vector<2x128xf32> -> vector<2x256xf32>
    %c0_46 = arith.constant 0 : index
    %c0_47 = arith.constant 0 : index
    %c0_48 = arith.constant 0 : index
    %163 = vector.load %arg4[%c0_46, %c0_47, %c0_48] : memref<3x256x512xf32, #tpu.memory_space<vmem>>, vector<1x256x512xf32>
    %164 = vector.shape_cast %163 : vector<1x256x512xf32> to vector<256x512xf32>
    %cst_49 = arith.constant dense<0.000000e+00> : vector<2x512xf32>
    %165 = tpu.matmul %162, %164, %cst_49 {dimension_numbers = #tpu.dot_dimension_numbers<[1], [0], [0], [1], [0, 0, 1, 1], [], []>} : vector<2x256xf32>, vector<256x512xf32>, vector<2x512xf32> -> vector<2x512xf32>
    %c0_50 = arith.constant 0 : index
    %c0_51 = arith.constant 0 : index
    %c0_52 = arith.constant 0 : index
    %166 = vector.load %arg5[%c0_50, %c0_51, %c0_52] : memref<3x1x512xf32, #tpu.memory_space<vmem>>, vector<1x1x512xf32>
    %167 = vector.shape_cast %166 : vector<1x1x512xf32> to vector<1x512xf32>
    %168 = vector.broadcast %167 : vector<1x512xf32> to vector<2x512xf32>
    %169 = arith.addf %165, %168 : vector<2x512xf32>
    %170 = vector.extract_strided_slice %169 {offsets = [0, 0], sizes = [2, 128], strides = [1, 1]} : vector<2x512xf32> to vector<2x128xf32>
    %171 = arith.negf %170 : vector<2x128xf32>
    %172 = math.exp %171 : vector<2x128xf32>
    %cst_53 = arith.constant 1.000000e+00 : f32
    %173 = vector.broadcast %cst_53 : f32 to vector<2x128xf32>
    %174 = arith.addf %173, %172 : vector<2x128xf32>
    %175 = arith.divf %173, %174 : vector<2x128xf32>
    %176 = vector.extract_strided_slice %169 {offsets = [0, 128], sizes = [2, 128], strides = [1, 1]} : vector<2x512xf32> to vector<2x128xf32>
    %177 = arith.negf %176 : vector<2x128xf32>
    %178 = math.exp %177 : vector<2x128xf32>
    %cst_54 = arith.constant 1.000000e+00 : f32
    %179 = vector.broadcast %cst_54 : f32 to vector<2x128xf32>
    %180 = arith.addf %179, %178 : vector<2x128xf32>
    %181 = arith.divf %179, %180 : vector<2x128xf32>
    %182 = vector.extract_strided_slice %169 {offsets = [0, 256], sizes = [2, 128], strides = [1, 1]} : vector<2x512xf32> to vector<2x128xf32>
    %183 = math.tanh %182 : vector<2x128xf32>
    %184 = vector.extract_strided_slice %169 {offsets = [0, 384], sizes = [2, 128], strides = [1, 1]} : vector<2x512xf32> to vector<2x128xf32>
    %185 = arith.negf %184 : vector<2x128xf32>
    %186 = math.exp %185 : vector<2x128xf32>
    %cst_55 = arith.constant 1.000000e+00 : f32
    %187 = vector.broadcast %cst_55 : f32 to vector<2x128xf32>
    %188 = arith.addf %187, %186 : vector<2x128xf32>
    %189 = arith.divf %187, %188 : vector<2x128xf32>
    %190 = arith.mulf %181, %65 : vector<2x128xf32>
    %191 = arith.mulf %175, %183 : vector<2x128xf32>
    %192 = arith.addf %190, %191 : vector<2x128xf32>
    %193 = math.tanh %192 : vector<2x128xf32>
    %194 = arith.mulf %189, %193 : vector<2x128xf32>
    %195 = tpu.concatenate %194, %100 in 1 : vector<2x128xf32>, vector<2x128xf32> -> vector<2x256xf32>
    %c1_56 = arith.constant 1 : index
    %c0_57 = arith.constant 0 : index
    %c0_58 = arith.constant 0 : index
    %196 = vector.load %arg4[%c1_56, %c0_57, %c0_58] : memref<3x256x512xf32, #tpu.memory_space<vmem>>, vector<1x256x512xf32>
    %197 = vector.shape_cast %196 : vector<1x256x512xf32> to vector<256x512xf32>
    %cst_59 = arith.constant dense<0.000000e+00> : vector<2x512xf32>
    %198 = tpu.matmul %195, %197, %cst_59 {dimension_numbers = #tpu.dot_dimension_numbers<[1], [0], [0], [1], [0, 0, 1, 1], [], []>} : vector<2x256xf32>, vector<256x512xf32>, vector<2x512xf32> -> vector<2x512xf32>
    %c1_60 = arith.constant 1 : index
    %c0_61 = arith.constant 0 : index
    %c0_62 = arith.constant 0 : index
    %199 = vector.load %arg5[%c1_60, %c0_61, %c0_62] : memref<3x1x512xf32, #tpu.memory_space<vmem>>, vector<1x1x512xf32>
    %200 = vector.shape_cast %199 : vector<1x1x512xf32> to vector<1x512xf32>
    %201 = vector.broadcast %200 : vector<1x512xf32> to vector<2x512xf32>
    %202 = arith.addf %198, %201 : vector<2x512xf32>
    %203 = vector.extract_strided_slice %202 {offsets = [0, 0], sizes = [2, 128], strides = [1, 1]} : vector<2x512xf32> to vector<2x128xf32>
    %204 = arith.negf %203 : vector<2x128xf32>
    %205 = math.exp %204 : vector<2x128xf32>
    %cst_63 = arith.constant 1.000000e+00 : f32
    %206 = vector.broadcast %cst_63 : f32 to vector<2x128xf32>
    %207 = arith.addf %206, %205 : vector<2x128xf32>
    %208 = arith.divf %206, %207 : vector<2x128xf32>
    %209 = vector.extract_strided_slice %202 {offsets = [0, 128], sizes = [2, 128], strides = [1, 1]} : vector<2x512xf32> to vector<2x128xf32>
    %210 = arith.negf %209 : vector<2x128xf32>
    %211 = math.exp %210 : vector<2x128xf32>
    %cst_64 = arith.constant 1.000000e+00 : f32
    %212 = vector.broadcast %cst_64 : f32 to vector<2x128xf32>
    %213 = arith.addf %212, %211 : vector<2x128xf32>
    %214 = arith.divf %212, %213 : vector<2x128xf32>
    %215 = vector.extract_strided_slice %202 {offsets = [0, 256], sizes = [2, 128], strides = [1, 1]} : vector<2x512xf32> to vector<2x128xf32>
    %216 = math.tanh %215 : vector<2x128xf32>
    %217 = vector.extract_strided_slice %202 {offsets = [0, 384], sizes = [2, 128], strides = [1, 1]} : vector<2x512xf32> to vector<2x128xf32>
    %218 = arith.negf %217 : vector<2x128xf32>
    %219 = math.exp %218 : vector<2x128xf32>
    %cst_65 = arith.constant 1.000000e+00 : f32
    %220 = vector.broadcast %cst_65 : f32 to vector<2x128xf32>
    %221 = arith.addf %220, %219 : vector<2x128xf32>
    %222 = arith.divf %220, %221 : vector<2x128xf32>
    %223 = arith.mulf %214, %98 : vector<2x128xf32>
    %224 = arith.mulf %208, %216 : vector<2x128xf32>
    %225 = arith.addf %223, %224 : vector<2x128xf32>
    %226 = math.tanh %225 : vector<2x128xf32>
    %227 = arith.mulf %222, %226 : vector<2x128xf32>
    %228 = tpu.concatenate %227, %133 in 1 : vector<2x128xf32>, vector<2x128xf32> -> vector<2x256xf32>
    %c2_66 = arith.constant 2 : index
    %c0_67 = arith.constant 0 : index
    %c0_68 = arith.constant 0 : index
    %229 = vector.load %arg4[%c2_66, %c0_67, %c0_68] : memref<3x256x512xf32, #tpu.memory_space<vmem>>, vector<1x256x512xf32>
    %230 = vector.shape_cast %229 : vector<1x256x512xf32> to vector<256x512xf32>
    %cst_69 = arith.constant dense<0.000000e+00> : vector<2x512xf32>
    %231 = tpu.matmul %228, %230, %cst_69 {dimension_numbers = #tpu.dot_dimension_numbers<[1], [0], [0], [1], [0, 0, 1, 1], [], []>} : vector<2x256xf32>, vector<256x512xf32>, vector<2x512xf32> -> vector<2x512xf32>
    %c2_70 = arith.constant 2 : index
    %c0_71 = arith.constant 0 : index
    %c0_72 = arith.constant 0 : index
    %232 = vector.load %arg5[%c2_70, %c0_71, %c0_72] : memref<3x1x512xf32, #tpu.memory_space<vmem>>, vector<1x1x512xf32>
    %233 = vector.shape_cast %232 : vector<1x1x512xf32> to vector<1x512xf32>
    %234 = vector.broadcast %233 : vector<1x512xf32> to vector<2x512xf32>
    %235 = arith.addf %231, %234 : vector<2x512xf32>
    %236 = vector.extract_strided_slice %235 {offsets = [0, 0], sizes = [2, 128], strides = [1, 1]} : vector<2x512xf32> to vector<2x128xf32>
    %237 = arith.negf %236 : vector<2x128xf32>
    %238 = math.exp %237 : vector<2x128xf32>
    %cst_73 = arith.constant 1.000000e+00 : f32
    %239 = vector.broadcast %cst_73 : f32 to vector<2x128xf32>
    %240 = arith.addf %239, %238 : vector<2x128xf32>
    %241 = arith.divf %239, %240 : vector<2x128xf32>
    %242 = vector.extract_strided_slice %235 {offsets = [0, 128], sizes = [2, 128], strides = [1, 1]} : vector<2x512xf32> to vector<2x128xf32>
    %243 = arith.negf %242 : vector<2x128xf32>
    %244 = math.exp %243 : vector<2x128xf32>
    %cst_74 = arith.constant 1.000000e+00 : f32
    %245 = vector.broadcast %cst_74 : f32 to vector<2x128xf32>
    %246 = arith.addf %245, %244 : vector<2x128xf32>
    %247 = arith.divf %245, %246 : vector<2x128xf32>
    %248 = vector.extract_strided_slice %235 {offsets = [0, 256], sizes = [2, 128], strides = [1, 1]} : vector<2x512xf32> to vector<2x128xf32>
    %249 = math.tanh %248 : vector<2x128xf32>
    %250 = vector.extract_strided_slice %235 {offsets = [0, 384], sizes = [2, 128], strides = [1, 1]} : vector<2x512xf32> to vector<2x128xf32>
    %251 = arith.negf %250 : vector<2x128xf32>
    %252 = math.exp %251 : vector<2x128xf32>
    %cst_75 = arith.constant 1.000000e+00 : f32
    %253 = vector.broadcast %cst_75 : f32 to vector<2x128xf32>
    %254 = arith.addf %253, %252 : vector<2x128xf32>
    %255 = arith.divf %253, %254 : vector<2x128xf32>
    %256 = arith.mulf %247, %131 : vector<2x128xf32>
    %257 = arith.mulf %241, %249 : vector<2x128xf32>
    %258 = arith.addf %256, %257 : vector<2x128xf32>
    %259 = math.tanh %258 : vector<2x128xf32>
    %260 = arith.mulf %255, %259 : vector<2x128xf32>
    %c0_76 = arith.constant 0 : index
    %c0_77 = arith.constant 0 : index
    %261 = vector.load %arg2[%c0_76, %c0_77] : memref<128x512xf32, #tpu.memory_space<vmem>>, vector<128x512xf32>
    %cst_78 = arith.constant dense<0.000000e+00> : vector<2x512xf32>
    %262 = tpu.matmul %161, %261, %cst_78 {dimension_numbers = #tpu.dot_dimension_numbers<[1], [0], [0], [1], [0, 0, 1, 1], [], []>} : vector<2x128xf32>, vector<128x512xf32>, vector<2x512xf32> -> vector<2x512xf32>
    %263 = arith.addf %5, %262 : vector<2x512xf32>
    %264 = vector.extract_strided_slice %263 {offsets = [0, 0], sizes = [2, 128], strides = [1, 1]} : vector<2x512xf32> to vector<2x128xf32>
    %265 = arith.negf %264 : vector<2x128xf32>
    %266 = math.exp %265 : vector<2x128xf32>
    %cst_79 = arith.constant 1.000000e+00 : f32
    %267 = vector.broadcast %cst_79 : f32 to vector<2x128xf32>
    %268 = arith.addf %267, %266 : vector<2x128xf32>
    %269 = arith.divf %267, %268 : vector<2x128xf32>
    %270 = vector.extract_strided_slice %263 {offsets = [0, 128], sizes = [2, 128], strides = [1, 1]} : vector<2x512xf32> to vector<2x128xf32>
    %271 = arith.negf %270 : vector<2x128xf32>
    %272 = math.exp %271 : vector<2x128xf32>
    %cst_80 = arith.constant 1.000000e+00 : f32
    %273 = vector.broadcast %cst_80 : f32 to vector<2x128xf32>
    %274 = arith.addf %273, %272 : vector<2x128xf32>
    %275 = arith.divf %273, %274 : vector<2x128xf32>
    %276 = vector.extract_strided_slice %263 {offsets = [0, 256], sizes = [2, 128], strides = [1, 1]} : vector<2x512xf32> to vector<2x128xf32>
    %277 = math.tanh %276 : vector<2x128xf32>
    %278 = vector.extract_strided_slice %263 {offsets = [0, 384], sizes = [2, 128], strides = [1, 1]} : vector<2x512xf32> to vector<2x128xf32>
    %279 = arith.negf %278 : vector<2x128xf32>
    %280 = math.exp %279 : vector<2x128xf32>
    %cst_81 = arith.constant 1.000000e+00 : f32
    %281 = vector.broadcast %cst_81 : f32 to vector<2x128xf32>
    %282 = arith.addf %281, %280 : vector<2x128xf32>
    %283 = arith.divf %281, %282 : vector<2x128xf32>
    %284 = arith.mulf %275, %159 : vector<2x128xf32>
    %285 = arith.mulf %269, %277 : vector<2x128xf32>
    %286 = arith.addf %284, %285 : vector<2x128xf32>
    %287 = math.tanh %286 : vector<2x128xf32>
    %288 = arith.mulf %283, %287 : vector<2x128xf32>
    %289 = tpu.concatenate %288, %194 in 1 : vector<2x128xf32>, vector<2x128xf32> -> vector<2x256xf32>
    %c0_82 = arith.constant 0 : index
    %c0_83 = arith.constant 0 : index
    %c0_84 = arith.constant 0 : index
    %290 = vector.load %arg4[%c0_82, %c0_83, %c0_84] : memref<3x256x512xf32, #tpu.memory_space<vmem>>, vector<1x256x512xf32>
    %291 = vector.shape_cast %290 : vector<1x256x512xf32> to vector<256x512xf32>
    %cst_85 = arith.constant dense<0.000000e+00> : vector<2x512xf32>
    %292 = tpu.matmul %289, %291, %cst_85 {dimension_numbers = #tpu.dot_dimension_numbers<[1], [0], [0], [1], [0, 0, 1, 1], [], []>} : vector<2x256xf32>, vector<256x512xf32>, vector<2x512xf32> -> vector<2x512xf32>
    %c0_86 = arith.constant 0 : index
    %c0_87 = arith.constant 0 : index
    %c0_88 = arith.constant 0 : index
    %293 = vector.load %arg5[%c0_86, %c0_87, %c0_88] : memref<3x1x512xf32, #tpu.memory_space<vmem>>, vector<1x1x512xf32>
    %294 = vector.shape_cast %293 : vector<1x1x512xf32> to vector<1x512xf32>
    %295 = vector.broadcast %294 : vector<1x512xf32> to vector<2x512xf32>
    %296 = arith.addf %292, %295 : vector<2x512xf32>
    %297 = vector.extract_strided_slice %296 {offsets = [0, 0], sizes = [2, 128], strides = [1, 1]} : vector<2x512xf32> to vector<2x128xf32>
    %298 = arith.negf %297 : vector<2x128xf32>
    %299 = math.exp %298 : vector<2x128xf32>
    %cst_89 = arith.constant 1.000000e+00 : f32
    %300 = vector.broadcast %cst_89 : f32 to vector<2x128xf32>
    %301 = arith.addf %300, %299 : vector<2x128xf32>
    %302 = arith.divf %300, %301 : vector<2x128xf32>
    %303 = vector.extract_strided_slice %296 {offsets = [0, 128], sizes = [2, 128], strides = [1, 1]} : vector<2x512xf32> to vector<2x128xf32>
    %304 = arith.negf %303 : vector<2x128xf32>
    %305 = math.exp %304 : vector<2x128xf32>
    %cst_90 = arith.constant 1.000000e+00 : f32
    %306 = vector.broadcast %cst_90 : f32 to vector<2x128xf32>
    %307 = arith.addf %306, %305 : vector<2x128xf32>
    %308 = arith.divf %306, %307 : vector<2x128xf32>
    %309 = vector.extract_strided_slice %296 {offsets = [0, 256], sizes = [2, 128], strides = [1, 1]} : vector<2x512xf32> to vector<2x128xf32>
    %310 = math.tanh %309 : vector<2x128xf32>
    %311 = vector.extract_strided_slice %296 {offsets = [0, 384], sizes = [2, 128], strides = [1, 1]} : vector<2x512xf32> to vector<2x128xf32>
    %312 = arith.negf %311 : vector<2x128xf32>
    %313 = math.exp %312 : vector<2x128xf32>
    %cst_91 = arith.constant 1.000000e+00 : f32
    %314 = vector.broadcast %cst_91 : f32 to vector<2x128xf32>
    %315 = arith.addf %314, %313 : vector<2x128xf32>
    %316 = arith.divf %314, %315 : vector<2x128xf32>
    %317 = arith.mulf %308, %192 : vector<2x128xf32>
    %318 = arith.mulf %302, %310 : vector<2x128xf32>
    %319 = arith.addf %317, %318 : vector<2x128xf32>
    %320 = math.tanh %319 : vector<2x128xf32>
    %321 = arith.mulf %316, %320 : vector<2x128xf32>
    %322 = tpu.concatenate %321, %227 in 1 : vector<2x128xf32>, vector<2x128xf32> -> vector<2x256xf32>
    %c1_92 = arith.constant 1 : index
    %c0_93 = arith.constant 0 : index
    %c0_94 = arith.constant 0 : index
    %323 = vector.load %arg4[%c1_92, %c0_93, %c0_94] : memref<3x256x512xf32, #tpu.memory_space<vmem>>, vector<1x256x512xf32>
    %324 = vector.shape_cast %323 : vector<1x256x512xf32> to vector<256x512xf32>
    %cst_95 = arith.constant dense<0.000000e+00> : vector<2x512xf32>
    %325 = tpu.matmul %322, %324, %cst_95 {dimension_numbers = #tpu.dot_dimension_numbers<[1], [0], [0], [1], [0, 0, 1, 1], [], []>} : vector<2x256xf32>, vector<256x512xf32>, vector<2x512xf32> -> vector<2x512xf32>
    %c1_96 = arith.constant 1 : index
    %c0_97 = arith.constant 0 : index
    %c0_98 = arith.constant 0 : index
    %326 = vector.load %arg5[%c1_96, %c0_97, %c0_98] : memref<3x1x512xf32, #tpu.memory_space<vmem>>, vector<1x1x512xf32>
    %327 = vector.shape_cast %326 : vector<1x1x512xf32> to vector<1x512xf32>
    %328 = vector.broadcast %327 : vector<1x512xf32> to vector<2x512xf32>
    %329 = arith.addf %325, %328 : vector<2x512xf32>
    %330 = vector.extract_strided_slice %329 {offsets = [0, 0], sizes = [2, 128], strides = [1, 1]} : vector<2x512xf32> to vector<2x128xf32>
    %331 = arith.negf %330 : vector<2x128xf32>
    %332 = math.exp %331 : vector<2x128xf32>
    %cst_99 = arith.constant 1.000000e+00 : f32
    %333 = vector.broadcast %cst_99 : f32 to vector<2x128xf32>
    %334 = arith.addf %333, %332 : vector<2x128xf32>
    %335 = arith.divf %333, %334 : vector<2x128xf32>
    %336 = vector.extract_strided_slice %329 {offsets = [0, 128], sizes = [2, 128], strides = [1, 1]} : vector<2x512xf32> to vector<2x128xf32>
    %337 = arith.negf %336 : vector<2x128xf32>
    %338 = math.exp %337 : vector<2x128xf32>
    %cst_100 = arith.constant 1.000000e+00 : f32
    %339 = vector.broadcast %cst_100 : f32 to vector<2x128xf32>
    %340 = arith.addf %339, %338 : vector<2x128xf32>
    %341 = arith.divf %339, %340 : vector<2x128xf32>
    %342 = vector.extract_strided_slice %329 {offsets = [0, 256], sizes = [2, 128], strides = [1, 1]} : vector<2x512xf32> to vector<2x128xf32>
    %343 = math.tanh %342 : vector<2x128xf32>
    %344 = vector.extract_strided_slice %329 {offsets = [0, 384], sizes = [2, 128], strides = [1, 1]} : vector<2x512xf32> to vector<2x128xf32>
    %345 = arith.negf %344 : vector<2x128xf32>
    %346 = math.exp %345 : vector<2x128xf32>
    %cst_101 = arith.constant 1.000000e+00 : f32
    %347 = vector.broadcast %cst_101 : f32 to vector<2x128xf32>
    %348 = arith.addf %347, %346 : vector<2x128xf32>
    %349 = arith.divf %347, %348 : vector<2x128xf32>
    %350 = arith.mulf %341, %225 : vector<2x128xf32>
    %351 = arith.mulf %335, %343 : vector<2x128xf32>
    %352 = arith.addf %350, %351 : vector<2x128xf32>
    %353 = math.tanh %352 : vector<2x128xf32>
    %354 = arith.mulf %349, %353 : vector<2x128xf32>
    %355 = tpu.concatenate %354, %260 in 1 : vector<2x128xf32>, vector<2x128xf32> -> vector<2x256xf32>
    %c2_102 = arith.constant 2 : index
    %c0_103 = arith.constant 0 : index
    %c0_104 = arith.constant 0 : index
    %356 = vector.load %arg4[%c2_102, %c0_103, %c0_104] : memref<3x256x512xf32, #tpu.memory_space<vmem>>, vector<1x256x512xf32>
    %357 = vector.shape_cast %356 : vector<1x256x512xf32> to vector<256x512xf32>
    %cst_105 = arith.constant dense<0.000000e+00> : vector<2x512xf32>
    %358 = tpu.matmul %355, %357, %cst_105 {dimension_numbers = #tpu.dot_dimension_numbers<[1], [0], [0], [1], [0, 0, 1, 1], [], []>} : vector<2x256xf32>, vector<256x512xf32>, vector<2x512xf32> -> vector<2x512xf32>
    %c2_106 = arith.constant 2 : index
    %c0_107 = arith.constant 0 : index
    %c0_108 = arith.constant 0 : index
    %359 = vector.load %arg5[%c2_106, %c0_107, %c0_108] : memref<3x1x512xf32, #tpu.memory_space<vmem>>, vector<1x1x512xf32>
    %360 = vector.shape_cast %359 : vector<1x1x512xf32> to vector<1x512xf32>
    %361 = vector.broadcast %360 : vector<1x512xf32> to vector<2x512xf32>
    %362 = arith.addf %358, %361 : vector<2x512xf32>
    %363 = vector.extract_strided_slice %362 {offsets = [0, 0], sizes = [2, 128], strides = [1, 1]} : vector<2x512xf32> to vector<2x128xf32>
    %364 = arith.negf %363 : vector<2x128xf32>
    %365 = math.exp %364 : vector<2x128xf32>
    %cst_109 = arith.constant 1.000000e+00 : f32
    %366 = vector.broadcast %cst_109 : f32 to vector<2x128xf32>
    %367 = arith.addf %366, %365 : vector<2x128xf32>
    %368 = arith.divf %366, %367 : vector<2x128xf32>
    %369 = vector.extract_strided_slice %362 {offsets = [0, 128], sizes = [2, 128], strides = [1, 1]} : vector<2x512xf32> to vector<2x128xf32>
    %370 = arith.negf %369 : vector<2x128xf32>
    %371 = math.exp %370 : vector<2x128xf32>
    %cst_110 = arith.constant 1.000000e+00 : f32
    %372 = vector.broadcast %cst_110 : f32 to vector<2x128xf32>
    %373 = arith.addf %372, %371 : vector<2x128xf32>
    %374 = arith.divf %372, %373 : vector<2x128xf32>
    %375 = vector.extract_strided_slice %362 {offsets = [0, 256], sizes = [2, 128], strides = [1, 1]} : vector<2x512xf32> to vector<2x128xf32>
    %376 = math.tanh %375 : vector<2x128xf32>
    %377 = vector.extract_strided_slice %362 {offsets = [0, 384], sizes = [2, 128], strides = [1, 1]} : vector<2x512xf32> to vector<2x128xf32>
    %378 = arith.negf %377 : vector<2x128xf32>
    %379 = math.exp %378 : vector<2x128xf32>
    %cst_111 = arith.constant 1.000000e+00 : f32
    %380 = vector.broadcast %cst_111 : f32 to vector<2x128xf32>
    %381 = arith.addf %380, %379 : vector<2x128xf32>
    %382 = arith.divf %380, %381 : vector<2x128xf32>
    %383 = arith.mulf %374, %258 : vector<2x128xf32>
    %384 = arith.mulf %368, %376 : vector<2x128xf32>
    %385 = arith.addf %383, %384 : vector<2x128xf32>
    %386 = math.tanh %385 : vector<2x128xf32>
    %387 = arith.mulf %382, %386 : vector<2x128xf32>
    %c0_112 = arith.constant 0 : index
    %c0_113 = arith.constant 0 : index
    %388 = vector.load %arg2[%c0_112, %c0_113] : memref<128x512xf32, #tpu.memory_space<vmem>>, vector<128x512xf32>
    %cst_114 = arith.constant dense<0.000000e+00> : vector<2x512xf32>
    %389 = tpu.matmul %288, %388, %cst_114 {dimension_numbers = #tpu.dot_dimension_numbers<[1], [0], [0], [1], [0, 0, 1, 1], [], []>} : vector<2x128xf32>, vector<128x512xf32>, vector<2x512xf32> -> vector<2x512xf32>
    %390 = arith.addf %5, %389 : vector<2x512xf32>
    %391 = vector.extract_strided_slice %390 {offsets = [0, 0], sizes = [2, 128], strides = [1, 1]} : vector<2x512xf32> to vector<2x128xf32>
    %392 = arith.negf %391 : vector<2x128xf32>
    %393 = math.exp %392 : vector<2x128xf32>
    %cst_115 = arith.constant 1.000000e+00 : f32
    %394 = vector.broadcast %cst_115 : f32 to vector<2x128xf32>
    %395 = arith.addf %394, %393 : vector<2x128xf32>
    %396 = arith.divf %394, %395 : vector<2x128xf32>
    %397 = vector.extract_strided_slice %390 {offsets = [0, 128], sizes = [2, 128], strides = [1, 1]} : vector<2x512xf32> to vector<2x128xf32>
    %398 = arith.negf %397 : vector<2x128xf32>
    %399 = math.exp %398 : vector<2x128xf32>
    %cst_116 = arith.constant 1.000000e+00 : f32
    %400 = vector.broadcast %cst_116 : f32 to vector<2x128xf32>
    %401 = arith.addf %400, %399 : vector<2x128xf32>
    %402 = arith.divf %400, %401 : vector<2x128xf32>
    %403 = vector.extract_strided_slice %390 {offsets = [0, 256], sizes = [2, 128], strides = [1, 1]} : vector<2x512xf32> to vector<2x128xf32>
    %404 = math.tanh %403 : vector<2x128xf32>
    %405 = vector.extract_strided_slice %390 {offsets = [0, 384], sizes = [2, 128], strides = [1, 1]} : vector<2x512xf32> to vector<2x128xf32>
    %406 = arith.negf %405 : vector<2x128xf32>
    %407 = math.exp %406 : vector<2x128xf32>
    %cst_117 = arith.constant 1.000000e+00 : f32
    %408 = vector.broadcast %cst_117 : f32 to vector<2x128xf32>
    %409 = arith.addf %408, %407 : vector<2x128xf32>
    %410 = arith.divf %408, %409 : vector<2x128xf32>
    %411 = arith.mulf %402, %286 : vector<2x128xf32>
    %412 = arith.mulf %396, %404 : vector<2x128xf32>
    %413 = arith.addf %411, %412 : vector<2x128xf32>
    %414 = math.tanh %413 : vector<2x128xf32>
    %415 = arith.mulf %410, %414 : vector<2x128xf32>
    %416 = tpu.concatenate %415, %321 in 1 : vector<2x128xf32>, vector<2x128xf32> -> vector<2x256xf32>
    %c0_118 = arith.constant 0 : index
    %c0_119 = arith.constant 0 : index
    %c0_120 = arith.constant 0 : index
    %417 = vector.load %arg4[%c0_118, %c0_119, %c0_120] : memref<3x256x512xf32, #tpu.memory_space<vmem>>, vector<1x256x512xf32>
    %418 = vector.shape_cast %417 : vector<1x256x512xf32> to vector<256x512xf32>
    %cst_121 = arith.constant dense<0.000000e+00> : vector<2x512xf32>
    %419 = tpu.matmul %416, %418, %cst_121 {dimension_numbers = #tpu.dot_dimension_numbers<[1], [0], [0], [1], [0, 0, 1, 1], [], []>} : vector<2x256xf32>, vector<256x512xf32>, vector<2x512xf32> -> vector<2x512xf32>
    %c0_122 = arith.constant 0 : index
    %c0_123 = arith.constant 0 : index
    %c0_124 = arith.constant 0 : index
    %420 = vector.load %arg5[%c0_122, %c0_123, %c0_124] : memref<3x1x512xf32, #tpu.memory_space<vmem>>, vector<1x1x512xf32>
    %421 = vector.shape_cast %420 : vector<1x1x512xf32> to vector<1x512xf32>
    %422 = vector.broadcast %421 : vector<1x512xf32> to vector<2x512xf32>
    %423 = arith.addf %419, %422 : vector<2x512xf32>
    %424 = vector.extract_strided_slice %423 {offsets = [0, 0], sizes = [2, 128], strides = [1, 1]} : vector<2x512xf32> to vector<2x128xf32>
    %425 = arith.negf %424 : vector<2x128xf32>
    %426 = math.exp %425 : vector<2x128xf32>
    %cst_125 = arith.constant 1.000000e+00 : f32
    %427 = vector.broadcast %cst_125 : f32 to vector<2x128xf32>
    %428 = arith.addf %427, %426 : vector<2x128xf32>
    %429 = arith.divf %427, %428 : vector<2x128xf32>
    %430 = vector.extract_strided_slice %423 {offsets = [0, 128], sizes = [2, 128], strides = [1, 1]} : vector<2x512xf32> to vector<2x128xf32>
    %431 = arith.negf %430 : vector<2x128xf32>
    %432 = math.exp %431 : vector<2x128xf32>
    %cst_126 = arith.constant 1.000000e+00 : f32
    %433 = vector.broadcast %cst_126 : f32 to vector<2x128xf32>
    %434 = arith.addf %433, %432 : vector<2x128xf32>
    %435 = arith.divf %433, %434 : vector<2x128xf32>
    %436 = vector.extract_strided_slice %423 {offsets = [0, 256], sizes = [2, 128], strides = [1, 1]} : vector<2x512xf32> to vector<2x128xf32>
    %437 = math.tanh %436 : vector<2x128xf32>
    %438 = vector.extract_strided_slice %423 {offsets = [0, 384], sizes = [2, 128], strides = [1, 1]} : vector<2x512xf32> to vector<2x128xf32>
    %439 = arith.negf %438 : vector<2x128xf32>
    %440 = math.exp %439 : vector<2x128xf32>
    %cst_127 = arith.constant 1.000000e+00 : f32
    %441 = vector.broadcast %cst_127 : f32 to vector<2x128xf32>
    %442 = arith.addf %441, %440 : vector<2x128xf32>
    %443 = arith.divf %441, %442 : vector<2x128xf32>
    %444 = arith.mulf %435, %319 : vector<2x128xf32>
    %445 = arith.mulf %429, %437 : vector<2x128xf32>
    %446 = arith.addf %444, %445 : vector<2x128xf32>
    %447 = math.tanh %446 : vector<2x128xf32>
    %448 = arith.mulf %443, %447 : vector<2x128xf32>
    %449 = tpu.concatenate %448, %354 in 1 : vector<2x128xf32>, vector<2x128xf32> -> vector<2x256xf32>
    %c1_128 = arith.constant 1 : index
    %c0_129 = arith.constant 0 : index
    %c0_130 = arith.constant 0 : index
    %450 = vector.load %arg4[%c1_128, %c0_129, %c0_130] : memref<3x256x512xf32, #tpu.memory_space<vmem>>, vector<1x256x512xf32>
    %451 = vector.shape_cast %450 : vector<1x256x512xf32> to vector<256x512xf32>
    %cst_131 = arith.constant dense<0.000000e+00> : vector<2x512xf32>
    %452 = tpu.matmul %449, %451, %cst_131 {dimension_numbers = #tpu.dot_dimension_numbers<[1], [0], [0], [1], [0, 0, 1, 1], [], []>} : vector<2x256xf32>, vector<256x512xf32>, vector<2x512xf32> -> vector<2x512xf32>
    %c1_132 = arith.constant 1 : index
    %c0_133 = arith.constant 0 : index
    %c0_134 = arith.constant 0 : index
    %453 = vector.load %arg5[%c1_132, %c0_133, %c0_134] : memref<3x1x512xf32, #tpu.memory_space<vmem>>, vector<1x1x512xf32>
    %454 = vector.shape_cast %453 : vector<1x1x512xf32> to vector<1x512xf32>
    %455 = vector.broadcast %454 : vector<1x512xf32> to vector<2x512xf32>
    %456 = arith.addf %452, %455 : vector<2x512xf32>
    %457 = vector.extract_strided_slice %456 {offsets = [0, 0], sizes = [2, 128], strides = [1, 1]} : vector<2x512xf32> to vector<2x128xf32>
    %458 = arith.negf %457 : vector<2x128xf32>
    %459 = math.exp %458 : vector<2x128xf32>
    %cst_135 = arith.constant 1.000000e+00 : f32
    %460 = vector.broadcast %cst_135 : f32 to vector<2x128xf32>
    %461 = arith.addf %460, %459 : vector<2x128xf32>
    %462 = arith.divf %460, %461 : vector<2x128xf32>
    %463 = vector.extract_strided_slice %456 {offsets = [0, 128], sizes = [2, 128], strides = [1, 1]} : vector<2x512xf32> to vector<2x128xf32>
    %464 = arith.negf %463 : vector<2x128xf32>
    %465 = math.exp %464 : vector<2x128xf32>
    %cst_136 = arith.constant 1.000000e+00 : f32
    %466 = vector.broadcast %cst_136 : f32 to vector<2x128xf32>
    %467 = arith.addf %466, %465 : vector<2x128xf32>
    %468 = arith.divf %466, %467 : vector<2x128xf32>
    %469 = vector.extract_strided_slice %456 {offsets = [0, 256], sizes = [2, 128], strides = [1, 1]} : vector<2x512xf32> to vector<2x128xf32>
    %470 = math.tanh %469 : vector<2x128xf32>
    %471 = vector.extract_strided_slice %456 {offsets = [0, 384], sizes = [2, 128], strides = [1, 1]} : vector<2x512xf32> to vector<2x128xf32>
    %472 = arith.negf %471 : vector<2x128xf32>
    %473 = math.exp %472 : vector<2x128xf32>
    %cst_137 = arith.constant 1.000000e+00 : f32
    %474 = vector.broadcast %cst_137 : f32 to vector<2x128xf32>
    %475 = arith.addf %474, %473 : vector<2x128xf32>
    %476 = arith.divf %474, %475 : vector<2x128xf32>
    %477 = arith.mulf %468, %352 : vector<2x128xf32>
    %478 = arith.mulf %462, %470 : vector<2x128xf32>
    %479 = arith.addf %477, %478 : vector<2x128xf32>
    %480 = math.tanh %479 : vector<2x128xf32>
    %481 = arith.mulf %476, %480 : vector<2x128xf32>
    %482 = tpu.concatenate %481, %387 in 1 : vector<2x128xf32>, vector<2x128xf32> -> vector<2x256xf32>
    %c2_138 = arith.constant 2 : index
    %c0_139 = arith.constant 0 : index
    %c0_140 = arith.constant 0 : index
    %483 = vector.load %arg4[%c2_138, %c0_139, %c0_140] : memref<3x256x512xf32, #tpu.memory_space<vmem>>, vector<1x256x512xf32>
    %484 = vector.shape_cast %483 : vector<1x256x512xf32> to vector<256x512xf32>
    %cst_141 = arith.constant dense<0.000000e+00> : vector<2x512xf32>
    %485 = tpu.matmul %482, %484, %cst_141 {dimension_numbers = #tpu.dot_dimension_numbers<[1], [0], [0], [1], [0, 0, 1, 1], [], []>} : vector<2x256xf32>, vector<256x512xf32>, vector<2x512xf32> -> vector<2x512xf32>
    %c2_142 = arith.constant 2 : index
    %c0_143 = arith.constant 0 : index
    %c0_144 = arith.constant 0 : index
    %486 = vector.load %arg5[%c2_142, %c0_143, %c0_144] : memref<3x1x512xf32, #tpu.memory_space<vmem>>, vector<1x1x512xf32>
    %487 = vector.shape_cast %486 : vector<1x1x512xf32> to vector<1x512xf32>
    %488 = vector.broadcast %487 : vector<1x512xf32> to vector<2x512xf32>
    %489 = arith.addf %485, %488 : vector<2x512xf32>
    %490 = vector.extract_strided_slice %489 {offsets = [0, 0], sizes = [2, 128], strides = [1, 1]} : vector<2x512xf32> to vector<2x128xf32>
    %491 = arith.negf %490 : vector<2x128xf32>
    %492 = math.exp %491 : vector<2x128xf32>
    %cst_145 = arith.constant 1.000000e+00 : f32
    %493 = vector.broadcast %cst_145 : f32 to vector<2x128xf32>
    %494 = arith.addf %493, %492 : vector<2x128xf32>
    %495 = arith.divf %493, %494 : vector<2x128xf32>
    %496 = vector.extract_strided_slice %489 {offsets = [0, 128], sizes = [2, 128], strides = [1, 1]} : vector<2x512xf32> to vector<2x128xf32>
    %497 = arith.negf %496 : vector<2x128xf32>
    %498 = math.exp %497 : vector<2x128xf32>
    %cst_146 = arith.constant 1.000000e+00 : f32
    %499 = vector.broadcast %cst_146 : f32 to vector<2x128xf32>
    %500 = arith.addf %499, %498 : vector<2x128xf32>
    %501 = arith.divf %499, %500 : vector<2x128xf32>
    %502 = vector.extract_strided_slice %489 {offsets = [0, 256], sizes = [2, 128], strides = [1, 1]} : vector<2x512xf32> to vector<2x128xf32>
    %503 = math.tanh %502 : vector<2x128xf32>
    %504 = vector.extract_strided_slice %489 {offsets = [0, 384], sizes = [2, 128], strides = [1, 1]} : vector<2x512xf32> to vector<2x128xf32>
    %505 = arith.negf %504 : vector<2x128xf32>
    %506 = math.exp %505 : vector<2x128xf32>
    %cst_147 = arith.constant 1.000000e+00 : f32
    %507 = vector.broadcast %cst_147 : f32 to vector<2x128xf32>
    %508 = arith.addf %507, %506 : vector<2x128xf32>
    %509 = arith.divf %507, %508 : vector<2x128xf32>
    %510 = arith.mulf %501, %385 : vector<2x128xf32>
    %511 = arith.mulf %495, %503 : vector<2x128xf32>
    %512 = arith.addf %510, %511 : vector<2x128xf32>
    %513 = math.tanh %512 : vector<2x128xf32>
    %514 = arith.mulf %509, %513 : vector<2x128xf32>
    %c0_148 = arith.constant 0 : index
    %c0_149 = arith.constant 0 : index
    %515 = vector.load %arg2[%c0_148, %c0_149] : memref<128x512xf32, #tpu.memory_space<vmem>>, vector<128x512xf32>
    %cst_150 = arith.constant dense<0.000000e+00> : vector<2x512xf32>
    %516 = tpu.matmul %415, %515, %cst_150 {dimension_numbers = #tpu.dot_dimension_numbers<[1], [0], [0], [1], [0, 0, 1, 1], [], []>} : vector<2x128xf32>, vector<128x512xf32>, vector<2x512xf32> -> vector<2x512xf32>
    %517 = arith.addf %5, %516 : vector<2x512xf32>
    %518 = vector.extract_strided_slice %517 {offsets = [0, 0], sizes = [2, 128], strides = [1, 1]} : vector<2x512xf32> to vector<2x128xf32>
    %519 = arith.negf %518 : vector<2x128xf32>
    %520 = math.exp %519 : vector<2x128xf32>
    %cst_151 = arith.constant 1.000000e+00 : f32
    %521 = vector.broadcast %cst_151 : f32 to vector<2x128xf32>
    %522 = arith.addf %521, %520 : vector<2x128xf32>
    %523 = arith.divf %521, %522 : vector<2x128xf32>
    %524 = vector.extract_strided_slice %517 {offsets = [0, 128], sizes = [2, 128], strides = [1, 1]} : vector<2x512xf32> to vector<2x128xf32>
    %525 = arith.negf %524 : vector<2x128xf32>
    %526 = math.exp %525 : vector<2x128xf32>
    %cst_152 = arith.constant 1.000000e+00 : f32
    %527 = vector.broadcast %cst_152 : f32 to vector<2x128xf32>
    %528 = arith.addf %527, %526 : vector<2x128xf32>
    %529 = arith.divf %527, %528 : vector<2x128xf32>
    %530 = vector.extract_strided_slice %517 {offsets = [0, 256], sizes = [2, 128], strides = [1, 1]} : vector<2x512xf32> to vector<2x128xf32>
    %531 = math.tanh %530 : vector<2x128xf32>
    %532 = vector.extract_strided_slice %517 {offsets = [0, 384], sizes = [2, 128], strides = [1, 1]} : vector<2x512xf32> to vector<2x128xf32>
    %533 = arith.negf %532 : vector<2x128xf32>
    %534 = math.exp %533 : vector<2x128xf32>
    %cst_153 = arith.constant 1.000000e+00 : f32
    %535 = vector.broadcast %cst_153 : f32 to vector<2x128xf32>
    %536 = arith.addf %535, %534 : vector<2x128xf32>
    %537 = arith.divf %535, %536 : vector<2x128xf32>
    %538 = arith.mulf %529, %413 : vector<2x128xf32>
    %539 = arith.mulf %523, %531 : vector<2x128xf32>
    %540 = arith.addf %538, %539 : vector<2x128xf32>
    %541 = math.tanh %540 : vector<2x128xf32>
    %542 = arith.mulf %537, %541 : vector<2x128xf32>
    %543 = tpu.concatenate %542, %448 in 1 : vector<2x128xf32>, vector<2x128xf32> -> vector<2x256xf32>
    %c0_154 = arith.constant 0 : index
    %c0_155 = arith.constant 0 : index
    %c0_156 = arith.constant 0 : index
    %544 = vector.load %arg4[%c0_154, %c0_155, %c0_156] : memref<3x256x512xf32, #tpu.memory_space<vmem>>, vector<1x256x512xf32>
    %545 = vector.shape_cast %544 : vector<1x256x512xf32> to vector<256x512xf32>
    %cst_157 = arith.constant dense<0.000000e+00> : vector<2x512xf32>
    %546 = tpu.matmul %543, %545, %cst_157 {dimension_numbers = #tpu.dot_dimension_numbers<[1], [0], [0], [1], [0, 0, 1, 1], [], []>} : vector<2x256xf32>, vector<256x512xf32>, vector<2x512xf32> -> vector<2x512xf32>
    %c0_158 = arith.constant 0 : index
    %c0_159 = arith.constant 0 : index
    %c0_160 = arith.constant 0 : index
    %547 = vector.load %arg5[%c0_158, %c0_159, %c0_160] : memref<3x1x512xf32, #tpu.memory_space<vmem>>, vector<1x1x512xf32>
    %548 = vector.shape_cast %547 : vector<1x1x512xf32> to vector<1x512xf32>
    %549 = vector.broadcast %548 : vector<1x512xf32> to vector<2x512xf32>
    %550 = arith.addf %546, %549 : vector<2x512xf32>
    %551 = vector.extract_strided_slice %550 {offsets = [0, 0], sizes = [2, 128], strides = [1, 1]} : vector<2x512xf32> to vector<2x128xf32>
    %552 = arith.negf %551 : vector<2x128xf32>
    %553 = math.exp %552 : vector<2x128xf32>
    %cst_161 = arith.constant 1.000000e+00 : f32
    %554 = vector.broadcast %cst_161 : f32 to vector<2x128xf32>
    %555 = arith.addf %554, %553 : vector<2x128xf32>
    %556 = arith.divf %554, %555 : vector<2x128xf32>
    %557 = vector.extract_strided_slice %550 {offsets = [0, 128], sizes = [2, 128], strides = [1, 1]} : vector<2x512xf32> to vector<2x128xf32>
    %558 = arith.negf %557 : vector<2x128xf32>
    %559 = math.exp %558 : vector<2x128xf32>
    %cst_162 = arith.constant 1.000000e+00 : f32
    %560 = vector.broadcast %cst_162 : f32 to vector<2x128xf32>
    %561 = arith.addf %560, %559 : vector<2x128xf32>
    %562 = arith.divf %560, %561 : vector<2x128xf32>
    %563 = vector.extract_strided_slice %550 {offsets = [0, 256], sizes = [2, 128], strides = [1, 1]} : vector<2x512xf32> to vector<2x128xf32>
    %564 = math.tanh %563 : vector<2x128xf32>
    %565 = vector.extract_strided_slice %550 {offsets = [0, 384], sizes = [2, 128], strides = [1, 1]} : vector<2x512xf32> to vector<2x128xf32>
    %566 = arith.negf %565 : vector<2x128xf32>
    %567 = math.exp %566 : vector<2x128xf32>
    %cst_163 = arith.constant 1.000000e+00 : f32
    %568 = vector.broadcast %cst_163 : f32 to vector<2x128xf32>
    %569 = arith.addf %568, %567 : vector<2x128xf32>
    %570 = arith.divf %568, %569 : vector<2x128xf32>
    %571 = arith.mulf %562, %446 : vector<2x128xf32>
    %572 = arith.mulf %556, %564 : vector<2x128xf32>
    %573 = arith.addf %571, %572 : vector<2x128xf32>
    %574 = math.tanh %573 : vector<2x128xf32>
    %575 = arith.mulf %570, %574 : vector<2x128xf32>
    %576 = tpu.concatenate %575, %481 in 1 : vector<2x128xf32>, vector<2x128xf32> -> vector<2x256xf32>
    %c1_164 = arith.constant 1 : index
    %c0_165 = arith.constant 0 : index
    %c0_166 = arith.constant 0 : index
    %577 = vector.load %arg4[%c1_164, %c0_165, %c0_166] : memref<3x256x512xf32, #tpu.memory_space<vmem>>, vector<1x256x512xf32>
    %578 = vector.shape_cast %577 : vector<1x256x512xf32> to vector<256x512xf32>
    %cst_167 = arith.constant dense<0.000000e+00> : vector<2x512xf32>
    %579 = tpu.matmul %576, %578, %cst_167 {dimension_numbers = #tpu.dot_dimension_numbers<[1], [0], [0], [1], [0, 0, 1, 1], [], []>} : vector<2x256xf32>, vector<256x512xf32>, vector<2x512xf32> -> vector<2x512xf32>
    %c1_168 = arith.constant 1 : index
    %c0_169 = arith.constant 0 : index
    %c0_170 = arith.constant 0 : index
    %580 = vector.load %arg5[%c1_168, %c0_169, %c0_170] : memref<3x1x512xf32, #tpu.memory_space<vmem>>, vector<1x1x512xf32>
    %581 = vector.shape_cast %580 : vector<1x1x512xf32> to vector<1x512xf32>
    %582 = vector.broadcast %581 : vector<1x512xf32> to vector<2x512xf32>
    %583 = arith.addf %579, %582 : vector<2x512xf32>
    %584 = vector.extract_strided_slice %583 {offsets = [0, 0], sizes = [2, 128], strides = [1, 1]} : vector<2x512xf32> to vector<2x128xf32>
    %585 = arith.negf %584 : vector<2x128xf32>
    %586 = math.exp %585 : vector<2x128xf32>
    %cst_171 = arith.constant 1.000000e+00 : f32
    %587 = vector.broadcast %cst_171 : f32 to vector<2x128xf32>
    %588 = arith.addf %587, %586 : vector<2x128xf32>
    %589 = arith.divf %587, %588 : vector<2x128xf32>
    %590 = vector.extract_strided_slice %583 {offsets = [0, 128], sizes = [2, 128], strides = [1, 1]} : vector<2x512xf32> to vector<2x128xf32>
    %591 = arith.negf %590 : vector<2x128xf32>
    %592 = math.exp %591 : vector<2x128xf32>
    %cst_172 = arith.constant 1.000000e+00 : f32
    %593 = vector.broadcast %cst_172 : f32 to vector<2x128xf32>
    %594 = arith.addf %593, %592 : vector<2x128xf32>
    %595 = arith.divf %593, %594 : vector<2x128xf32>
    %596 = vector.extract_strided_slice %583 {offsets = [0, 256], sizes = [2, 128], strides = [1, 1]} : vector<2x512xf32> to vector<2x128xf32>
    %597 = math.tanh %596 : vector<2x128xf32>
    %598 = vector.extract_strided_slice %583 {offsets = [0, 384], sizes = [2, 128], strides = [1, 1]} : vector<2x512xf32> to vector<2x128xf32>
    %599 = arith.negf %598 : vector<2x128xf32>
    %600 = math.exp %599 : vector<2x128xf32>
    %cst_173 = arith.constant 1.000000e+00 : f32
    %601 = vector.broadcast %cst_173 : f32 to vector<2x128xf32>
    %602 = arith.addf %601, %600 : vector<2x128xf32>
    %603 = arith.divf %601, %602 : vector<2x128xf32>
    %604 = arith.mulf %595, %479 : vector<2x128xf32>
    %605 = arith.mulf %589, %597 : vector<2x128xf32>
    %606 = arith.addf %604, %605 : vector<2x128xf32>
    %607 = math.tanh %606 : vector<2x128xf32>
    %608 = arith.mulf %603, %607 : vector<2x128xf32>
    %609 = tpu.concatenate %608, %514 in 1 : vector<2x128xf32>, vector<2x128xf32> -> vector<2x256xf32>
    %c2_174 = arith.constant 2 : index
    %c0_175 = arith.constant 0 : index
    %c0_176 = arith.constant 0 : index
    %610 = vector.load %arg4[%c2_174, %c0_175, %c0_176] : memref<3x256x512xf32, #tpu.memory_space<vmem>>, vector<1x256x512xf32>
    %611 = vector.shape_cast %610 : vector<1x256x512xf32> to vector<256x512xf32>
    %cst_177 = arith.constant dense<0.000000e+00> : vector<2x512xf32>
    %612 = tpu.matmul %609, %611, %cst_177 {dimension_numbers = #tpu.dot_dimension_numbers<[1], [0], [0], [1], [0, 0, 1, 1], [], []>} : vector<2x256xf32>, vector<256x512xf32>, vector<2x512xf32> -> vector<2x512xf32>
    %c2_178 = arith.constant 2 : index
    %c0_179 = arith.constant 0 : index
    %c0_180 = arith.constant 0 : index
    %613 = vector.load %arg5[%c2_178, %c0_179, %c0_180] : memref<3x1x512xf32, #tpu.memory_space<vmem>>, vector<1x1x512xf32>
    %614 = vector.shape_cast %613 : vector<1x1x512xf32> to vector<1x512xf32>
    %615 = vector.broadcast %614 : vector<1x512xf32> to vector<2x512xf32>
    %616 = arith.addf %612, %615 : vector<2x512xf32>
    %617 = vector.extract_strided_slice %616 {offsets = [0, 0], sizes = [2, 128], strides = [1, 1]} : vector<2x512xf32> to vector<2x128xf32>
    %618 = arith.negf %617 : vector<2x128xf32>
    %619 = math.exp %618 : vector<2x128xf32>
    %cst_181 = arith.constant 1.000000e+00 : f32
    %620 = vector.broadcast %cst_181 : f32 to vector<2x128xf32>
    %621 = arith.addf %620, %619 : vector<2x128xf32>
    %622 = arith.divf %620, %621 : vector<2x128xf32>
    %623 = vector.extract_strided_slice %616 {offsets = [0, 128], sizes = [2, 128], strides = [1, 1]} : vector<2x512xf32> to vector<2x128xf32>
    %624 = arith.negf %623 : vector<2x128xf32>
    %625 = math.exp %624 : vector<2x128xf32>
    %cst_182 = arith.constant 1.000000e+00 : f32
    %626 = vector.broadcast %cst_182 : f32 to vector<2x128xf32>
    %627 = arith.addf %626, %625 : vector<2x128xf32>
    %628 = arith.divf %626, %627 : vector<2x128xf32>
    %629 = vector.extract_strided_slice %616 {offsets = [0, 256], sizes = [2, 128], strides = [1, 1]} : vector<2x512xf32> to vector<2x128xf32>
    %630 = math.tanh %629 : vector<2x128xf32>
    %631 = vector.extract_strided_slice %616 {offsets = [0, 384], sizes = [2, 128], strides = [1, 1]} : vector<2x512xf32> to vector<2x128xf32>
    %632 = arith.negf %631 : vector<2x128xf32>
    %633 = math.exp %632 : vector<2x128xf32>
    %cst_183 = arith.constant 1.000000e+00 : f32
    %634 = vector.broadcast %cst_183 : f32 to vector<2x128xf32>
    %635 = arith.addf %634, %633 : vector<2x128xf32>
    %636 = arith.divf %634, %635 : vector<2x128xf32>
    %637 = arith.mulf %628, %512 : vector<2x128xf32>
    %638 = arith.mulf %622, %630 : vector<2x128xf32>
    %639 = arith.addf %637, %638 : vector<2x128xf32>
    %640 = math.tanh %639 : vector<2x128xf32>
    %641 = arith.mulf %636, %640 : vector<2x128xf32>
    %c0_184 = arith.constant 0 : index
    %c0_185 = arith.constant 0 : index
    %642 = vector.load %arg2[%c0_184, %c0_185] : memref<128x512xf32, #tpu.memory_space<vmem>>, vector<128x512xf32>
    %cst_186 = arith.constant dense<0.000000e+00> : vector<2x512xf32>
    %643 = tpu.matmul %542, %642, %cst_186 {dimension_numbers = #tpu.dot_dimension_numbers<[1], [0], [0], [1], [0, 0, 1, 1], [], []>} : vector<2x128xf32>, vector<128x512xf32>, vector<2x512xf32> -> vector<2x512xf32>
    %644 = arith.addf %5, %643 : vector<2x512xf32>
    %645 = vector.extract_strided_slice %644 {offsets = [0, 0], sizes = [2, 128], strides = [1, 1]} : vector<2x512xf32> to vector<2x128xf32>
    %646 = arith.negf %645 : vector<2x128xf32>
    %647 = math.exp %646 : vector<2x128xf32>
    %cst_187 = arith.constant 1.000000e+00 : f32
    %648 = vector.broadcast %cst_187 : f32 to vector<2x128xf32>
    %649 = arith.addf %648, %647 : vector<2x128xf32>
    %650 = arith.divf %648, %649 : vector<2x128xf32>
    %651 = vector.extract_strided_slice %644 {offsets = [0, 128], sizes = [2, 128], strides = [1, 1]} : vector<2x512xf32> to vector<2x128xf32>
    %652 = arith.negf %651 : vector<2x128xf32>
    %653 = math.exp %652 : vector<2x128xf32>
    %cst_188 = arith.constant 1.000000e+00 : f32
    %654 = vector.broadcast %cst_188 : f32 to vector<2x128xf32>
    %655 = arith.addf %654, %653 : vector<2x128xf32>
    %656 = arith.divf %654, %655 : vector<2x128xf32>
    %657 = vector.extract_strided_slice %644 {offsets = [0, 256], sizes = [2, 128], strides = [1, 1]} : vector<2x512xf32> to vector<2x128xf32>
    %658 = math.tanh %657 : vector<2x128xf32>
    %659 = vector.extract_strided_slice %644 {offsets = [0, 384], sizes = [2, 128], strides = [1, 1]} : vector<2x512xf32> to vector<2x128xf32>
    %660 = arith.negf %659 : vector<2x128xf32>
    %661 = math.exp %660 : vector<2x128xf32>
    %cst_189 = arith.constant 1.000000e+00 : f32
    %662 = vector.broadcast %cst_189 : f32 to vector<2x128xf32>
    %663 = arith.addf %662, %661 : vector<2x128xf32>
    %664 = arith.divf %662, %663 : vector<2x128xf32>
    %665 = arith.mulf %656, %540 : vector<2x128xf32>
    %666 = arith.mulf %650, %658 : vector<2x128xf32>
    %667 = arith.addf %665, %666 : vector<2x128xf32>
    %668 = math.tanh %667 : vector<2x128xf32>
    %669 = arith.mulf %664, %668 : vector<2x128xf32>
    %670 = tpu.concatenate %669, %575 in 1 : vector<2x128xf32>, vector<2x128xf32> -> vector<2x256xf32>
    %c0_190 = arith.constant 0 : index
    %c0_191 = arith.constant 0 : index
    %c0_192 = arith.constant 0 : index
    %671 = vector.load %arg4[%c0_190, %c0_191, %c0_192] : memref<3x256x512xf32, #tpu.memory_space<vmem>>, vector<1x256x512xf32>
    %672 = vector.shape_cast %671 : vector<1x256x512xf32> to vector<256x512xf32>
    %cst_193 = arith.constant dense<0.000000e+00> : vector<2x512xf32>
    %673 = tpu.matmul %670, %672, %cst_193 {dimension_numbers = #tpu.dot_dimension_numbers<[1], [0], [0], [1], [0, 0, 1, 1], [], []>} : vector<2x256xf32>, vector<256x512xf32>, vector<2x512xf32> -> vector<2x512xf32>
    %c0_194 = arith.constant 0 : index
    %c0_195 = arith.constant 0 : index
    %c0_196 = arith.constant 0 : index
    %674 = vector.load %arg5[%c0_194, %c0_195, %c0_196] : memref<3x1x512xf32, #tpu.memory_space<vmem>>, vector<1x1x512xf32>
    %675 = vector.shape_cast %674 : vector<1x1x512xf32> to vector<1x512xf32>
    %676 = vector.broadcast %675 : vector<1x512xf32> to vector<2x512xf32>
    %677 = arith.addf %673, %676 : vector<2x512xf32>
    %678 = vector.extract_strided_slice %677 {offsets = [0, 0], sizes = [2, 128], strides = [1, 1]} : vector<2x512xf32> to vector<2x128xf32>
    %679 = arith.negf %678 : vector<2x128xf32>
    %680 = math.exp %679 : vector<2x128xf32>
    %cst_197 = arith.constant 1.000000e+00 : f32
    %681 = vector.broadcast %cst_197 : f32 to vector<2x128xf32>
    %682 = arith.addf %681, %680 : vector<2x128xf32>
    %683 = arith.divf %681, %682 : vector<2x128xf32>
    %684 = vector.extract_strided_slice %677 {offsets = [0, 128], sizes = [2, 128], strides = [1, 1]} : vector<2x512xf32> to vector<2x128xf32>
    %685 = arith.negf %684 : vector<2x128xf32>
    %686 = math.exp %685 : vector<2x128xf32>
    %cst_198 = arith.constant 1.000000e+00 : f32
    %687 = vector.broadcast %cst_198 : f32 to vector<2x128xf32>
    %688 = arith.addf %687, %686 : vector<2x128xf32>
    %689 = arith.divf %687, %688 : vector<2x128xf32>
    %690 = vector.extract_strided_slice %677 {offsets = [0, 256], sizes = [2, 128], strides = [1, 1]} : vector<2x512xf32> to vector<2x128xf32>
    %691 = math.tanh %690 : vector<2x128xf32>
    %692 = vector.extract_strided_slice %677 {offsets = [0, 384], sizes = [2, 128], strides = [1, 1]} : vector<2x512xf32> to vector<2x128xf32>
    %693 = arith.negf %692 : vector<2x128xf32>
    %694 = math.exp %693 : vector<2x128xf32>
    %cst_199 = arith.constant 1.000000e+00 : f32
    %695 = vector.broadcast %cst_199 : f32 to vector<2x128xf32>
    %696 = arith.addf %695, %694 : vector<2x128xf32>
    %697 = arith.divf %695, %696 : vector<2x128xf32>
    %698 = arith.mulf %689, %573 : vector<2x128xf32>
    %699 = arith.mulf %683, %691 : vector<2x128xf32>
    %700 = arith.addf %698, %699 : vector<2x128xf32>
    %701 = math.tanh %700 : vector<2x128xf32>
    %702 = arith.mulf %697, %701 : vector<2x128xf32>
    %703 = tpu.concatenate %702, %608 in 1 : vector<2x128xf32>, vector<2x128xf32> -> vector<2x256xf32>
    %c1_200 = arith.constant 1 : index
    %c0_201 = arith.constant 0 : index
    %c0_202 = arith.constant 0 : index
    %704 = vector.load %arg4[%c1_200, %c0_201, %c0_202] : memref<3x256x512xf32, #tpu.memory_space<vmem>>, vector<1x256x512xf32>
    %705 = vector.shape_cast %704 : vector<1x256x512xf32> to vector<256x512xf32>
    %cst_203 = arith.constant dense<0.000000e+00> : vector<2x512xf32>
    %706 = tpu.matmul %703, %705, %cst_203 {dimension_numbers = #tpu.dot_dimension_numbers<[1], [0], [0], [1], [0, 0, 1, 1], [], []>} : vector<2x256xf32>, vector<256x512xf32>, vector<2x512xf32> -> vector<2x512xf32>
    %c1_204 = arith.constant 1 : index
    %c0_205 = arith.constant 0 : index
    %c0_206 = arith.constant 0 : index
    %707 = vector.load %arg5[%c1_204, %c0_205, %c0_206] : memref<3x1x512xf32, #tpu.memory_space<vmem>>, vector<1x1x512xf32>
    %708 = vector.shape_cast %707 : vector<1x1x512xf32> to vector<1x512xf32>
    %709 = vector.broadcast %708 : vector<1x512xf32> to vector<2x512xf32>
    %710 = arith.addf %706, %709 : vector<2x512xf32>
    %711 = vector.extract_strided_slice %710 {offsets = [0, 0], sizes = [2, 128], strides = [1, 1]} : vector<2x512xf32> to vector<2x128xf32>
    %712 = arith.negf %711 : vector<2x128xf32>
    %713 = math.exp %712 : vector<2x128xf32>
    %cst_207 = arith.constant 1.000000e+00 : f32
    %714 = vector.broadcast %cst_207 : f32 to vector<2x128xf32>
    %715 = arith.addf %714, %713 : vector<2x128xf32>
    %716 = arith.divf %714, %715 : vector<2x128xf32>
    %717 = vector.extract_strided_slice %710 {offsets = [0, 128], sizes = [2, 128], strides = [1, 1]} : vector<2x512xf32> to vector<2x128xf32>
    %718 = arith.negf %717 : vector<2x128xf32>
    %719 = math.exp %718 : vector<2x128xf32>
    %cst_208 = arith.constant 1.000000e+00 : f32
    %720 = vector.broadcast %cst_208 : f32 to vector<2x128xf32>
    %721 = arith.addf %720, %719 : vector<2x128xf32>
    %722 = arith.divf %720, %721 : vector<2x128xf32>
    %723 = vector.extract_strided_slice %710 {offsets = [0, 256], sizes = [2, 128], strides = [1, 1]} : vector<2x512xf32> to vector<2x128xf32>
    %724 = math.tanh %723 : vector<2x128xf32>
    %725 = vector.extract_strided_slice %710 {offsets = [0, 384], sizes = [2, 128], strides = [1, 1]} : vector<2x512xf32> to vector<2x128xf32>
    %726 = arith.negf %725 : vector<2x128xf32>
    %727 = math.exp %726 : vector<2x128xf32>
    %cst_209 = arith.constant 1.000000e+00 : f32
    %728 = vector.broadcast %cst_209 : f32 to vector<2x128xf32>
    %729 = arith.addf %728, %727 : vector<2x128xf32>
    %730 = arith.divf %728, %729 : vector<2x128xf32>
    %731 = arith.mulf %722, %606 : vector<2x128xf32>
    %732 = arith.mulf %716, %724 : vector<2x128xf32>
    %733 = arith.addf %731, %732 : vector<2x128xf32>
    %734 = math.tanh %733 : vector<2x128xf32>
    %735 = arith.mulf %730, %734 : vector<2x128xf32>
    %736 = tpu.concatenate %735, %641 in 1 : vector<2x128xf32>, vector<2x128xf32> -> vector<2x256xf32>
    %c2_210 = arith.constant 2 : index
    %c0_211 = arith.constant 0 : index
    %c0_212 = arith.constant 0 : index
    %737 = vector.load %arg4[%c2_210, %c0_211, %c0_212] : memref<3x256x512xf32, #tpu.memory_space<vmem>>, vector<1x256x512xf32>
    %738 = vector.shape_cast %737 : vector<1x256x512xf32> to vector<256x512xf32>
    %cst_213 = arith.constant dense<0.000000e+00> : vector<2x512xf32>
    %739 = tpu.matmul %736, %738, %cst_213 {dimension_numbers = #tpu.dot_dimension_numbers<[1], [0], [0], [1], [0, 0, 1, 1], [], []>} : vector<2x256xf32>, vector<256x512xf32>, vector<2x512xf32> -> vector<2x512xf32>
    %c2_214 = arith.constant 2 : index
    %c0_215 = arith.constant 0 : index
    %c0_216 = arith.constant 0 : index
    %740 = vector.load %arg5[%c2_214, %c0_215, %c0_216] : memref<3x1x512xf32, #tpu.memory_space<vmem>>, vector<1x1x512xf32>
    %741 = vector.shape_cast %740 : vector<1x1x512xf32> to vector<1x512xf32>
    %742 = vector.broadcast %741 : vector<1x512xf32> to vector<2x512xf32>
    %743 = arith.addf %739, %742 : vector<2x512xf32>
    %744 = vector.extract_strided_slice %743 {offsets = [0, 0], sizes = [2, 128], strides = [1, 1]} : vector<2x512xf32> to vector<2x128xf32>
    %745 = arith.negf %744 : vector<2x128xf32>
    %746 = math.exp %745 : vector<2x128xf32>
    %cst_217 = arith.constant 1.000000e+00 : f32
    %747 = vector.broadcast %cst_217 : f32 to vector<2x128xf32>
    %748 = arith.addf %747, %746 : vector<2x128xf32>
    %749 = arith.divf %747, %748 : vector<2x128xf32>
    %750 = vector.extract_strided_slice %743 {offsets = [0, 128], sizes = [2, 128], strides = [1, 1]} : vector<2x512xf32> to vector<2x128xf32>
    %751 = arith.negf %750 : vector<2x128xf32>
    %752 = math.exp %751 : vector<2x128xf32>
    %cst_218 = arith.constant 1.000000e+00 : f32
    %753 = vector.broadcast %cst_218 : f32 to vector<2x128xf32>
    %754 = arith.addf %753, %752 : vector<2x128xf32>
    %755 = arith.divf %753, %754 : vector<2x128xf32>
    %756 = vector.extract_strided_slice %743 {offsets = [0, 256], sizes = [2, 128], strides = [1, 1]} : vector<2x512xf32> to vector<2x128xf32>
    %757 = math.tanh %756 : vector<2x128xf32>
    %758 = vector.extract_strided_slice %743 {offsets = [0, 384], sizes = [2, 128], strides = [1, 1]} : vector<2x512xf32> to vector<2x128xf32>
    %759 = arith.negf %758 : vector<2x128xf32>
    %760 = math.exp %759 : vector<2x128xf32>
    %cst_219 = arith.constant 1.000000e+00 : f32
    %761 = vector.broadcast %cst_219 : f32 to vector<2x128xf32>
    %762 = arith.addf %761, %760 : vector<2x128xf32>
    %763 = arith.divf %761, %762 : vector<2x128xf32>
    %764 = arith.mulf %755, %639 : vector<2x128xf32>
    %765 = arith.mulf %749, %757 : vector<2x128xf32>
    %766 = arith.addf %764, %765 : vector<2x128xf32>
    %767 = math.tanh %766 : vector<2x128xf32>
    %768 = arith.mulf %763, %767 : vector<2x128xf32>
    %c0_220 = arith.constant 0 : index
    %c0_221 = arith.constant 0 : index
    %769 = vector.load %arg2[%c0_220, %c0_221] : memref<128x512xf32, #tpu.memory_space<vmem>>, vector<128x512xf32>
    %cst_222 = arith.constant dense<0.000000e+00> : vector<2x512xf32>
    %770 = tpu.matmul %669, %769, %cst_222 {dimension_numbers = #tpu.dot_dimension_numbers<[1], [0], [0], [1], [0, 0, 1, 1], [], []>} : vector<2x128xf32>, vector<128x512xf32>, vector<2x512xf32> -> vector<2x512xf32>
    %771 = arith.addf %5, %770 : vector<2x512xf32>
    %772 = vector.extract_strided_slice %771 {offsets = [0, 0], sizes = [2, 128], strides = [1, 1]} : vector<2x512xf32> to vector<2x128xf32>
    %773 = arith.negf %772 : vector<2x128xf32>
    %774 = math.exp %773 : vector<2x128xf32>
    %cst_223 = arith.constant 1.000000e+00 : f32
    %775 = vector.broadcast %cst_223 : f32 to vector<2x128xf32>
    %776 = arith.addf %775, %774 : vector<2x128xf32>
    %777 = arith.divf %775, %776 : vector<2x128xf32>
    %778 = vector.extract_strided_slice %771 {offsets = [0, 128], sizes = [2, 128], strides = [1, 1]} : vector<2x512xf32> to vector<2x128xf32>
    %779 = arith.negf %778 : vector<2x128xf32>
    %780 = math.exp %779 : vector<2x128xf32>
    %cst_224 = arith.constant 1.000000e+00 : f32
    %781 = vector.broadcast %cst_224 : f32 to vector<2x128xf32>
    %782 = arith.addf %781, %780 : vector<2x128xf32>
    %783 = arith.divf %781, %782 : vector<2x128xf32>
    %784 = vector.extract_strided_slice %771 {offsets = [0, 256], sizes = [2, 128], strides = [1, 1]} : vector<2x512xf32> to vector<2x128xf32>
    %785 = math.tanh %784 : vector<2x128xf32>
    %786 = vector.extract_strided_slice %771 {offsets = [0, 384], sizes = [2, 128], strides = [1, 1]} : vector<2x512xf32> to vector<2x128xf32>
    %787 = arith.negf %786 : vector<2x128xf32>
    %788 = math.exp %787 : vector<2x128xf32>
    %cst_225 = arith.constant 1.000000e+00 : f32
    %789 = vector.broadcast %cst_225 : f32 to vector<2x128xf32>
    %790 = arith.addf %789, %788 : vector<2x128xf32>
    %791 = arith.divf %789, %790 : vector<2x128xf32>
    %792 = arith.mulf %783, %667 : vector<2x128xf32>
    %793 = arith.mulf %777, %785 : vector<2x128xf32>
    %794 = arith.addf %792, %793 : vector<2x128xf32>
    %795 = math.tanh %794 : vector<2x128xf32>
    %796 = arith.mulf %791, %795 : vector<2x128xf32>
    %797 = tpu.concatenate %796, %702 in 1 : vector<2x128xf32>, vector<2x128xf32> -> vector<2x256xf32>
    %c0_226 = arith.constant 0 : index
    %c0_227 = arith.constant 0 : index
    %c0_228 = arith.constant 0 : index
    %798 = vector.load %arg4[%c0_226, %c0_227, %c0_228] : memref<3x256x512xf32, #tpu.memory_space<vmem>>, vector<1x256x512xf32>
    %799 = vector.shape_cast %798 : vector<1x256x512xf32> to vector<256x512xf32>
    %cst_229 = arith.constant dense<0.000000e+00> : vector<2x512xf32>
    %800 = tpu.matmul %797, %799, %cst_229 {dimension_numbers = #tpu.dot_dimension_numbers<[1], [0], [0], [1], [0, 0, 1, 1], [], []>} : vector<2x256xf32>, vector<256x512xf32>, vector<2x512xf32> -> vector<2x512xf32>
    %c0_230 = arith.constant 0 : index
    %c0_231 = arith.constant 0 : index
    %c0_232 = arith.constant 0 : index
    %801 = vector.load %arg5[%c0_230, %c0_231, %c0_232] : memref<3x1x512xf32, #tpu.memory_space<vmem>>, vector<1x1x512xf32>
    %802 = vector.shape_cast %801 : vector<1x1x512xf32> to vector<1x512xf32>
    %803 = vector.broadcast %802 : vector<1x512xf32> to vector<2x512xf32>
    %804 = arith.addf %800, %803 : vector<2x512xf32>
    %805 = vector.extract_strided_slice %804 {offsets = [0, 0], sizes = [2, 128], strides = [1, 1]} : vector<2x512xf32> to vector<2x128xf32>
    %806 = arith.negf %805 : vector<2x128xf32>
    %807 = math.exp %806 : vector<2x128xf32>
    %cst_233 = arith.constant 1.000000e+00 : f32
    %808 = vector.broadcast %cst_233 : f32 to vector<2x128xf32>
    %809 = arith.addf %808, %807 : vector<2x128xf32>
    %810 = arith.divf %808, %809 : vector<2x128xf32>
    %811 = vector.extract_strided_slice %804 {offsets = [0, 128], sizes = [2, 128], strides = [1, 1]} : vector<2x512xf32> to vector<2x128xf32>
    %812 = arith.negf %811 : vector<2x128xf32>
    %813 = math.exp %812 : vector<2x128xf32>
    %cst_234 = arith.constant 1.000000e+00 : f32
    %814 = vector.broadcast %cst_234 : f32 to vector<2x128xf32>
    %815 = arith.addf %814, %813 : vector<2x128xf32>
    %816 = arith.divf %814, %815 : vector<2x128xf32>
    %817 = vector.extract_strided_slice %804 {offsets = [0, 256], sizes = [2, 128], strides = [1, 1]} : vector<2x512xf32> to vector<2x128xf32>
    %818 = math.tanh %817 : vector<2x128xf32>
    %819 = vector.extract_strided_slice %804 {offsets = [0, 384], sizes = [2, 128], strides = [1, 1]} : vector<2x512xf32> to vector<2x128xf32>
    %820 = arith.negf %819 : vector<2x128xf32>
    %821 = math.exp %820 : vector<2x128xf32>
    %cst_235 = arith.constant 1.000000e+00 : f32
    %822 = vector.broadcast %cst_235 : f32 to vector<2x128xf32>
    %823 = arith.addf %822, %821 : vector<2x128xf32>
    %824 = arith.divf %822, %823 : vector<2x128xf32>
    %825 = arith.mulf %816, %700 : vector<2x128xf32>
    %826 = arith.mulf %810, %818 : vector<2x128xf32>
    %827 = arith.addf %825, %826 : vector<2x128xf32>
    %828 = math.tanh %827 : vector<2x128xf32>
    %829 = arith.mulf %824, %828 : vector<2x128xf32>
    %830 = tpu.concatenate %829, %735 in 1 : vector<2x128xf32>, vector<2x128xf32> -> vector<2x256xf32>
    %c1_236 = arith.constant 1 : index
    %c0_237 = arith.constant 0 : index
    %c0_238 = arith.constant 0 : index
    %831 = vector.load %arg4[%c1_236, %c0_237, %c0_238] : memref<3x256x512xf32, #tpu.memory_space<vmem>>, vector<1x256x512xf32>
    %832 = vector.shape_cast %831 : vector<1x256x512xf32> to vector<256x512xf32>
    %cst_239 = arith.constant dense<0.000000e+00> : vector<2x512xf32>
    %833 = tpu.matmul %830, %832, %cst_239 {dimension_numbers = #tpu.dot_dimension_numbers<[1], [0], [0], [1], [0, 0, 1, 1], [], []>} : vector<2x256xf32>, vector<256x512xf32>, vector<2x512xf32> -> vector<2x512xf32>
    %c1_240 = arith.constant 1 : index
    %c0_241 = arith.constant 0 : index
    %c0_242 = arith.constant 0 : index
    %834 = vector.load %arg5[%c1_240, %c0_241, %c0_242] : memref<3x1x512xf32, #tpu.memory_space<vmem>>, vector<1x1x512xf32>
    %835 = vector.shape_cast %834 : vector<1x1x512xf32> to vector<1x512xf32>
    %836 = vector.broadcast %835 : vector<1x512xf32> to vector<2x512xf32>
    %837 = arith.addf %833, %836 : vector<2x512xf32>
    %838 = vector.extract_strided_slice %837 {offsets = [0, 0], sizes = [2, 128], strides = [1, 1]} : vector<2x512xf32> to vector<2x128xf32>
    %839 = arith.negf %838 : vector<2x128xf32>
    %840 = math.exp %839 : vector<2x128xf32>
    %cst_243 = arith.constant 1.000000e+00 : f32
    %841 = vector.broadcast %cst_243 : f32 to vector<2x128xf32>
    %842 = arith.addf %841, %840 : vector<2x128xf32>
    %843 = arith.divf %841, %842 : vector<2x128xf32>
    %844 = vector.extract_strided_slice %837 {offsets = [0, 128], sizes = [2, 128], strides = [1, 1]} : vector<2x512xf32> to vector<2x128xf32>
    %845 = arith.negf %844 : vector<2x128xf32>
    %846 = math.exp %845 : vector<2x128xf32>
    %cst_244 = arith.constant 1.000000e+00 : f32
    %847 = vector.broadcast %cst_244 : f32 to vector<2x128xf32>
    %848 = arith.addf %847, %846 : vector<2x128xf32>
    %849 = arith.divf %847, %848 : vector<2x128xf32>
    %850 = vector.extract_strided_slice %837 {offsets = [0, 256], sizes = [2, 128], strides = [1, 1]} : vector<2x512xf32> to vector<2x128xf32>
    %851 = math.tanh %850 : vector<2x128xf32>
    %852 = vector.extract_strided_slice %837 {offsets = [0, 384], sizes = [2, 128], strides = [1, 1]} : vector<2x512xf32> to vector<2x128xf32>
    %853 = arith.negf %852 : vector<2x128xf32>
    %854 = math.exp %853 : vector<2x128xf32>
    %cst_245 = arith.constant 1.000000e+00 : f32
    %855 = vector.broadcast %cst_245 : f32 to vector<2x128xf32>
    %856 = arith.addf %855, %854 : vector<2x128xf32>
    %857 = arith.divf %855, %856 : vector<2x128xf32>
    %858 = arith.mulf %849, %733 : vector<2x128xf32>
    %859 = arith.mulf %843, %851 : vector<2x128xf32>
    %860 = arith.addf %858, %859 : vector<2x128xf32>
    %861 = math.tanh %860 : vector<2x128xf32>
    %862 = arith.mulf %857, %861 : vector<2x128xf32>
    %863 = tpu.concatenate %862, %768 in 1 : vector<2x128xf32>, vector<2x128xf32> -> vector<2x256xf32>
    %c2_246 = arith.constant 2 : index
    %c0_247 = arith.constant 0 : index
    %c0_248 = arith.constant 0 : index
    %864 = vector.load %arg4[%c2_246, %c0_247, %c0_248] : memref<3x256x512xf32, #tpu.memory_space<vmem>>, vector<1x256x512xf32>
    %865 = vector.shape_cast %864 : vector<1x256x512xf32> to vector<256x512xf32>
    %cst_249 = arith.constant dense<0.000000e+00> : vector<2x512xf32>
    %866 = tpu.matmul %863, %865, %cst_249 {dimension_numbers = #tpu.dot_dimension_numbers<[1], [0], [0], [1], [0, 0, 1, 1], [], []>} : vector<2x256xf32>, vector<256x512xf32>, vector<2x512xf32> -> vector<2x512xf32>
    %c2_250 = arith.constant 2 : index
    %c0_251 = arith.constant 0 : index
    %c0_252 = arith.constant 0 : index
    %867 = vector.load %arg5[%c2_250, %c0_251, %c0_252] : memref<3x1x512xf32, #tpu.memory_space<vmem>>, vector<1x1x512xf32>
    %868 = vector.shape_cast %867 : vector<1x1x512xf32> to vector<1x512xf32>
    %869 = vector.broadcast %868 : vector<1x512xf32> to vector<2x512xf32>
    %870 = arith.addf %866, %869 : vector<2x512xf32>
    %871 = vector.extract_strided_slice %870 {offsets = [0, 0], sizes = [2, 128], strides = [1, 1]} : vector<2x512xf32> to vector<2x128xf32>
    %872 = arith.negf %871 : vector<2x128xf32>
    %873 = math.exp %872 : vector<2x128xf32>
    %cst_253 = arith.constant 1.000000e+00 : f32
    %874 = vector.broadcast %cst_253 : f32 to vector<2x128xf32>
    %875 = arith.addf %874, %873 : vector<2x128xf32>
    %876 = arith.divf %874, %875 : vector<2x128xf32>
    %877 = vector.extract_strided_slice %870 {offsets = [0, 128], sizes = [2, 128], strides = [1, 1]} : vector<2x512xf32> to vector<2x128xf32>
    %878 = arith.negf %877 : vector<2x128xf32>
    %879 = math.exp %878 : vector<2x128xf32>
    %cst_254 = arith.constant 1.000000e+00 : f32
    %880 = vector.broadcast %cst_254 : f32 to vector<2x128xf32>
    %881 = arith.addf %880, %879 : vector<2x128xf32>
    %882 = arith.divf %880, %881 : vector<2x128xf32>
    %883 = vector.extract_strided_slice %870 {offsets = [0, 256], sizes = [2, 128], strides = [1, 1]} : vector<2x512xf32> to vector<2x128xf32>
    %884 = math.tanh %883 : vector<2x128xf32>
    %885 = vector.extract_strided_slice %870 {offsets = [0, 384], sizes = [2, 128], strides = [1, 1]} : vector<2x512xf32> to vector<2x128xf32>
    %886 = arith.negf %885 : vector<2x128xf32>
    %887 = math.exp %886 : vector<2x128xf32>
    %cst_255 = arith.constant 1.000000e+00 : f32
    %888 = vector.broadcast %cst_255 : f32 to vector<2x128xf32>
    %889 = arith.addf %888, %887 : vector<2x128xf32>
    %890 = arith.divf %888, %889 : vector<2x128xf32>
    %891 = arith.mulf %882, %766 : vector<2x128xf32>
    %892 = arith.mulf %876, %884 : vector<2x128xf32>
    %893 = arith.addf %891, %892 : vector<2x128xf32>
    %894 = math.tanh %893 : vector<2x128xf32>
    %895 = arith.mulf %890, %894 : vector<2x128xf32>
    %c0_256 = arith.constant 0 : index
    %c0_257 = arith.constant 0 : index
    %896 = vector.load %arg2[%c0_256, %c0_257] : memref<128x512xf32, #tpu.memory_space<vmem>>, vector<128x512xf32>
    %cst_258 = arith.constant dense<0.000000e+00> : vector<2x512xf32>
    %897 = tpu.matmul %796, %896, %cst_258 {dimension_numbers = #tpu.dot_dimension_numbers<[1], [0], [0], [1], [0, 0, 1, 1], [], []>} : vector<2x128xf32>, vector<128x512xf32>, vector<2x512xf32> -> vector<2x512xf32>
    %898 = arith.addf %5, %897 : vector<2x512xf32>
    %899 = vector.extract_strided_slice %898 {offsets = [0, 0], sizes = [2, 128], strides = [1, 1]} : vector<2x512xf32> to vector<2x128xf32>
    %900 = arith.negf %899 : vector<2x128xf32>
    %901 = math.exp %900 : vector<2x128xf32>
    %cst_259 = arith.constant 1.000000e+00 : f32
    %902 = vector.broadcast %cst_259 : f32 to vector<2x128xf32>
    %903 = arith.addf %902, %901 : vector<2x128xf32>
    %904 = arith.divf %902, %903 : vector<2x128xf32>
    %905 = vector.extract_strided_slice %898 {offsets = [0, 128], sizes = [2, 128], strides = [1, 1]} : vector<2x512xf32> to vector<2x128xf32>
    %906 = arith.negf %905 : vector<2x128xf32>
    %907 = math.exp %906 : vector<2x128xf32>
    %cst_260 = arith.constant 1.000000e+00 : f32
    %908 = vector.broadcast %cst_260 : f32 to vector<2x128xf32>
    %909 = arith.addf %908, %907 : vector<2x128xf32>
    %910 = arith.divf %908, %909 : vector<2x128xf32>
    %911 = vector.extract_strided_slice %898 {offsets = [0, 256], sizes = [2, 128], strides = [1, 1]} : vector<2x512xf32> to vector<2x128xf32>
    %912 = math.tanh %911 : vector<2x128xf32>
    %913 = vector.extract_strided_slice %898 {offsets = [0, 384], sizes = [2, 128], strides = [1, 1]} : vector<2x512xf32> to vector<2x128xf32>
    %914 = arith.negf %913 : vector<2x128xf32>
    %915 = math.exp %914 : vector<2x128xf32>
    %cst_261 = arith.constant 1.000000e+00 : f32
    %916 = vector.broadcast %cst_261 : f32 to vector<2x128xf32>
    %917 = arith.addf %916, %915 : vector<2x128xf32>
    %918 = arith.divf %916, %917 : vector<2x128xf32>
    %919 = arith.mulf %910, %794 : vector<2x128xf32>
    %920 = arith.mulf %904, %912 : vector<2x128xf32>
    %921 = arith.addf %919, %920 : vector<2x128xf32>
    %922 = math.tanh %921 : vector<2x128xf32>
    %923 = arith.mulf %918, %922 : vector<2x128xf32>
    %924 = tpu.concatenate %923, %829 in 1 : vector<2x128xf32>, vector<2x128xf32> -> vector<2x256xf32>
    %c0_262 = arith.constant 0 : index
    %c0_263 = arith.constant 0 : index
    %c0_264 = arith.constant 0 : index
    %925 = vector.load %arg4[%c0_262, %c0_263, %c0_264] : memref<3x256x512xf32, #tpu.memory_space<vmem>>, vector<1x256x512xf32>
    %926 = vector.shape_cast %925 : vector<1x256x512xf32> to vector<256x512xf32>
    %cst_265 = arith.constant dense<0.000000e+00> : vector<2x512xf32>
    %927 = tpu.matmul %924, %926, %cst_265 {dimension_numbers = #tpu.dot_dimension_numbers<[1], [0], [0], [1], [0, 0, 1, 1], [], []>} : vector<2x256xf32>, vector<256x512xf32>, vector<2x512xf32> -> vector<2x512xf32>
    %c0_266 = arith.constant 0 : index
    %c0_267 = arith.constant 0 : index
    %c0_268 = arith.constant 0 : index
    %928 = vector.load %arg5[%c0_266, %c0_267, %c0_268] : memref<3x1x512xf32, #tpu.memory_space<vmem>>, vector<1x1x512xf32>
    %929 = vector.shape_cast %928 : vector<1x1x512xf32> to vector<1x512xf32>
    %930 = vector.broadcast %929 : vector<1x512xf32> to vector<2x512xf32>
    %931 = arith.addf %927, %930 : vector<2x512xf32>
    %932 = vector.extract_strided_slice %931 {offsets = [0, 0], sizes = [2, 128], strides = [1, 1]} : vector<2x512xf32> to vector<2x128xf32>
    %933 = arith.negf %932 : vector<2x128xf32>
    %934 = math.exp %933 : vector<2x128xf32>
    %cst_269 = arith.constant 1.000000e+00 : f32
    %935 = vector.broadcast %cst_269 : f32 to vector<2x128xf32>
    %936 = arith.addf %935, %934 : vector<2x128xf32>
    %937 = arith.divf %935, %936 : vector<2x128xf32>
    %938 = vector.extract_strided_slice %931 {offsets = [0, 128], sizes = [2, 128], strides = [1, 1]} : vector<2x512xf32> to vector<2x128xf32>
    %939 = arith.negf %938 : vector<2x128xf32>
    %940 = math.exp %939 : vector<2x128xf32>
    %cst_270 = arith.constant 1.000000e+00 : f32
    %941 = vector.broadcast %cst_270 : f32 to vector<2x128xf32>
    %942 = arith.addf %941, %940 : vector<2x128xf32>
    %943 = arith.divf %941, %942 : vector<2x128xf32>
    %944 = vector.extract_strided_slice %931 {offsets = [0, 256], sizes = [2, 128], strides = [1, 1]} : vector<2x512xf32> to vector<2x128xf32>
    %945 = math.tanh %944 : vector<2x128xf32>
    %946 = vector.extract_strided_slice %931 {offsets = [0, 384], sizes = [2, 128], strides = [1, 1]} : vector<2x512xf32> to vector<2x128xf32>
    %947 = arith.negf %946 : vector<2x128xf32>
    %948 = math.exp %947 : vector<2x128xf32>
    %cst_271 = arith.constant 1.000000e+00 : f32
    %949 = vector.broadcast %cst_271 : f32 to vector<2x128xf32>
    %950 = arith.addf %949, %948 : vector<2x128xf32>
    %951 = arith.divf %949, %950 : vector<2x128xf32>
    %952 = arith.mulf %943, %827 : vector<2x128xf32>
    %953 = arith.mulf %937, %945 : vector<2x128xf32>
    %954 = arith.addf %952, %953 : vector<2x128xf32>
    %955 = math.tanh %954 : vector<2x128xf32>
    %956 = arith.mulf %951, %955 : vector<2x128xf32>
    %957 = tpu.concatenate %956, %862 in 1 : vector<2x128xf32>, vector<2x128xf32> -> vector<2x256xf32>
    %c1_272 = arith.constant 1 : index
    %c0_273 = arith.constant 0 : index
    %c0_274 = arith.constant 0 : index
    %958 = vector.load %arg4[%c1_272, %c0_273, %c0_274] : memref<3x256x512xf32, #tpu.memory_space<vmem>>, vector<1x256x512xf32>
    %959 = vector.shape_cast %958 : vector<1x256x512xf32> to vector<256x512xf32>
    %cst_275 = arith.constant dense<0.000000e+00> : vector<2x512xf32>
    %960 = tpu.matmul %957, %959, %cst_275 {dimension_numbers = #tpu.dot_dimension_numbers<[1], [0], [0], [1], [0, 0, 1, 1], [], []>} : vector<2x256xf32>, vector<256x512xf32>, vector<2x512xf32> -> vector<2x512xf32>
    %c1_276 = arith.constant 1 : index
    %c0_277 = arith.constant 0 : index
    %c0_278 = arith.constant 0 : index
    %961 = vector.load %arg5[%c1_276, %c0_277, %c0_278] : memref<3x1x512xf32, #tpu.memory_space<vmem>>, vector<1x1x512xf32>
    %962 = vector.shape_cast %961 : vector<1x1x512xf32> to vector<1x512xf32>
    %963 = vector.broadcast %962 : vector<1x512xf32> to vector<2x512xf32>
    %964 = arith.addf %960, %963 : vector<2x512xf32>
    %965 = vector.extract_strided_slice %964 {offsets = [0, 0], sizes = [2, 128], strides = [1, 1]} : vector<2x512xf32> to vector<2x128xf32>
    %966 = arith.negf %965 : vector<2x128xf32>
    %967 = math.exp %966 : vector<2x128xf32>
    %cst_279 = arith.constant 1.000000e+00 : f32
    %968 = vector.broadcast %cst_279 : f32 to vector<2x128xf32>
    %969 = arith.addf %968, %967 : vector<2x128xf32>
    %970 = arith.divf %968, %969 : vector<2x128xf32>
    %971 = vector.extract_strided_slice %964 {offsets = [0, 128], sizes = [2, 128], strides = [1, 1]} : vector<2x512xf32> to vector<2x128xf32>
    %972 = arith.negf %971 : vector<2x128xf32>
    %973 = math.exp %972 : vector<2x128xf32>
    %cst_280 = arith.constant 1.000000e+00 : f32
    %974 = vector.broadcast %cst_280 : f32 to vector<2x128xf32>
    %975 = arith.addf %974, %973 : vector<2x128xf32>
    %976 = arith.divf %974, %975 : vector<2x128xf32>
    %977 = vector.extract_strided_slice %964 {offsets = [0, 256], sizes = [2, 128], strides = [1, 1]} : vector<2x512xf32> to vector<2x128xf32>
    %978 = math.tanh %977 : vector<2x128xf32>
    %979 = vector.extract_strided_slice %964 {offsets = [0, 384], sizes = [2, 128], strides = [1, 1]} : vector<2x512xf32> to vector<2x128xf32>
    %980 = arith.negf %979 : vector<2x128xf32>
    %981 = math.exp %980 : vector<2x128xf32>
    %cst_281 = arith.constant 1.000000e+00 : f32
    %982 = vector.broadcast %cst_281 : f32 to vector<2x128xf32>
    %983 = arith.addf %982, %981 : vector<2x128xf32>
    %984 = arith.divf %982, %983 : vector<2x128xf32>
    %985 = arith.mulf %976, %860 : vector<2x128xf32>
    %986 = arith.mulf %970, %978 : vector<2x128xf32>
    %987 = arith.addf %985, %986 : vector<2x128xf32>
    %988 = math.tanh %987 : vector<2x128xf32>
    %989 = arith.mulf %984, %988 : vector<2x128xf32>
    %990 = tpu.concatenate %989, %895 in 1 : vector<2x128xf32>, vector<2x128xf32> -> vector<2x256xf32>
    %c2_282 = arith.constant 2 : index
    %c0_283 = arith.constant 0 : index
    %c0_284 = arith.constant 0 : index
    %991 = vector.load %arg4[%c2_282, %c0_283, %c0_284] : memref<3x256x512xf32, #tpu.memory_space<vmem>>, vector<1x256x512xf32>
    %992 = vector.shape_cast %991 : vector<1x256x512xf32> to vector<256x512xf32>
    %cst_285 = arith.constant dense<0.000000e+00> : vector<2x512xf32>
    %993 = tpu.matmul %990, %992, %cst_285 {dimension_numbers = #tpu.dot_dimension_numbers<[1], [0], [0], [1], [0, 0, 1, 1], [], []>} : vector<2x256xf32>, vector<256x512xf32>, vector<2x512xf32> -> vector<2x512xf32>
    %c2_286 = arith.constant 2 : index
    %c0_287 = arith.constant 0 : index
    %c0_288 = arith.constant 0 : index
    %994 = vector.load %arg5[%c2_286, %c0_287, %c0_288] : memref<3x1x512xf32, #tpu.memory_space<vmem>>, vector<1x1x512xf32>
    %995 = vector.shape_cast %994 : vector<1x1x512xf32> to vector<1x512xf32>
    %996 = vector.broadcast %995 : vector<1x512xf32> to vector<2x512xf32>
    %997 = arith.addf %993, %996 : vector<2x512xf32>
    %998 = vector.extract_strided_slice %997 {offsets = [0, 0], sizes = [2, 128], strides = [1, 1]} : vector<2x512xf32> to vector<2x128xf32>
    %999 = arith.negf %998 : vector<2x128xf32>
    %1000 = math.exp %999 : vector<2x128xf32>
    %cst_289 = arith.constant 1.000000e+00 : f32
    %1001 = vector.broadcast %cst_289 : f32 to vector<2x128xf32>
    %1002 = arith.addf %1001, %1000 : vector<2x128xf32>
    %1003 = arith.divf %1001, %1002 : vector<2x128xf32>
    %1004 = vector.extract_strided_slice %997 {offsets = [0, 128], sizes = [2, 128], strides = [1, 1]} : vector<2x512xf32> to vector<2x128xf32>
    %1005 = arith.negf %1004 : vector<2x128xf32>
    %1006 = math.exp %1005 : vector<2x128xf32>
    %cst_290 = arith.constant 1.000000e+00 : f32
    %1007 = vector.broadcast %cst_290 : f32 to vector<2x128xf32>
    %1008 = arith.addf %1007, %1006 : vector<2x128xf32>
    %1009 = arith.divf %1007, %1008 : vector<2x128xf32>
    %1010 = vector.extract_strided_slice %997 {offsets = [0, 256], sizes = [2, 128], strides = [1, 1]} : vector<2x512xf32> to vector<2x128xf32>
    %1011 = math.tanh %1010 : vector<2x128xf32>
    %1012 = vector.extract_strided_slice %997 {offsets = [0, 384], sizes = [2, 128], strides = [1, 1]} : vector<2x512xf32> to vector<2x128xf32>
    %1013 = arith.negf %1012 : vector<2x128xf32>
    %1014 = math.exp %1013 : vector<2x128xf32>
    %cst_291 = arith.constant 1.000000e+00 : f32
    %1015 = vector.broadcast %cst_291 : f32 to vector<2x128xf32>
    %1016 = arith.addf %1015, %1014 : vector<2x128xf32>
    %1017 = arith.divf %1015, %1016 : vector<2x128xf32>
    %1018 = arith.mulf %1009, %893 : vector<2x128xf32>
    %1019 = arith.mulf %1003, %1011 : vector<2x128xf32>
    %1020 = arith.addf %1018, %1019 : vector<2x128xf32>
    %1021 = math.tanh %1020 : vector<2x128xf32>
    %1022 = arith.mulf %1017, %1021 : vector<2x128xf32>
    %1023 = tpu.concatenate %133, %260, %387, %514, %641, %768, %895, %1022 in 0 : vector<2x128xf32>, vector<2x128xf32>, vector<2x128xf32>, vector<2x128xf32>, vector<2x128xf32>, vector<2x128xf32>, vector<2x128xf32>, vector<2x128xf32> -> vector<16x128xf32>
    %c0_292 = arith.constant 0 : index
    %c0_293 = arith.constant 0 : index
    %1024 = vector.load %arg6[%c0_292, %c0_293] : memref<128x128xf32, #tpu.memory_space<vmem>>, vector<128x128xf32>
    %cst_294 = arith.constant dense<0.000000e+00> : vector<16x128xf32>
    %1025 = tpu.matmul %1023, %1024, %cst_294 {dimension_numbers = #tpu.dot_dimension_numbers<[1], [0], [0], [1], [0, 0, 1, 1], [], []>} : vector<16x128xf32>, vector<128x128xf32>, vector<16x128xf32> -> vector<16x128xf32>
    %c0_295 = arith.constant 0 : index
    %c0_296 = arith.constant 0 : index
    %1026 = vector.load %arg7[%c0_295, %c0_296] : memref<1x128xf32, #tpu.memory_space<vmem>>, vector<1x128xf32>
    %1027 = vector.broadcast %1026 : vector<1x128xf32> to vector<16x128xf32>
    %1028 = arith.addf %1025, %1027 : vector<16x128xf32>
    %c0_297 = arith.constant 0 : index
    %c0_298 = arith.constant 0 : index
    %1029 = vector.load %arg8[%c0_297, %c0_298] : memref<16x128xf32, #tpu.memory_space<vmem>>, vector<16x128xf32>
    tpu.vector_store %arg8[%c0_297, %c0_298], %1028 {strides = array<i32>} : memref<16x128xf32, #tpu.memory_space<vmem>>, vector<16x128xf32>,
    return
  }
}

</mosaic_0001>

<llo_original>
// kernel: decoder_forward.1
$region0: #{decoder_forward.1}
  #allocation0 [shape = 'u32[]', space=smem, size = 0x4, offset = 0x4, fixed_abs, tag = 'smem constant byte address 0x4 - core index']
  #allocation1 [shape = 'u32[144,128]{1,0:T(1,128)}', space=vmem, size = 0x12000, scoped, tag = 'internal scratch']
  %s0 = inlined_call_operand.vmem [shape: f32[2,64], index: 0, kind: input, shape index: {}]
  %s1 = inlined_call_operand.vmem [shape: f32[64,512], index: 1, kind: input, shape index: {}]
  %s2 = inlined_call_operand.vmem [shape: f32[128,512], index: 2, kind: input, shape index: {}]
  %s3 = inlined_call_operand.vmem [shape: f32[1,512], index: 3, kind: input, shape index: {}]
  %s4 = inlined_call_operand.vmem [shape: f32[3,256,512], index: 4, kind: input, shape index: {}]
  %s5 = inlined_call_operand.vmem [shape: f32[3,1,512], index: 5, kind: input, shape index: {}]
  %s6 = inlined_call_operand.vmem [shape: f32[128,128], index: 6, kind: input, shape index: {}]
  %s7 = inlined_call_operand.vmem [shape: f32[1,128], index: 7, kind: input, shape index: {}]
  %s8 = inlined_call_operand.vmem [shape: f32[16,128], index: 8, kind: output, shape index: {}]
  %s9 = sld [smem:[#allocation0]]
  $region42: #{decoder_forward.1} parent=0
    _
  %s11 = ssub.s32 1, %s9
  %s12 = scalar_select 0, %s11, %s9
  // Predicated region
  $region2: #{decoder_forward.1} parent=0 // pred_check
    _
  $region3: #{decoder_forward.1} parent=0 // pred_check_branch
    %14 = sbr.rel (0) target = $region5
  $region4: #{decoder_forward.1} parent=0 // pred_region
    _
  $region5: #{decoder_forward.1} parent=0 // pred_fallthru
    _
  // Predicated region
  $region6: #{decoder_forward.1} parent=0 // pred_check
    _
  $region7: #{decoder_forward.1} parent=0 // pred_check_branch
    %16 = sbr.rel (0) target = $region9
  $region8: #{decoder_forward.1} parent=0 // pred_region
    _
  $region9: #{decoder_forward.1} parent=0 // pred_fallthru
    _
  // Predicated region
  $region10: #{decoder_forward.1} parent=0 // pred_check
    _
  $region11: #{decoder_forward.1} parent=0 // pred_check_branch
    %18 = sbr.rel (0) target = $region13
  $region12: #{decoder_forward.1} parent=0 // pred_region
    _
  $region13: #{decoder_forward.1} parent=0 // pred_fallthru
    _
  // Predicated region
  $region14: #{decoder_forward.1} parent=0 // pred_check
    _
  $region15: #{decoder_forward.1} parent=0 // pred_check_branch
    %20 = sbr.rel (0) target = $region17
  $region16: #{decoder_forward.1} parent=0 // pred_region
    _
  $region17: #{decoder_forward.1} parent=0 // pred_fallthru
    _
  // Predicated region
  $region18: #{decoder_forward.1} parent=0 // pred_check
    _
  $region19: #{decoder_forward.1} parent=0 // pred_check_branch
    %22 = sbr.rel (0) target = $region21
  $region20: #{decoder_forward.1} parent=0 // pred_region
    _
  $region21: #{decoder_forward.1} parent=0 // pred_fallthru
    _
  // Predicated region
  $region22: #{decoder_forward.1} parent=0 // pred_check
    _
  $region23: #{decoder_forward.1} parent=0 // pred_check_branch
    %24 = sbr.rel (0) target = $region25
  $region24: #{decoder_forward.1} parent=0 // pred_region
    _
  $region25: #{decoder_forward.1} parent=0 // pred_fallthru
    _
  // Predicated region
  $region26: #{decoder_forward.1} parent=0 // pred_check
    _
  $region27: #{decoder_forward.1} parent=0 // pred_check_branch
    %26 = sbr.rel (0) target = $region29
  $region28: #{decoder_forward.1} parent=0 // pred_region
    _
  $region29: #{decoder_forward.1} parent=0 // pred_fallthru
    _
  // Predicated region
  $region30: #{decoder_forward.1} parent=0 // pred_check
    _
  $region31: #{decoder_forward.1} parent=0 // pred_check_branch
    %28 = sbr.rel (0) target = $region33
  $region32: #{decoder_forward.1} parent=0 // pred_region
    _
  $region33: #{decoder_forward.1} parent=0 // pred_fallthru
    _
  %v29 = vld [vmem:[%s0] sm:$0x3]
  %v30 = vld [vmem:[%s1] sm:$0xff]
  %v31 = vld [vmem:[%s1 + $0x8] sm:$0xff]
  %v32 = vld [vmem:[%s1 + $0x10] sm:$0xff]
  %v33 = vld [vmem:[%s1 + $0x18] sm:$0xff]
  %v34 = vld [vmem:[%s1 + $0x20] sm:$0xff]
  %v35 = vld [vmem:[%s1 + $0x28] sm:$0xff]
  %v36 = vld [vmem:[%s1 + $0x30] sm:$0xff]
  %v37 = vld [vmem:[%s1 + $0x38] sm:$0xff]
  %v38 = vld [vmem:[%s1 + $0x40] sm:$0xff]
  %v39 = vld [vmem:[%s1 + $0x48] sm:$0xff]
  %v40 = vld [vmem:[%s1 + $0x50] sm:$0xff]
  %v41 = vld [vmem:[%s1 + $0x58] sm:$0xff]
  %v42 = vld [vmem:[%s1 + $0x60] sm:$0xff]
  %v43 = vld [vmem:[%s1 + $0x68] sm:$0xff]
  %v44 = vld [vmem:[%s1 + $0x70] sm:$0xff]
  %v45 = vld [vmem:[%s1 + $0x78] sm:$0xff]
  %v46 = vld [vmem:[%s1 + $0x80] sm:$0xff]
  %v47 = vld [vmem:[%s1 + $0x88] sm:$0xff]
  %v48 = vld [vmem:[%s1 + $0x90] sm:$0xff]
  %v49 = vld [vmem:[%s1 + $0x98] sm:$0xff]
  %v50 = vld [vmem:[%s1 + $0xa0] sm:$0xff]
  %v51 = vld [vmem:[%s1 + $0xa8] sm:$0xff]
  %v52 = vld [vmem:[%s1 + $0xb0] sm:$0xff]
  %v53 = vld [vmem:[%s1 + $0xb8] sm:$0xff]
  %v54 = vld [vmem:[%s1 + $0xc0] sm:$0xff]
  %v55 = vld [vmem:[%s1 + $0xc8] sm:$0xff]
  %v56 = vld [vmem:[%s1 + $0xd0] sm:$0xff]
  %v57 = vld [vmem:[%s1 + $0xd8] sm:$0xff]
  %v58 = vld [vmem:[%s1 + $0xe0] sm:$0xff]
  %v59 = vld [vmem:[%s1 + $0xe8] sm:$0xff]
  %v60 = vld [vmem:[%s1 + $0xf0] sm:$0xff]
  %v61 = vld [vmem:[%s1 + $0xf8] sm:$0xff]
  %v62 = vld [vmem:[%s3] sm:$0xf]
  %v64 = vlaneseq
  %v65 = vshrl.u32 %v64, 7
  %v66 = vsub.s32 0, %v65
  %v67 = vrot.slane %v62, %v66
  %v68 = vlaneseq
  %v69 = vshrl.u32 %v68, 7
  %v70 = vsub.s32 1, %v69
  %v71 = vrot.slane %v62, %v70
  %v72 = vlaneseq
  %v73 = vshrl.u32 %v72, 7
  %v74 = vsub.s32 2, %v73
  %v75 = vrot.slane %v62, %v74
  %v76 = vlaneseq
  %v77 = vshrl.u32 %v76, 7
  %v78 = vsub.s32 3, %v77
  %v79 = vrot.slane %v62, %v78
  %vm84 = vcmask 523264
  %v86 = vsel %vm84, %v29, 0
  %88 = vmatprep.subr.mxu0 0.0
  %89 = vmatpush1.msra.mxu0 0.0
  %90 = vmatprep.subr.mxu0 0.0
  %91 = vmatpush1.msra.mxu0 0.0
  %92 = vmatprep.subr.mxu0 0.0
  %93 = vmatpush1.msra.mxu0 0.0
  %94 = vmatprep.subr.mxu0 0.0
  %95 = vmatpush1.msra.mxu0 0.0
  %96 = vmatprep.subr.mxu0 0.0
  %97 = vmatpush1.msra.mxu0 0.0
  %98 = vmatprep.subr.mxu0 0.0
  %99 = vmatpush1.msra.mxu0 0.0
  %100 = vmatprep.subr.mxu0 0.0
  %101 = vmatpush1.msra.mxu0 0.0
  %102 = vmatprep.subr.mxu0 0.0
  %103 = vmatpush1.msra.mxu0 0.0
  %104 = vmatprep.subr.mxu0 %v59
  %105 = vmatpush1.msra.mxu0 %v58
  %106 = vmatprep.subr.mxu0 %v55
  %107 = vmatpush1.msra.mxu0 %v54
  %108 = vmatprep.subr.mxu0 %v51
  %109 = vmatpush1.msra.mxu0 %v50
  %110 = vmatprep.subr.mxu0 %v47
  %111 = vmatpush1.msra.mxu0 %v46
  %112 = vmatprep.subr.mxu0 %v43
  %113 = vmatpush1.msra.mxu0 %v42
  %114 = vmatprep.subr.mxu0 %v39
  %115 = vmatpush1.msra.mxu0 %v38
  %116 = vmatprep.subr.mxu0 %v35
  %117 = vmatpush1.msra.mxu0 %v34
  %118 = vmatprep.subr.mxu0 %v31
  %119 = vmatpush1.msra.mxu0 %v30
  %120 = vmatprep.subr.mxu0 0.0
  %121 = vmatpush2.msra.mxu0 0.0
  %122 = vmatprep.subr.mxu0 0.0
  %123 = vmatpush2.msra.mxu0 0.0
  %124 = vmatprep.subr.mxu0 0.0
  %125 = vmatpush2.msra.mxu0 0.0
  %126 = vmatprep.subr.mxu0 0.0
  %127 = vmatpush2.msra.mxu0 0.0
  %128 = vmatprep.subr.mxu0 0.0
  %129 = vmatpush2.msra.mxu0 0.0
  %130 = vmatprep.subr.mxu0 0.0
  %131 = vmatpush2.msra.mxu0 0.0
  %132 = vmatprep.subr.mxu0 0.0
  %133 = vmatpush2.msra.mxu0 0.0
  %134 = vmatprep.subr.mxu0 0.0
  %135 = vmatpush2.msra.mxu0 0.0
  %136 = vmatprep.subr.mxu0 0.0
  %137 = vmatpush2.msra.mxu0 0.0
  %138 = vmatprep.subr.mxu0 0.0
  %139 = vmatpush2.msra.mxu0 0.0
  %140 = vmatprep.subr.mxu0 0.0
  %141 = vmatpush2.msra.mxu0 0.0
  %142 = vmatprep.subr.mxu0 0.0
  %143 = vmatpush2.msra.mxu0 0.0
  %144 = vmatprep.subr.mxu0 0.0
  %145 = vmatpush2.msra.mxu0 0.0
  %146 = vmatprep.subr.mxu0 0.0
  %147 = vmatpush2.msra.mxu0 0.0
  %148 = vmatprep.subr.mxu0 0.0
  %149 = vmatpush2.msra.mxu0 0.0
  %150 = vmatprep.subr.mxu0 0.0
  %151 = vmatpush2.msra.mxu0 0.0
  %152 = vmatprep.mubr.f32.mxu0 0.0
  %153 = vmatmul.mubr.f32.gmra.mxu0 %v86
  %v154 = vpop.f32.mrf.mxu0
  %v155 = vadd.f32 %v67, %v154
  %v156 = vpop.f32.mrf.mxu0
  %v157 = vadd.f32 %v71, %v156
  %158 = vdwg.mxu0
  %159 = vmatprep.subr.mxu0 0.0
  %160 = vmatpush1.msra.mxu0 0.0
  %161 = vmatprep.subr.mxu0 0.0
  %162 = vmatpush1.msra.mxu0 0.0
  %163 = vmatprep.subr.mxu0 0.0
  %164 = vmatpush1.msra.mxu0 0.0
  %165 = vmatprep.subr.mxu0 0.0
  %166 = vmatpush1.msra.mxu0 0.0
  %167 = vmatprep.subr.mxu0 0.0
  %168 = vmatpush1.msra.mxu0 0.0
  %169 = vmatprep.subr.mxu0 0.0
  %170 = vmatpush1.msra.mxu0 0.0
  %171 = vmatprep.subr.mxu0 0.0
  %172 = vmatpush1.msra.mxu0 0.0
  %173 = vmatprep.subr.mxu0 0.0
  %174 = vmatpush1.msra.mxu0 0.0
  %175 = vmatprep.subr.mxu0 %v61
  %176 = vmatpush1.msra.mxu0 %v60
  %177 = vmatprep.subr.mxu0 %v57
  %178 = vmatpush1.msra.mxu0 %v56
  %179 = vmatprep.subr.mxu0 %v53
  %180 = vmatpush1.msra.mxu0 %v52
  %181 = vmatprep.subr.mxu0 %v49
  %182 = vmatpush1.msra.mxu0 %v48
  %183 = vmatprep.subr.mxu0 %v45
  %184 = vmatpush1.msra.mxu0 %v44
  %185 = vmatprep.subr.mxu0 %v41
  %186 = vmatpush1.msra.mxu0 %v40
  %187 = vmatprep.subr.mxu0 %v37
  %188 = vmatpush1.msra.mxu0 %v36
  %189 = vmatprep.subr.mxu0 %v33
  %190 = vmatpush1.msra.mxu0 %v32
  %191 = vmatprep.subr.mxu0 0.0
  %192 = vmatpush2.msra.mxu0 0.0
  %193 = vmatprep.subr.mxu0 0.0
  %194 = vmatpush2.msra.mxu0 0.0
  %195 = vmatprep.subr.mxu0 0.0
  %196 = vmatpush2.msra.mxu0 0.0
  %197 = vmatprep.subr.mxu0 0.0
  %198 = vmatpush2.msra.mxu0 0.0
  %199 = vmatprep.subr.mxu0 0.0
  %200 = vmatpush2.msra.mxu0 0.0
  %201 = vmatprep.subr.mxu0 0.0
  %202 = vmatpush2.msra.mxu0 0.0
  %203 = vmatprep.subr.mxu0 0.0
  %204 = vmatpush2.msra.mxu0 0.0
  %205 = vmatprep.subr.mxu0 0.0
  %206 = vmatpush2.msra.mxu0 0.0
  %207 = vmatprep.subr.mxu0 0.0
  %208 = vmatpush2.msra.mxu0 0.0
  %209 = vmatprep.subr.mxu0 0.0
  %210 = vmatpush2.msra.mxu0 0.0
  %211 = vmatprep.subr.mxu0 0.0
  %212 = vmatpush2.msra.mxu0 0.0
  %213 = vmatprep.subr.mxu0 0.0
  %214 = vmatpush2.msra.mxu0 0.0
  %215 = vmatprep.subr.mxu0 0.0
  %216 = vmatpush2.msra.mxu0 0.0
  %217 = vmatprep.subr.mxu0 0.0
  %218 = vmatpush2.msra.mxu0 0.0
  %219 = vmatprep.subr.mxu0 0.0
  %220 = vmatpush2.msra.mxu0 0.0
  %221 = vmatprep.subr.mxu0 0.0
  %222 = vmatpush2.msra.mxu0 0.0
  %223 = vmatprep.mubr.f32.mxu0 0.0
  %224 = vmatmul.mubr.f32.gmra.mxu0 %v86
  %v225 = vpop.f32.mrf.mxu0
  %v226 = vadd.f32 %v75, %v225
  %v227 = vpop.f32.mrf.mxu0
  %v228 = vadd.f32 %v79, %v227
  %229 = vdwg.mxu0
  %v230 = vld [vmem:[%s2] sm:$0xff]
  %v231 = vld [vmem:[%s2 + $0x8] sm:$0xff]
  %v232 = vld [vmem:[%s2 + $0x10] sm:$0xff]
  %v233 = vld [vmem:[%s2 + $0x18] sm:$0xff]
  %v234 = vld [vmem:[%s2 + $0x20] sm:$0xff]
  %v235 = vld [vmem:[%s2 + $0x28] sm:$0xff]
  %v236 = vld [vmem:[%s2 + $0x30] sm:$0xff]
  %v237 = vld [vmem:[%s2 + $0x38] sm:$0xff]
  %v238 = vld [vmem:[%s2 + $0x40] sm:$0xff]
  %v239 = vld [vmem:[%s2 + $0x48] sm:$0xff]
  %v240 = vld [vmem:[%s2 + $0x50] sm:$0xff]
  %v241 = vld [vmem:[%s2 + $0x58] sm:$0xff]
  %v242 = vld [vmem:[%s2 + $0x60] sm:$0xff]
  %v243 = vld [vmem:[%s2 + $0x68] sm:$0xff]
  %v244 = vld [vmem:[%s2 + $0x70] sm:$0xff]
  %v245 = vld [vmem:[%s2 + $0x78] sm:$0xff]
  %v246 = vld [vmem:[%s2 + $0x80] sm:$0xff]
  %v247 = vld [vmem:[%s2 + $0x88] sm:$0xff]
  %v248 = vld [vmem:[%s2 + $0x90] sm:$0xff]
  %v249 = vld [vmem:[%s2 + $0x98] sm:$0xff]
  %v250 = vld [vmem:[%s2 + $0xa0] sm:$0xff]
  %v251 = vld [vmem:[%s2 + $0xa8] sm:$0xff]
  %v252 = vld [vmem:[%s2 + $0xb0] sm:$0xff]
  %v253 = vld [vmem:[%s2 + $0xb8] sm:$0xff]
  %v254 = vld [vmem:[%s2 + $0xc0] sm:$0xff]
  %v255 = vld [vmem:[%s2 + $0xc8] sm:$0xff]
  %v256 = vld [vmem:[%s2 + $0xd0] sm:$0xff]
  %v257 = vld [vmem:[%s2 + $0xd8] sm:$0xff]
  %v258 = vld [vmem:[%s2 + $0xe0] sm:$0xff]
  %v259 = vld [vmem:[%s2 + $0xe8] sm:$0xff]
  %v260 = vld [vmem:[%s2 + $0xf0] sm:$0xff]
  %v261 = vld [vmem:[%s2 + $0xf8] sm:$0xff]
  %v262 = vld [vmem:[%s2 + $0x100] sm:$0xff]
  %v263 = vld [vmem:[%s2 + $0x108] sm:$0xff]
  %v264 = vld [vmem:[%s2 + $0x110] sm:$0xff]
  %v265 = vld [vmem:[%s2 + $0x118] sm:$0xff]
  %v266 = vld [vmem:[%s2 + $0x120] sm:$0xff]
  %v267 = vld [vmem:[%s2 + $0x128] sm:$0xff]
  %v268 = vld [vmem:[%s2 + $0x130] sm:$0xff]
  %v269 = vld [vmem:[%s2 + $0x138] sm:$0xff]
  %v270 = vld [vmem:[%s2 + $0x140] sm:$0xff]
  %v271 = vld [vmem:[%s2 + $0x148] sm:$0xff]
  %v272 = vld [vmem:[%s2 + $0x150] sm:$0xff]
  %v273 = vld [vmem:[%s2 + $0x158] sm:$0xff]
  %v274 = vld [vmem:[%s2 + $0x160] sm:$0xff]
  %v275 = vld [vmem:[%s2 + $0x168] sm:$0xff]
  %v276 = vld [vmem:[%s2 + $0x170] sm:$0xff]
  %v277 = vld [vmem:[%s2 + $0x178] sm:$0xff]
  %v278 = vld [vmem:[%s2 + $0x180] sm:$0xff]
  %v279 = vld [vmem:[%s2 + $0x188] sm:$0xff]
  %v280 = vld [vmem:[%s2 + $0x190] sm:$0xff]
  %v281 = vld [vmem:[%s2 + $0x198] sm:$0xff]
  %v282 = vld [vmem:[%s2 + $0x1a0] sm:$0xff]
  %v283 = vld [vmem:[%s2 + $0x1a8] sm:$0xff]
  %v284 = vld [vmem:[%s2 + $0x1b0] sm:$0xff]
  %v285 = vld [vmem:[%s2 + $0x1b8] sm:$0xff]
  %v286 = vld [vmem:[%s2 + $0x1c0] sm:$0xff]
  %v287 = vld [vmem:[%s2 + $0x1c8] sm:$0xff]
  %v288 = vld [vmem:[%s2 + $0x1d0] sm:$0xff]
  %v289 = vld [vmem:[%s2 + $0x1d8] sm:$0xff]
  %v290 = vld [vmem:[%s2 + $0x1e0] sm:$0xff]
  %v291 = vld [vmem:[%s2 + $0x1e8] sm:$0xff]
  %v292 = vld [vmem:[%s2 + $0x1f0] sm:$0xff]
  %v293 = vld [vmem:[%s2 + $0x1f8] sm:$0xff]
  %294 = vmatprep.subr.mxu0 %v291
  %295 = vmatpush1.msra.mxu0 %v290
  %296 = vmatprep.subr.mxu0 %v287
  %297 = vmatpush1.msra.mxu0 %v286
  %298 = vmatprep.subr.mxu0 %v283
  %299 = vmatpush1.msra.mxu0 %v282
  %300 = vmatprep.subr.mxu0 %v279
  %301 = vmatpush1.msra.mxu0 %v278
  %302 = vmatprep.subr.mxu0 %v275
  %303 = vmatpush1.msra.mxu0 %v274
  %304 = vmatprep.subr.mxu0 %v271
  %305 = vmatpush1.msra.mxu0 %v270
  %306 = vmatprep.subr.mxu0 %v267
  %307 = vmatpush1.msra.mxu0 %v266
  %308 = vmatprep.subr.mxu0 %v263
  %309 = vmatpush1.msra.mxu0 %v262
  %310 = vmatprep.subr.mxu0 %v259
  %311 = vmatpush1.msra.mxu0 %v258
  %312 = vmatprep.subr.mxu0 %v255
  %313 = vmatpush1.msra.mxu0 %v254
  %314 = vmatprep.subr.mxu0 %v251
  %315 = vmatpush1.msra.mxu0 %v250
  %316 = vmatprep.subr.mxu0 %v247
  %317 = vmatpush1.msra.mxu0 %v246
  %318 = vmatprep.subr.mxu0 %v243
  %319 = vmatpush1.msra.mxu0 %v242
  %320 = vmatprep.subr.mxu0 %v239
  %321 = vmatpush1.msra.mxu0 %v238
  %322 = vmatprep.subr.mxu0 %v235
  %323 = vmatpush1.msra.mxu0 %v234
  %324 = vmatprep.subr.mxu0 %v231
  %325 = vmatpush1.msra.mxu0 %v230
  %326 = vmatprep.subr.mxu0 0.0
  %327 = vmatpush2.msra.mxu0 0.0
  %328 = vmatprep.subr.mxu0 0.0
  %329 = vmatpush2.msra.mxu0 0.0
  %330 = vmatprep.subr.mxu0 0.0
  %331 = vmatpush2.msra.mxu0 0.0
  %332 = vmatprep.subr.mxu0 0.0
  %333 = vmatpush2.msra.mxu0 0.0
  %334 = vmatprep.subr.mxu0 0.0
  %335 = vmatpush2.msra.mxu0 0.0
  %336 = vmatprep.subr.mxu0 0.0
  %337 = vmatpush2.msra.mxu0 0.0
  %338 = vmatprep.subr.mxu0 0.0
  %339 = vmatpush2.msra.mxu0 0.0
  %340 = vmatprep.subr.mxu0 0.0
  %341 = vmatpush2.msra.mxu0 0.0
  %342 = vmatprep.subr.mxu0 0.0
  %343 = vmatpush2.msra.mxu0 0.0
  %344 = vmatprep.subr.mxu0 0.0
  %345 = vmatpush2.msra.mxu0 0.0
  %346 = vmatprep.subr.mxu0 0.0
  %347 = vmatpush2.msra.mxu0 0.0
  %348 = vmatprep.subr.mxu0 0.0
  %349 = vmatpush2.msra.mxu0 0.0
  %350 = vmatprep.subr.mxu0 0.0
  %351 = vmatpush2.msra.mxu0 0.0
  %352 = vmatprep.subr.mxu0 0.0
  %353 = vmatpush2.msra.mxu0 0.0
  %354 = vmatprep.subr.mxu0 0.0
  %355 = vmatpush2.msra.mxu0 0.0
  %356 = vmatprep.subr.mxu0 0.0
  %357 = vmatpush2.msra.mxu0 0.0
  %358 = vmatprep.mubr.f32.mxu0 0.0
  %359 = vmatmul.mubr.f32.gmra.mxu0 0.0
  %v360 = vpop.f32.mrf.mxu0
  %v361 = vadd.f32 0.0, %v360
  %v362 = vpop.f32.mrf.mxu0
  %v363 = vadd.f32 0.0, %v362
  %364 = vdwg.mxu0
  %365 = vmatprep.subr.mxu0 %v293
  %366 = vmatpush1.msra.mxu0 %v292
  %367 = vmatprep.subr.mxu0 %v289
  %368 = vmatpush1.msra.mxu0 %v288
  %369 = vmatprep.subr.mxu0 %v285
  %370 = vmatpush1.msra.mxu0 %v284
  %371 = vmatprep.subr.mxu0 %v281
  %372 = vmatpush1.msra.mxu0 %v280
  %373 = vmatprep.subr.mxu0 %v277
  %374 = vmatpush1.msra.mxu0 %v276
  %375 = vmatprep.subr.mxu0 %v273
  %376 = vmatpush1.msra.mxu0 %v272
  %377 = vmatprep.subr.mxu0 %v269
  %378 = vmatpush1.msra.mxu0 %v268
  %379 = vmatprep.subr.mxu0 %v265
  %380 = vmatpush1.msra.mxu0 %v264
  %381 = vmatprep.subr.mxu0 %v261
  %382 = vmatpush1.msra.mxu0 %v260
  %383 = vmatprep.subr.mxu0 %v257
  %384 = vmatpush1.msra.mxu0 %v256
  %385 = vmatprep.subr.mxu0 %v253
  %386 = vmatpush1.msra.mxu0 %v252
  %387 = vmatprep.subr.mxu0 %v249
  %388 = vmatpush1.msra.mxu0 %v248
  %389 = vmatprep.subr.mxu0 %v245
  %390 = vmatpush1.msra.mxu0 %v244
  %391 = vmatprep.subr.mxu0 %v241
  %392 = vmatpush1.msra.mxu0 %v240
  %393 = vmatprep.subr.mxu0 %v237
  %394 = vmatpush1.msra.mxu0 %v236
  %395 = vmatprep.subr.mxu0 %v233
  %396 = vmatpush1.msra.mxu0 %v232
  %397 = vmatprep.subr.mxu0 0.0
  %398 = vmatpush2.msra.mxu0 0.0
  %399 = vmatprep.subr.mxu0 0.0
  %400 = vmatpush2.msra.mxu0 0.0
  %401 = vmatprep.subr.mxu0 0.0
  %402 = vmatpush2.msra.mxu0 0.0
  %403 = vmatprep.subr.mxu0 0.0
  %404 = vmatpush2.msra.mxu0 0.0
  %405 = vmatprep.subr.mxu0 0.0
  %406 = vmatpush2.msra.mxu0 0.0
  %407 = vmatprep.subr.mxu0 0.0
  %408 = vmatpush2.msra.mxu0 0.0
  %409 = vmatprep.subr.mxu0 0.0
  %410 = vmatpush2.msra.mxu0 0.0
  %411 = vmatprep.subr.mxu0 0.0
  %412 = vmatpush2.msra.mxu0 0.0
  %413 = vmatprep.subr.mxu0 0.0
  %414 = vmatpush2.msra.mxu0 0.0
  %415 = vmatprep.subr.mxu0 0.0
  %416 = vmatpush2.msra.mxu0 0.0
  %417 = vmatprep.subr.mxu0 0.0
  %418 = vmatpush2.msra.mxu0 0.0
  %419 = vmatprep.subr.mxu0 0.0
  %420 = vmatpush2.msra.mxu0 0.0
  %421 = vmatprep.subr.mxu0 0.0
  %422 = vmatpush2.msra.mxu0 0.0
  %423 = vmatprep.subr.mxu0 0.0
  %424 = vmatpush2.msra.mxu0 0.0
  %425 = vmatprep.subr.mxu0 0.0
  %426 = vmatpush2.msra.mxu0 0.0
  %427 = vmatprep.subr.mxu0 0.0
  %428 = vmatpush2.msra.mxu0 0.0
  %429 = vmatprep.mubr.f32.mxu0 0.0
  %430 = vmatmul.mubr.f32.gmra.mxu0 0.0
  %v431 = vpop.f32.mrf.mxu0
  %v432 = vadd.f32 0.0, %v431
  %v433 = vpop.f32.mrf.mxu0
  %v434 = vadd.f32 0.0, %v433
  %435 = vdwg.mxu0
  %v436 = vadd.f32 %v155, %v361
  %v437 = vadd.f32 %v157, %v363
  %v438 = vadd.f32 %v226, %v432
  %v439 = vadd.f32 %v228, %v434
  %v440 = vxor.u32 %v436, 2147483648
  %v441 = vmul.f32 %v440, 1.442695
  %v442 = vpow.pop %v441
  %v443 = vadd.f32 %v442, 1.0
  %v444 = vrcp.pop %v443
  %v445 = vmul.f32 1.0, %v444
  %v446 = vxor.u32 %v437, 2147483648
  %v447 = vmul.f32 %v446, 1.442695
  %v448 = vpow.pop %v447
  %v449 = vadd.f32 %v448, 1.0
  %v450 = vrcp.pop %v449
  %v451 = vmul.f32 1.0, %v450
  %v452 = vtanh.pop %v438
  %v453 = vxor.u32 %v439, 2147483648
  %v454 = vmul.f32 %v453, 1.442695
  %v455 = vpow.pop %v454
  %v456 = vadd.f32 %v455, 1.0
  %v457 = vrcp.pop %v456
  %v458 = vmul.f32 1.0, %v457
  %v459 = vmul.f32 %v451, 0.0
  %v460 = vmul.f32 %v445, %v452
  %v461 = vadd.f32 %v459, %v460
  %v462 = vtanh.pop %v461
  %v463 = vmul.f32 %v458, %v462
  %v464 = vld [vmem:[%s4] sm:$0xff]
  %v465 = vld [vmem:[%s4 + $0x8] sm:$0xff]
  %v466 = vld [vmem:[%s4 + $0x10] sm:$0xff]
  %v467 = vld [vmem:[%s4 + $0x18] sm:$0xff]
  %v468 = vld [vmem:[%s4 + $0x20] sm:$0xff]
  %v469 = vld [vmem:[%s4 + $0x28] sm:$0xff]
  %v470 = vld [vmem:[%s4 + $0x30] sm:$0xff]
  %v471 = vld [vmem:[%s4 + $0x38] sm:$0xff]
  %v472 = vld [vmem:[%s4 + $0x40] sm:$0xff]
  %v473 = vld [vmem:[%s4 + $0x48] sm:$0xff]
  %v474 = vld [vmem:[%s4 + $0x50] sm:$0xff]
  %v475 = vld [vmem:[%s4 + $0x58] sm:$0xff]
  %v476 = vld [vmem:[%s4 + $0x60] sm:$0xff]
  %v477 = vld [vmem:[%s4 + $0x68] sm:$0xff]
  %v478 = vld [vmem:[%s4 + $0x70] sm:$0xff]
  %v479 = vld [vmem:[%s4 + $0x78] sm:$0xff]
  %v480 = vld [vmem:[%s4 + $0x80] sm:$0xff]
  %v481 = vld [vmem:[%s4 + $0x88] sm:$0xff]
  %v482 = vld [vmem:[%s4 + $0x90] sm:$0xff]
  %v483 = vld [vmem:[%s4 + $0x98] sm:$0xff]
  %v484 = vld [vmem:[%s4 + $0xa0] sm:$0xff]
  %v485 = vld [vmem:[%s4 + $0xa8] sm:$0xff]
  %v486 = vld [vmem:[%s4 + $0xb0] sm:$0xff]
  %v487 = vld [vmem:[%s4 + $0xb8] sm:$0xff]
  %v488 = vld [vmem:[%s4 + $0xc0] sm:$0xff]
  %v489 = vld [vmem:[%s4 + $0xc8] sm:$0xff]
  %v490 = vld [vmem:[%s4 + $0xd0] sm:$0xff]
  %v491 = vld [vmem:[%s4 + $0xd8] sm:$0xff]
  %v492 = vld [vmem:[%s4 + $0xe0] sm:$0xff]
  %v493 = vld [vmem:[%s4 + $0xe8] sm:$0xff]
  %v494 = vld [vmem:[%s4 + $0xf0] sm:$0xff]
  %v495 = vld [vmem:[%s4 + $0xf8] sm:$0xff]
  %v496 = vld [vmem:[%s4 + $0x100] sm:$0xff]
  %v497 = vld [vmem:[%s4 + $0x108] sm:$0xff]
  %v498 = vld [vmem:[%s4 + $0x110] sm:$0xff]
  %v499 = vld [vmem:[%s4 + $0x118] sm:$0xff]
  %v500 = vld [vmem:[%s4 + $0x120] sm:$0xff]
  %v501 = vld [vmem:[%s4 + $0x128] sm:$0xff]
  %v502 = vld [vmem:[%s4 + $0x130] sm:$0xff]
  %v503 = vld [vmem:[%s4 + $0x138] sm:$0xff]
  %v504 = vld [vmem:[%s4 + $0x140] sm:$0xff]
  %v505 = vld [vmem:[%s4 + $0x148] sm:$0xff]
  %v506 = vld [vmem:[%s4 + $0x150] sm:$0xff]
  %v507 = vld [vmem:[%s4 + $0x158] sm:$0xff]
  %v508 = vld [vmem:[%s4 + $0x160] sm:$0xff]
  %v509 = vld [vmem:[%s4 + $0x168] sm:$0xff]
  %v510 = vld [vmem:[%s4 + $0x170] sm:$0xff]
  %v511 = vld [vmem:[%s4 + $0x178] sm:$0xff]
  %v512 = vld [vmem:[%s4 + $0x180] sm:$0xff]
  %v513 = vld [vmem:[%s4 + $0x188] sm:$0xff]
  %v514 = vld [vmem:[%s4 + $0x190] sm:$0xff]
  %v515 = vld [vmem:[%s4 + $0x198] sm:$0xff]
  %v516 = vld [vmem:[%s4 + $0x1a0] sm:$0xff]
  %v517 = vld [vmem:[%s4 + $0x1a8] sm:$0xff]
  %v518 = vld [vmem:[%s4 + $0x1b0] sm:$0xff]
  %v519 = vld [vmem:[%s4 + $0x1b8] sm:$0xff]
  %v520 = vld [vmem:[%s4 + $0x1c0] sm:$0xff]
  %v521 = vld [vmem:[%s4 + $0x1c8] sm:$0xff]
  %v522 = vld [vmem:[%s4 + $0x1d0] sm:$0xff]
  %v523 = vld [vmem:[%s4 + $0x1d8] sm:$0xff]
  %v524 = vld [vmem:[%s4 + $0x1e0] sm:$0xff]
  %v525 = vld [vmem:[%s4 + $0x1e8] sm:$0xff]
  %v526 = vld [vmem:[%s4 + $0x1f0] sm:$0xff]
  %v527 = vld [vmem:[%s4 + $0x1f8] sm:$0xff]
  %v528 = vld [vmem:[%s4 + $0x200] sm:$0xff]
  %v529 = vld [vmem:[%s4 + $0x208] sm:$0xff]
  %v530 = vld [vmem:[%s4 + $0x210] sm:$0xff]
  %v531 = vld [vmem:[%s4 + $0x218] sm:$0xff]
  %v532 = vld [vmem:[%s4 + $0x220] sm:$0xff]
  %v533 = vld [vmem:[%s4 + $0x228] sm:$0xff]
  %v534 = vld [vmem:[%s4 + $0x230] sm:$0xff]
  %v535 = vld [vmem:[%s4 + $0x238] sm:$0xff]
  %v536 = vld [vmem:[%s4 + $0x240] sm:$0xff]
  %v537 = vld [vmem:[%s4 + $0x248] sm:$0xff]
  %v538 = vld [vmem:[%s4 + $0x250] sm:$0xff]
  %v539 = vld [vmem:[%s4 + $0x258] sm:$0xff]
  %v540 = vld [vmem:[%s4 + $0x260] sm:$0xff]
  %v541 = vld [vmem:[%s4 + $0x268] sm:$0xff]
  %v542 = vld [vmem:[%s4 + $0x270] sm:$0xff]
  %v543 = vld [vmem:[%s4 + $0x278] sm:$0xff]
  %v544 = vld [vmem:[%s4 + $0x280] sm:$0xff]
  %v545 = vld [vmem:[%s4 + $0x288] sm:$0xff]
  %v546 = vld [vmem:[%s4 + $0x290] sm:$0xff]
  %v547 = vld [vmem:[%s4 + $0x298] sm:$0xff]
  %v548 = vld [vmem:[%s4 + $0x2a0] sm:$0xff]
  %v549 = vld [vmem:[%s4 + $0x2a8] sm:$0xff]
  %v550 = vld [vmem:[%s4 + $0x2b0] sm:$0xff]
  %v551 = vld [vmem:[%s4 + $0x2b8] sm:$0xff]
  %v552 = vld [vmem:[%s4 + $0x2c0] sm:$0xff]
  %v553 = vld [vmem:[%s4 + $0x2c8] sm:$0xff]
  %v554 = vld [vmem:[%s4 + $0x2d0] sm:$0xff]
  %v555 = vld [vmem:[%s4 + $0x2d8] sm:$0xff]
  %v556 = vld [vmem:[%s4 + $0x2e0] sm:$0xff]
  %v557 = vld [vmem:[%s4 + $0x2e8] sm:$0xff]
  %v558 = vld [vmem:[%s4 + $0x2f0] sm:$0xff]
  %v559 = vld [vmem:[%s4 + $0x2f8] sm:$0xff]
  %v560 = vld [vmem:[%s4 + $0x300] sm:$0xff]
  %v561 = vld [vmem:[%s4 + $0x308] sm:$0xff]
  %v562 = vld [vmem:[%s4 + $0x310] sm:$0xff]
  %v563 = vld [vmem:[%s4 + $0x318] sm:$0xff]
  %v564 = vld [vmem:[%s4 + $0x320] sm:$0xff]
  %v565 = vld [vmem:[%s4 + $0x328] sm:$0xff]
  %v566 = vld [vmem:[%s4 + $0x330] sm:$0xff]
  %v567 = vld [vmem:[%s4 + $0x338] sm:$0xff]
  %v568 = vld [vmem:[%s4 + $0x340] sm:$0xff]
  %v569 = vld [vmem:[%s4 + $0x348] sm:$0xff]
  %v570 = vld [vmem:[%s4 + $0x350] sm:$0xff]
  %v571 = vld [vmem:[%s4 + $0x358] sm:$0xff]
  %v572 = vld [vmem:[%s4 + $0x360] sm:$0xff]
  %v573 = vld [vmem:[%s4 + $0x368] sm:$0xff]
  %v574 = vld [vmem:[%s4 + $0x370] sm:$0xff]
  %v575 = vld [vmem:[%s4 + $0x378] sm:$0xff]
  %v576 = vld [vmem:[%s4 + $0x380] sm:$0xff]
  %v577 = vld [vmem:[%s4 + $0x388] sm:$0xff]
  %v578 = vld [vmem:[%s4 + $0x390] sm:$0xff]
  %v579 = vld [vmem:[%s4 + $0x398] sm:$0xff]
  %v580 = vld [vmem:[%s4 + $0x3a0] sm:$0xff]
  %v581 = vld [vmem:[%s4 + $0x3a8] sm:$0xff]
  %v582 = vld [vmem:[%s4 + $0x3b0] sm:$0xff]
  %v583 = vld [vmem:[%s4 + $0x3b8] sm:$0xff]
  %v584 = vld [vmem:[%s4 + $0x3c0] sm:$0xff]
  %v585 = vld [vmem:[%s4 + $0x3c8] sm:$0xff]
  %v586 = vld [vmem:[%s4 + $0x3d0] sm:$0xff]
  %v587 = vld [vmem:[%s4 + $0x3d8] sm:$0xff]
  %v588 = vld [vmem:[%s4 + $0x3e0] sm:$0xff]
  %v589 = vld [vmem:[%s4 + $0x3e8] sm:$0xff]
  %v590 = vld [vmem:[%s4 + $0x3f0] sm:$0xff]
  %v591 = vld [vmem:[%s4 + $0x3f8] sm:$0xff]
  %v592 = vld [vmem:[%s5] sm:$0xf]
  %v594 = vlaneseq
  %v595 = vshrl.u32 %v594, 7
  %v596 = vsub.s32 0, %v595
  %v597 = vrot.slane %v592, %v596
  %v598 = vlaneseq
  %v599 = vshrl.u32 %v598, 7
  %v600 = vsub.s32 1, %v599
  %v601 = vrot.slane %v592, %v600
  %v602 = vlaneseq
  %v603 = vshrl.u32 %v602, 7
  %v604 = vsub.s32 2, %v603
  %v605 = vrot.slane %v592, %v604
  %v606 = vlaneseq
  %v607 = vshrl.u32 %v606, 7
  %v608 = vsub.s32 3, %v607
  %v609 = vrot.slane %v592, %v608
  %614 = vmatprep.subr.mxu0 %v525
  %615 = vmatpush1.msra.mxu0 %v524
  %616 = vmatprep.subr.mxu0 %v521
  %617 = vmatpush1.msra.mxu0 %v520
  %618 = vmatprep.subr.mxu0 %v517
  %619 = vmatpush1.msra.mxu0 %v516
  %620 = vmatprep.subr.mxu0 %v513
  %621 = vmatpush1.msra.mxu0 %v512
  %622 = vmatprep.subr.mxu0 %v509
  %623 = vmatpush1.msra.mxu0 %v508
  %624 = vmatprep.subr.mxu0 %v505
  %625 = vmatpush1.msra.mxu0 %v504
  %626 = vmatprep.subr.mxu0 %v501
  %627 = vmatpush1.msra.mxu0 %v500
  %628 = vmatprep.subr.mxu0 %v497
  %629 = vmatpush1.msra.mxu0 %v496
  %630 = vmatprep.subr.mxu0 %v493
  %631 = vmatpush1.msra.mxu0 %v492
  %632 = vmatprep.subr.mxu0 %v489
  %633 = vmatpush1.msra.mxu0 %v488
  %634 = vmatprep.subr.mxu0 %v485
  %635 = vmatpush1.msra.mxu0 %v484
  %636 = vmatprep.subr.mxu0 %v481
  %637 = vmatpush1.msra.mxu0 %v480
  %638 = vmatprep.subr.mxu0 %v477
  %639 = vmatpush1.msra.mxu0 %v476
  %640 = vmatprep.subr.mxu0 %v473
  %641 = vmatpush1.msra.mxu0 %v472
  %642 = vmatprep.subr.mxu0 %v469
  %643 = vmatpush1.msra.mxu0 %v468
  %644 = vmatprep.subr.mxu0 %v465
  %645 = vmatpush1.msra.mxu0 %v464
  %646 = vmatprep.subr.mxu0 %v589
  %647 = vmatpush2.msra.mxu0 %v588
  %648 = vmatprep.subr.mxu0 %v585
  %649 = vmatpush2.msra.mxu0 %v584
  %650 = vmatprep.subr.mxu0 %v581
  %651 = vmatpush2.msra.mxu0 %v580
  %652 = vmatprep.subr.mxu0 %v577
  %653 = vmatpush2.msra.mxu0 %v576
  %654 = vmatprep.subr.mxu0 %v573
  %655 = vmatpush2.msra.mxu0 %v572
  %656 = vmatprep.subr.mxu0 %v569
  %657 = vmatpush2.msra.mxu0 %v568
  %658 = vmatprep.subr.mxu0 %v565
  %659 = vmatpush2.msra.mxu0 %v564
  %660 = vmatprep.subr.mxu0 %v561
  %661 = vmatpush2.msra.mxu0 %v560
  %662 = vmatprep.subr.mxu0 %v557
  %663 = vmatpush2.msra.mxu0 %v556
  %664 = vmatprep.subr.mxu0 %v553
  %665 = vmatpush2.msra.mxu0 %v552
  %666 = vmatprep.subr.mxu0 %v549
  %667 = vmatpush2.msra.mxu0 %v548
  %668 = vmatprep.subr.mxu0 %v545
  %669 = vmatpush2.msra.mxu0 %v544
  %670 = vmatprep.subr.mxu0 %v541
  %671 = vmatpush2.msra.mxu0 %v540
  %672 = vmatprep.subr.mxu0 %v537
  %673 = vmatpush2.msra.mxu0 %v536
  %674 = vmatprep.subr.mxu0 %v533
  %675 = vmatpush2.msra.mxu0 %v532
  %676 = vmatprep.subr.mxu0 %v529
  %677 = vmatpush2.msra.mxu0 %v528
  %678 = vmatprep.mubr.f32.mxu0 0.0
  %679 = vmatmul.mubr.f32.gmra.mxu0 %v463
  %v680 = vpop.f32.mrf.mxu0
  %v681 = vadd.f32 %v597, %v680
  %v682 = vpop.f32.mrf.mxu0
  %v683 = vadd.f32 %v601, %v682
  %684 = vdwg.mxu0
  %685 = vmatprep.subr.mxu0 %v527
  %686 = vmatpush1.msra.mxu0 %v526
  %687 = vmatprep.subr.mxu0 %v523
  %688 = vmatpush1.msra.mxu0 %v522
  %689 = vmatprep.subr.mxu0 %v519
  %690 = vmatpush1.msra.mxu0 %v518
  %691 = vmatprep.subr.mxu0 %v515
  %692 = vmatpush1.msra.mxu0 %v514
  %693 = vmatprep.subr.mxu0 %v511
  %694 = vmatpush1.msra.mxu0 %v510
  %695 = vmatprep.subr.mxu0 %v507
  %696 = vmatpush1.msra.mxu0 %v506
  %697 = vmatprep.subr.mxu0 %v503
  %698 = vmatpush1.msra.mxu0 %v502
  %699 = vmatprep.subr.mxu0 %v499
  %700 = vmatpush1.msra.mxu0 %v498
  %701 = vmatprep.subr.mxu0 %v495
  %702 = vmatpush1.msra.mxu0 %v494
  %703 = vmatprep.subr.mxu0 %v491
  %704 = vmatpush1.msra.mxu0 %v490
  %705 = vmatprep.subr.mxu0 %v487
  %706 = vmatpush1.msra.mxu0 %v486
  %707 = vmatprep.subr.mxu0 %v483
  %708 = vmatpush1.msra.mxu0 %v482
  %709 = vmatprep.subr.mxu0 %v479
  %710 = vmatpush1.msra.mxu0 %v478
  %711 = vmatprep.subr.mxu0 %v475
  %712 = vmatpush1.msra.mxu0 %v474
  %713 = vmatprep.subr.mxu0 %v471
  %714 = vmatpush1.msra.mxu0 %v470
  %715 = vmatprep.subr.mxu0 %v467
  %716 = vmatpush1.msra.mxu0 %v466
  %717 = vmatprep.subr.mxu0 %v591
  %718 = vmatpush2.msra.mxu0 %v590
  %719 = vmatprep.subr.mxu0 %v587
  %720 = vmatpush2.msra.mxu0 %v586
  %721 = vmatprep.subr.mxu0 %v583
  %722 = vmatpush2.msra.mxu0 %v582
  %723 = vmatprep.subr.mxu0 %v579
  %724 = vmatpush2.msra.mxu0 %v578
  %725 = vmatprep.subr.mxu0 %v575
  %726 = vmatpush2.msra.mxu0 %v574
  %727 = vmatprep.subr.mxu0 %v571
  %728 = vmatpush2.msra.mxu0 %v570
  %729 = vmatprep.subr.mxu0 %v567
  %730 = vmatpush2.msra.mxu0 %v566
  %731 = vmatprep.subr.mxu0 %v563
  %732 = vmatpush2.msra.mxu0 %v562
  %733 = vmatprep.subr.mxu0 %v559
  %734 = vmatpush2.msra.mxu0 %v558
  %735 = vmatprep.subr.mxu0 %v555
  %736 = vmatpush2.msra.mxu0 %v554
  %737 = vmatprep.subr.mxu0 %v551
  %738 = vmatpush2.msra.mxu0 %v550
  %739 = vmatprep.subr.mxu0 %v547
  %740 = vmatpush2.msra.mxu0 %v546
  %741 = vmatprep.subr.mxu0 %v543
  %742 = vmatpush2.msra.mxu0 %v542
  %743 = vmatprep.subr.mxu0 %v539
  %744 = vmatpush2.msra.mxu0 %v538
  %745 = vmatprep.subr.mxu0 %v535
  %746 = vmatpush2.msra.mxu0 %v534
  %747 = vmatprep.subr.mxu0 %v531
  %748 = vmatpush2.msra.mxu0 %v530
  %749 = vmatprep.mubr.f32.mxu0 0.0
  %750 = vmatmul.mubr.f32.gmra.mxu0 %v463
  %v751 = vpop.f32.mrf.mxu0
  %v752 = vadd.f32 %v605, %v751
  %v753 = vpop.f32.mrf.mxu0
  %v754 = vadd.f32 %v609, %v753
  %755 = vdwg.mxu0
  %v756 = vxor.u32 %v681, 2147483648
  %v757 = vmul.f32 %v756, 1.442695
  %v758 = vpow.pop %v757
  %v759 = vadd.f32 %v758, 1.0
  %v760 = vrcp.pop %v759
  %v761 = vmul.f32 1.0, %v760
  %v762 = vxor.u32 %v683, 2147483648
  %v763 = vmul.f32 %v762, 1.442695
  %v764 = vpow.pop %v763
  %v765 = vadd.f32 %v764, 1.0
  %v766 = vrcp.pop %v765
  %v767 = vmul.f32 1.0, %v766
  %v768 = vtanh.pop %v752
  %v769 = vxor.u32 %v754, 2147483648
  %v770 = vmul.f32 %v769, 1.442695
  %v771 = vpow.pop %v770
  %v772 = vadd.f32 %v771, 1.0
  %v773 = vrcp.pop %v772
  %v774 = vmul.f32 1.0, %v773
  %v775 = vmul.f32 %v767, 0.0
  %v776 = vmul.f32 %v761, %v768
  %v777 = vadd.f32 %v775, %v776
  %v778 = vtanh.pop %v777
  %v779 = vmul.f32 %v774, %v778
  %s780 = scalar_lea.vmem %s4, 1024
  %v781 = vld [vmem:[%s780] sm:$0xff]
  %v782 = vld [vmem:[%s780 + $0x8] sm:$0xff]
  %v783 = vld [vmem:[%s780 + $0x10] sm:$0xff]
  %v784 = vld [vmem:[%s780 + $0x18] sm:$0xff]
  %v785 = vld [vmem:[%s780 + $0x20] sm:$0xff]
  %v786 = vld [vmem:[%s780 + $0x28] sm:$0xff]
  %v787 = vld [vmem:[%s780 + $0x30] sm:$0xff]
  %v788 = vld [vmem:[%s780 + $0x38] sm:$0xff]
  %v789 = vld [vmem:[%s780 + $0x40] sm:$0xff]
  %v790 = vld [vmem:[%s780 + $0x48] sm:$0xff]
  %v791 = vld [vmem:[%s780 + $0x50] sm:$0xff]
  %v792 = vld [vmem:[%s780 + $0x58] sm:$0xff]
  %v793 = vld [vmem:[%s780 + $0x60] sm:$0xff]
  %v794 = vld [vmem:[%s780 + $0x68] sm:$0xff]
  %v795 = vld [vmem:[%s780 + $0x70] sm:$0xff]
  %v796 = vld [vmem:[%s780 + $0x78] sm:$0xff]
  %v797 = vld [vmem:[%s780 + $0x80] sm:$0xff]
  %v798 = vld [vmem:[%s780 + $0x88] sm:$0xff]
  %v799 = vld [vmem:[%s780 + $0x90] sm:$0xff]
  %v800 = vld [vmem:[%s780 + $0x98] sm:$0xff]
  %v801 = vld [vmem:[%s780 + $0xa0] sm:$0xff]
  %v802 = vld [vmem:[%s780 + $0xa8] sm:$0xff]
  %v803 = vld [vmem:[%s780 + $0xb0] sm:$0xff]
  %v804 = vld [vmem:[%s780 + $0xb8] sm:$0xff]
  %v805 = vld [vmem:[%s780 + $0xc0] sm:$0xff]
  %v806 = vld [vmem:[%s780 + $0xc8] sm:$0xff]
  %v807 = vld [vmem:[%s780 + $0xd0] sm:$0xff]
  %v808 = vld [vmem:[%s780 + $0xd8] sm:$0xff]
  %v809 = vld [vmem:[%s780 + $0xe0] sm:$0xff]
  %v810 = vld [vmem:[%s780 + $0xe8] sm:$0xff]
  %v811 = vld [vmem:[%s780 + $0xf0] sm:$0xff]
  %v812 = vld [vmem:[%s780 + $0xf8] sm:$0xff]
  %v813 = vld [vmem:[%s780 + $0x100] sm:$0xff]
  %v814 = vld [vmem:[%s780 + $0x108] sm:$0xff]
  %v815 = vld [vmem:[%s780 + $0x110] sm:$0xff]
  %v816 = vld [vmem:[%s780 + $0x118] sm:$0xff]
  %v817 = vld [vmem:[%s780 + $0x120] sm:$0xff]
  %v818 = vld [vmem:[%s780 + $0x128] sm:$0xff]
  %v819 = vld [vmem:[%s780 + $0x130] sm:$0xff]
  %v820 = vld [vmem:[%s780 + $0x138] sm:$0xff]
  %v821 = vld [vmem:[%s780 + $0x140] sm:$0xff]
  %v822 = vld [vmem:[%s780 + $0x148] sm:$0xff]
  %v823 = vld [vmem:[%s780 + $0x150] sm:$0xff]
  %v824 = vld [vmem:[%s780 + $0x158] sm:$0xff]
  %v825 = vld [vmem:[%s780 + $0x160] sm:$0xff]
  %v826 = vld [vmem:[%s780 + $0x168] sm:$0xff]
  %v827 = vld [vmem:[%s780 + $0x170] sm:$0xff]
  %v828 = vld [vmem:[%s780 + $0x178] sm:$0xff]
  %v829 = vld [vmem:[%s780 + $0x180] sm:$0xff]
  %v830 = vld [vmem:[%s780 + $0x188] sm:$0xff]
  %v831 = vld [vmem:[%s780 + $0x190] sm:$0xff]
  %v832 = vld [vmem:[%s780 + $0x198] sm:$0xff]
  %v833 = vld [vmem:[%s780 + $0x1a0] sm:$0xff]
  %v834 = vld [vmem:[%s780 + $0x1a8] sm:$0xff]
  %v835 = vld [vmem:[%s780 + $0x1b0] sm:$0xff]
  %v836 = vld [vmem:[%s780 + $0x1b8] sm:$0xff]
  %v837 = vld [vmem:[%s780 + $0x1c0] sm:$0xff]
  %v838 = vld [vmem:[%s780 + $0x1c8] sm:$0xff]
  %v839 = vld [vmem:[%s780 + $0x1d0] sm:$0xff]
  %v840 = vld [vmem:[%s780 + $0x1d8] sm:$0xff]
  %v841 = vld [vmem:[%s780 + $0x1e0] sm:$0xff]
  %v842 = vld [vmem:[%s780 + $0x1e8] sm:$0xff]
  %v843 = vld [vmem:[%s780 + $0x1f0] sm:$0xff]
  %v844 = vld [vmem:[%s780 + $0x1f8] sm:$0xff]
  %v845 = vld [vmem:[%s780 + $0x200] sm:$0xff]
  %v846 = vld [vmem:[%s780 + $0x208] sm:$0xff]
  %v847 = vld [vmem:[%s780 + $0x210] sm:$0xff]
  %v848 = vld [vmem:[%s780 + $0x218] sm:$0xff]
  %v849 = vld [vmem:[%s780 + $0x220] sm:$0xff]
  %v850 = vld [vmem:[%s780 + $0x228] sm:$0xff]
  %v851 = vld [vmem:[%s780 + $0x230] sm:$0xff]
  %v852 = vld [vmem:[%s780 + $0x238] sm:$0xff]
  %v853 = vld [vmem:[%s780 + $0x240] sm:$0xff]
  %v854 = vld [vmem:[%s780 + $0x248] sm:$0xff]
  %v855 = vld [vmem:[%s780 + $0x250] sm:$0xff]
  %v856 = vld [vmem:[%s780 + $0x258] sm:$0xff]
  %v857 = vld [vmem:[%s780 + $0x260] sm:$0xff]
  %v858 = vld [vmem:[%s780 + $0x268] sm:$0xff]
  %v859 = vld [vmem:[%s780 + $0x270] sm:$0xff]
  %v860 = vld [vmem:[%s780 + $0x278] sm:$0xff]
  %v861 = vld [vmem:[%s780 + $0x280] sm:$0xff]
  %v862 = vld [vmem:[%s780 + $0x288] sm:$0xff]
  %v863 = vld [vmem:[%s780 + $0x290] sm:$0xff]
  %v864 = vld [vmem:[%s780 + $0x298] sm:$0xff]
  %v865 = vld [vmem:[%s780 + $0x2a0] sm:$0xff]
  %v866 = vld [vmem:[%s780 + $0x2a8] sm:$0xff]
  %v867 = vld [vmem:[%s780 + $0x2b0] sm:$0xff]
  %v868 = vld [vmem:[%s780 + $0x2b8] sm:$0xff]
  %v869 = vld [vmem:[%s780 + $0x2c0] sm:$0xff]
  %v870 = vld [vmem:[%s780 + $0x2c8] sm:$0xff]
  %v871 = vld [vmem:[%s780 + $0x2d0] sm:$0xff]
  %v872 = vld [vmem:[%s780 + $0x2d8] sm:$0xff]
  %v873 = vld [vmem:[%s780 + $0x2e0] sm:$0xff]
  %v874 = vld [vmem:[%s780 + $0x2e8] sm:$0xff]
  %v875 = vld [vmem:[%s780 + $0x2f0] sm:$0xff]
  %v876 = vld [vmem:[%s780 + $0x2f8] sm:$0xff]
  %v877 = vld [vmem:[%s780 + $0x300] sm:$0xff]
  %v878 = vld [vmem:[%s780 + $0x308] sm:$0xff]
  %v879 = vld [vmem:[%s780 + $0x310] sm:$0xff]
  %v880 = vld [vmem:[%s780 + $0x318] sm:$0xff]
  %v881 = vld [vmem:[%s780 + $0x320] sm:$0xff]
  %v882 = vld [vmem:[%s780 + $0x328] sm:$0xff]
  %v883 = vld [vmem:[%s780 + $0x330] sm:$0xff]
  %v884 = vld [vmem:[%s780 + $0x338] sm:$0xff]
  %v885 = vld [vmem:[%s780 + $0x340] sm:$0xff]
  %v886 = vld [vmem:[%s780 + $0x348] sm:$0xff]
  %v887 = vld [vmem:[%s780 + $0x350] sm:$0xff]
  %v888 = vld [vmem:[%s780 + $0x358] sm:$0xff]
  %v889 = vld [vmem:[%s780 + $0x360] sm:$0xff]
  %v890 = vld [vmem:[%s780 + $0x368] sm:$0xff]
  %v891 = vld [vmem:[%s780 + $0x370] sm:$0xff]
  %v892 = vld [vmem:[%s780 + $0x378] sm:$0xff]
  %v893 = vld [vmem:[%s780 + $0x380] sm:$0xff]
  %v894 = vld [vmem:[%s780 + $0x388] sm:$0xff]
  %v895 = vld [vmem:[%s780 + $0x390] sm:$0xff]
  %v896 = vld [vmem:[%s780 + $0x398] sm:$0xff]
  %v897 = vld [vmem:[%s780 + $0x3a0] sm:$0xff]
  %v898 = vld [vmem:[%s780 + $0x3a8] sm:$0xff]
  %v899 = vld [vmem:[%s780 + $0x3b0] sm:$0xff]
  %v900 = vld [vmem:[%s780 + $0x3b8] sm:$0xff]
  %v901 = vld [vmem:[%s780 + $0x3c0] sm:$0xff]
  %v902 = vld [vmem:[%s780 + $0x3c8] sm:$0xff]
  %v903 = vld [vmem:[%s780 + $0x3d0] sm:$0xff]
  %v904 = vld [vmem:[%s780 + $0x3d8] sm:$0xff]
  %v905 = vld [vmem:[%s780 + $0x3e0] sm:$0xff]
  %v906 = vld [vmem:[%s780 + $0x3e8] sm:$0xff]
  %v907 = vld [vmem:[%s780 + $0x3f0] sm:$0xff]
  %v908 = vld [vmem:[%s780 + $0x3f8] sm:$0xff]
  %s909 = scalar_lea.vmem %s5, 4
  %v910 = vld [vmem:[%s909] sm:$0xf]
  %v912 = vlaneseq
  %v913 = vshrl.u32 %v912, 7
  %v914 = vsub.s32 0, %v913
  %v915 = vrot.slane %v910, %v914
  %v916 = vlaneseq
  %v917 = vshrl.u32 %v916, 7
  %v918 = vsub.s32 1, %v917
  %v919 = vrot.slane %v910, %v918
  %v920 = vlaneseq
  %v921 = vshrl.u32 %v920, 7
  %v922 = vsub.s32 2, %v921
  %v923 = vrot.slane %v910, %v922
  %v924 = vlaneseq
  %v925 = vshrl.u32 %v924, 7
  %v926 = vsub.s32 3, %v925
  %v927 = vrot.slane %v910, %v926
  %932 = vmatprep.subr.mxu0 %v842
  %933 = vmatpush1.msra.mxu0 %v841
  %934 = vmatprep.subr.mxu0 %v838
  %935 = vmatpush1.msra.mxu0 %v837
  %936 = vmatprep.subr.mxu0 %v834
  %937 = vmatpush1.msra.mxu0 %v833
  %938 = vmatprep.subr.mxu0 %v830
  %939 = vmatpush1.msra.mxu0 %v829
  %940 = vmatprep.subr.mxu0 %v826
  %941 = vmatpush1.msra.mxu0 %v825
  %942 = vmatprep.subr.mxu0 %v822
  %943 = vmatpush1.msra.mxu0 %v821
  %944 = vmatprep.subr.mxu0 %v818
  %945 = vmatpush1.msra.mxu0 %v817
  %946 = vmatprep.subr.mxu0 %v814
  %947 = vmatpush1.msra.mxu0 %v813
  %948 = vmatprep.subr.mxu0 %v810
  %949 = vmatpush1.msra.mxu0 %v809
  %950 = vmatprep.subr.mxu0 %v806
  %951 = vmatpush1.msra.mxu0 %v805
  %952 = vmatprep.subr.mxu0 %v802
  %953 = vmatpush1.msra.mxu0 %v801
  %954 = vmatprep.subr.mxu0 %v798
  %955 = vmatpush1.msra.mxu0 %v797
  %956 = vmatprep.subr.mxu0 %v794
  %957 = vmatpush1.msra.mxu0 %v793
  %958 = vmatprep.subr.mxu0 %v790
  %959 = vmatpush1.msra.mxu0 %v789
  %960 = vmatprep.subr.mxu0 %v786
  %961 = vmatpush1.msra.mxu0 %v785
  %962 = vmatprep.subr.mxu0 %v782
  %963 = vmatpush1.msra.mxu0 %v781
  %964 = vmatprep.subr.mxu0 %v906
  %965 = vmatpush2.msra.mxu0 %v905
  %966 = vmatprep.subr.mxu0 %v902
  %967 = vmatpush2.msra.mxu0 %v901
  %968 = vmatprep.subr.mxu0 %v898
  %969 = vmatpush2.msra.mxu0 %v897
  %970 = vmatprep.subr.mxu0 %v894
  %971 = vmatpush2.msra.mxu0 %v893
  %972 = vmatprep.subr.mxu0 %v890
  %973 = vmatpush2.msra.mxu0 %v889
  %974 = vmatprep.subr.mxu0 %v886
  %975 = vmatpush2.msra.mxu0 %v885
  %976 = vmatprep.subr.mxu0 %v882
  %977 = vmatpush2.msra.mxu0 %v881
  %978 = vmatprep.subr.mxu0 %v878
  %979 = vmatpush2.msra.mxu0 %v877
  %980 = vmatprep.subr.mxu0 %v874
  %981 = vmatpush2.msra.mxu0 %v873
  %982 = vmatprep.subr.mxu0 %v870
  %983 = vmatpush2.msra.mxu0 %v869
  %984 = vmatprep.subr.mxu0 %v866
  %985 = vmatpush2.msra.mxu0 %v865
  %986 = vmatprep.subr.mxu0 %v862
  %987 = vmatpush2.msra.mxu0 %v861
  %988 = vmatprep.subr.mxu0 %v858
  %989 = vmatpush2.msra.mxu0 %v857
  %990 = vmatprep.subr.mxu0 %v854
  %991 = vmatpush2.msra.mxu0 %v853
  %992 = vmatprep.subr.mxu0 %v850
  %993 = vmatpush2.msra.mxu0 %v849
  %994 = vmatprep.subr.mxu0 %v846
  %995 = vmatpush2.msra.mxu0 %v845
  %996 = vmatprep.mubr.f32.mxu0 0.0
  %997 = vmatmul.mubr.f32.gmra.mxu0 %v779
  %v998 = vpop.f32.mrf.mxu0
  %v999 = vadd.f32 %v915, %v998
  %v1000 = vpop.f32.mrf.mxu0
  %v1001 = vadd.f32 %v919, %v1000
  %1002 = vdwg.mxu0
  %1003 = vmatprep.subr.mxu0 %v844
  %1004 = vmatpush1.msra.mxu0 %v843
  %1005 = vmatprep.subr.mxu0 %v840
  %1006 = vmatpush1.msra.mxu0 %v839
  %1007 = vmatprep.subr.mxu0 %v836
  %1008 = vmatpush1.msra.mxu0 %v835
  %1009 = vmatprep.subr.mxu0 %v832
  %1010 = vmatpush1.msra.mxu0 %v831
  %1011 = vmatprep.subr.mxu0 %v828
  %1012 = vmatpush1.msra.mxu0 %v827
  %1013 = vmatprep.subr.mxu0 %v824
  %1014 = vmatpush1.msra.mxu0 %v823
  %1015 = vmatprep.subr.mxu0 %v820
  %1016 = vmatpush1.msra.mxu0 %v819
  %1017 = vmatprep.subr.mxu0 %v816
  %1018 = vmatpush1.msra.mxu0 %v815
  %1019 = vmatprep.subr.mxu0 %v812
  %1020 = vmatpush1.msra.mxu0 %v811
  %1021 = vmatprep.subr.mxu0 %v808
  %1022 = vmatpush1.msra.mxu0 %v807
  %1023 = vmatprep.subr.mxu0 %v804
  %1024 = vmatpush1.msra.mxu0 %v803
  %1025 = vmatprep.subr.mxu0 %v800
  %1026 = vmatpush1.msra.mxu0 %v799
  %1027 = vmatprep.subr.mxu0 %v796
  %1028 = vmatpush1.msra.mxu0 %v795
  %1029 = vmatprep.subr.mxu0 %v792
  %1030 = vmatpush1.msra.mxu0 %v791
  %1031 = vmatprep.subr.mxu0 %v788
  %1032 = vmatpush1.msra.mxu0 %v787
  %1033 = vmatprep.subr.mxu0 %v784
  %1034 = vmatpush1.msra.mxu0 %v783
  %1035 = vmatprep.subr.mxu0 %v908
  %1036 = vmatpush2.msra.mxu0 %v907
  %1037 = vmatprep.subr.mxu0 %v904
  %1038 = vmatpush2.msra.mxu0 %v903
  %1039 = vmatprep.subr.mxu0 %v900
  %1040 = vmatpush2.msra.mxu0 %v899
  %1041 = vmatprep.subr.mxu0 %v896
  %1042 = vmatpush2.msra.mxu0 %v895
  %1043 = vmatprep.subr.mxu0 %v892
  %1044 = vmatpush2.msra.mxu0 %v891
  %1045 = vmatprep.subr.mxu0 %v888
  %1046 = vmatpush2.msra.mxu0 %v887
  %1047 = vmatprep.subr.mxu0 %v884
  %1048 = vmatpush2.msra.mxu0 %v883
  %1049 = vmatprep.subr.mxu0 %v880
  %1050 = vmatpush2.msra.mxu0 %v879
  %1051 = vmatprep.subr.mxu0 %v876
  %1052 = vmatpush2.msra.mxu0 %v875
  %1053 = vmatprep.subr.mxu0 %v872
  %1054 = vmatpush2.msra.mxu0 %v871
  %1055 = vmatprep.subr.mxu0 %v868
  %1056 = vmatpush2.msra.mxu0 %v867
  %1057 = vmatprep.subr.mxu0 %v864
  %1058 = vmatpush2.msra.mxu0 %v863
  %1059 = vmatprep.subr.mxu0 %v860
  %1060 = vmatpush2.msra.mxu0 %v859
  %1061 = vmatprep.subr.mxu0 %v856
  %1062 = vmatpush2.msra.mxu0 %v855
  %1063 = vmatprep.subr.mxu0 %v852
  %1064 = vmatpush2.msra.mxu0 %v851
  %1065 = vmatprep.subr.mxu0 %v848
  %1066 = vmatpush2.msra.mxu0 %v847
  %1067 = vmatprep.mubr.f32.mxu0 0.0
  %1068 = vmatmul.mubr.f32.gmra.mxu0 %v779
  %v1069 = vpop.f32.mrf.mxu0
  %v1070 = vadd.f32 %v923, %v1069
  %v1071 = vpop.f32.mrf.mxu0
  %v1072 = vadd.f32 %v927, %v1071
  %1073 = vdwg.mxu0
  %v1074 = vxor.u32 %v999, 2147483648
  %v1075 = vmul.f32 %v1074, 1.442695
  %v1076 = vpow.pop %v1075
  %v1077 = vadd.f32 %v1076, 1.0
  %v1078 = vrcp.pop %v1077
  %v1079 = vmul.f32 1.0, %v1078
  %v1080 = vxor.u32 %v1001, 2147483648
  %v1081 = vmul.f32 %v1080, 1.442695
  %v1082 = vpow.pop %v1081
  %v1083 = vadd.f32 %v1082, 1.0
  %v1084 = vrcp.pop %v1083
  %v1085 = vmul.f32 1.0, %v1084
  %v1086 = vtanh.pop %v1070
  %v1087 = vxor.u32 %v1072, 2147483648
  %v1088 = vmul.f32 %v1087, 1.442695
  %v1089 = vpow.pop %v1088
  %v1090 = vadd.f32 %v1089, 1.0
  %v1091 = vrcp.pop %v1090
  %v1092 = vmul.f32 1.0, %v1091
  %v1093 = vmul.f32 %v1085, 0.0
  %v1094 = vmul.f32 %v1079, %v1086
  %v1095 = vadd.f32 %v1093, %v1094
  %v1096 = vtanh.pop %v1095
  %v1097 = vmul.f32 %v1092, %v1096
  %s1098 = scalar_lea.vmem %s4, 2048
  %v1099 = vld [vmem:[%s1098] sm:$0xff]
  %v1100 = vld [vmem:[%s1098 + $0x8] sm:$0xff]
  %v1101 = vld [vmem:[%s1098 + $0x10] sm:$0xff]
  %v1102 = vld [vmem:[%s1098 + $0x18] sm:$0xff]
  %v1103 = vld [vmem:[%s1098 + $0x20] sm:$0xff]
  %v1104 = vld [vmem:[%s1098 + $0x28] sm:$0xff]
  %v1105 = vld [vmem:[%s1098 + $0x30] sm:$0xff]
  %v1106 = vld [vmem:[%s1098 + $0x38] sm:$0xff]
  %v1107 = vld [vmem:[%s1098 + $0x40] sm:$0xff]
  %v1108 = vld [vmem:[%s1098 + $0x48] sm:$0xff]
  %v1109 = vld [vmem:[%s1098 + $0x50] sm:$0xff]
  %v1110 = vld [vmem:[%s1098 + $0x58] sm:$0xff]
  %v1111 = vld [vmem:[%s1098 + $0x60] sm:$0xff]
  %v1112 = vld [vmem:[%s1098 + $0x68] sm:$0xff]
  %v1113 = vld [vmem:[%s1098 + $0x70] sm:$0xff]
  %v1114 = vld [vmem:[%s1098 + $0x78] sm:$0xff]
  %v1115 = vld [vmem:[%s1098 + $0x80] sm:$0xff]
  %v1116 = vld [vmem:[%s1098 + $0x88] sm:$0xff]
  %v1117 = vld [vmem:[%s1098 + $0x90] sm:$0xff]
  %v1118 = vld [vmem:[%s1098 + $0x98] sm:$0xff]
  %v1119 = vld [vmem:[%s1098 + $0xa0] sm:$0xff]
  %v1120 = vld [vmem:[%s1098 + $0xa8] sm:$0xff]
  %v1121 = vld [vmem:[%s1098 + $0xb0] sm:$0xff]
  %v1122 = vld [vmem:[%s1098 + $0xb8] sm:$0xff]
  %v1123 = vld [vmem:[%s1098 + $0xc0] sm:$0xff]
  %v1124 = vld [vmem:[%s1098 + $0xc8] sm:$0xff]
  %v1125 = vld [vmem:[%s1098 + $0xd0] sm:$0xff]
  %v1126 = vld [vmem:[%s1098 + $0xd8] sm:$0xff]
  %v1127 = vld [vmem:[%s1098 + $0xe0] sm:$0xff]
  %v1128 = vld [vmem:[%s1098 + $0xe8] sm:$0xff]
  %v1129 = vld [vmem:[%s1098 + $0xf0] sm:$0xff]
  %v1130 = vld [vmem:[%s1098 + $0xf8] sm:$0xff]
  %v1131 = vld [vmem:[%s1098 + $0x100] sm:$0xff]
  %v1132 = vld [vmem:[%s1098 + $0x108] sm:$0xff]
  %v1133 = vld [vmem:[%s1098 + $0x110] sm:$0xff]
  %v1134 = vld [vmem:[%s1098 + $0x118] sm:$0xff]
  %v1135 = vld [vmem:[%s1098 + $0x120] sm:$0xff]
  %v1136 = vld [vmem:[%s1098 + $0x128] sm:$0xff]
  %v1137 = vld [vmem:[%s1098 + $0x130] sm:$0xff]
  %v1138 = vld [vmem:[%s1098 + $0x138] sm:$0xff]
  %v1139 = vld [vmem:[%s1098 + $0x140] sm:$0xff]
  %v1140 = vld [vmem:[%s1098 + $0x148] sm:$0xff]
  %v1141 = vld [vmem:[%s1098 + $0x150] sm:$0xff]
  %v1142 = vld [vmem:[%s1098 + $0x158] sm:$0xff]
  %v1143 = vld [vmem:[%s1098 + $0x160] sm:$0xff]
  %v1144 = vld [vmem:[%s1098 + $0x168] sm:$0xff]
  %v1145 = vld [vmem:[%s1098 + $0x170] sm:$0xff]
  %v1146 = vld [vmem:[%s1098 + $0x178] sm:$0xff]
  %v1147 = vld [vmem:[%s1098 + $0x180] sm:$0xff]
  %v1148 = vld [vmem:[%s1098 + $0x188] sm:$0xff]
  %v1149 = vld [vmem:[%s1098 + $0x190] sm:$0xff]
  %v1150 = vld [vmem:[%s1098 + $0x198] sm:$0xff]
  %v1151 = vld [vmem:[%s1098 + $0x1a0] sm:$0xff]
  %v1152 = vld [vmem:[%s1098 + $0x1a8] sm:$0xff]
  %v1153 = vld [vmem:[%s1098 + $0x1b0] sm:$0xff]
  %v1154 = vld [vmem:[%s1098 + $0x1b8] sm:$0xff]
  %v1155 = vld [vmem:[%s1098 + $0x1c0] sm:$0xff]
  %v1156 = vld [vmem:[%s1098 + $0x1c8] sm:$0xff]
  %v1157 = vld [vmem:[%s1098 + $0x1d0] sm:$0xff]
  %v1158 = vld [vmem:[%s1098 + $0x1d8] sm:$0xff]
  %v1159 = vld [vmem:[%s1098 + $0x1e0] sm:$0xff]
  %v1160 = vld [vmem:[%s1098 + $0x1e8] sm:$0xff]
  %v1161 = vld [vmem:[%s1098 + $0x1f0] sm:$0xff]
  %v1162 = vld [vmem:[%s1098 + $0x1f8] sm:$0xff]
  %v1163 = vld [vmem:[%s1098 + $0x200] sm:$0xff]
  %v1164 = vld [vmem:[%s1098 + $0x208] sm:$0xff]
  %v1165 = vld [vmem:[%s1098 + $0x210] sm:$0xff]
  %v1166 = vld [vmem:[%s1098 + $0x218] sm:$0xff]
  %v1167 = vld [vmem:[%s1098 + $0x220] sm:$0xff]
  %v1168 = vld [vmem:[%s1098 + $0x228] sm:$0xff]
  %v1169 = vld [vmem:[%s1098 + $0x230] sm:$0xff]
  %v1170 = vld [vmem:[%s1098 + $0x238] sm:$0xff]
  %v1171 = vld [vmem:[%s1098 + $0x240] sm:$0xff]
  %v1172 = vld [vmem:[%s1098 + $0x248] sm:$0xff]
  %v1173 = vld [vmem:[%s1098 + $0x250] sm:$0xff]
  %v1174 = vld [vmem:[%s1098 + $0x258] sm:$0xff]
  %v1175 = vld [vmem:[%s1098 + $0x260] sm:$0xff]
  %v1176 = vld [vmem:[%s1098 + $0x268] sm:$0xff]
  %v1177 = vld [vmem:[%s1098 + $0x270] sm:$0xff]
  %v1178 = vld [vmem:[%s1098 + $0x278] sm:$0xff]
  %v1179 = vld [vmem:[%s1098 + $0x280] sm:$0xff]
  %v1180 = vld [vmem:[%s1098 + $0x288] sm:$0xff]
  %v1181 = vld [vmem:[%s1098 + $0x290] sm:$0xff]
  %v1182 = vld [vmem:[%s1098 + $0x298] sm:$0xff]
  %v1183 = vld [vmem:[%s1098 + $0x2a0] sm:$0xff]
  %v1184 = vld [vmem:[%s1098 + $0x2a8] sm:$0xff]
  %v1185 = vld [vmem:[%s1098 + $0x2b0] sm:$0xff]
  %v1186 = vld [vmem:[%s1098 + $0x2b8] sm:$0xff]
  %v1187 = vld [vmem:[%s1098 + $0x2c0] sm:$0xff]
  %v1188 = vld [vmem:[%s1098 + $0x2c8] sm:$0xff]
  %v1189 = vld [vmem:[%s1098 + $0x2d0] sm:$0xff]
  %v1190 = vld [vmem:[%s1098 + $0x2d8] sm:$0xff]
  %v1191 = vld [vmem:[%s1098 + $0x2e0] sm:$0xff]
  %v1192 = vld [vmem:[%s1098 + $0x2e8] sm:$0xff]
  %v1193 = vld [vmem:[%s1098 + $0x2f0] sm:$0xff]
  %v1194 = vld [vmem:[%s1098 + $0x2f8] sm:$0xff]
  %v1195 = vld [vmem:[%s1098 + $0x300] sm:$0xff]
  %v1196 = vld [vmem:[%s1098 + $0x308] sm:$0xff]
  %v1197 = vld [vmem:[%s1098 + $0x310] sm:$0xff]
  %v1198 = vld [vmem:[%s1098 + $0x318] sm:$0xff]
  %v1199 = vld [vmem:[%s1098 + $0x320] sm:$0xff]
  %v1200 = vld [vmem:[%s1098 + $0x328] sm:$0xff]
  %v1201 = vld [vmem:[%s1098 + $0x330] sm:$0xff]
  %v1202 = vld [vmem:[%s1098 + $0x338] sm:$0xff]
  %v1203 = vld [vmem:[%s1098 + $0x340] sm:$0xff]
  %v1204 = vld [vmem:[%s1098 + $0x348] sm:$0xff]
  %v1205 = vld [vmem:[%s1098 + $0x350] sm:$0xff]
  %v1206 = vld [vmem:[%s1098 + $0x358] sm:$0xff]
  %v1207 = vld [vmem:[%s1098 + $0x360] sm:$0xff]
  %v1208 = vld [vmem:[%s1098 + $0x368] sm:$0xff]
  %v1209 = vld [vmem:[%s1098 + $0x370] sm:$0xff]
  %v1210 = vld [vmem:[%s1098 + $0x378] sm:$0xff]
  %v1211 = vld [vmem:[%s1098 + $0x380] sm:$0xff]
  %v1212 = vld [vmem:[%s1098 + $0x388] sm:$0xff]
  %v1213 = vld [vmem:[%s1098 + $0x390] sm:$0xff]
  %v1214 = vld [vmem:[%s1098 + $0x398] sm:$0xff]
  %v1215 = vld [vmem:[%s1098 + $0x3a0] sm:$0xff]
  %v1216 = vld [vmem:[%s1098 + $0x3a8] sm:$0xff]
  %v1217 = vld [vmem:[%s1098 + $0x3b0] sm:$0xff]
  %v1218 = vld [vmem:[%s1098 + $0x3b8] sm:$0xff]
  %v1219 = vld [vmem:[%s1098 + $0x3c0] sm:$0xff]
  %v1220 = vld [vmem:[%s1098 + $0x3c8] sm:$0xff]
  %v1221 = vld [vmem:[%s1098 + $0x3d0] sm:$0xff]
  %v1222 = vld [vmem:[%s1098 + $0x3d8] sm:$0xff]
  %v1223 = vld [vmem:[%s1098 + $0x3e0] sm:$0xff]
  %v1224 = vld [vmem:[%s1098 + $0x3e8] sm:$0xff]
  %v1225 = vld [vmem:[%s1098 + $0x3f0] sm:$0xff]
  %v1226 = vld [vmem:[%s1098 + $0x3f8] sm:$0xff]
  %s1227 = scalar_lea.vmem %s5, 8
  %v1228 = vld [vmem:[%s1227] sm:$0xf]
  %v1230 = vlaneseq
  %v1231 = vshrl.u32 %v1230, 7
  %v1232 = vsub.s32 0, %v1231
  %v1233 = vrot.slane %v1228, %v1232
  %v1234 = vlaneseq
  %v1235 = vshrl.u32 %v1234, 7
  %v1236 = vsub.s32 1, %v1235
  %v1237 = vrot.slane %v1228, %v1236
  %v1238 = vlaneseq
  %v1239 = vshrl.u32 %v1238, 7
  %v1240 = vsub.s32 2, %v1239
  %v1241 = vrot.slane %v1228, %v1240
  %v1242 = vlaneseq
  %v1243 = vshrl.u32 %v1242, 7
  %v1244 = vsub.s32 3, %v1243
  %v1245 = vrot.slane %v1228, %v1244
  %1250 = vmatprep.subr.mxu0 %v1160
  %1251 = vmatpush1.msra.mxu0 %v1159
  %1252 = vmatprep.subr.mxu0 %v1156
  %1253 = vmatpush1.msra.mxu0 %v1155
  %1254 = vmatprep.subr.mxu0 %v1152
  %1255 = vmatpush1.msra.mxu0 %v1151
  %1256 = vmatprep.subr.mxu0 %v1148
  %1257 = vmatpush1.msra.mxu0 %v1147
  %1258 = vmatprep.subr.mxu0 %v1144
  %1259 = vmatpush1.msra.mxu0 %v1143
  %1260 = vmatprep.subr.mxu0 %v1140
  %1261 = vmatpush1.msra.mxu0 %v1139
  %1262 = vmatprep.subr.mxu0 %v1136
  %1263 = vmatpush1.msra.mxu0 %v1135
  %1264 = vmatprep.subr.mxu0 %v1132
  %1265 = vmatpush1.msra.mxu0 %v1131
  %1266 = vmatprep.subr.mxu0 %v1128
  %1267 = vmatpush1.msra.mxu0 %v1127
  %1268 = vmatprep.subr.mxu0 %v1124
  %1269 = vmatpush1.msra.mxu0 %v1123
  %1270 = vmatprep.subr.mxu0 %v1120
  %1271 = vmatpush1.msra.mxu0 %v1119
  %1272 = vmatprep.subr.mxu0 %v1116
  %1273 = vmatpush1.msra.mxu0 %v1115
  %1274 = vmatprep.subr.mxu0 %v1112
  %1275 = vmatpush1.msra.mxu0 %v1111
  %1276 = vmatprep.subr.mxu0 %v1108
  %1277 = vmatpush1.msra.mxu0 %v1107
  %1278 = vmatprep.subr.mxu0 %v1104
  %1279 = vmatpush1.msra.mxu0 %v1103
  %1280 = vmatprep.subr.mxu0 %v1100
  %1281 = vmatpush1.msra.mxu0 %v1099
  %1282 = vmatprep.subr.mxu0 %v1224
  %1283 = vmatpush2.msra.mxu0 %v1223
  %1284 = vmatprep.subr.mxu0 %v1220
  %1285 = vmatpush2.msra.mxu0 %v1219
  %1286 = vmatprep.subr.mxu0 %v1216
  %1287 = vmatpush2.msra.mxu0 %v1215
  %1288 = vmatprep.subr.mxu0 %v1212
  %1289 = vmatpush2.msra.mxu0 %v1211
  %1290 = vmatprep.subr.mxu0 %v1208
  %1291 = vmatpush2.msra.mxu0 %v1207
  %1292 = vmatprep.subr.mxu0 %v1204
  %1293 = vmatpush2.msra.mxu0 %v1203
  %1294 = vmatprep.subr.mxu0 %v1200
  %1295 = vmatpush2.msra.mxu0 %v1199
  %1296 = vmatprep.subr.mxu0 %v1196
  %1297 = vmatpush2.msra.mxu0 %v1195
  %1298 = vmatprep.subr.mxu0 %v1192
  %1299 = vmatpush2.msra.mxu0 %v1191
  %1300 = vmatprep.subr.mxu0 %v1188
  %1301 = vmatpush2.msra.mxu0 %v1187
  %1302 = vmatprep.subr.mxu0 %v1184
  %1303 = vmatpush2.msra.mxu0 %v1183
  %1304 = vmatprep.subr.mxu0 %v1180
  %1305 = vmatpush2.msra.mxu0 %v1179
  %1306 = vmatprep.subr.mxu0 %v1176
  %1307 = vmatpush2.msra.mxu0 %v1175
  %1308 = vmatprep.subr.mxu0 %v1172
  %1309 = vmatpush2.msra.mxu0 %v1171
  %1310 = vmatprep.subr.mxu0 %v1168
  %1311 = vmatpush2.msra.mxu0 %v1167
  %1312 = vmatprep.subr.mxu0 %v1164
  %1313 = vmatpush2.msra.mxu0 %v1163
  %1314 = vmatprep.mubr.f32.mxu0 0.0
  %1315 = vmatmul.mubr.f32.gmra.mxu0 %v1097
  %v1316 = vpop.f32.mrf.mxu0
  %v1317 = vadd.f32 %v1233, %v1316
  %v1318 = vpop.f32.mrf.mxu0
  %v1319 = vadd.f32 %v1237, %v1318
  %1320 = vdwg.mxu0
  %1321 = vmatprep.subr.mxu0 %v1162
  %1322 = vmatpush1.msra.mxu0 %v1161
  %1323 = vmatprep.subr.mxu0 %v1158
  %1324 = vmatpush1.msra.mxu0 %v1157
  %1325 = vmatprep.subr.mxu0 %v1154
  %1326 = vmatpush1.msra.mxu0 %v1153
  %1327 = vmatprep.subr.mxu0 %v1150
  %1328 = vmatpush1.msra.mxu0 %v1149
  %1329 = vmatprep.subr.mxu0 %v1146
  %1330 = vmatpush1.msra.mxu0 %v1145
  %1331 = vmatprep.subr.mxu0 %v1142
  %1332 = vmatpush1.msra.mxu0 %v1141
  %1333 = vmatprep.subr.mxu0 %v1138
  %1334 = vmatpush1.msra.mxu0 %v1137
  %1335 = vmatprep.subr.mxu0 %v1134
  %1336 = vmatpush1.msra.mxu0 %v1133
  %1337 = vmatprep.subr.mxu0 %v1130
  %1338 = vmatpush1.msra.mxu0 %v1129
  %1339 = vmatprep.subr.mxu0 %v1126
  %1340 = vmatpush1.msra.mxu0 %v1125
  %1341 = vmatprep.subr.mxu0 %v1122
  %1342 = vmatpush1.msra.mxu0 %v1121
  %1343 = vmatprep.subr.mxu0 %v1118
  %1344 = vmatpush1.msra.mxu0 %v1117
  %1345 = vmatprep.subr.mxu0 %v1114
  %1346 = vmatpush1.msra.mxu0 %v1113
  %1347 = vmatprep.subr.mxu0 %v1110
  %1348 = vmatpush1.msra.mxu0 %v1109
  %1349 = vmatprep.subr.mxu0 %v1106
  %1350 = vmatpush1.msra.mxu0 %v1105
  %1351 = vmatprep.subr.mxu0 %v1102
  %1352 = vmatpush1.msra.mxu0 %v1101
  %1353 = vmatprep.subr.mxu0 %v1226
  %1354 = vmatpush2.msra.mxu0 %v1225
  %1355 = vmatprep.subr.mxu0 %v1222
  %1356 = vmatpush2.msra.mxu0 %v1221
  %1357 = vmatprep.subr.mxu0 %v1218
  %1358 = vmatpush2.msra.mxu0 %v1217
  %1359 = vmatprep.subr.mxu0 %v1214
  %1360 = vmatpush2.msra.mxu0 %v1213
  %1361 = vmatprep.subr.mxu0 %v1210
  %1362 = vmatpush2.msra.mxu0 %v1209
  %1363 = vmatprep.subr.mxu0 %v1206
  %1364 = vmatpush2.msra.mxu0 %v1205
  %1365 = vmatprep.subr.mxu0 %v1202
  %1366 = vmatpush2.msra.mxu0 %v1201
  %1367 = vmatprep.subr.mxu0 %v1198
  %1368 = vmatpush2.msra.mxu0 %v1197
  %1369 = vmatprep.subr.mxu0 %v1194
  %1370 = vmatpush2.msra.mxu0 %v1193
  %1371 = vmatprep.subr.mxu0 %v1190
  %1372 = vmatpush2.msra.mxu0 %v1189
  %1373 = vmatprep.subr.mxu0 %v1186
  %1374 = vmatpush2.msra.mxu0 %v1185
  %1375 = vmatprep.subr.mxu0 %v1182
  %1376 = vmatpush2.msra.mxu0 %v1181
  %1377 = vmatprep.subr.mxu0 %v1178
  %1378 = vmatpush2.msra.mxu0 %v1177
  %1379 = vmatprep.subr.mxu0 %v1174
  %1380 = vmatpush2.msra.mxu0 %v1173
  %1381 = vmatprep.subr.mxu0 %v1170
  %1382 = vmatpush2.msra.mxu0 %v1169
  %1383 = vmatprep.subr.mxu0 %v1166
  %1384 = vmatpush2.msra.mxu0 %v1165
  %1385 = vmatprep.mubr.f32.mxu0 0.0
  %1386 = vmatmul.mubr.f32.gmra.mxu0 %v1097
  %v1387 = vpop.f32.mrf.mxu0
  %v1388 = vadd.f32 %v1241, %v1387
  %v1389 = vpop.f32.mrf.mxu0
  %v1390 = vadd.f32 %v1245, %v1389
  %1391 = vdwg.mxu0
  %v1392 = vxor.u32 %v1317, 2147483648
  %v1393 = vmul.f32 %v1392, 1.442695
  %v1394 = vpow.pop %v1393
  %v1395 = vadd.f32 %v1394, 1.0
  %v1396 = vrcp.pop %v1395
  %v1397 = vmul.f32 1.0, %v1396
  %v1398 = vxor.u32 %v1319, 2147483648
  %v1399 = vmul.f32 %v1398, 1.442695
  %v1400 = vpow.pop %v1399
  %v1401 = vadd.f32 %v1400, 1.0
  %v1402 = vrcp.pop %v1401
  %v1403 = vmul.f32 1.0, %v1402
  %v1404 = vtanh.pop %v1388
  %v1405 = vxor.u32 %v1390, 2147483648
  %v1406 = vmul.f32 %v1405, 1.442695
  %v1407 = vpow.pop %v1406
  %v1408 = vadd.f32 %v1407, 1.0
  %v1409 = vrcp.pop %v1408
  %v1410 = vmul.f32 1.0, %v1409
  %v1411 = vmul.f32 %v1403, 0.0
  %v1412 = vmul.f32 %v1397, %v1404
  %v1413 = vadd.f32 %v1411, %v1412
  %v1414 = vtanh.pop %v1413
  %v1415 = vmul.f32 %v1410, %v1414
  %1416 = vmatprep.subr.mxu0 %v291
  %1417 = vmatpush1.msra.mxu0 %v290
  %1418 = vmatprep.subr.mxu0 %v287
  %1419 = vmatpush1.msra.mxu0 %v286
  %1420 = vmatprep.subr.mxu0 %v283
  %1421 = vmatpush1.msra.mxu0 %v282
  %1422 = vmatprep.subr.mxu0 %v279
  %1423 = vmatpush1.msra.mxu0 %v278
  %1424 = vmatprep.subr.mxu0 %v275
  %1425 = vmatpush1.msra.mxu0 %v274
  %1426 = vmatprep.subr.mxu0 %v271
  %1427 = vmatpush1.msra.mxu0 %v270
  %1428 = vmatprep.subr.mxu0 %v267
  %1429 = vmatpush1.msra.mxu0 %v266
  %1430 = vmatprep.subr.mxu0 %v263
  %1431 = vmatpush1.msra.mxu0 %v262
  %1432 = vmatprep.subr.mxu0 %v259
  %1433 = vmatpush1.msra.mxu0 %v258
  %1434 = vmatprep.subr.mxu0 %v255
  %1435 = vmatpush1.msra.mxu0 %v254
  %1436 = vmatprep.subr.mxu0 %v251
  %1437 = vmatpush1.msra.mxu0 %v250
  %1438 = vmatprep.subr.mxu0 %v247
  %1439 = vmatpush1.msra.mxu0 %v246
  %1440 = vmatprep.subr.mxu0 %v243
  %1441 = vmatpush1.msra.mxu0 %v242
  %1442 = vmatprep.subr.mxu0 %v239
  %1443 = vmatpush1.msra.mxu0 %v238
  %1444 = vmatprep.subr.mxu0 %v235
  %1445 = vmatpush1.msra.mxu0 %v234
  %1446 = vmatprep.subr.mxu0 %v231
  %1447 = vmatpush1.msra.mxu0 %v230
  %1448 = vmatprep.subr.mxu0 0.0
  %1449 = vmatpush2.msra.mxu0 0.0
  %1450 = vmatprep.subr.mxu0 0.0
  %1451 = vmatpush2.msra.mxu0 0.0
  %1452 = vmatprep.subr.mxu0 0.0
  %1453 = vmatpush2.msra.mxu0 0.0
  %1454 = vmatprep.subr.mxu0 0.0
  %1455 = vmatpush2.msra.mxu0 0.0
  %1456 = vmatprep.subr.mxu0 0.0
  %1457 = vmatpush2.msra.mxu0 0.0
  %1458 = vmatprep.subr.mxu0 0.0
  %1459 = vmatpush2.msra.mxu0 0.0
  %1460 = vmatprep.subr.mxu0 0.0
  %1461 = vmatpush2.msra.mxu0 0.0
  %1462 = vmatprep.subr.mxu0 0.0
  %1463 = vmatpush2.msra.mxu0 0.0
  %1464 = vmatprep.subr.mxu0 0.0
  %1465 = vmatpush2.msra.mxu0 0.0
  %1466 = vmatprep.subr.mxu0 0.0
  %1467 = vmatpush2.msra.mxu0 0.0
  %1468 = vmatprep.subr.mxu0 0.0
  %1469 = vmatpush2.msra.mxu0 0.0
  %1470 = vmatprep.subr.mxu0 0.0
  %1471 = vmatpush2.msra.mxu0 0.0
  %1472 = vmatprep.subr.mxu0 0.0
  %1473 = vmatpush2.msra.mxu0 0.0
  %1474 = vmatprep.subr.mxu0 0.0
  %1475 = vmatpush2.msra.mxu0 0.0
  %1476 = vmatprep.subr.mxu0 0.0
  %1477 = vmatpush2.msra.mxu0 0.0
  %1478 = vmatprep.subr.mxu0 0.0
  %1479 = vmatpush2.msra.mxu0 0.0
  %1480 = vmatprep.mubr.f32.mxu0 0.0
  %1481 = vmatmul.mubr.f32.gmra.mxu0 %v463
  %v1482 = vpop.f32.mrf.mxu0
  %v1483 = vadd.f32 0.0, %v1482
  %v1484 = vpop.f32.mrf.mxu0
  %v1485 = vadd.f32 0.0, %v1484
  %1486 = vdwg.mxu0
  %1487 = vmatprep.subr.mxu0 %v293
  %1488 = vmatpush1.msra.mxu0 %v292
  %1489 = vmatprep.subr.mxu0 %v289
  %1490 = vmatpush1.msra.mxu0 %v288
  %1491 = vmatprep.subr.mxu0 %v285
  %1492 = vmatpush1.msra.mxu0 %v284
  %1493 = vmatprep.subr.mxu0 %v281
  %1494 = vmatpush1.msra.mxu0 %v280
  %1495 = vmatprep.subr.mxu0 %v277
  %1496 = vmatpush1.msra.mxu0 %v276
  %1497 = vmatprep.subr.mxu0 %v273
  %1498 = vmatpush1.msra.mxu0 %v272
  %1499 = vmatprep.subr.mxu0 %v269
  %1500 = vmatpush1.msra.mxu0 %v268
  %1501 = vmatprep.subr.mxu0 %v265
  %1502 = vmatpush1.msra.mxu0 %v264
  %1503 = vmatprep.subr.mxu0 %v261
  %1504 = vmatpush1.msra.mxu0 %v260
  %1505 = vmatprep.subr.mxu0 %v257
  %1506 = vmatpush1.msra.mxu0 %v256
  %1507 = vmatprep.subr.mxu0 %v253
  %1508 = vmatpush1.msra.mxu0 %v252
  %1509 = vmatprep.subr.mxu0 %v249
  %1510 = vmatpush1.msra.mxu0 %v248
  %1511 = vmatprep.subr.mxu0 %v245
  %1512 = vmatpush1.msra.mxu0 %v244
  %1513 = vmatprep.subr.mxu0 %v241
  %1514 = vmatpush1.msra.mxu0 %v240
  %1515 = vmatprep.subr.mxu0 %v237
  %1516 = vmatpush1.msra.mxu0 %v236
  %1517 = vmatprep.subr.mxu0 %v233
  %1518 = vmatpush1.msra.mxu0 %v232
  %1519 = vmatprep.subr.mxu0 0.0
  %1520 = vmatpush2.msra.mxu0 0.0
  %1521 = vmatprep.subr.mxu0 0.0
  %1522 = vmatpush2.msra.mxu0 0.0
  %1523 = vmatprep.subr.mxu0 0.0
  %1524 = vmatpush2.msra.mxu0 0.0
  %1525 = vmatprep.subr.mxu0 0.0
  %1526 = vmatpush2.msra.mxu0 0.0
  %1527 = vmatprep.subr.mxu0 0.0
  %1528 = vmatpush2.msra.mxu0 0.0
  %1529 = vmatprep.subr.mxu0 0.0
  %1530 = vmatpush2.msra.mxu0 0.0
  %1531 = vmatprep.subr.mxu0 0.0
  %1532 = vmatpush2.msra.mxu0 0.0
  %1533 = vmatprep.subr.mxu0 0.0
  %1534 = vmatpush2.msra.mxu0 0.0
  %1535 = vmatprep.subr.mxu0 0.0
  %1536 = vmatpush2.msra.mxu0 0.0
  %1537 = vmatprep.subr.mxu0 0.0
  %1538 = vmatpush2.msra.mxu0 0.0
  %1539 = vmatprep.subr.mxu0 0.0
  %1540 = vmatpush2.msra.mxu0 0.0
  %1541 = vmatprep.subr.mxu0 0.0
  %1542 = vmatpush2.msra.mxu0 0.0
  %1543 = vmatprep.subr.mxu0 0.0
  %1544 = vmatpush2.msra.mxu0 0.0
  %1545 = vmatprep.subr.mxu0 0.0
  %1546 = vmatpush2.msra.mxu0 0.0
  %1547 = vmatprep.subr.mxu0 0.0
  %1548 = vmatpush2.msra.mxu0 0.0
  %1549 = vmatprep.subr.mxu0 0.0
  %1550 = vmatpush2.msra.mxu0 0.0
  %1551 = vmatprep.mubr.f32.mxu0 0.0
  %1552 = vmatmul.mubr.f32.gmra.mxu0 %v463
  %v1553 = vpop.f32.mrf.mxu0
  %v1554 = vadd.f32 0.0, %v1553
  %v1555 = vpop.f32.mrf.mxu0
  %v1556 = vadd.f32 0.0, %v1555
  %1557 = vdwg.mxu0
  %v1558 = vadd.f32 %v155, %v1483
  %v1559 = vadd.f32 %v157, %v1485
  %v1560 = vadd.f32 %v226, %v1554
  %v1561 = vadd.f32 %v228, %v1556
  %v1562 = vxor.u32 %v1558, 2147483648
  %v1563 = vmul.f32 %v1562, 1.442695
  %v1564 = vpow.pop %v1563
  %v1565 = vadd.f32 %v1564, 1.0
  %v1566 = vrcp.pop %v1565
  %v1567 = vmul.f32 1.0, %v1566
  %v1568 = vxor.u32 %v1559, 2147483648
  %v1569 = vmul.f32 %v1568, 1.442695
  %v1570 = vpow.pop %v1569
  %v1571 = vadd.f32 %v1570, 1.0
  %v1572 = vrcp.pop %v1571
  %v1573 = vmul.f32 1.0, %v1572
  %v1574 = vtanh.pop %v1560
  %v1575 = vxor.u32 %v1561, 2147483648
  %v1576 = vmul.f32 %v1575, 1.442695
  %v1577 = vpow.pop %v1576
  %v1578 = vadd.f32 %v1577, 1.0
  %v1579 = vrcp.pop %v1578
  %v1580 = vmul.f32 1.0, %v1579
  %v1581 = vmul.f32 %v1573, %v461
  %v1582 = vmul.f32 %v1567, %v1574
  %v1583 = vadd.f32 %v1581, %v1582
  %v1584 = vtanh.pop %v1583
  %v1585 = vmul.f32 %v1580, %v1584
  %1586 = vmatprep.subr.mxu0 %v525
  %1587 = vmatpush1.msra.mxu0 %v524
  %1588 = vmatprep.subr.mxu0 %v521
  %1589 = vmatpush1.msra.mxu0 %v520
  %1590 = vmatprep.subr.mxu0 %v517
  %1591 = vmatpush1.msra.mxu0 %v516
  %1592 = vmatprep.subr.mxu0 %v513
  %1593 = vmatpush1.msra.mxu0 %v512
  %1594 = vmatprep.subr.mxu0 %v509
  %1595 = vmatpush1.msra.mxu0 %v508
  %1596 = vmatprep.subr.mxu0 %v505
  %1597 = vmatpush1.msra.mxu0 %v504
  %1598 = vmatprep.subr.mxu0 %v501
  %1599 = vmatpush1.msra.mxu0 %v500
  %1600 = vmatprep.subr.mxu0 %v497
  %1601 = vmatpush1.msra.mxu0 %v496
  %1602 = vmatprep.subr.mxu0 %v493
  %1603 = vmatpush1.msra.mxu0 %v492
  %1604 = vmatprep.subr.mxu0 %v489
  %1605 = vmatpush1.msra.mxu0 %v488
  %1606 = vmatprep.subr.mxu0 %v485
  %1607 = vmatpush1.msra.mxu0 %v484
  %1608 = vmatprep.subr.mxu0 %v481
  %1609 = vmatpush1.msra.mxu0 %v480
  %1610 = vmatprep.subr.mxu0 %v477
  %1611 = vmatpush1.msra.mxu0 %v476
  %1612 = vmatprep.subr.mxu0 %v473
  %1613 = vmatpush1.msra.mxu0 %v472
  %1614 = vmatprep.subr.mxu0 %v469
  %1615 = vmatpush1.msra.mxu0 %v468
  %1616 = vmatprep.subr.mxu0 %v465
  %1617 = vmatpush1.msra.mxu0 %v464
  %1618 = vmatprep.subr.mxu0 %v589
  %1619 = vmatpush2.msra.mxu0 %v588
  %1620 = vmatprep.subr.mxu0 %v585
  %1621 = vmatpush2.msra.mxu0 %v584
  %1622 = vmatprep.subr.mxu0 %v581
  %1623 = vmatpush2.msra.mxu0 %v580
  %1624 = vmatprep.subr.mxu0 %v577
  %1625 = vmatpush2.msra.mxu0 %v576
  %1626 = vmatprep.subr.mxu0 %v573
  %1627 = vmatpush2.msra.mxu0 %v572
  %1628 = vmatprep.subr.mxu0 %v569
  %1629 = vmatpush2.msra.mxu0 %v568
  %1630 = vmatprep.subr.mxu0 %v565
  %1631 = vmatpush2.msra.mxu0 %v564
  %1632 = vmatprep.subr.mxu0 %v561
  %1633 = vmatpush2.msra.mxu0 %v560
  %1634 = vmatprep.subr.mxu0 %v557
  %1635 = vmatpush2.msra.mxu0 %v556
  %1636 = vmatprep.subr.mxu0 %v553
  %1637 = vmatpush2.msra.mxu0 %v552
  %1638 = vmatprep.subr.mxu0 %v549
  %1639 = vmatpush2.msra.mxu0 %v548
  %1640 = vmatprep.subr.mxu0 %v545
  %1641 = vmatpush2.msra.mxu0 %v544
  %1642 = vmatprep.subr.mxu0 %v541
  %1643 = vmatpush2.msra.mxu0 %v540
  %1644 = vmatprep.subr.mxu0 %v537
  %1645 = vmatpush2.msra.mxu0 %v536
  %1646 = vmatprep.subr.mxu0 %v533
  %1647 = vmatpush2.msra.mxu0 %v532
  %1648 = vmatprep.subr.mxu0 %v529
  %1649 = vmatpush2.msra.mxu0 %v528
  %1650 = vmatprep.mubr.f32.mxu0 %v779
  %1651 = vmatmul.mubr.f32.gmra.mxu0 %v1585
  %v1652 = vpop.f32.mrf.mxu0
  %v1653 = vadd.f32 %v597, %v1652
  %v1654 = vpop.f32.mrf.mxu0
  %v1655 = vadd.f32 %v601, %v1654
  %1656 = vdwg.mxu0
  %1657 = vmatprep.subr.mxu0 %v527
  %1658 = vmatpush1.msra.mxu0 %v526
  %1659 = vmatprep.subr.mxu0 %v523
  %1660 = vmatpush1.msra.mxu0 %v522
  %1661 = vmatprep.subr.mxu0 %v519
  %1662 = vmatpush1.msra.mxu0 %v518
  %1663 = vmatprep.subr.mxu0 %v515
  %1664 = vmatpush1.msra.mxu0 %v514
  %1665 = vmatprep.subr.mxu0 %v511
  %1666 = vmatpush1.msra.mxu0 %v510
  %1667 = vmatprep.subr.mxu0 %v507
  %1668 = vmatpush1.msra.mxu0 %v506
  %1669 = vmatprep.subr.mxu0 %v503
  %1670 = vmatpush1.msra.mxu0 %v502
  %1671 = vmatprep.subr.mxu0 %v499
  %1672 = vmatpush1.msra.mxu0 %v498
  %1673 = vmatprep.subr.mxu0 %v495
  %1674 = vmatpush1.msra.mxu0 %v494
  %1675 = vmatprep.subr.mxu0 %v491
  %1676 = vmatpush1.msra.mxu0 %v490
  %1677 = vmatprep.subr.mxu0 %v487
  %1678 = vmatpush1.msra.mxu0 %v486
  %1679 = vmatprep.subr.mxu0 %v483
  %1680 = vmatpush1.msra.mxu0 %v482
  %1681 = vmatprep.subr.mxu0 %v479
  %1682 = vmatpush1.msra.mxu0 %v478
  %1683 = vmatprep.subr.mxu0 %v475
  %1684 = vmatpush1.msra.mxu0 %v474
  %1685 = vmatprep.subr.mxu0 %v471
  %1686 = vmatpush1.msra.mxu0 %v470
  %1687 = vmatprep.subr.mxu0 %v467
  %1688 = vmatpush1.msra.mxu0 %v466
  %1689 = vmatprep.subr.mxu0 %v591
  %1690 = vmatpush2.msra.mxu0 %v590
  %1691 = vmatprep.subr.mxu0 %v587
  %1692 = vmatpush2.msra.mxu0 %v586
  %1693 = vmatprep.subr.mxu0 %v583
  %1694 = vmatpush2.msra.mxu0 %v582
  %1695 = vmatprep.subr.mxu0 %v579
  %1696 = vmatpush2.msra.mxu0 %v578
  %1697 = vmatprep.subr.mxu0 %v575
  %1698 = vmatpush2.msra.mxu0 %v574
  %1699 = vmatprep.subr.mxu0 %v571
  %1700 = vmatpush2.msra.mxu0 %v570
  %1701 = vmatprep.subr.mxu0 %v567
  %1702 = vmatpush2.msra.mxu0 %v566
  %1703 = vmatprep.subr.mxu0 %v563
  %1704 = vmatpush2.msra.mxu0 %v562
  %1705 = vmatprep.subr.mxu0 %v559
  %1706 = vmatpush2.msra.mxu0 %v558
  %1707 = vmatprep.subr.mxu0 %v555
  %1708 = vmatpush2.msra.mxu0 %v554
  %1709 = vmatprep.subr.mxu0 %v551
  %1710 = vmatpush2.msra.mxu0 %v550
  %1711 = vmatprep.subr.mxu0 %v547
  %1712 = vmatpush2.msra.mxu0 %v546
  %1713 = vmatprep.subr.mxu0 %v543
  %1714 = vmatpush2.msra.mxu0 %v542
  %1715 = vmatprep.subr.mxu0 %v539
  %1716 = vmatpush2.msra.mxu0 %v538
  %1717 = vmatprep.subr.mxu0 %v535
  %1718 = vmatpush2.msra.mxu0 %v534
  %1719 = vmatprep.subr.mxu0 %v531
  %1720 = vmatpush2.msra.mxu0 %v530
  %1721 = vmatprep.mubr.f32.mxu0 %v779
  %1722 = vmatmul.mubr.f32.gmra.mxu0 %v1585
  %v1723 = vpop.f32.mrf.mxu0
  %v1724 = vadd.f32 %v605, %v1723
  %v1725 = vpop.f32.mrf.mxu0
  %v1726 = vadd.f32 %v609, %v1725
  %1727 = vdwg.mxu0
  %v1728 = vxor.u32 %v1653, 2147483648
  %v1729 = vmul.f32 %v1728, 1.442695
  %v1730 = vpow.pop %v1729
  %v1731 = vadd.f32 %v1730, 1.0
  %v1732 = vrcp.pop %v1731
  %v1733 = vmul.f32 1.0, %v1732
  %v1734 = vxor.u32 %v1655, 2147483648
  %v1735 = vmul.f32 %v1734, 1.442695
  %v1736 = vpow.pop %v1735
  %v1737 = vadd.f32 %v1736, 1.0
  %v1738 = vrcp.pop %v1737
  %v1739 = vmul.f32 1.0, %v1738
  %v1740 = vtanh.pop %v1724
  %v1741 = vxor.u32 %v1726, 2147483648
  %v1742 = vmul.f32 %v1741, 1.442695
  %v1743 = vpow.pop %v1742
  %v1744 = vadd.f32 %v1743, 1.0
  %v1745 = vrcp.pop %v1744
  %v1746 = vmul.f32 1.0, %v1745
  %v1747 = vmul.f32 %v1739, %v777
  %v1748 = vmul.f32 %v1733, %v1740
  %v1749 = vadd.f32 %v1747, %v1748
  %v1750 = vtanh.pop %v1749
  %v1751 = vmul.f32 %v1746, %v1750
  %1752 = vmatprep.subr.mxu0 %v842
  %1753 = vmatpush1.msra.mxu0 %v841
  %1754 = vmatprep.subr.mxu0 %v838
  %1755 = vmatpush1.msra.mxu0 %v837
  %1756 = vmatprep.subr.mxu0 %v834
  %1757 = vmatpush1.msra.mxu0 %v833
  %1758 = vmatprep.subr.mxu0 %v830
  %1759 = vmatpush1.msra.mxu0 %v829
  %1760 = vmatprep.subr.mxu0 %v826
  %1761 = vmatpush1.msra.mxu0 %v825
  %1762 = vmatprep.subr.mxu0 %v822
  %1763 = vmatpush1.msra.mxu0 %v821
  %1764 = vmatprep.subr.mxu0 %v818
  %1765 = vmatpush1.msra.mxu0 %v817
  %1766 = vmatprep.subr.mxu0 %v814
  %1767 = vmatpush1.msra.mxu0 %v813
  %1768 = vmatprep.subr.mxu0 %v810
  %1769 = vmatpush1.msra.mxu0 %v809
  %1770 = vmatprep.subr.mxu0 %v806
  %1771 = vmatpush1.msra.mxu0 %v805
  %1772 = vmatprep.subr.mxu0 %v802
  %1773 = vmatpush1.msra.mxu0 %v801
  %1774 = vmatprep.subr.mxu0 %v798
  %1775 = vmatpush1.msra.mxu0 %v797
  %1776 = vmatprep.subr.mxu0 %v794
  %1777 = vmatpush1.msra.mxu0 %v793
  %1778 = vmatprep.subr.mxu0 %v790
  %1779 = vmatpush1.msra.mxu0 %v789
  %1780 = vmatprep.subr.mxu0 %v786
  %1781 = vmatpush1.msra.mxu0 %v785
  %1782 = vmatprep.subr.mxu0 %v782
  %1783 = vmatpush1.msra.mxu0 %v781
  %1784 = vmatprep.subr.mxu0 %v906
  %1785 = vmatpush2.msra.mxu0 %v905
  %1786 = vmatprep.subr.mxu0 %v902
  %1787 = vmatpush2.msra.mxu0 %v901
  %1788 = vmatprep.subr.mxu0 %v898
  %1789 = vmatpush2.msra.mxu0 %v897
  %1790 = vmatprep.subr.mxu0 %v894
  %1791 = vmatpush2.msra.mxu0 %v893
  %1792 = vmatprep.subr.mxu0 %v890
  %1793 = vmatpush2.msra.mxu0 %v889
  %1794 = vmatprep.subr.mxu0 %v886
  %1795 = vmatpush2.msra.mxu0 %v885
  %1796 = vmatprep.subr.mxu0 %v882
  %1797 = vmatpush2.msra.mxu0 %v881
  %1798 = vmatprep.subr.mxu0 %v878
  %1799 = vmatpush2.msra.mxu0 %v877
  %1800 = vmatprep.subr.mxu0 %v874
  %1801 = vmatpush2.msra.mxu0 %v873
  %1802 = vmatprep.subr.mxu0 %v870
  %1803 = vmatpush2.msra.mxu0 %v869
  %1804 = vmatprep.subr.mxu0 %v866
  %1805 = vmatpush2.msra.mxu0 %v865
  %1806 = vmatprep.subr.mxu0 %v862
  %1807 = vmatpush2.msra.mxu0 %v861
  %1808 = vmatprep.subr.mxu0 %v858
  %1809 = vmatpush2.msra.mxu0 %v857
  %1810 = vmatprep.subr.mxu0 %v854
  %1811 = vmatpush2.msra.mxu0 %v853
  %1812 = vmatprep.subr.mxu0 %v850
  %1813 = vmatpush2.msra.mxu0 %v849
  %1814 = vmatprep.subr.mxu0 %v846
  %1815 = vmatpush2.msra.mxu0 %v845
  %1816 = vmatprep.mubr.f32.mxu0 %v1097
  %1817 = vmatmul.mubr.f32.gmra.mxu0 %v1751
  %v1818 = vpop.f32.mrf.mxu0
  %v1819 = vadd.f32 %v915, %v1818
  %v1820 = vpop.f32.mrf.mxu0
  %v1821 = vadd.f32 %v919, %v1820
  %1822 = vdwg.mxu0
  %1823 = vmatprep.subr.mxu0 %v844
  %1824 = vmatpush1.msra.mxu0 %v843
  %1825 = vmatprep.subr.mxu0 %v840
  %1826 = vmatpush1.msra.mxu0 %v839
  %1827 = vmatprep.subr.mxu0 %v836
  %1828 = vmatpush1.msra.mxu0 %v835
  %1829 = vmatprep.subr.mxu0 %v832
  %1830 = vmatpush1.msra.mxu0 %v831
  %1831 = vmatprep.subr.mxu0 %v828
  %1832 = vmatpush1.msra.mxu0 %v827
  %1833 = vmatprep.subr.mxu0 %v824
  %1834 = vmatpush1.msra.mxu0 %v823
  %1835 = vmatprep.subr.mxu0 %v820
  %1836 = vmatpush1.msra.mxu0 %v819
  %1837 = vmatprep.subr.mxu0 %v816
  %1838 = vmatpush1.msra.mxu0 %v815
  %1839 = vmatprep.subr.mxu0 %v812
  %1840 = vmatpush1.msra.mxu0 %v811
  %1841 = vmatprep.subr.mxu0 %v808
  %1842 = vmatpush1.msra.mxu0 %v807
  %1843 = vmatprep.subr.mxu0 %v804
  %1844 = vmatpush1.msra.mxu0 %v803
  %1845 = vmatprep.subr.mxu0 %v800
  %1846 = vmatpush1.msra.mxu0 %v799
  %1847 = vmatprep.subr.mxu0 %v796
  %1848 = vmatpush1.msra.mxu0 %v795
  %1849 = vmatprep.subr.mxu0 %v792
  %1850 = vmatpush1.msra.mxu0 %v791
  %1851 = vmatprep.subr.mxu0 %v788
  %1852 = vmatpush1.msra.mxu0 %v787
  %1853 = vmatprep.subr.mxu0 %v784
  %1854 = vmatpush1.msra.mxu0 %v783
  %1855 = vmatprep.subr.mxu0 %v908
  %1856 = vmatpush2.msra.mxu0 %v907
  %1857 = vmatprep.subr.mxu0 %v904
  %1858 = vmatpush2.msra.mxu0 %v903
  %1859 = vmatprep.subr.mxu0 %v900
  %1860 = vmatpush2.msra.mxu0 %v899
  %1861 = vmatprep.subr.mxu0 %v896
  %1862 = vmatpush2.msra.mxu0 %v895
  %1863 = vmatprep.subr.mxu0 %v892
  %1864 = vmatpush2.msra.mxu0 %v891
  %1865 = vmatprep.subr.mxu0 %v888
  %1866 = vmatpush2.msra.mxu0 %v887
  %1867 = vmatprep.subr.mxu0 %v884
  %1868 = vmatpush2.msra.mxu0 %v883
  %1869 = vmatprep.subr.mxu0 %v880
  %1870 = vmatpush2.msra.mxu0 %v879
  %1871 = vmatprep.subr.mxu0 %v876
  %1872 = vmatpush2.msra.mxu0 %v875
  %1873 = vmatprep.subr.mxu0 %v872
  %1874 = vmatpush2.msra.mxu0 %v871
  %1875 = vmatprep.subr.mxu0 %v868
  %1876 = vmatpush2.msra.mxu0 %v867
  %1877 = vmatprep.subr.mxu0 %v864
  %1878 = vmatpush2.msra.mxu0 %v863
  %1879 = vmatprep.subr.mxu0 %v860
  %1880 = vmatpush2.msra.mxu0 %v859
  %1881 = vmatprep.subr.mxu0 %v856
  %1882 = vmatpush2.msra.mxu0 %v855
  %1883 = vmatprep.subr.mxu0 %v852
  %1884 = vmatpush2.msra.mxu0 %v851
  %1885 = vmatprep.subr.mxu0 %v848
  %1886 = vmatpush2.msra.mxu0 %v847
  %1887 = vmatprep.mubr.f32.mxu0 %v1097
  %1888 = vmatmul.mubr.f32.gmra.mxu0 %v1751
  %v1889 = vpop.f32.mrf.mxu0
  %v1890 = vadd.f32 %v923, %v1889
  %v1891 = vpop.f32.mrf.mxu0
  %v1892 = vadd.f32 %v927, %v1891
  %1893 = vdwg.mxu0
  %v1894 = vxor.u32 %v1819, 2147483648
  %v1895 = vmul.f32 %v1894, 1.442695
  %v1896 = vpow.pop %v1895
  %v1897 = vadd.f32 %v1896, 1.0
  %v1898 = vrcp.pop %v1897
  %v1899 = vmul.f32 1.0, %v1898
  %v1900 = vxor.u32 %v1821, 2147483648
  %v1901 = vmul.f32 %v1900, 1.442695
  %v1902 = vpow.pop %v1901
  %v1903 = vadd.f32 %v1902, 1.0
  %v1904 = vrcp.pop %v1903
  %v1905 = vmul.f32 1.0, %v1904
  %v1906 = vtanh.pop %v1890
  %v1907 = vxor.u32 %v1892, 2147483648
  %v1908 = vmul.f32 %v1907, 1.442695
  %v1909 = vpow.pop %v1908
  %v1910 = vadd.f32 %v1909, 1.0
  %v1911 = vrcp.pop %v1910
  %v1912 = vmul.f32 1.0, %v1911
  %v1913 = vmul.f32 %v1905, %v1095
  %v1914 = vmul.f32 %v1899, %v1906
  %v1915 = vadd.f32 %v1913, %v1914
  %v1916 = vtanh.pop %v1915
  %v1917 = vmul.f32 %v1912, %v1916
  %1918 = vmatprep.subr.mxu0 %v1160
  %1919 = vmatpush1.msra.mxu0 %v1159
  %1920 = vmatprep.subr.mxu0 %v1156
  %1921 = vmatpush1.msra.mxu0 %v1155
  %1922 = vmatprep.subr.mxu0 %v1152
  %1923 = vmatpush1.msra.mxu0 %v1151
  %1924 = vmatprep.subr.mxu0 %v1148
  %1925 = vmatpush1.msra.mxu0 %v1147
  %1926 = vmatprep.subr.mxu0 %v1144
  %1927 = vmatpush1.msra.mxu0 %v1143
  %1928 = vmatprep.subr.mxu0 %v1140
  %1929 = vmatpush1.msra.mxu0 %v1139
  %1930 = vmatprep.subr.mxu0 %v1136
  %1931 = vmatpush1.msra.mxu0 %v1135
  %1932 = vmatprep.subr.mxu0 %v1132
  %1933 = vmatpush1.msra.mxu0 %v1131
  %1934 = vmatprep.subr.mxu0 %v1128
  %1935 = vmatpush1.msra.mxu0 %v1127
  %1936 = vmatprep.subr.mxu0 %v1124
  %1937 = vmatpush1.msra.mxu0 %v1123
  %1938 = vmatprep.subr.mxu0 %v1120
  %1939 = vmatpush1.msra.mxu0 %v1119
  %1940 = vmatprep.subr.mxu0 %v1116
  %1941 = vmatpush1.msra.mxu0 %v1115
  %1942 = vmatprep.subr.mxu0 %v1112
  %1943 = vmatpush1.msra.mxu0 %v1111
  %1944 = vmatprep.subr.mxu0 %v1108
  %1945 = vmatpush1.msra.mxu0 %v1107
  %1946 = vmatprep.subr.mxu0 %v1104
  %1947 = vmatpush1.msra.mxu0 %v1103
  %1948 = vmatprep.subr.mxu0 %v1100
  %1949 = vmatpush1.msra.mxu0 %v1099
  %1950 = vmatprep.subr.mxu0 %v1224
  %1951 = vmatpush2.msra.mxu0 %v1223
  %1952 = vmatprep.subr.mxu0 %v1220
  %1953 = vmatpush2.msra.mxu0 %v1219
  %1954 = vmatprep.subr.mxu0 %v1216
  %1955 = vmatpush2.msra.mxu0 %v1215
  %1956 = vmatprep.subr.mxu0 %v1212
  %1957 = vmatpush2.msra.mxu0 %v1211
  %1958 = vmatprep.subr.mxu0 %v1208
  %1959 = vmatpush2.msra.mxu0 %v1207
  %1960 = vmatprep.subr.mxu0 %v1204
  %1961 = vmatpush2.msra.mxu0 %v1203
  %1962 = vmatprep.subr.mxu0 %v1200
  %1963 = vmatpush2.msra.mxu0 %v1199
  %1964 = vmatprep.subr.mxu0 %v1196
  %1965 = vmatpush2.msra.mxu0 %v1195
  %1966 = vmatprep.subr.mxu0 %v1192
  %1967 = vmatpush2.msra.mxu0 %v1191
  %1968 = vmatprep.subr.mxu0 %v1188
  %1969 = vmatpush2.msra.mxu0 %v1187
  %1970 = vmatprep.subr.mxu0 %v1184
  %1971 = vmatpush2.msra.mxu0 %v1183
  %1972 = vmatprep.subr.mxu0 %v1180
  %1973 = vmatpush2.msra.mxu0 %v1179
  %1974 = vmatprep.subr.mxu0 %v1176
  %1975 = vmatpush2.msra.mxu0 %v1175
  %1976 = vmatprep.subr.mxu0 %v1172
  %1977 = vmatpush2.msra.mxu0 %v1171
  %1978 = vmatprep.subr.mxu0 %v1168
  %1979 = vmatpush2.msra.mxu0 %v1167
  %1980 = vmatprep.subr.mxu0 %v1164
  %1981 = vmatpush2.msra.mxu0 %v1163
  %1982 = vmatprep.mubr.f32.mxu0 %v1415
  %1983 = vmatmul.mubr.f32.gmra.mxu0 %v1917
  %v1984 = vpop.f32.mrf.mxu0
  %v1985 = vadd.f32 %v1233, %v1984
  %v1986 = vpop.f32.mrf.mxu0
  %v1987 = vadd.f32 %v1237, %v1986
  %1988 = vdwg.mxu0
  %1989 = vmatprep.subr.mxu0 %v1162
  %1990 = vmatpush1.msra.mxu0 %v1161
  %1991 = vmatprep.subr.mxu0 %v1158
  %1992 = vmatpush1.msra.mxu0 %v1157
  %1993 = vmatprep.subr.mxu0 %v1154
  %1994 = vmatpush1.msra.mxu0 %v1153
  %1995 = vmatprep.subr.mxu0 %v1150
  %1996 = vmatpush1.msra.mxu0 %v1149
  %1997 = vmatprep.subr.mxu0 %v1146
  %1998 = vmatpush1.msra.mxu0 %v1145
  %1999 = vmatprep.subr.mxu0 %v1142
  %2000 = vmatpush1.msra.mxu0 %v1141
  %2001 = vmatprep.subr.mxu0 %v1138
  %2002 = vmatpush1.msra.mxu0 %v1137
  %2003 = vmatprep.subr.mxu0 %v1134
  %2004 = vmatpush1.msra.mxu0 %v1133
  %2005 = vmatprep.subr.mxu0 %v1130
  %2006 = vmatpush1.msra.mxu0 %v1129
  %2007 = vmatprep.subr.mxu0 %v1126
  %2008 = vmatpush1.msra.mxu0 %v1125
  %2009 = vmatprep.subr.mxu0 %v1122
  %2010 = vmatpush1.msra.mxu0 %v1121
  %2011 = vmatprep.subr.mxu0 %v1118
  %2012 = vmatpush1.msra.mxu0 %v1117
  %2013 = vmatprep.subr.mxu0 %v1114
  %2014 = vmatpush1.msra.mxu0 %v1113
  %2015 = vmatprep.subr.mxu0 %v1110
  %2016 = vmatpush1.msra.mxu0 %v1109
  %2017 = vmatprep.subr.mxu0 %v1106
  %2018 = vmatpush1.msra.mxu0 %v1105
  %2019 = vmatprep.subr.mxu0 %v1102
  %2020 = vmatpush1.msra.mxu0 %v1101
  %2021 = vmatprep.subr.mxu0 %v1226
  %2022 = vmatpush2.msra.mxu0 %v1225
  %2023 = vmatprep.subr.mxu0 %v1222
  %2024 = vmatpush2.msra.mxu0 %v1221
  %2025 = vmatprep.subr.mxu0 %v1218
  %2026 = vmatpush2.msra.mxu0 %v1217
  %2027 = vmatprep.subr.mxu0 %v1214
  %2028 = vmatpush2.msra.mxu0 %v1213
  %2029 = vmatprep.subr.mxu0 %v1210
  %2030 = vmatpush2.msra.mxu0 %v1209
  %2031 = vmatprep.subr.mxu0 %v1206
  %2032 = vmatpush2.msra.mxu0 %v1205
  %2033 = vmatprep.subr.mxu0 %v1202
  %2034 = vmatpush2.msra.mxu0 %v1201
  %2035 = vmatprep.subr.mxu0 %v1198
  %2036 = vmatpush2.msra.mxu0 %v1197
  %2037 = vmatprep.subr.mxu0 %v1194
  %2038 = vmatpush2.msra.mxu0 %v1193
  %2039 = vmatprep.subr.mxu0 %v1190
  %2040 = vmatpush2.msra.mxu0 %v1189
  %2041 = vmatprep.subr.mxu0 %v1186
  %2042 = vmatpush2.msra.mxu0 %v1185
  %2043 = vmatprep.subr.mxu0 %v1182
  %2044 = vmatpush2.msra.mxu0 %v1181
  %2045 = vmatprep.subr.mxu0 %v1178
  %2046 = vmatpush2.msra.mxu0 %v1177
  %2047 = vmatprep.subr.mxu0 %v1174
  %2048 = vmatpush2.msra.mxu0 %v1173
  %2049 = vmatprep.subr.mxu0 %v1170
  %2050 = vmatpush2.msra.mxu0 %v1169
  %2051 = vmatprep.subr.mxu0 %v1166
  %2052 = vmatpush2.msra.mxu0 %v1165
  %2053 = vmatprep.mubr.f32.mxu0 %v1415
  %2054 = vmatmul.mubr.f32.gmra.mxu0 %v1917
  %v2055 = vpop.f32.mrf.mxu0
  %v2056 = vadd.f32 %v1241, %v2055
  %v2057 = vpop.f32.mrf.mxu0
  %v2058 = vadd.f32 %v1245, %v2057
  %2059 = vdwg.mxu0
  %v2060 = vxor.u32 %v1985, 2147483648
  %v2061 = vmul.f32 %v2060, 1.442695
  %v2062 = vpow.pop %v2061
  %v2063 = vadd.f32 %v2062, 1.0
  %v2064 = vrcp.pop %v2063
  %v2065 = vmul.f32 1.0, %v2064
  %v2066 = vxor.u32 %v1987, 2147483648
  %v2067 = vmul.f32 %v2066, 1.442695
  %v2068 = vpow.pop %v2067
  %v2069 = vadd.f32 %v2068, 1.0
  %v2070 = vrcp.pop %v2069
  %v2071 = vmul.f32 1.0, %v2070
  %v2072 = vtanh.pop %v2056
  %v2073 = vxor.u32 %v2058, 2147483648
  %v2074 = vmul.f32 %v2073, 1.442695
  %v2075 = vpow.pop %v2074
  %v2076 = vadd.f32 %v2075, 1.0
  %v2077 = vrcp.pop %v2076
  %v2078 = vmul.f32 1.0, %v2077
  %v2079 = vmul.f32 %v2071, %v1413
  %v2080 = vmul.f32 %v2065, %v2072
  %v2081 = vadd.f32 %v2079, %v2080
  %v2082 = vtanh.pop %v2081
  %v2083 = vmul.f32 %v2078, %v2082
  %2084 = vmatprep.subr.mxu0 %v291
  %2085 = vmatpush1.msra.mxu0 %v290
  %2086 = vmatprep.subr.mxu0 %v287
  %2087 = vmatpush1.msra.mxu0 %v286
  %2088 = vmatprep.subr.mxu0 %v283
  %2089 = vmatpush1.msra.mxu0 %v282
  %2090 = vmatprep.subr.mxu0 %v279
  %2091 = vmatpush1.msra.mxu0 %v278
  %2092 = vmatprep.subr.mxu0 %v275
  %2093 = vmatpush1.msra.mxu0 %v274
  %2094 = vmatprep.subr.mxu0 %v271
  %2095 = vmatpush1.msra.mxu0 %v270
  %2096 = vmatprep.subr.mxu0 %v267
  %2097 = vmatpush1.msra.mxu0 %v266
  %2098 = vmatprep.subr.mxu0 %v263
  %2099 = vmatpush1.msra.mxu0 %v262
  %2100 = vmatprep.subr.mxu0 %v259
  %2101 = vmatpush1.msra.mxu0 %v258
  %2102 = vmatprep.subr.mxu0 %v255
  %2103 = vmatpush1.msra.mxu0 %v254
  %2104 = vmatprep.subr.mxu0 %v251
  %2105 = vmatpush1.msra.mxu0 %v250
  %2106 = vmatprep.subr.mxu0 %v247
  %2107 = vmatpush1.msra.mxu0 %v246
  %2108 = vmatprep.subr.mxu0 %v243
  %2109 = vmatpush1.msra.mxu0 %v242
  %2110 = vmatprep.subr.mxu0 %v239
  %2111 = vmatpush1.msra.mxu0 %v238
  %2112 = vmatprep.subr.mxu0 %v235
  %2113 = vmatpush1.msra.mxu0 %v234
  %2114 = vmatprep.subr.mxu0 %v231
  %2115 = vmatpush1.msra.mxu0 %v230
  %2116 = vmatprep.subr.mxu0 0.0
  %2117 = vmatpush2.msra.mxu0 0.0
  %2118 = vmatprep.subr.mxu0 0.0
  %2119 = vmatpush2.msra.mxu0 0.0
  %2120 = vmatprep.subr.mxu0 0.0
  %2121 = vmatpush2.msra.mxu0 0.0
  %2122 = vmatprep.subr.mxu0 0.0
  %2123 = vmatpush2.msra.mxu0 0.0
  %2124 = vmatprep.subr.mxu0 0.0
  %2125 = vmatpush2.msra.mxu0 0.0
  %2126 = vmatprep.subr.mxu0 0.0
  %2127 = vmatpush2.msra.mxu0 0.0
  %2128 = vmatprep.subr.mxu0 0.0
  %2129 = vmatpush2.msra.mxu0 0.0
  %2130 = vmatprep.subr.mxu0 0.0
  %2131 = vmatpush2.msra.mxu0 0.0
  %2132 = vmatprep.subr.mxu0 0.0
  %2133 = vmatpush2.msra.mxu0 0.0
  %2134 = vmatprep.subr.mxu0 0.0
  %2135 = vmatpush2.msra.mxu0 0.0
  %2136 = vmatprep.subr.mxu0 0.0
  %2137 = vmatpush2.msra.mxu0 0.0
  %2138 = vmatprep.subr.mxu0 0.0
  %2139 = vmatpush2.msra.mxu0 0.0
  %2140 = vmatprep.subr.mxu0 0.0
  %2141 = vmatpush2.msra.mxu0 0.0
  %2142 = vmatprep.subr.mxu0 0.0
  %2143 = vmatpush2.msra.mxu0 0.0
  %2144 = vmatprep.subr.mxu0 0.0
  %2145 = vmatpush2.msra.mxu0 0.0
  %2146 = vmatprep.subr.mxu0 0.0
  %2147 = vmatpush2.msra.mxu0 0.0
  %2148 = vmatprep.mubr.f32.mxu0 0.0
  %2149 = vmatmul.mubr.f32.gmra.mxu0 %v1585
  %v2150 = vpop.f32.mrf.mxu0
  %v2151 = vadd.f32 0.0, %v2150
  %v2152 = vpop.f32.mrf.mxu0
  %v2153 = vadd.f32 0.0, %v2152
  %2154 = vdwg.mxu0
  %2155 = vmatprep.subr.mxu0 %v293
  %2156 = vmatpush1.msra.mxu0 %v292
  %2157 = vmatprep.subr.mxu0 %v289
  %2158 = vmatpush1.msra.mxu0 %v288
  %2159 = vmatprep.subr.mxu0 %v285
  %2160 = vmatpush1.msra.mxu0 %v284
  %2161 = vmatprep.subr.mxu0 %v281
  %2162 = vmatpush1.msra.mxu0 %v280
  %2163 = vmatprep.subr.mxu0 %v277
  %2164 = vmatpush1.msra.mxu0 %v276
  %2165 = vmatprep.subr.mxu0 %v273
  %2166 = vmatpush1.msra.mxu0 %v272
  %2167 = vmatprep.subr.mxu0 %v269
  %2168 = vmatpush1.msra.mxu0 %v268
  %2169 = vmatprep.subr.mxu0 %v265
  %2170 = vmatpush1.msra.mxu0 %v264
  %2171 = vmatprep.subr.mxu0 %v261
  %2172 = vmatpush1.msra.mxu0 %v260
  %2173 = vmatprep.subr.mxu0 %v257
  %2174 = vmatpush1.msra.mxu0 %v256
  %2175 = vmatprep.subr.mxu0 %v253
  %2176 = vmatpush1.msra.mxu0 %v252
  %2177 = vmatprep.subr.mxu0 %v249
  %2178 = vmatpush1.msra.mxu0 %v248
  %2179 = vmatprep.subr.mxu0 %v245
  %2180 = vmatpush1.msra.mxu0 %v244
  %2181 = vmatprep.subr.mxu0 %v241
  %2182 = vmatpush1.msra.mxu0 %v240
  %2183 = vmatprep.subr.mxu0 %v237
  %2184 = vmatpush1.msra.mxu0 %v236
  %2185 = vmatprep.subr.mxu0 %v233
  %2186 = vmatpush1.msra.mxu0 %v232
  %2187 = vmatprep.subr.mxu0 0.0
  %2188 = vmatpush2.msra.mxu0 0.0
  %2189 = vmatprep.subr.mxu0 0.0
  %2190 = vmatpush2.msra.mxu0 0.0
  %2191 = vmatprep.subr.mxu0 0.0
  %2192 = vmatpush2.msra.mxu0 0.0
  %2193 = vmatprep.subr.mxu0 0.0
  %2194 = vmatpush2.msra.mxu0 0.0
  %2195 = vmatprep.subr.mxu0 0.0
  %2196 = vmatpush2.msra.mxu0 0.0
  %2197 = vmatprep.subr.mxu0 0.0
  %2198 = vmatpush2.msra.mxu0 0.0
  %2199 = vmatprep.subr.mxu0 0.0
  %2200 = vmatpush2.msra.mxu0 0.0
  %2201 = vmatprep.subr.mxu0 0.0
  %2202 = vmatpush2.msra.mxu0 0.0
  %2203 = vmatprep.subr.mxu0 0.0
  %2204 = vmatpush2.msra.mxu0 0.0
  %2205 = vmatprep.subr.mxu0 0.0
  %2206 = vmatpush2.msra.mxu0 0.0
  %2207 = vmatprep.subr.mxu0 0.0
  %2208 = vmatpush2.msra.mxu0 0.0
  %2209 = vmatprep.subr.mxu0 0.0
  %2210 = vmatpush2.msra.mxu0 0.0
  %2211 = vmatprep.subr.mxu0 0.0
  %2212 = vmatpush2.msra.mxu0 0.0
  %2213 = vmatprep.subr.mxu0 0.0
  %2214 = vmatpush2.msra.mxu0 0.0
  %2215 = vmatprep.subr.mxu0 0.0
  %2216 = vmatpush2.msra.mxu0 0.0
  %2217 = vmatprep.subr.mxu0 0.0
  %2218 = vmatpush2.msra.mxu0 0.0
  %2219 = vmatprep.mubr.f32.mxu0 0.0
  %2220 = vmatmul.mubr.f32.gmra.mxu0 %v1585
  %v2221 = vpop.f32.mrf.mxu0
  %v2222 = vadd.f32 0.0, %v2221
  %v2223 = vpop.f32.mrf.mxu0
  %v2224 = vadd.f32 0.0, %v2223
  %2225 = vdwg.mxu0
  %v2226 = vadd.f32 %v155, %v2151
  %v2227 = vadd.f32 %v157, %v2153
  %v2228 = vadd.f32 %v226, %v2222
  %v2229 = vadd.f32 %v228, %v2224
  %v2230 = vxor.u32 %v2226, 2147483648
  %v2231 = vmul.f32 %v2230, 1.442695
  %v2232 = vpow.pop %v2231
  %v2233 = vadd.f32 %v2232, 1.0
  %v2234 = vrcp.pop %v2233
  %v2235 = vmul.f32 1.0, %v2234
  %v2236 = vxor.u32 %v2227, 2147483648
  %v2237 = vmul.f32 %v2236, 1.442695
  %v2238 = vpow.pop %v2237
  %v2239 = vadd.f32 %v2238, 1.0
  %v2240 = vrcp.pop %v2239
  %v2241 = vmul.f32 1.0, %v2240
  %v2242 = vtanh.pop %v2228
  %v2243 = vxor.u32 %v2229, 2147483648
  %v2244 = vmul.f32 %v2243, 1.442695
  %v2245 = vpow.pop %v2244
  %v2246 = vadd.f32 %v2245, 1.0
  %v2247 = vrcp.pop %v2246
  %v2248 = vmul.f32 1.0, %v2247
  %v2249 = vmul.f32 %v2241, %v1583
  %v2250 = vmul.f32 %v2235, %v2242
  %v2251 = vadd.f32 %v2249, %v2250
  %v2252 = vtanh.pop %v2251
  %v2253 = vmul.f32 %v2248, %v2252
  %2254 = vmatprep.subr.mxu0 %v525
  %2255 = vmatpush1.msra.mxu0 %v524
  %2256 = vmatprep.subr.mxu0 %v521
  %2257 = vmatpush1.msra.mxu0 %v520
  %2258 = vmatprep.subr.mxu0 %v517
  %2259 = vmatpush1.msra.mxu0 %v516
  %2260 = vmatprep.subr.mxu0 %v513
  %2261 = vmatpush1.msra.mxu0 %v512
  %2262 = vmatprep.subr.mxu0 %v509
  %2263 = vmatpush1.msra.mxu0 %v508
  %2264 = vmatprep.subr.mxu0 %v505
  %2265 = vmatpush1.msra.mxu0 %v504
  %2266 = vmatprep.subr.mxu0 %v501
  %2267 = vmatpush1.msra.mxu0 %v500
  %2268 = vmatprep.subr.mxu0 %v497
  %2269 = vmatpush1.msra.mxu0 %v496
  %2270 = vmatprep.subr.mxu0 %v493
  %2271 = vmatpush1.msra.mxu0 %v492
  %2272 = vmatprep.subr.mxu0 %v489
  %2273 = vmatpush1.msra.mxu0 %v488
  %2274 = vmatprep.subr.mxu0 %v485
  %2275 = vmatpush1.msra.mxu0 %v484
  %2276 = vmatprep.subr.mxu0 %v481
  %2277 = vmatpush1.msra.mxu0 %v480
  %2278 = vmatprep.subr.mxu0 %v477
  %2279 = vmatpush1.msra.mxu0 %v476
  %2280 = vmatprep.subr.mxu0 %v473
  %2281 = vmatpush1.msra.mxu0 %v472
  %2282 = vmatprep.subr.mxu0 %v469
  %2283 = vmatpush1.msra.mxu0 %v468
  %2284 = vmatprep.subr.mxu0 %v465
  %2285 = vmatpush1.msra.mxu0 %v464
  %2286 = vmatprep.subr.mxu0 %v589
  %2287 = vmatpush2.msra.mxu0 %v588
  %2288 = vmatprep.subr.mxu0 %v585
  %2289 = vmatpush2.msra.mxu0 %v584
  %2290 = vmatprep.subr.mxu0 %v581
  %2291 = vmatpush2.msra.mxu0 %v580
  %2292 = vmatprep.subr.mxu0 %v577
  %2293 = vmatpush2.msra.mxu0 %v576
  %2294 = vmatprep.subr.mxu0 %v573
  %2295 = vmatpush2.msra.mxu0 %v572
  %2296 = vmatprep.subr.mxu0 %v569
  %2297 = vmatpush2.msra.mxu0 %v568
  %2298 = vmatprep.subr.mxu0 %v565
  %2299 = vmatpush2.msra.mxu0 %v564
  %2300 = vmatprep.subr.mxu0 %v561
  %2301 = vmatpush2.msra.mxu0 %v560
  %2302 = vmatprep.subr.mxu0 %v557
  %2303 = vmatpush2.msra.mxu0 %v556
  %2304 = vmatprep.subr.mxu0 %v553
  %2305 = vmatpush2.msra.mxu0 %v552
  %2306 = vmatprep.subr.mxu0 %v549
  %2307 = vmatpush2.msra.mxu0 %v548
  %2308 = vmatprep.subr.mxu0 %v545
  %2309 = vmatpush2.msra.mxu0 %v544
  %2310 = vmatprep.subr.mxu0 %v541
  %2311 = vmatpush2.msra.mxu0 %v540
  %2312 = vmatprep.subr.mxu0 %v537
  %2313 = vmatpush2.msra.mxu0 %v536
  %2314 = vmatprep.subr.mxu0 %v533
  %2315 = vmatpush2.msra.mxu0 %v532
  %2316 = vmatprep.subr.mxu0 %v529
  %2317 = vmatpush2.msra.mxu0 %v528
  %2318 = vmatprep.mubr.f32.mxu0 %v1751
  %2319 = vmatmul.mubr.f32.gmra.mxu0 %v2253
  %v2320 = vpop.f32.mrf.mxu0
  %v2321 = vadd.f32 %v597, %v2320
  %v2322 = vpop.f32.mrf.mxu0
  %v2323 = vadd.f32 %v601, %v2322
  %2324 = vdwg.mxu0
  %2325 = vmatprep.subr.mxu0 %v527
  %2326 = vmatpush1.msra.mxu0 %v526
  %2327 = vmatprep.subr.mxu0 %v523
  %2328 = vmatpush1.msra.mxu0 %v522
  %2329 = vmatprep.subr.mxu0 %v519
  %2330 = vmatpush1.msra.mxu0 %v518
  %2331 = vmatprep.subr.mxu0 %v515
  %2332 = vmatpush1.msra.mxu0 %v514
  %2333 = vmatprep.subr.mxu0 %v511
  %2334 = vmatpush1.msra.mxu0 %v510
  %2335 = vmatprep.subr.mxu0 %v507
  %2336 = vmatpush1.msra.mxu0 %v506
  %2337 = vmatprep.subr.mxu0 %v503
  %2338 = vmatpush1.msra.mxu0 %v502
  %2339 = vmatprep.subr.mxu0 %v499
  %2340 = vmatpush1.msra.mxu0 %v498
  %2341 = vmatprep.subr.mxu0 %v495
  %2342 = vmatpush1.msra.mxu0 %v494
  %2343 = vmatprep.subr.mxu0 %v491
  %2344 = vmatpush1.msra.mxu0 %v490
  %2345 = vmatprep.subr.mxu0 %v487
  %2346 = vmatpush1.msra.mxu0 %v486
  %2347 = vmatprep.subr.mxu0 %v483
  %2348 = vmatpush1.msra.mxu0 %v482
  %2349 = vmatprep.subr.mxu0 %v479
  %2350 = vmatpush1.msra.mxu0 %v478
  %2351 = vmatprep.subr.mxu0 %v475
  %2352 = vmatpush1.msra.mxu0 %v474
  %2353 = vmatprep.subr.mxu0 %v471
  %2354 = vmatpush1.msra.mxu0 %v470
  %2355 = vmatprep.subr.mxu0 %v467
  %2356 = vmatpush1.msra.mxu0 %v466
  %2357 = vmatprep.subr.mxu0 %v591
  %2358 = vmatpush2.msra.mxu0 %v590
  %2359 = vmatprep.subr.mxu0 %v587
  %2360 = vmatpush2.msra.mxu0 %v586
  %2361 = vmatprep.subr.mxu0 %v583
  %2362 = vmatpush2.msra.mxu0 %v582
  %2363 = vmatprep.subr.mxu0 %v579
  %2364 = vmatpush2.msra.mxu0 %v578
  %2365 = vmatprep.subr.mxu0 %v575
  %2366 = vmatpush2.msra.mxu0 %v574
  %2367 = vmatprep.subr.mxu0 %v571
  %2368 = vmatpush2.msra.mxu0 %v570
  %2369 = vmatprep.subr.mxu0 %v567
  %2370 = vmatpush2.msra.mxu0 %v566
  %2371 = vmatprep.subr.mxu0 %v563
  %2372 = vmatpush2.msra.mxu0 %v562
  %2373 = vmatprep.subr.mxu0 %v559
  %2374 = vmatpush2.msra.mxu0 %v558
  %2375 = vmatprep.subr.mxu0 %v555
  %2376 = vmatpush2.msra.mxu0 %v554
  %2377 = vmatprep.subr.mxu0 %v551
  %2378 = vmatpush2.msra.mxu0 %v550
  %2379 = vmatprep.subr.mxu0 %v547
  %2380 = vmatpush2.msra.mxu0 %v546
  %2381 = vmatprep.subr.mxu0 %v543
  %2382 = vmatpush2.msra.mxu0 %v542
  %2383 = vmatprep.subr.mxu0 %v539
  %2384 = vmatpush2.msra.mxu0 %v538
  %2385 = vmatprep.subr.mxu0 %v535
  %2386 = vmatpush2.msra.mxu0 %v534
  %2387 = vmatprep.subr.mxu0 %v531
  %2388 = vmatpush2.msra.mxu0 %v530
  %2389 = vmatprep.mubr.f32.mxu0 %v1751
  %2390 = vmatmul.mubr.f32.gmra.mxu0 %v2253
  %v2391 = vpop.f32.mrf.mxu0
  %v2392 = vadd.f32 %v605, %v2391
  %v2393 = vpop.f32.mrf.mxu0
  %v2394 = vadd.f32 %v609, %v2393
  %2395 = vdwg.mxu0
  %v2396 = vxor.u32 %v2321, 2147483648
  %v2397 = vmul.f32 %v2396, 1.442695
  %v2398 = vpow.pop %v2397
  %v2399 = vadd.f32 %v2398, 1.0
  %v2400 = vrcp.pop %v2399
  %v2401 = vmul.f32 1.0, %v2400
  %v2402 = vxor.u32 %v2323, 2147483648
  %v2403 = vmul.f32 %v2402, 1.442695
  %v2404 = vpow.pop %v2403
  %v2405 = vadd.f32 %v2404, 1.0
  %v2406 = vrcp.pop %v2405
  %v2407 = vmul.f32 1.0, %v2406
  %v2408 = vtanh.pop %v2392
  %v2409 = vxor.u32 %v2394, 2147483648
  %v2410 = vmul.f32 %v2409, 1.442695
  %v2411 = vpow.pop %v2410
  %v2412 = vadd.f32 %v2411, 1.0
  %v2413 = vrcp.pop %v2412
  %v2414 = vmul.f32 1.0, %v2413
  %v2415 = vmul.f32 %v2407, %v1749
  %v2416 = vmul.f32 %v2401, %v2408
  %v2417 = vadd.f32 %v2415, %v2416
  %v2418 = vtanh.pop %v2417
  %v2419 = vmul.f32 %v2414, %v2418
  %2420 = vmatprep.subr.mxu0 %v842
  %2421 = vmatpush1.msra.mxu0 %v841
  %2422 = vmatprep.subr.mxu0 %v838
  %2423 = vmatpush1.msra.mxu0 %v837
  %2424 = vmatprep.subr.mxu0 %v834
  %2425 = vmatpush1.msra.mxu0 %v833
  %2426 = vmatprep.subr.mxu0 %v830
  %2427 = vmatpush1.msra.mxu0 %v829
  %2428 = vmatprep.subr.mxu0 %v826
  %2429 = vmatpush1.msra.mxu0 %v825
  %2430 = vmatprep.subr.mxu0 %v822
  %2431 = vmatpush1.msra.mxu0 %v821
  %2432 = vmatprep.subr.mxu0 %v818
  %2433 = vmatpush1.msra.mxu0 %v817
  %2434 = vmatprep.subr.mxu0 %v814
  %2435 = vmatpush1.msra.mxu0 %v813
  %2436 = vmatprep.subr.mxu0 %v810
  %2437 = vmatpush1.msra.mxu0 %v809
  %2438 = vmatprep.subr.mxu0 %v806
  %2439 = vmatpush1.msra.mxu0 %v805
  %2440 = vmatprep.subr.mxu0 %v802
  %2441 = vmatpush1.msra.mxu0 %v801
  %2442 = vmatprep.subr.mxu0 %v798
  %2443 = vmatpush1.msra.mxu0 %v797
  %2444 = vmatprep.subr.mxu0 %v794
  %2445 = vmatpush1.msra.mxu0 %v793
  %2446 = vmatprep.subr.mxu0 %v790
  %2447 = vmatpush1.msra.mxu0 %v789
  %2448 = vmatprep.subr.mxu0 %v786
  %2449 = vmatpush1.msra.mxu0 %v785
  %2450 = vmatprep.subr.mxu0 %v782
  %2451 = vmatpush1.msra.mxu0 %v781
  %2452 = vmatprep.subr.mxu0 %v906
  %2453 = vmatpush2.msra.mxu0 %v905
  %2454 = vmatprep.subr.mxu0 %v902
  %2455 = vmatpush2.msra.mxu0 %v901
  %2456 = vmatprep.subr.mxu0 %v898
  %2457 = vmatpush2.msra.mxu0 %v897
  %2458 = vmatprep.subr.mxu0 %v894
  %2459 = vmatpush2.msra.mxu0 %v893
  %2460 = vmatprep.subr.mxu0 %v890
  %2461 = vmatpush2.msra.mxu0 %v889
  %2462 = vmatprep.subr.mxu0 %v886
  %2463 = vmatpush2.msra.mxu0 %v885
  %2464 = vmatprep.subr.mxu0 %v882
  %2465 = vmatpush2.msra.mxu0 %v881
  %2466 = vmatprep.subr.mxu0 %v878
  %2467 = vmatpush2.msra.mxu0 %v877
  %2468 = vmatprep.subr.mxu0 %v874
  %2469 = vmatpush2.msra.mxu0 %v873
  %2470 = vmatprep.subr.mxu0 %v870
  %2471 = vmatpush2.msra.mxu0 %v869
  %2472 = vmatprep.subr.mxu0 %v866
  %2473 = vmatpush2.msra.mxu0 %v865
  %2474 = vmatprep.subr.mxu0 %v862
  %2475 = vmatpush2.msra.mxu0 %v861
  %2476 = vmatprep.subr.mxu0 %v858
  %2477 = vmatpush2.msra.mxu0 %v857
  %2478 = vmatprep.subr.mxu0 %v854
  %2479 = vmatpush2.msra.mxu0 %v853
  %2480 = vmatprep.subr.mxu0 %v850
  %2481 = vmatpush2.msra.mxu0 %v849
  %2482 = vmatprep.subr.mxu0 %v846
  %2483 = vmatpush2.msra.mxu0 %v845
  %2484 = vmatprep.mubr.f32.mxu0 %v1917
  %2485 = vmatmul.mubr.f32.gmra.mxu0 %v2419
  %v2486 = vpop.f32.mrf.mxu0
  %v2487 = vadd.f32 %v915, %v2486
  %v2488 = vpop.f32.mrf.mxu0
  %v2489 = vadd.f32 %v919, %v2488
  %2490 = vdwg.mxu0
  %2491 = vmatprep.subr.mxu0 %v844
  %2492 = vmatpush1.msra.mxu0 %v843
  %2493 = vmatprep.subr.mxu0 %v840
  %2494 = vmatpush1.msra.mxu0 %v839
  %2495 = vmatprep.subr.mxu0 %v836
  %2496 = vmatpush1.msra.mxu0 %v835
  %2497 = vmatprep.subr.mxu0 %v832
  %2498 = vmatpush1.msra.mxu0 %v831
  %2499 = vmatprep.subr.mxu0 %v828
  %2500 = vmatpush1.msra.mxu0 %v827
  %2501 = vmatprep.subr.mxu0 %v824
  %2502 = vmatpush1.msra.mxu0 %v823
  %2503 = vmatprep.subr.mxu0 %v820
  %2504 = vmatpush1.msra.mxu0 %v819
  %2505 = vmatprep.subr.mxu0 %v816
  %2506 = vmatpush1.msra.mxu0 %v815
  %2507 = vmatprep.subr.mxu0 %v812
  %2508 = vmatpush1.msra.mxu0 %v811
  %2509 = vmatprep.subr.mxu0 %v808
  %2510 = vmatpush1.msra.mxu0 %v807
  %2511 = vmatprep.subr.mxu0 %v804
  %2512 = vmatpush1.msra.mxu0 %v803
  %2513 = vmatprep.subr.mxu0 %v800
  %2514 = vmatpush1.msra.mxu0 %v799
  %2515 = vmatprep.subr.mxu0 %v796
  %2516 = vmatpush1.msra.mxu0 %v795
  %2517 = vmatprep.subr.mxu0 %v792
  %2518 = vmatpush1.msra.mxu0 %v791
  %2519 = vmatprep.subr.mxu0 %v788
  %2520 = vmatpush1.msra.mxu0 %v787
  %2521 = vmatprep.subr.mxu0 %v784
  %2522 = vmatpush1.msra.mxu0 %v783
  %2523 = vmatprep.subr.mxu0 %v908
  %2524 = vmatpush2.msra.mxu0 %v907
  %2525 = vmatprep.subr.mxu0 %v904
  %2526 = vmatpush2.msra.mxu0 %v903
  %2527 = vmatprep.subr.mxu0 %v900
  %2528 = vmatpush2.msra.mxu0 %v899
  %2529 = vmatprep.subr.mxu0 %v896
  %2530 = vmatpush2.msra.mxu0 %v895
  %2531 = vmatprep.subr.mxu0 %v892
  %2532 = vmatpush2.msra.mxu0 %v891
  %2533 = vmatprep.subr.mxu0 %v888
  %2534 = vmatpush2.msra.mxu0 %v887
  %2535 = vmatprep.subr.mxu0 %v884
  %2536 = vmatpush2.msra.mxu0 %v883
  %2537 = vmatprep.subr.mxu0 %v880
  %2538 = vmatpush2.msra.mxu0 %v879
  %2539 = vmatprep.subr.mxu0 %v876
  %2540 = vmatpush2.msra.mxu0 %v875
  %2541 = vmatprep.subr.mxu0 %v872
  %2542 = vmatpush2.msra.mxu0 %v871
  %2543 = vmatprep.subr.mxu0 %v868
  %2544 = vmatpush2.msra.mxu0 %v867
  %2545 = vmatprep.subr.mxu0 %v864
  %2546 = vmatpush2.msra.mxu0 %v863
  %2547 = vmatprep.subr.mxu0 %v860
  %2548 = vmatpush2.msra.mxu0 %v859
  %2549 = vmatprep.subr.mxu0 %v856
  %2550 = vmatpush2.msra.mxu0 %v855
  %2551 = vmatprep.subr.mxu0 %v852
  %2552 = vmatpush2.msra.mxu0 %v851
  %2553 = vmatprep.subr.mxu0 %v848
  %2554 = vmatpush2.msra.mxu0 %v847
  %2555 = vmatprep.mubr.f32.mxu0 %v1917
  %2556 = vmatmul.mubr.f32.gmra.mxu0 %v2419
  %v2557 = vpop.f32.mrf.mxu0
  %v2558 = vadd.f32 %v923, %v2557
  %v2559 = vpop.f32.mrf.mxu0
  %v2560 = vadd.f32 %v927, %v2559
  %2561 = vdwg.mxu0
  %v2562 = vxor.u32 %v2487, 2147483648
  %v2563 = vmul.f32 %v2562, 1.442695
  %v2564 = vpow.pop %v2563
  %v2565 = vadd.f32 %v2564, 1.0
  %v2566 = vrcp.pop %v2565
  %v2567 = vmul.f32 1.0, %v2566
  %v2568 = vxor.u32 %v2489, 2147483648
  %v2569 = vmul.f32 %v2568, 1.442695
  %v2570 = vpow.pop %v2569
  %v2571 = vadd.f32 %v2570, 1.0
  %v2572 = vrcp.pop %v2571
  %v2573 = vmul.f32 1.0, %v2572
  %v2574 = vtanh.pop %v2558
  %v2575 = vxor.u32 %v2560, 2147483648
  %v2576 = vmul.f32 %v2575, 1.442695
  %v2577 = vpow.pop %v2576
  %v2578 = vadd.f32 %v2577, 1.0
  %v2579 = vrcp.pop %v2578
  %v2580 = vmul.f32 1.0, %v2579
  %v2581 = vmul.f32 %v2573, %v1915
  %v2582 = vmul.f32 %v2567, %v2574
  %v2583 = vadd.f32 %v2581, %v2582
  %v2584 = vtanh.pop %v2583
  %v2585 = vmul.f32 %v2580, %v2584
  %2586 = vmatprep.subr.mxu0 %v1160
  %2587 = vmatpush1.msra.mxu0 %v1159
  %2588 = vmatprep.subr.mxu0 %v1156
  %2589 = vmatpush1.msra.mxu0 %v1155
  %2590 = vmatprep.subr.mxu0 %v1152
  %2591 = vmatpush1.msra.mxu0 %v1151
  %2592 = vmatprep.subr.mxu0 %v1148
  %2593 = vmatpush1.msra.mxu0 %v1147
  %2594 = vmatprep.subr.mxu0 %v1144
  %2595 = vmatpush1.msra.mxu0 %v1143
  %2596 = vmatprep.subr.mxu0 %v1140
  %2597 = vmatpush1.msra.mxu0 %v1139
  %2598 = vmatprep.subr.mxu0 %v1136
  %2599 = vmatpush1.msra.mxu0 %v1135
  %2600 = vmatprep.subr.mxu0 %v1132
  %2601 = vmatpush1.msra.mxu0 %v1131
  %2602 = vmatprep.subr.mxu0 %v1128
  %2603 = vmatpush1.msra.mxu0 %v1127
  %2604 = vmatprep.subr.mxu0 %v1124
  %2605 = vmatpush1.msra.mxu0 %v1123
  %2606 = vmatprep.subr.mxu0 %v1120
  %2607 = vmatpush1.msra.mxu0 %v1119
  %2608 = vmatprep.subr.mxu0 %v1116
  %2609 = vmatpush1.msra.mxu0 %v1115
  %2610 = vmatprep.subr.mxu0 %v1112
  %2611 = vmatpush1.msra.mxu0 %v1111
  %2612 = vmatprep.subr.mxu0 %v1108
  %2613 = vmatpush1.msra.mxu0 %v1107
  %2614 = vmatprep.subr.mxu0 %v1104
  %2615 = vmatpush1.msra.mxu0 %v1103
  %2616 = vmatprep.subr.mxu0 %v1100
  %2617 = vmatpush1.msra.mxu0 %v1099
  %2618 = vmatprep.subr.mxu0 %v1224
  %2619 = vmatpush2.msra.mxu0 %v1223
  %2620 = vmatprep.subr.mxu0 %v1220
  %2621 = vmatpush2.msra.mxu0 %v1219
  %2622 = vmatprep.subr.mxu0 %v1216
  %2623 = vmatpush2.msra.mxu0 %v1215
  %2624 = vmatprep.subr.mxu0 %v1212
  %2625 = vmatpush2.msra.mxu0 %v1211
  %2626 = vmatprep.subr.mxu0 %v1208
  %2627 = vmatpush2.msra.mxu0 %v1207
  %2628 = vmatprep.subr.mxu0 %v1204
  %2629 = vmatpush2.msra.mxu0 %v1203
  %2630 = vmatprep.subr.mxu0 %v1200
  %2631 = vmatpush2.msra.mxu0 %v1199
  %2632 = vmatprep.subr.mxu0 %v1196
  %2633 = vmatpush2.msra.mxu0 %v1195
  %2634 = vmatprep.subr.mxu0 %v1192
  %2635 = vmatpush2.msra.mxu0 %v1191
  %2636 = vmatprep.subr.mxu0 %v1188
  %2637 = vmatpush2.msra.mxu0 %v1187
  %2638 = vmatprep.subr.mxu0 %v1184
  %2639 = vmatpush2.msra.mxu0 %v1183
  %2640 = vmatprep.subr.mxu0 %v1180
  %2641 = vmatpush2.msra.mxu0 %v1179
  %2642 = vmatprep.subr.mxu0 %v1176
  %2643 = vmatpush2.msra.mxu0 %v1175
  %2644 = vmatprep.subr.mxu0 %v1172
  %2645 = vmatpush2.msra.mxu0 %v1171
  %2646 = vmatprep.subr.mxu0 %v1168
  %2647 = vmatpush2.msra.mxu0 %v1167
  %2648 = vmatprep.subr.mxu0 %v1164
  %2649 = vmatpush2.msra.mxu0 %v1163
  %2650 = vmatprep.mubr.f32.mxu0 %v2083
  %2651 = vmatmul.mubr.f32.gmra.mxu0 %v2585
  %v2652 = vpop.f32.mrf.mxu0
  %v2653 = vadd.f32 %v1233, %v2652
  %v2654 = vpop.f32.mrf.mxu0
  %v2655 = vadd.f32 %v1237, %v2654
  %2656 = vdwg.mxu0
  %2657 = vmatprep.subr.mxu0 %v1162
  %2658 = vmatpush1.msra.mxu0 %v1161
  %2659 = vmatprep.subr.mxu0 %v1158
  %2660 = vmatpush1.msra.mxu0 %v1157
  %2661 = vmatprep.subr.mxu0 %v1154
  %2662 = vmatpush1.msra.mxu0 %v1153
  %2663 = vmatprep.subr.mxu0 %v1150
  %2664 = vmatpush1.msra.mxu0 %v1149
  %2665 = vmatprep.subr.mxu0 %v1146
  %2666 = vmatpush1.msra.mxu0 %v1145
  %2667 = vmatprep.subr.mxu0 %v1142
  %2668 = vmatpush1.msra.mxu0 %v1141
  %2669 = vmatprep.subr.mxu0 %v1138
  %2670 = vmatpush1.msra.mxu0 %v1137
  %2671 = vmatprep.subr.mxu0 %v1134
  %2672 = vmatpush1.msra.mxu0 %v1133
  %2673 = vmatprep.subr.mxu0 %v1130
  %2674 = vmatpush1.msra.mxu0 %v1129
  %2675 = vmatprep.subr.mxu0 %v1126
  %2676 = vmatpush1.msra.mxu0 %v1125
  %2677 = vmatprep.subr.mxu0 %v1122
  %2678 = vmatpush1.msra.mxu0 %v1121
  %2679 = vmatprep.subr.mxu0 %v1118
  %2680 = vmatpush1.msra.mxu0 %v1117
  %2681 = vmatprep.subr.mxu0 %v1114
  %2682 = vmatpush1.msra.mxu0 %v1113
  %2683 = vmatprep.subr.mxu0 %v1110
  %2684 = vmatpush1.msra.mxu0 %v1109
  %2685 = vmatprep.subr.mxu0 %v1106
  %2686 = vmatpush1.msra.mxu0 %v1105
  %2687 = vmatprep.subr.mxu0 %v1102
  %2688 = vmatpush1.msra.mxu0 %v1101
  %2689 = vmatprep.subr.mxu0 %v1226
  %2690 = vmatpush2.msra.mxu0 %v1225
  %2691 = vmatprep.subr.mxu0 %v1222
  %2692 = vmatpush2.msra.mxu0 %v1221
  %2693 = vmatprep.subr.mxu0 %v1218
  %2694 = vmatpush2.msra.mxu0 %v1217
  %2695 = vmatprep.subr.mxu0 %v1214
  %2696 = vmatpush2.msra.mxu0 %v1213
  %2697 = vmatprep.subr.mxu0 %v1210
  %2698 = vmatpush2.msra.mxu0 %v1209
  %2699 = vmatprep.subr.mxu0 %v1206
  %2700 = vmatpush2.msra.mxu0 %v1205
  %2701 = vmatprep.subr.mxu0 %v1202
  %2702 = vmatpush2.msra.mxu0 %v1201
  %2703 = vmatprep.subr.mxu0 %v1198
  %2704 = vmatpush2.msra.mxu0 %v1197
  %2705 = vmatprep.subr.mxu0 %v1194
  %2706 = vmatpush2.msra.mxu0 %v1193
  %2707 = vmatprep.subr.mxu0 %v1190
  %2708 = vmatpush2.msra.mxu0 %v1189
  %2709 = vmatprep.subr.mxu0 %v1186
  %2710 = vmatpush2.msra.mxu0 %v1185
  %2711 = vmatprep.subr.mxu0 %v1182
  %2712 = vmatpush2.msra.mxu0 %v1181
  %2713 = vmatprep.subr.mxu0 %v1178
  %2714 = vmatpush2.msra.mxu0 %v1177
  %2715 = vmatprep.subr.mxu0 %v1174
  %2716 = vmatpush2.msra.mxu0 %v1173
  %2717 = vmatprep.subr.mxu0 %v1170
  %2718 = vmatpush2.msra.mxu0 %v1169
  %2719 = vmatprep.subr.mxu0 %v1166
  %2720 = vmatpush2.msra.mxu0 %v1165
  %2721 = vmatprep.mubr.f32.mxu0 %v2083
  %2722 = vmatmul.mubr.f32.gmra.mxu0 %v2585
  %v2723 = vpop.f32.mrf.mxu0
  %v2724 = vadd.f32 %v1241, %v2723
  %v2725 = vpop.f32.mrf.mxu0
  %v2726 = vadd.f32 %v1245, %v2725
  %2727 = vdwg.mxu0
  %v2728 = vxor.u32 %v2653, 2147483648
  %v2729 = vmul.f32 %v2728, 1.442695
  %v2730 = vpow.pop %v2729
  %v2731 = vadd.f32 %v2730, 1.0
  %v2732 = vrcp.pop %v2731
  %v2733 = vmul.f32 1.0, %v2732
  %v2734 = vxor.u32 %v2655, 2147483648
  %v2735 = vmul.f32 %v2734, 1.442695
  %v2736 = vpow.pop %v2735
  %v2737 = vadd.f32 %v2736, 1.0
  %v2738 = vrcp.pop %v2737
  %v2739 = vmul.f32 1.0, %v2738
  %v2740 = vtanh.pop %v2724
  %v2741 = vxor.u32 %v2726, 2147483648
  %v2742 = vmul.f32 %v2741, 1.442695
  %v2743 = vpow.pop %v2742
  %v2744 = vadd.f32 %v2743, 1.0
  %v2745 = vrcp.pop %v2744
  %v2746 = vmul.f32 1.0, %v2745
  %v2747 = vmul.f32 %v2739, %v2081
  %v2748 = vmul.f32 %v2733, %v2740
  %v2749 = vadd.f32 %v2747, %v2748
  %v2750 = vtanh.pop %v2749
  %v2751 = vmul.f32 %v2746, %v2750
  %2752 = vmatprep.subr.mxu0 %v291
  %2753 = vmatpush1.msra.mxu0 %v290
  %2754 = vmatprep.subr.mxu0 %v287
  %2755 = vmatpush1.msra.mxu0 %v286
  %2756 = vmatprep.subr.mxu0 %v283
  %2757 = vmatpush1.msra.mxu0 %v282
  %2758 = vmatprep.subr.mxu0 %v279
  %2759 = vmatpush1.msra.mxu0 %v278
  %2760 = vmatprep.subr.mxu0 %v275
  %2761 = vmatpush1.msra.mxu0 %v274
  %2762 = vmatprep.subr.mxu0 %v271
  %2763 = vmatpush1.msra.mxu0 %v270
  %2764 = vmatprep.subr.mxu0 %v267
  %2765 = vmatpush1.msra.mxu0 %v266
  %2766 = vmatprep.subr.mxu0 %v263
  %2767 = vmatpush1.msra.mxu0 %v262
  %2768 = vmatprep.subr.mxu0 %v259
  %2769 = vmatpush1.msra.mxu0 %v258
  %2770 = vmatprep.subr.mxu0 %v255
  %2771 = vmatpush1.msra.mxu0 %v254
  %2772 = vmatprep.subr.mxu0 %v251
  %2773 = vmatpush1.msra.mxu0 %v250
  %2774 = vmatprep.subr.mxu0 %v247
  %2775 = vmatpush1.msra.mxu0 %v246
  %2776 = vmatprep.subr.mxu0 %v243
  %2777 = vmatpush1.msra.mxu0 %v242
  %2778 = vmatprep.subr.mxu0 %v239
  %2779 = vmatpush1.msra.mxu0 %v238
  %2780 = vmatprep.subr.mxu0 %v235
  %2781 = vmatpush1.msra.mxu0 %v234
  %2782 = vmatprep.subr.mxu0 %v231
  %2783 = vmatpush1.msra.mxu0 %v230
  %2784 = vmatprep.subr.mxu0 0.0
  %2785 = vmatpush2.msra.mxu0 0.0
  %2786 = vmatprep.subr.mxu0 0.0
  %2787 = vmatpush2.msra.mxu0 0.0
  %2788 = vmatprep.subr.mxu0 0.0
  %2789 = vmatpush2.msra.mxu0 0.0
  %2790 = vmatprep.subr.mxu0 0.0
  %2791 = vmatpush2.msra.mxu0 0.0
  %2792 = vmatprep.subr.mxu0 0.0
  %2793 = vmatpush2.msra.mxu0 0.0
  %2794 = vmatprep.subr.mxu0 0.0
  %2795 = vmatpush2.msra.mxu0 0.0
  %2796 = vmatprep.subr.mxu0 0.0
  %2797 = vmatpush2.msra.mxu0 0.0
  %2798 = vmatprep.subr.mxu0 0.0
  %2799 = vmatpush2.msra.mxu0 0.0
  %2800 = vmatprep.subr.mxu0 0.0
  %2801 = vmatpush2.msra.mxu0 0.0
  %2802 = vmatprep.subr.mxu0 0.0
  %2803 = vmatpush2.msra.mxu0 0.0
  %2804 = vmatprep.subr.mxu0 0.0
  %2805 = vmatpush2.msra.mxu0 0.0
  %2806 = vmatprep.subr.mxu0 0.0
  %2807 = vmatpush2.msra.mxu0 0.0
  %2808 = vmatprep.subr.mxu0 0.0
  %2809 = vmatpush2.msra.mxu0 0.0
  %2810 = vmatprep.subr.mxu0 0.0
  %2811 = vmatpush2.msra.mxu0 0.0
  %2812 = vmatprep.subr.mxu0 0.0
  %2813 = vmatpush2.msra.mxu0 0.0
  %2814 = vmatprep.subr.mxu0 0.0
  %2815 = vmatpush2.msra.mxu0 0.0
  %2816 = vmatprep.mubr.f32.mxu0 0.0
  %2817 = vmatmul.mubr.f32.gmra.mxu0 %v2253
  %v2818 = vpop.f32.mrf.mxu0
  %v2819 = vadd.f32 0.0, %v2818
  %v2820 = vpop.f32.mrf.mxu0
  %v2821 = vadd.f32 0.0, %v2820
  %2822 = vdwg.mxu0
  %2823 = vmatprep.subr.mxu0 %v293
  %2824 = vmatpush1.msra.mxu0 %v292
  %2825 = vmatprep.subr.mxu0 %v289
  %2826 = vmatpush1.msra.mxu0 %v288
  %2827 = vmatprep.subr.mxu0 %v285
  %2828 = vmatpush1.msra.mxu0 %v284
  %2829 = vmatprep.subr.mxu0 %v281
  %2830 = vmatpush1.msra.mxu0 %v280
  %2831 = vmatprep.subr.mxu0 %v277
  %2832 = vmatpush1.msra.mxu0 %v276
  %2833 = vmatprep.subr.mxu0 %v273
  %2834 = vmatpush1.msra.mxu0 %v272
  %2835 = vmatprep.subr.mxu0 %v269
  %2836 = vmatpush1.msra.mxu0 %v268
  %2837 = vmatprep.subr.mxu0 %v265
  %2838 = vmatpush1.msra.mxu0 %v264
  %2839 = vmatprep.subr.mxu0 %v261
  %2840 = vmatpush1.msra.mxu0 %v260
  %2841 = vmatprep.subr.mxu0 %v257
  %2842 = vmatpush1.msra.mxu0 %v256
  %2843 = vmatprep.subr.mxu0 %v253
  %2844 = vmatpush1.msra.mxu0 %v252
  %2845 = vmatprep.subr.mxu0 %v249
  %2846 = vmatpush1.msra.mxu0 %v248
  %2847 = vmatprep.subr.mxu0 %v245
  %2848 = vmatpush1.msra.mxu0 %v244
  %2849 = vmatprep.subr.mxu0 %v241
  %2850 = vmatpush1.msra.mxu0 %v240
  %2851 = vmatprep.subr.mxu0 %v237
  %2852 = vmatpush1.msra.mxu0 %v236
  %2853 = vmatprep.subr.mxu0 %v233
  %2854 = vmatpush1.msra.mxu0 %v232
  %2855 = vmatprep.subr.mxu0 0.0
  %2856 = vmatpush2.msra.mxu0 0.0
  %2857 = vmatprep.subr.mxu0 0.0
  %2858 = vmatpush2.msra.mxu0 0.0
  %2859 = vmatprep.subr.mxu0 0.0
  %2860 = vmatpush2.msra.mxu0 0.0
  %2861 = vmatprep.subr.mxu0 0.0
  %2862 = vmatpush2.msra.mxu0 0.0
  %2863 = vmatprep.subr.mxu0 0.0
  %2864 = vmatpush2.msra.mxu0 0.0
  %2865 = vmatprep.subr.mxu0 0.0
  %2866 = vmatpush2.msra.mxu0 0.0
  %2867 = vmatprep.subr.mxu0 0.0
  %2868 = vmatpush2.msra.mxu0 0.0
  %2869 = vmatprep.subr.mxu0 0.0
  %2870 = vmatpush2.msra.mxu0 0.0
  %2871 = vmatprep.subr.mxu0 0.0
  %2872 = vmatpush2.msra.mxu0 0.0
  %2873 = vmatprep.subr.mxu0 0.0
  %2874 = vmatpush2.msra.mxu0 0.0
  %2875 = vmatprep.subr.mxu0 0.0
  %2876 = vmatpush2.msra.mxu0 0.0
  %2877 = vmatprep.subr.mxu0 0.0
  %2878 = vmatpush2.msra.mxu0 0.0
  %2879 = vmatprep.subr.mxu0 0.0
  %2880 = vmatpush2.msra.mxu0 0.0
  %2881 = vmatprep.subr.mxu0 0.0
  %2882 = vmatpush2.msra.mxu0 0.0
  %2883 = vmatprep.subr.mxu0 0.0
  %2884 = vmatpush2.msra.mxu0 0.0
  %2885 = vmatprep.subr.mxu0 0.0
  %2886 = vmatpush2.msra.mxu0 0.0
  %2887 = vmatprep.mubr.f32.mxu0 0.0
  %2888 = vmatmul.mubr.f32.gmra.mxu0 %v2253
  %v2889 = vpop.f32.mrf.mxu0
  %v2890 = vadd.f32 0.0, %v2889
  %v2891 = vpop.f32.mrf.mxu0
  %v2892 = vadd.f32 0.0, %v2891
  %2893 = vdwg.mxu0
  %v2894 = vadd.f32 %v155, %v2819
  %v2895 = vadd.f32 %v157, %v2821
  %v2896 = vadd.f32 %v226, %v2890
  %v2897 = vadd.f32 %v228, %v2892
  %v2898 = vxor.u32 %v2894, 2147483648
  %v2899 = vmul.f32 %v2898, 1.442695
  %v2900 = vpow.pop %v2899
  %v2901 = vadd.f32 %v2900, 1.0
  %v2902 = vrcp.pop %v2901
  %v2903 = vmul.f32 1.0, %v2902
  %v2904 = vxor.u32 %v2895, 2147483648
  %v2905 = vmul.f32 %v2904, 1.442695
  %v2906 = vpow.pop %v2905
  %v2907 = vadd.f32 %v2906, 1.0
  %v2908 = vrcp.pop %v2907
  %v2909 = vmul.f32 1.0, %v2908
  %v2910 = vtanh.pop %v2896
  %v2911 = vxor.u32 %v2897, 2147483648
  %v2912 = vmul.f32 %v2911, 1.442695
  %v2913 = vpow.pop %v2912
  %v2914 = vadd.f32 %v2913, 1.0
  %v2915 = vrcp.pop %v2914
  %v2916 = vmul.f32 1.0, %v2915
  %v2917 = vmul.f32 %v2909, %v2251
  %v2918 = vmul.f32 %v2903, %v2910
  %v2919 = vadd.f32 %v2917, %v2918
  %v2920 = vtanh.pop %v2919
  %v2921 = vmul.f32 %v2916, %v2920
  %2922 = vmatprep.subr.mxu0 %v525
  %2923 = vmatpush1.msra.mxu0 %v524
  %2924 = vmatprep.subr.mxu0 %v521
  %2925 = vmatpush1.msra.mxu0 %v520
  %2926 = vmatprep.subr.mxu0 %v517
  %2927 = vmatpush1.msra.mxu0 %v516
  %2928 = vmatprep.subr.mxu0 %v513
  %2929 = vmatpush1.msra.mxu0 %v512
  %2930 = vmatprep.subr.mxu0 %v509
  %2931 = vmatpush1.msra.mxu0 %v508
  %2932 = vmatprep.subr.mxu0 %v505
  %2933 = vmatpush1.msra.mxu0 %v504
  %2934 = vmatprep.subr.mxu0 %v501
  %2935 = vmatpush1.msra.mxu0 %v500
  %2936 = vmatprep.subr.mxu0 %v497
  %2937 = vmatpush1.msra.mxu0 %v496
  %2938 = vmatprep.subr.mxu0 %v493
  %2939 = vmatpush1.msra.mxu0 %v492
  %2940 = vmatprep.subr.mxu0 %v489
  %2941 = vmatpush1.msra.mxu0 %v488
  %2942 = vmatprep.subr.mxu0 %v485
  %2943 = vmatpush1.msra.mxu0 %v484
  %2944 = vmatprep.subr.mxu0 %v481
  %2945 = vmatpush1.msra.mxu0 %v480
  %2946 = vmatprep.subr.mxu0 %v477
  %2947 = vmatpush1.msra.mxu0 %v476
  %2948 = vmatprep.subr.mxu0 %v473
  %2949 = vmatpush1.msra.mxu0 %v472
  %2950 = vmatprep.subr.mxu0 %v469
  %2951 = vmatpush1.msra.mxu0 %v468
  %2952 = vmatprep.subr.mxu0 %v465
  %2953 = vmatpush1.msra.mxu0 %v464
  %2954 = vmatprep.subr.mxu0 %v589
  %2955 = vmatpush2.msra.mxu0 %v588
  %2956 = vmatprep.subr.mxu0 %v585
  %2957 = vmatpush2.msra.mxu0 %v584
  %2958 = vmatprep.subr.mxu0 %v581
  %2959 = vmatpush2.msra.mxu0 %v580
  %2960 = vmatprep.subr.mxu0 %v577
  %2961 = vmatpush2.msra.mxu0 %v576
  %2962 = vmatprep.subr.mxu0 %v573
  %2963 = vmatpush2.msra.mxu0 %v572
  %2964 = vmatprep.subr.mxu0 %v569
  %2965 = vmatpush2.msra.mxu0 %v568
  %2966 = vmatprep.subr.mxu0 %v565
  %2967 = vmatpush2.msra.mxu0 %v564
  %2968 = vmatprep.subr.mxu0 %v561
  %2969 = vmatpush2.msra.mxu0 %v560
  %2970 = vmatprep.subr.mxu0 %v557
  %2971 = vmatpush2.msra.mxu0 %v556
  %2972 = vmatprep.subr.mxu0 %v553
  %2973 = vmatpush2.msra.mxu0 %v552
  %2974 = vmatprep.subr.mxu0 %v549
  %2975 = vmatpush2.msra.mxu0 %v548
  %2976 = vmatprep.subr.mxu0 %v545
  %2977 = vmatpush2.msra.mxu0 %v544
  %2978 = vmatprep.subr.mxu0 %v541
  %2979 = vmatpush2.msra.mxu0 %v540
  %2980 = vmatprep.subr.mxu0 %v537
  %2981 = vmatpush2.msra.mxu0 %v536
  %2982 = vmatprep.subr.mxu0 %v533
  %2983 = vmatpush2.msra.mxu0 %v532
  %2984 = vmatprep.subr.mxu0 %v529
  %2985 = vmatpush2.msra.mxu0 %v528
  %2986 = vmatprep.mubr.f32.mxu0 %v2419
  %2987 = vmatmul.mubr.f32.gmra.mxu0 %v2921
  %v2988 = vpop.f32.mrf.mxu0
  %v2989 = vadd.f32 %v597, %v2988
  %v2990 = vpop.f32.mrf.mxu0
  %v2991 = vadd.f32 %v601, %v2990
  %2992 = vdwg.mxu0
  %2993 = vmatprep.subr.mxu0 %v527
  %2994 = vmatpush1.msra.mxu0 %v526
  %2995 = vmatprep.subr.mxu0 %v523
  %2996 = vmatpush1.msra.mxu0 %v522
  %2997 = vmatprep.subr.mxu0 %v519
  %2998 = vmatpush1.msra.mxu0 %v518
  %2999 = vmatprep.subr.mxu0 %v515
  %3000 = vmatpush1.msra.mxu0 %v514
  %3001 = vmatprep.subr.mxu0 %v511
  %3002 = vmatpush1.msra.mxu0 %v510
  %3003 = vmatprep.subr.mxu0 %v507
  %3004 = vmatpush1.msra.mxu0 %v506
  %3005 = vmatprep.subr.mxu0 %v503
  %3006 = vmatpush1.msra.mxu0 %v502
  %3007 = vmatprep.subr.mxu0 %v499
  %3008 = vmatpush1.msra.mxu0 %v498
  %3009 = vmatprep.subr.mxu0 %v495
  %3010 = vmatpush1.msra.mxu0 %v494
  %3011 = vmatprep.subr.mxu0 %v491
  %3012 = vmatpush1.msra.mxu0 %v490
  %3013 = vmatprep.subr.mxu0 %v487
  %3014 = vmatpush1.msra.mxu0 %v486
  %3015 = vmatprep.subr.mxu0 %v483
  %3016 = vmatpush1.msra.mxu0 %v482
  %3017 = vmatprep.subr.mxu0 %v479
  %3018 = vmatpush1.msra.mxu0 %v478
  %3019 = vmatprep.subr.mxu0 %v475
  %3020 = vmatpush1.msra.mxu0 %v474
  %3021 = vmatprep.subr.mxu0 %v471
  %3022 = vmatpush1.msra.mxu0 %v470
  %3023 = vmatprep.subr.mxu0 %v467
  %3024 = vmatpush1.msra.mxu0 %v466
  %3025 = vmatprep.subr.mxu0 %v591
  %3026 = vmatpush2.msra.mxu0 %v590
  %3027 = vmatprep.subr.mxu0 %v587
  %3028 = vmatpush2.msra.mxu0 %v586
  %3029 = vmatprep.subr.mxu0 %v583
  %3030 = vmatpush2.msra.mxu0 %v582
  %3031 = vmatprep.subr.mxu0 %v579
  %3032 = vmatpush2.msra.mxu0 %v578
  %3033 = vmatprep.subr.mxu0 %v575
  %3034 = vmatpush2.msra.mxu0 %v574
  %3035 = vmatprep.subr.mxu0 %v571
  %3036 = vmatpush2.msra.mxu0 %v570
  %3037 = vmatprep.subr.mxu0 %v567
  %3038 = vmatpush2.msra.mxu0 %v566
  %3039 = vmatprep.subr.mxu0 %v563
  %3040 = vmatpush2.msra.mxu0 %v562
  %3041 = vmatprep.subr.mxu0 %v559
  %3042 = vmatpush2.msra.mxu0 %v558
  %3043 = vmatprep.subr.mxu0 %v555
  %3044 = vmatpush2.msra.mxu0 %v554
  %3045 = vmatprep.subr.mxu0 %v551
  %3046 = vmatpush2.msra.mxu0 %v550
  %3047 = vmatprep.subr.mxu0 %v547
  %3048 = vmatpush2.msra.mxu0 %v546
  %3049 = vmatprep.subr.mxu0 %v543
  %3050 = vmatpush2.msra.mxu0 %v542
  %3051 = vmatprep.subr.mxu0 %v539
  %3052 = vmatpush2.msra.mxu0 %v538
  %3053 = vmatprep.subr.mxu0 %v535
  %3054 = vmatpush2.msra.mxu0 %v534
  %3055 = vmatprep.subr.mxu0 %v531
  %3056 = vmatpush2.msra.mxu0 %v530
  %3057 = vmatprep.mubr.f32.mxu0 %v2419
  %3058 = vmatmul.mubr.f32.gmra.mxu0 %v2921
  %v3059 = vpop.f32.mrf.mxu0
  %v3060 = vadd.f32 %v605, %v3059
  %v3061 = vpop.f32.mrf.mxu0
  %v3062 = vadd.f32 %v609, %v3061
  %3063 = vdwg.mxu0
  %v3064 = vxor.u32 %v2989, 2147483648
  %v3065 = vmul.f32 %v3064, 1.442695
  %v3066 = vpow.pop %v3065
  %v3067 = vadd.f32 %v3066, 1.0
  %v3068 = vrcp.pop %v3067
  %v3069 = vmul.f32 1.0, %v3068
  %v3070 = vxor.u32 %v2991, 2147483648
  %v3071 = vmul.f32 %v3070, 1.442695
  %v3072 = vpow.pop %v3071
  %v3073 = vadd.f32 %v3072, 1.0
  %v3074 = vrcp.pop %v3073
  %v3075 = vmul.f32 1.0, %v3074
  %v3076 = vtanh.pop %v3060
  %v3077 = vxor.u32 %v3062, 2147483648
  %v3078 = vmul.f32 %v3077, 1.442695
  %v3079 = vpow.pop %v3078
  %v3080 = vadd.f32 %v3079, 1.0
  %v3081 = vrcp.pop %v3080
  %v3082 = vmul.f32 1.0, %v3081
  %v3083 = vmul.f32 %v3075, %v2417
  %v3084 = vmul.f32 %v3069, %v3076
  %v3085 = vadd.f32 %v3083, %v3084
  %v3086 = vtanh.pop %v3085
  %v3087 = vmul.f32 %v3082, %v3086
  %3088 = vmatprep.subr.mxu0 %v842
  %3089 = vmatpush1.msra.mxu0 %v841
  %3090 = vmatprep.subr.mxu0 %v838
  %3091 = vmatpush1.msra.mxu0 %v837
  %3092 = vmatprep.subr.mxu0 %v834
  %3093 = vmatpush1.msra.mxu0 %v833
  %3094 = vmatprep.subr.mxu0 %v830
  %3095 = vmatpush1.msra.mxu0 %v829
  %3096 = vmatprep.subr.mxu0 %v826
  %3097 = vmatpush1.msra.mxu0 %v825
  %3098 = vmatprep.subr.mxu0 %v822
  %3099 = vmatpush1.msra.mxu0 %v821
  %3100 = vmatprep.subr.mxu0 %v818
  %3101 = vmatpush1.msra.mxu0 %v817
  %3102 = vmatprep.subr.mxu0 %v814
  %3103 = vmatpush1.msra.mxu0 %v813
  %3104 = vmatprep.subr.mxu0 %v810
  %3105 = vmatpush1.msra.mxu0 %v809
  %3106 = vmatprep.subr.mxu0 %v806
  %3107 = vmatpush1.msra.mxu0 %v805
  %3108 = vmatprep.subr.mxu0 %v802
  %3109 = vmatpush1.msra.mxu0 %v801
  %3110 = vmatprep.subr.mxu0 %v798
  %3111 = vmatpush1.msra.mxu0 %v797
  %3112 = vmatprep.subr.mxu0 %v794
  %3113 = vmatpush1.msra.mxu0 %v793
  %3114 = vmatprep.subr.mxu0 %v790
  %3115 = vmatpush1.msra.mxu0 %v789
  %3116 = vmatprep.subr.mxu0 %v786
  %3117 = vmatpush1.msra.mxu0 %v785
  %3118 = vmatprep.subr.mxu0 %v782
  %3119 = vmatpush1.msra.mxu0 %v781
  %3120 = vmatprep.subr.mxu0 %v906
  %3121 = vmatpush2.msra.mxu0 %v905
  %3122 = vmatprep.subr.mxu0 %v902
  %3123 = vmatpush2.msra.mxu0 %v901
  %3124 = vmatprep.subr.mxu0 %v898
  %3125 = vmatpush2.msra.mxu0 %v897
  %3126 = vmatprep.subr.mxu0 %v894
  %3127 = vmatpush2.msra.mxu0 %v893
  %3128 = vmatprep.subr.mxu0 %v890
  %3129 = vmatpush2.msra.mxu0 %v889
  %3130 = vmatprep.subr.mxu0 %v886
  %3131 = vmatpush2.msra.mxu0 %v885
  %3132 = vmatprep.subr.mxu0 %v882
  %3133 = vmatpush2.msra.mxu0 %v881
  %3134 = vmatprep.subr.mxu0 %v878
  %3135 = vmatpush2.msra.mxu0 %v877
  %3136 = vmatprep.subr.mxu0 %v874
  %3137 = vmatpush2.msra.mxu0 %v873
  %3138 = vmatprep.subr.mxu0 %v870
  %3139 = vmatpush2.msra.mxu0 %v869
  %3140 = vmatprep.subr.mxu0 %v866
  %3141 = vmatpush2.msra.mxu0 %v865
  %3142 = vmatprep.subr.mxu0 %v862
  %3143 = vmatpush2.msra.mxu0 %v861
  %3144 = vmatprep.subr.mxu0 %v858
  %3145 = vmatpush2.msra.mxu0 %v857
  %3146 = vmatprep.subr.mxu0 %v854
  %3147 = vmatpush2.msra.mxu0 %v853
  %3148 = vmatprep.subr.mxu0 %v850
  %3149 = vmatpush2.msra.mxu0 %v849
  %3150 = vmatprep.subr.mxu0 %v846
  %3151 = vmatpush2.msra.mxu0 %v845
  %3152 = vmatprep.mubr.f32.mxu0 %v2585
  %3153 = vmatmul.mubr.f32.gmra.mxu0 %v3087
  %v3154 = vpop.f32.mrf.mxu0
  %v3155 = vadd.f32 %v915, %v3154
  %v3156 = vpop.f32.mrf.mxu0
  %v3157 = vadd.f32 %v919, %v3156
  %3158 = vdwg.mxu0
  %3159 = vmatprep.subr.mxu0 %v844
  %3160 = vmatpush1.msra.mxu0 %v843
  %3161 = vmatprep.subr.mxu0 %v840
  %3162 = vmatpush1.msra.mxu0 %v839
  %3163 = vmatprep.subr.mxu0 %v836
  %3164 = vmatpush1.msra.mxu0 %v835
  %3165 = vmatprep.subr.mxu0 %v832
  %3166 = vmatpush1.msra.mxu0 %v831
  %3167 = vmatprep.subr.mxu0 %v828
  %3168 = vmatpush1.msra.mxu0 %v827
  %3169 = vmatprep.subr.mxu0 %v824
  %3170 = vmatpush1.msra.mxu0 %v823
  %3171 = vmatprep.subr.mxu0 %v820
  %3172 = vmatpush1.msra.mxu0 %v819
  %3173 = vmatprep.subr.mxu0 %v816
  %3174 = vmatpush1.msra.mxu0 %v815
  %3175 = vmatprep.subr.mxu0 %v812
  %3176 = vmatpush1.msra.mxu0 %v811
  %3177 = vmatprep.subr.mxu0 %v808
  %3178 = vmatpush1.msra.mxu0 %v807
  %3179 = vmatprep.subr.mxu0 %v804
  %3180 = vmatpush1.msra.mxu0 %v803
  %3181 = vmatprep.subr.mxu0 %v800
  %3182 = vmatpush1.msra.mxu0 %v799
  %3183 = vmatprep.subr.mxu0 %v796
  %3184 = vmatpush1.msra.mxu0 %v795
  %3185 = vmatprep.subr.mxu0 %v792
  %3186 = vmatpush1.msra.mxu0 %v791
  %3187 = vmatprep.subr.mxu0 %v788
  %3188 = vmatpush1.msra.mxu0 %v787
  %3189 = vmatprep.subr.mxu0 %v784
  %3190 = vmatpush1.msra.mxu0 %v783
  %3191 = vmatprep.subr.mxu0 %v908
  %3192 = vmatpush2.msra.mxu0 %v907
  %3193 = vmatprep.subr.mxu0 %v904
  %3194 = vmatpush2.msra.mxu0 %v903
  %3195 = vmatprep.subr.mxu0 %v900
  %3196 = vmatpush2.msra.mxu0 %v899
  %3197 = vmatprep.subr.mxu0 %v896
  %3198 = vmatpush2.msra.mxu0 %v895
  %3199 = vmatprep.subr.mxu0 %v892
  %3200 = vmatpush2.msra.mxu0 %v891
  %3201 = vmatprep.subr.mxu0 %v888
  %3202 = vmatpush2.msra.mxu0 %v887
  %3203 = vmatprep.subr.mxu0 %v884
  %3204 = vmatpush2.msra.mxu0 %v883
  %3205 = vmatprep.subr.mxu0 %v880
  %3206 = vmatpush2.msra.mxu0 %v879
  %3207 = vmatprep.subr.mxu0 %v876
  %3208 = vmatpush2.msra.mxu0 %v875
  %3209 = vmatprep.subr.mxu0 %v872
  %3210 = vmatpush2.msra.mxu0 %v871
  %3211 = vmatprep.subr.mxu0 %v868
  %3212 = vmatpush2.msra.mxu0 %v867
  %3213 = vmatprep.subr.mxu0 %v864
  %3214 = vmatpush2.msra.mxu0 %v863
  %3215 = vmatprep.subr.mxu0 %v860
  %3216 = vmatpush2.msra.mxu0 %v859
  %3217 = vmatprep.subr.mxu0 %v856
  %3218 = vmatpush2.msra.mxu0 %v855
  %3219 = vmatprep.subr.mxu0 %v852
  %3220 = vmatpush2.msra.mxu0 %v851
  %3221 = vmatprep.subr.mxu0 %v848
  %3222 = vmatpush2.msra.mxu0 %v847
  %3223 = vmatprep.mubr.f32.mxu0 %v2585
  %3224 = vmatmul.mubr.f32.gmra.mxu0 %v3087
  %v3225 = vpop.f32.mrf.mxu0
  %v3226 = vadd.f32 %v923, %v3225
  %v3227 = vpop.f32.mrf.mxu0
  %v3228 = vadd.f32 %v927, %v3227
  %3229 = vdwg.mxu0
  %v3230 = vxor.u32 %v3155, 2147483648
  %v3231 = vmul.f32 %v3230, 1.442695
  %v3232 = vpow.pop %v3231
  %v3233 = vadd.f32 %v3232, 1.0
  %v3234 = vrcp.pop %v3233
  %v3235 = vmul.f32 1.0, %v3234
  %v3236 = vxor.u32 %v3157, 2147483648
  %v3237 = vmul.f32 %v3236, 1.442695
  %v3238 = vpow.pop %v3237
  %v3239 = vadd.f32 %v3238, 1.0
  %v3240 = vrcp.pop %v3239
  %v3241 = vmul.f32 1.0, %v3240
  %v3242 = vtanh.pop %v3226
  %v3243 = vxor.u32 %v3228, 2147483648
  %v3244 = vmul.f32 %v3243, 1.442695
  %v3245 = vpow.pop %v3244
  %v3246 = vadd.f32 %v3245, 1.0
  %v3247 = vrcp.pop %v3246
  %v3248 = vmul.f32 1.0, %v3247
  %v3249 = vmul.f32 %v3241, %v2583
  %v3250 = vmul.f32 %v3235, %v3242
  %v3251 = vadd.f32 %v3249, %v3250
  %v3252 = vtanh.pop %v3251
  %v3253 = vmul.f32 %v3248, %v3252
  %3254 = vmatprep.subr.mxu0 %v1160
  %3255 = vmatpush1.msra.mxu0 %v1159
  %3256 = vmatprep.subr.mxu0 %v1156
  %3257 = vmatpush1.msra.mxu0 %v1155
  %3258 = vmatprep.subr.mxu0 %v1152
  %3259 = vmatpush1.msra.mxu0 %v1151
  %3260 = vmatprep.subr.mxu0 %v1148
  %3261 = vmatpush1.msra.mxu0 %v1147
  %3262 = vmatprep.subr.mxu0 %v1144
  %3263 = vmatpush1.msra.mxu0 %v1143
  %3264 = vmatprep.subr.mxu0 %v1140
  %3265 = vmatpush1.msra.mxu0 %v1139
  %3266 = vmatprep.subr.mxu0 %v1136
  %3267 = vmatpush1.msra.mxu0 %v1135
  %3268 = vmatprep.subr.mxu0 %v1132
  %3269 = vmatpush1.msra.mxu0 %v1131
  %3270 = vmatprep.subr.mxu0 %v1128
  %3271 = vmatpush1.msra.mxu0 %v1127
  %3272 = vmatprep.subr.mxu0 %v1124
  %3273 = vmatpush1.msra.mxu0 %v1123
  %3274 = vmatprep.subr.mxu0 %v1120
  %3275 = vmatpush1.msra.mxu0 %v1119
  %3276 = vmatprep.subr.mxu0 %v1116
  %3277 = vmatpush1.msra.mxu0 %v1115
  %3278 = vmatprep.subr.mxu0 %v1112
  %3279 = vmatpush1.msra.mxu0 %v1111
  %3280 = vmatprep.subr.mxu0 %v1108
  %3281 = vmatpush1.msra.mxu0 %v1107
  %3282 = vmatprep.subr.mxu0 %v1104
  %3283 = vmatpush1.msra.mxu0 %v1103
  %3284 = vmatprep.subr.mxu0 %v1100
  %3285 = vmatpush1.msra.mxu0 %v1099
  %3286 = vmatprep.subr.mxu0 %v1224
  %3287 = vmatpush2.msra.mxu0 %v1223
  %3288 = vmatprep.subr.mxu0 %v1220
  %3289 = vmatpush2.msra.mxu0 %v1219
  %3290 = vmatprep.subr.mxu0 %v1216
  %3291 = vmatpush2.msra.mxu0 %v1215
  %3292 = vmatprep.subr.mxu0 %v1212
  %3293 = vmatpush2.msra.mxu0 %v1211
  %3294 = vmatprep.subr.mxu0 %v1208
  %3295 = vmatpush2.msra.mxu0 %v1207
  %3296 = vmatprep.subr.mxu0 %v1204
  %3297 = vmatpush2.msra.mxu0 %v1203
  %3298 = vmatprep.subr.mxu0 %v1200
  %3299 = vmatpush2.msra.mxu0 %v1199
  %3300 = vmatprep.subr.mxu0 %v1196
  %3301 = vmatpush2.msra.mxu0 %v1195
  %3302 = vmatprep.subr.mxu0 %v1192
  %3303 = vmatpush2.msra.mxu0 %v1191
  %3304 = vmatprep.subr.mxu0 %v1188
  %3305 = vmatpush2.msra.mxu0 %v1187
  %3306 = vmatprep.subr.mxu0 %v1184
  %3307 = vmatpush2.msra.mxu0 %v1183
  %3308 = vmatprep.subr.mxu0 %v1180
  %3309 = vmatpush2.msra.mxu0 %v1179
  %3310 = vmatprep.subr.mxu0 %v1176
  %3311 = vmatpush2.msra.mxu0 %v1175
  %3312 = vmatprep.subr.mxu0 %v1172
  %3313 = vmatpush2.msra.mxu0 %v1171
  %3314 = vmatprep.subr.mxu0 %v1168
  %3315 = vmatpush2.msra.mxu0 %v1167
  %3316 = vmatprep.subr.mxu0 %v1164
  %3317 = vmatpush2.msra.mxu0 %v1163
  %3318 = vmatprep.mubr.f32.mxu0 %v2751
  %3319 = vmatmul.mubr.f32.gmra.mxu0 %v3253
  %v3320 = vpop.f32.mrf.mxu0
  %v3321 = vadd.f32 %v1233, %v3320
  %v3322 = vpop.f32.mrf.mxu0
  %v3323 = vadd.f32 %v1237, %v3322
  %3324 = vdwg.mxu0
  %3325 = vmatprep.subr.mxu0 %v1162
  %3326 = vmatpush1.msra.mxu0 %v1161
  %3327 = vmatprep.subr.mxu0 %v1158
  %3328 = vmatpush1.msra.mxu0 %v1157
  %3329 = vmatprep.subr.mxu0 %v1154
  %3330 = vmatpush1.msra.mxu0 %v1153
  %3331 = vmatprep.subr.mxu0 %v1150
  %3332 = vmatpush1.msra.mxu0 %v1149
  %3333 = vmatprep.subr.mxu0 %v1146
  %3334 = vmatpush1.msra.mxu0 %v1145
  %3335 = vmatprep.subr.mxu0 %v1142
  %3336 = vmatpush1.msra.mxu0 %v1141
  %3337 = vmatprep.subr.mxu0 %v1138
  %3338 = vmatpush1.msra.mxu0 %v1137
  %3339 = vmatprep.subr.mxu0 %v1134
  %3340 = vmatpush1.msra.mxu0 %v1133
  %3341 = vmatprep.subr.mxu0 %v1130
  %3342 = vmatpush1.msra.mxu0 %v1129
  %3343 = vmatprep.subr.mxu0 %v1126
  %3344 = vmatpush1.msra.mxu0 %v1125
  %3345 = vmatprep.subr.mxu0 %v1122
  %3346 = vmatpush1.msra.mxu0 %v1121
  %3347 = vmatprep.subr.mxu0 %v1118
  %3348 = vmatpush1.msra.mxu0 %v1117
  %3349 = vmatprep.subr.mxu0 %v1114
  %3350 = vmatpush1.msra.mxu0 %v1113
  %3351 = vmatprep.subr.mxu0 %v1110
  %3352 = vmatpush1.msra.mxu0 %v1109
  %3353 = vmatprep.subr.mxu0 %v1106
  %3354 = vmatpush1.msra.mxu0 %v1105
  %3355 = vmatprep.subr.mxu0 %v1102
  %3356 = vmatpush1.msra.mxu0 %v1101
  %3357 = vmatprep.subr.mxu0 %v1226
  %3358 = vmatpush2.msra.mxu0 %v1225
  %3359 = vmatprep.subr.mxu0 %v1222
  %3360 = vmatpush2.msra.mxu0 %v1221
  %3361 = vmatprep.subr.mxu0 %v1218
  %3362 = vmatpush2.msra.mxu0 %v1217
  %3363 = vmatprep.subr.mxu0 %v1214
  %3364 = vmatpush2.msra.mxu0 %v1213
  %3365 = vmatprep.subr.mxu0 %v1210
  %3366 = vmatpush2.msra.mxu0 %v1209
  %3367 = vmatprep.subr.mxu0 %v1206
  %3368 = vmatpush2.msra.mxu0 %v1205
  %3369 = vmatprep.subr.mxu0 %v1202
  %3370 = vmatpush2.msra.mxu0 %v1201
  %3371 = vmatprep.subr.mxu0 %v1198
  %3372 = vmatpush2.msra.mxu0 %v1197
  %3373 = vmatprep.subr.mxu0 %v1194
  %3374 = vmatpush2.msra.mxu0 %v1193
  %3375 = vmatprep.subr.mxu0 %v1190
  %3376 = vmatpush2.msra.mxu0 %v1189
  %3377 = vmatprep.subr.mxu0 %v1186
  %3378 = vmatpush2.msra.mxu0 %v1185
  %3379 = vmatprep.subr.mxu0 %v1182
  %3380 = vmatpush2.msra.mxu0 %v1181
  %3381 = vmatprep.subr.mxu0 %v1178
  %3382 = vmatpush2.msra.mxu0 %v1177
  %3383 = vmatprep.subr.mxu0 %v1174
  %3384 = vmatpush2.msra.mxu0 %v1173
  %3385 = vmatprep.subr.mxu0 %v1170
  %3386 = vmatpush2.msra.mxu0 %v1169
  %3387 = vmatprep.subr.mxu0 %v1166
  %3388 = vmatpush2.msra.mxu0 %v1165
  %3389 = vmatprep.mubr.f32.mxu0 %v2751
  %3390 = vmatmul.mubr.f32.gmra.mxu0 %v3253
  %v3391 = vpop.f32.mrf.mxu0
  %v3392 = vadd.f32 %v1241, %v3391
  %v3393 = vpop.f32.mrf.mxu0
  %v3394 = vadd.f32 %v1245, %v3393
  %3395 = vdwg.mxu0
  %v3396 = vxor.u32 %v3321, 2147483648
  %v3397 = vmul.f32 %v3396, 1.442695
  %v3398 = vpow.pop %v3397
  %v3399 = vadd.f32 %v3398, 1.0
  %v3400 = vrcp.pop %v3399
  %v3401 = vmul.f32 1.0, %v3400
  %v3402 = vxor.u32 %v3323, 2147483648
  %v3403 = vmul.f32 %v3402, 1.442695
  %v3404 = vpow.pop %v3403
  %v3405 = vadd.f32 %v3404, 1.0
  %v3406 = vrcp.pop %v3405
  %v3407 = vmul.f32 1.0, %v3406
  %v3408 = vtanh.pop %v3392
  %v3409 = vxor.u32 %v3394, 2147483648
  %v3410 = vmul.f32 %v3409, 1.442695
  %v3411 = vpow.pop %v3410
  %v3412 = vadd.f32 %v3411, 1.0
  %v3413 = vrcp.pop %v3412
  %v3414 = vmul.f32 1.0, %v3413
  %v3415 = vmul.f32 %v3407, %v2749
  %v3416 = vmul.f32 %v3401, %v3408
  %v3417 = vadd.f32 %v3415, %v3416
  %v3418 = vtanh.pop %v3417
  %v3419 = vmul.f32 %v3414, %v3418
  %3420 = vmatprep.subr.mxu0 %v291
  %3421 = vmatpush1.msra.mxu0 %v290
  %3422 = vmatprep.subr.mxu0 %v287
  %3423 = vmatpush1.msra.mxu0 %v286
  %3424 = vmatprep.subr.mxu0 %v283
  %3425 = vmatpush1.msra.mxu0 %v282
  %3426 = vmatprep.subr.mxu0 %v279
  %3427 = vmatpush1.msra.mxu0 %v278
  %3428 = vmatprep.subr.mxu0 %v275
  %3429 = vmatpush1.msra.mxu0 %v274
  %3430 = vmatprep.subr.mxu0 %v271
  %3431 = vmatpush1.msra.mxu0 %v270
  %3432 = vmatprep.subr.mxu0 %v267
  %3433 = vmatpush1.msra.mxu0 %v266
  %3434 = vmatprep.subr.mxu0 %v263
  %3435 = vmatpush1.msra.mxu0 %v262
  %3436 = vmatprep.subr.mxu0 %v259
  %3437 = vmatpush1.msra.mxu0 %v258
  %3438 = vmatprep.subr.mxu0 %v255
  %3439 = vmatpush1.msra.mxu0 %v254
  %3440 = vmatprep.subr.mxu0 %v251
  %3441 = vmatpush1.msra.mxu0 %v250
  %3442 = vmatprep.subr.mxu0 %v247
  %3443 = vmatpush1.msra.mxu0 %v246
  %3444 = vmatprep.subr.mxu0 %v243
  %3445 = vmatpush1.msra.mxu0 %v242
  %3446 = vmatprep.subr.mxu0 %v239
  %3447 = vmatpush1.msra.mxu0 %v238
  %3448 = vmatprep.subr.mxu0 %v235
  %3449 = vmatpush1.msra.mxu0 %v234
  %3450 = vmatprep.subr.mxu0 %v231
  %3451 = vmatpush1.msra.mxu0 %v230
  %3452 = vmatprep.subr.mxu0 0.0
  %3453 = vmatpush2.msra.mxu0 0.0
  %3454 = vmatprep.subr.mxu0 0.0
  %3455 = vmatpush2.msra.mxu0 0.0
  %3456 = vmatprep.subr.mxu0 0.0
  %3457 = vmatpush2.msra.mxu0 0.0
  %3458 = vmatprep.subr.mxu0 0.0
  %3459 = vmatpush2.msra.mxu0 0.0
  %3460 = vmatprep.subr.mxu0 0.0
  %3461 = vmatpush2.msra.mxu0 0.0
  %3462 = vmatprep.subr.mxu0 0.0
  %3463 = vmatpush2.msra.mxu0 0.0
  %3464 = vmatprep.subr.mxu0 0.0
  %3465 = vmatpush2.msra.mxu0 0.0
  %3466 = vmatprep.subr.mxu0 0.0
  %3467 = vmatpush2.msra.mxu0 0.0
  %3468 = vmatprep.subr.mxu0 0.0
  %3469 = vmatpush2.msra.mxu0 0.0
  %3470 = vmatprep.subr.mxu0 0.0
  %3471 = vmatpush2.msra.mxu0 0.0
  %3472 = vmatprep.subr.mxu0 0.0
  %3473 = vmatpush2.msra.mxu0 0.0
  %3474 = vmatprep.subr.mxu0 0.0
  %3475 = vmatpush2.msra.mxu0 0.0
  %3476 = vmatprep.subr.mxu0 0.0
  %3477 = vmatpush2.msra.mxu0 0.0
  %3478 = vmatprep.subr.mxu0 0.0
  %3479 = vmatpush2.msra.mxu0 0.0
  %3480 = vmatprep.subr.mxu0 0.0
  %3481 = vmatpush2.msra.mxu0 0.0
  %3482 = vmatprep.subr.mxu0 0.0
  %3483 = vmatpush2.msra.mxu0 0.0
  %3484 = vmatprep.mubr.f32.mxu0 0.0
  %3485 = vmatmul.mubr.f32.gmra.mxu0 %v2921
  %v3486 = vpop.f32.mrf.mxu0
  %v3487 = vadd.f32 0.0, %v3486
  %v3488 = vpop.f32.mrf.mxu0
  %v3489 = vadd.f32 0.0, %v3488
  %3490 = vdwg.mxu0
  %3491 = vmatprep.subr.mxu0 %v293
  %3492 = vmatpush1.msra.mxu0 %v292
  %3493 = vmatprep.subr.mxu0 %v289
  %3494 = vmatpush1.msra.mxu0 %v288
  %3495 = vmatprep.subr.mxu0 %v285
  %3496 = vmatpush1.msra.mxu0 %v284
  %3497 = vmatprep.subr.mxu0 %v281
  %3498 = vmatpush1.msra.mxu0 %v280
  %3499 = vmatprep.subr.mxu0 %v277
  %3500 = vmatpush1.msra.mxu0 %v276
  %3501 = vmatprep.subr.mxu0 %v273
  %3502 = vmatpush1.msra.mxu0 %v272
  %3503 = vmatprep.subr.mxu0 %v269
  %3504 = vmatpush1.msra.mxu0 %v268
  %3505 = vmatprep.subr.mxu0 %v265
  %3506 = vmatpush1.msra.mxu0 %v264
  %3507 = vmatprep.subr.mxu0 %v261
  %3508 = vmatpush1.msra.mxu0 %v260
  %3509 = vmatprep.subr.mxu0 %v257
  %3510 = vmatpush1.msra.mxu0 %v256
  %3511 = vmatprep.subr.mxu0 %v253
  %3512 = vmatpush1.msra.mxu0 %v252
  %3513 = vmatprep.subr.mxu0 %v249
  %3514 = vmatpush1.msra.mxu0 %v248
  %3515 = vmatprep.subr.mxu0 %v245
  %3516 = vmatpush1.msra.mxu0 %v244
  %3517 = vmatprep.subr.mxu0 %v241
  %3518 = vmatpush1.msra.mxu0 %v240
  %3519 = vmatprep.subr.mxu0 %v237
  %3520 = vmatpush1.msra.mxu0 %v236
  %3521 = vmatprep.subr.mxu0 %v233
  %3522 = vmatpush1.msra.mxu0 %v232
  %3523 = vmatprep.subr.mxu0 0.0
  %3524 = vmatpush2.msra.mxu0 0.0
  %3525 = vmatprep.subr.mxu0 0.0
  %3526 = vmatpush2.msra.mxu0 0.0
  %3527 = vmatprep.subr.mxu0 0.0
  %3528 = vmatpush2.msra.mxu0 0.0
  %3529 = vmatprep.subr.mxu0 0.0
  %3530 = vmatpush2.msra.mxu0 0.0
  %3531 = vmatprep.subr.mxu0 0.0
  %3532 = vmatpush2.msra.mxu0 0.0
  %3533 = vmatprep.subr.mxu0 0.0
  %3534 = vmatpush2.msra.mxu0 0.0
  %3535 = vmatprep.subr.mxu0 0.0
  %3536 = vmatpush2.msra.mxu0 0.0
  %3537 = vmatprep.subr.mxu0 0.0
  %3538 = vmatpush2.msra.mxu0 0.0
  %3539 = vmatprep.subr.mxu0 0.0
  %3540 = vmatpush2.msra.mxu0 0.0
  %3541 = vmatprep.subr.mxu0 0.0
  %3542 = vmatpush2.msra.mxu0 0.0
  %3543 = vmatprep.subr.mxu0 0.0
  %3544 = vmatpush2.msra.mxu0 0.0
  %3545 = vmatprep.subr.mxu0 0.0
  %3546 = vmatpush2.msra.mxu0 0.0
  %3547 = vmatprep.subr.mxu0 0.0
  %3548 = vmatpush2.msra.mxu0 0.0
  %3549 = vmatprep.subr.mxu0 0.0
  %3550 = vmatpush2.msra.mxu0 0.0
  %3551 = vmatprep.subr.mxu0 0.0
  %3552 = vmatpush2.msra.mxu0 0.0
  %3553 = vmatprep.subr.mxu0 0.0
  %3554 = vmatpush2.msra.mxu0 0.0
  %3555 = vmatprep.mubr.f32.mxu0 0.0
  %3556 = vmatmul.mubr.f32.gmra.mxu0 %v2921
  %v3557 = vpop.f32.mrf.mxu0
  %v3558 = vadd.f32 0.0, %v3557
  %v3559 = vpop.f32.mrf.mxu0
  %v3560 = vadd.f32 0.0, %v3559
  %3561 = vdwg.mxu0
  %v3562 = vadd.f32 %v155, %v3487
  %v3563 = vadd.f32 %v157, %v3489
  %v3564 = vadd.f32 %v226, %v3558
  %v3565 = vadd.f32 %v228, %v3560
  %v3566 = vxor.u32 %v3562, 2147483648
  %v3567 = vmul.f32 %v3566, 1.442695
  %v3568 = vpow.pop %v3567
  %v3569 = vadd.f32 %v3568, 1.0
  %v3570 = vrcp.pop %v3569
  %v3571 = vmul.f32 1.0, %v3570
  %v3572 = vxor.u32 %v3563, 2147483648
  %v3573 = vmul.f32 %v3572, 1.442695
  %v3574 = vpow.pop %v3573
  %v3575 = vadd.f32 %v3574, 1.0
  %v3576 = vrcp.pop %v3575
  %v3577 = vmul.f32 1.0, %v3576
  %v3578 = vtanh.pop %v3564
  %v3579 = vxor.u32 %v3565, 2147483648
  %v3580 = vmul.f32 %v3579, 1.442695
  %v3581 = vpow.pop %v3580
  %v3582 = vadd.f32 %v3581, 1.0
  %v3583 = vrcp.pop %v3582
  %v3584 = vmul.f32 1.0, %v3583
  %v3585 = vmul.f32 %v3577, %v2919
  %v3586 = vmul.f32 %v3571, %v3578
  %v3587 = vadd.f32 %v3585, %v3586
  %v3588 = vtanh.pop %v3587
  %v3589 = vmul.f32 %v3584, %v3588
  %3590 = vmatprep.subr.mxu0 %v525
  %3591 = vmatpush1.msra.mxu0 %v524
  %3592 = vmatprep.subr.mxu0 %v521
  %3593 = vmatpush1.msra.mxu0 %v520
  %3594 = vmatprep.subr.mxu0 %v517
  %3595 = vmatpush1.msra.mxu0 %v516
  %3596 = vmatprep.subr.mxu0 %v513
  %3597 = vmatpush1.msra.mxu0 %v512
  %3598 = vmatprep.subr.mxu0 %v509
  %3599 = vmatpush1.msra.mxu0 %v508
  %3600 = vmatprep.subr.mxu0 %v505
  %3601 = vmatpush1.msra.mxu0 %v504
  %3602 = vmatprep.subr.mxu0 %v501
  %3603 = vmatpush1.msra.mxu0 %v500
  %3604 = vmatprep.subr.mxu0 %v497
  %3605 = vmatpush1.msra.mxu0 %v496
  %3606 = vmatprep.subr.mxu0 %v493
  %3607 = vmatpush1.msra.mxu0 %v492
  %3608 = vmatprep.subr.mxu0 %v489
  %3609 = vmatpush1.msra.mxu0 %v488
  %3610 = vmatprep.subr.mxu0 %v485
  %3611 = vmatpush1.msra.mxu0 %v484
  %3612 = vmatprep.subr.mxu0 %v481
  %3613 = vmatpush1.msra.mxu0 %v480
  %3614 = vmatprep.subr.mxu0 %v477
  %3615 = vmatpush1.msra.mxu0 %v476
  %3616 = vmatprep.subr.mxu0 %v473
  %3617 = vmatpush1.msra.mxu0 %v472
  %3618 = vmatprep.subr.mxu0 %v469
  %3619 = vmatpush1.msra.mxu0 %v468
  %3620 = vmatprep.subr.mxu0 %v465
  %3621 = vmatpush1.msra.mxu0 %v464
  %3622 = vmatprep.subr.mxu0 %v589
  %3623 = vmatpush2.msra.mxu0 %v588
  %3624 = vmatprep.subr.mxu0 %v585
  %3625 = vmatpush2.msra.mxu0 %v584
  %3626 = vmatprep.subr.mxu0 %v581
  %3627 = vmatpush2.msra.mxu0 %v580
  %3628 = vmatprep.subr.mxu0 %v577
  %3629 = vmatpush2.msra.mxu0 %v576
  %3630 = vmatprep.subr.mxu0 %v573
  %3631 = vmatpush2.msra.mxu0 %v572
  %3632 = vmatprep.subr.mxu0 %v569
  %3633 = vmatpush2.msra.mxu0 %v568
  %3634 = vmatprep.subr.mxu0 %v565
  %3635 = vmatpush2.msra.mxu0 %v564
  %3636 = vmatprep.subr.mxu0 %v561
  %3637 = vmatpush2.msra.mxu0 %v560
  %3638 = vmatprep.subr.mxu0 %v557
  %3639 = vmatpush2.msra.mxu0 %v556
  %3640 = vmatprep.subr.mxu0 %v553
  %3641 = vmatpush2.msra.mxu0 %v552
  %3642 = vmatprep.subr.mxu0 %v549
  %3643 = vmatpush2.msra.mxu0 %v548
  %3644 = vmatprep.subr.mxu0 %v545
  %3645 = vmatpush2.msra.mxu0 %v544
  %3646 = vmatprep.subr.mxu0 %v541
  %3647 = vmatpush2.msra.mxu0 %v540
  %3648 = vmatprep.subr.mxu0 %v537
  %3649 = vmatpush2.msra.mxu0 %v536
  %3650 = vmatprep.subr.mxu0 %v533
  %3651 = vmatpush2.msra.mxu0 %v532
  %3652 = vmatprep.subr.mxu0 %v529
  %3653 = vmatpush2.msra.mxu0 %v528
  %3654 = vmatprep.mubr.f32.mxu0 %v3087
  %3655 = vmatmul.mubr.f32.gmra.mxu0 %v3589
  %v3656 = vpop.f32.mrf.mxu0
  %v3657 = vadd.f32 %v597, %v3656
  %v3658 = vpop.f32.mrf.mxu0
  %v3659 = vadd.f32 %v601, %v3658
  %3660 = vdwg.mxu0
  %3661 = vmatprep.subr.mxu0 %v527
  %3662 = vmatpush1.msra.mxu0 %v526
  %3663 = vmatprep.subr.mxu0 %v523
  %3664 = vmatpush1.msra.mxu0 %v522
  %3665 = vmatprep.subr.mxu0 %v519
  %3666 = vmatpush1.msra.mxu0 %v518
  %3667 = vmatprep.subr.mxu0 %v515
  %3668 = vmatpush1.msra.mxu0 %v514
  %3669 = vmatprep.subr.mxu0 %v511
  %3670 = vmatpush1.msra.mxu0 %v510
  %3671 = vmatprep.subr.mxu0 %v507
  %3672 = vmatpush1.msra.mxu0 %v506
  %3673 = vmatprep.subr.mxu0 %v503
  %3674 = vmatpush1.msra.mxu0 %v502
  %3675 = vmatprep.subr.mxu0 %v499
  %3676 = vmatpush1.msra.mxu0 %v498
  %3677 = vmatprep.subr.mxu0 %v495
  %3678 = vmatpush1.msra.mxu0 %v494
  %3679 = vmatprep.subr.mxu0 %v491
  %3680 = vmatpush1.msra.mxu0 %v490
  %3681 = vmatprep.subr.mxu0 %v487
  %3682 = vmatpush1.msra.mxu0 %v486
  %3683 = vmatprep.subr.mxu0 %v483
  %3684 = vmatpush1.msra.mxu0 %v482
  %3685 = vmatprep.subr.mxu0 %v479
  %3686 = vmatpush1.msra.mxu0 %v478
  %3687 = vmatprep.subr.mxu0 %v475
  %3688 = vmatpush1.msra.mxu0 %v474
  %3689 = vmatprep.subr.mxu0 %v471
  %3690 = vmatpush1.msra.mxu0 %v470
  %3691 = vmatprep.subr.mxu0 %v467
  %3692 = vmatpush1.msra.mxu0 %v466
  %3693 = vmatprep.subr.mxu0 %v591
  %3694 = vmatpush2.msra.mxu0 %v590
  %3695 = vmatprep.subr.mxu0 %v587
  %3696 = vmatpush2.msra.mxu0 %v586
  %3697 = vmatprep.subr.mxu0 %v583
  %3698 = vmatpush2.msra.mxu0 %v582
  %3699 = vmatprep.subr.mxu0 %v579
  %3700 = vmatpush2.msra.mxu0 %v578
  %3701 = vmatprep.subr.mxu0 %v575
  %3702 = vmatpush2.msra.mxu0 %v574
  %3703 = vmatprep.subr.mxu0 %v571
  %3704 = vmatpush2.msra.mxu0 %v570
  %3705 = vmatprep.subr.mxu0 %v567
  %3706 = vmatpush2.msra.mxu0 %v566
  %3707 = vmatprep.subr.mxu0 %v563
  %3708 = vmatpush2.msra.mxu0 %v562
  %3709 = vmatprep.subr.mxu0 %v559
  %3710 = vmatpush2.msra.mxu0 %v558
  %3711 = vmatprep.subr.mxu0 %v555
  %3712 = vmatpush2.msra.mxu0 %v554
  %3713 = vmatprep.subr.mxu0 %v551
  %3714 = vmatpush2.msra.mxu0 %v550
  %3715 = vmatprep.subr.mxu0 %v547
  %3716 = vmatpush2.msra.mxu0 %v546
  %3717 = vmatprep.subr.mxu0 %v543
  %3718 = vmatpush2.msra.mxu0 %v542
  %3719 = vmatprep.subr.mxu0 %v539
  %3720 = vmatpush2.msra.mxu0 %v538
  %3721 = vmatprep.subr.mxu0 %v535
  %3722 = vmatpush2.msra.mxu0 %v534
  %3723 = vmatprep.subr.mxu0 %v531
  %3724 = vmatpush2.msra.mxu0 %v530
  %3725 = vmatprep.mubr.f32.mxu0 %v3087
  %3726 = vmatmul.mubr.f32.gmra.mxu0 %v3589
  %v3727 = vpop.f32.mrf.mxu0
  %v3728 = vadd.f32 %v605, %v3727
  %v3729 = vpop.f32.mrf.mxu0
  %v3730 = vadd.f32 %v609, %v3729
  %3731 = vdwg.mxu0
  %v3732 = vxor.u32 %v3657, 2147483648
  %v3733 = vmul.f32 %v3732, 1.442695
  %v3734 = vpow.pop %v3733
  %v3735 = vadd.f32 %v3734, 1.0
  %v3736 = vrcp.pop %v3735
  %v3737 = vmul.f32 1.0, %v3736
  %v3738 = vxor.u32 %v3659, 2147483648
  %v3739 = vmul.f32 %v3738, 1.442695
  %v3740 = vpow.pop %v3739
  %v3741 = vadd.f32 %v3740, 1.0
  %v3742 = vrcp.pop %v3741
  %v3743 = vmul.f32 1.0, %v3742
  %v3744 = vtanh.pop %v3728
  %v3745 = vxor.u32 %v3730, 2147483648
  %v3746 = vmul.f32 %v3745, 1.442695
  %v3747 = vpow.pop %v3746
  %v3748 = vadd.f32 %v3747, 1.0
  %v3749 = vrcp.pop %v3748
  %v3750 = vmul.f32 1.0, %v3749
  %v3751 = vmul.f32 %v3743, %v3085
  %v3752 = vmul.f32 %v3737, %v3744
  %v3753 = vadd.f32 %v3751, %v3752
  %v3754 = vtanh.pop %v3753
  %v3755 = vmul.f32 %v3750, %v3754
  %3756 = vmatprep.subr.mxu0 %v842
  %3757 = vmatpush1.msra.mxu0 %v841
  %3758 = vmatprep.subr.mxu0 %v838
  %3759 = vmatpush1.msra.mxu0 %v837
  %3760 = vmatprep.subr.mxu0 %v834
  %3761 = vmatpush1.msra.mxu0 %v833
  %3762 = vmatprep.subr.mxu0 %v830
  %3763 = vmatpush1.msra.mxu0 %v829
  %3764 = vmatprep.subr.mxu0 %v826
  %3765 = vmatpush1.msra.mxu0 %v825
  %3766 = vmatprep.subr.mxu0 %v822
  %3767 = vmatpush1.msra.mxu0 %v821
  %3768 = vmatprep.subr.mxu0 %v818
  %3769 = vmatpush1.msra.mxu0 %v817
  %3770 = vmatprep.subr.mxu0 %v814
  %3771 = vmatpush1.msra.mxu0 %v813
  %3772 = vmatprep.subr.mxu0 %v810
  %3773 = vmatpush1.msra.mxu0 %v809
  %3774 = vmatprep.subr.mxu0 %v806
  %3775 = vmatpush1.msra.mxu0 %v805
  %3776 = vmatprep.subr.mxu0 %v802
  %3777 = vmatpush1.msra.mxu0 %v801
  %3778 = vmatprep.subr.mxu0 %v798
  %3779 = vmatpush1.msra.mxu0 %v797
  %3780 = vmatprep.subr.mxu0 %v794
  %3781 = vmatpush1.msra.mxu0 %v793
  %3782 = vmatprep.subr.mxu0 %v790
  %3783 = vmatpush1.msra.mxu0 %v789
  %3784 = vmatprep.subr.mxu0 %v786
  %3785 = vmatpush1.msra.mxu0 %v785
  %3786 = vmatprep.subr.mxu0 %v782
  %3787 = vmatpush1.msra.mxu0 %v781
  %3788 = vmatprep.subr.mxu0 %v906
  %3789 = vmatpush2.msra.mxu0 %v905
  %3790 = vmatprep.subr.mxu0 %v902
  %3791 = vmatpush2.msra.mxu0 %v901
  %3792 = vmatprep.subr.mxu0 %v898
  %3793 = vmatpush2.msra.mxu0 %v897
  %3794 = vmatprep.subr.mxu0 %v894
  %3795 = vmatpush2.msra.mxu0 %v893
  %3796 = vmatprep.subr.mxu0 %v890
  %3797 = vmatpush2.msra.mxu0 %v889
  %3798 = vmatprep.subr.mxu0 %v886
  %3799 = vmatpush2.msra.mxu0 %v885
  %3800 = vmatprep.subr.mxu0 %v882
  %3801 = vmatpush2.msra.mxu0 %v881
  %3802 = vmatprep.subr.mxu0 %v878
  %3803 = vmatpush2.msra.mxu0 %v877
  %3804 = vmatprep.subr.mxu0 %v874
  %3805 = vmatpush2.msra.mxu0 %v873
  %3806 = vmatprep.subr.mxu0 %v870
  %3807 = vmatpush2.msra.mxu0 %v869
  %3808 = vmatprep.subr.mxu0 %v866
  %3809 = vmatpush2.msra.mxu0 %v865
  %3810 = vmatprep.subr.mxu0 %v862
  %3811 = vmatpush2.msra.mxu0 %v861
  %3812 = vmatprep.subr.mxu0 %v858
  %3813 = vmatpush2.msra.mxu0 %v857
  %3814 = vmatprep.subr.mxu0 %v854
  %3815 = vmatpush2.msra.mxu0 %v853
  %3816 = vmatprep.subr.mxu0 %v850
  %3817 = vmatpush2.msra.mxu0 %v849
  %3818 = vmatprep.subr.mxu0 %v846
  %3819 = vmatpush2.msra.mxu0 %v845
  %3820 = vmatprep.mubr.f32.mxu0 %v3253
  %3821 = vmatmul.mubr.f32.gmra.mxu0 %v3755
  %v3822 = vpop.f32.mrf.mxu0
  %v3823 = vadd.f32 %v915, %v3822
  %v3824 = vpop.f32.mrf.mxu0
  %v3825 = vadd.f32 %v919, %v3824
  %3826 = vdwg.mxu0
  %3827 = vmatprep.subr.mxu0 %v844
  %3828 = vmatpush1.msra.mxu0 %v843
  %3829 = vmatprep.subr.mxu0 %v840
  %3830 = vmatpush1.msra.mxu0 %v839
  %3831 = vmatprep.subr.mxu0 %v836
  %3832 = vmatpush1.msra.mxu0 %v835
  %3833 = vmatprep.subr.mxu0 %v832
  %3834 = vmatpush1.msra.mxu0 %v831
  %3835 = vmatprep.subr.mxu0 %v828
  %3836 = vmatpush1.msra.mxu0 %v827
  %3837 = vmatprep.subr.mxu0 %v824
  %3838 = vmatpush1.msra.mxu0 %v823
  %3839 = vmatprep.subr.mxu0 %v820
  %3840 = vmatpush1.msra.mxu0 %v819
  %3841 = vmatprep.subr.mxu0 %v816
  %3842 = vmatpush1.msra.mxu0 %v815
  %3843 = vmatprep.subr.mxu0 %v812
  %3844 = vmatpush1.msra.mxu0 %v811
  %3845 = vmatprep.subr.mxu0 %v808
  %3846 = vmatpush1.msra.mxu0 %v807
  %3847 = vmatprep.subr.mxu0 %v804
  %3848 = vmatpush1.msra.mxu0 %v803
  %3849 = vmatprep.subr.mxu0 %v800
  %3850 = vmatpush1.msra.mxu0 %v799
  %3851 = vmatprep.subr.mxu0 %v796
  %3852 = vmatpush1.msra.mxu0 %v795
  %3853 = vmatprep.subr.mxu0 %v792
  %3854 = vmatpush1.msra.mxu0 %v791
  %3855 = vmatprep.subr.mxu0 %v788
  %3856 = vmatpush1.msra.mxu0 %v787
  %3857 = vmatprep.subr.mxu0 %v784
  %3858 = vmatpush1.msra.mxu0 %v783
  %3859 = vmatprep.subr.mxu0 %v908
  %3860 = vmatpush2.msra.mxu0 %v907
  %3861 = vmatprep.subr.mxu0 %v904
  %3862 = vmatpush2.msra.mxu0 %v903
  %3863 = vmatprep.subr.mxu0 %v900
  %3864 = vmatpush2.msra.mxu0 %v899
  %3865 = vmatprep.subr.mxu0 %v896
  %3866 = vmatpush2.msra.mxu0 %v895
  %3867 = vmatprep.subr.mxu0 %v892
  %3868 = vmatpush2.msra.mxu0 %v891
  %3869 = vmatprep.subr.mxu0 %v888
  %3870 = vmatpush2.msra.mxu0 %v887
  %3871 = vmatprep.subr.mxu0 %v884
  %3872 = vmatpush2.msra.mxu0 %v883
  %3873 = vmatprep.subr.mxu0 %v880
  %3874 = vmatpush2.msra.mxu0 %v879
  %3875 = vmatprep.subr.mxu0 %v876
  %3876 = vmatpush2.msra.mxu0 %v875
  %3877 = vmatprep.subr.mxu0 %v872
  %3878 = vmatpush2.msra.mxu0 %v871
  %3879 = vmatprep.subr.mxu0 %v868
  %3880 = vmatpush2.msra.mxu0 %v867
  %3881 = vmatprep.subr.mxu0 %v864
  %3882 = vmatpush2.msra.mxu0 %v863
  %3883 = vmatprep.subr.mxu0 %v860
  %3884 = vmatpush2.msra.mxu0 %v859
  %3885 = vmatprep.subr.mxu0 %v856
  %3886 = vmatpush2.msra.mxu0 %v855
  %3887 = vmatprep.subr.mxu0 %v852
  %3888 = vmatpush2.msra.mxu0 %v851
  %3889 = vmatprep.subr.mxu0 %v848
  %3890 = vmatpush2.msra.mxu0 %v847
  %3891 = vmatprep.mubr.f32.mxu0 %v3253
  %3892 = vmatmul.mubr.f32.gmra.mxu0 %v3755
  %v3893 = vpop.f32.mrf.mxu0
  %v3894 = vadd.f32 %v923, %v3893
  %v3895 = vpop.f32.mrf.mxu0
  %v3896 = vadd.f32 %v927, %v3895
  %3897 = vdwg.mxu0
  %v3898 = vxor.u32 %v3823, 2147483648
  %v3899 = vmul.f32 %v3898, 1.442695
  %v3900 = vpow.pop %v3899
  %v3901 = vadd.f32 %v3900, 1.0
  %v3902 = vrcp.pop %v3901
  %v3903 = vmul.f32 1.0, %v3902
  %v3904 = vxor.u32 %v3825, 2147483648
  %v3905 = vmul.f32 %v3904, 1.442695
  %v3906 = vpow.pop %v3905
  %v3907 = vadd.f32 %v3906, 1.0
  %v3908 = vrcp.pop %v3907
  %v3909 = vmul.f32 1.0, %v3908
  %v3910 = vtanh.pop %v3894
  %v3911 = vxor.u32 %v3896, 2147483648
  %v3912 = vmul.f32 %v3911, 1.442695
  %v3913 = vpow.pop %v3912
  %v3914 = vadd.f32 %v3913, 1.0
  %v3915 = vrcp.pop %v3914
  %v3916 = vmul.f32 1.0, %v3915
  %v3917 = vmul.f32 %v3909, %v3251
  %v3918 = vmul.f32 %v3903, %v3910
  %v3919 = vadd.f32 %v3917, %v3918
  %v3920 = vtanh.pop %v3919
  %v3921 = vmul.f32 %v3916, %v3920
  %3922 = vmatprep.subr.mxu0 %v1160
  %3923 = vmatpush1.msra.mxu0 %v1159
  %3924 = vmatprep.subr.mxu0 %v1156
  %3925 = vmatpush1.msra.mxu0 %v1155
  %3926 = vmatprep.subr.mxu0 %v1152
  %3927 = vmatpush1.msra.mxu0 %v1151
  %3928 = vmatprep.subr.mxu0 %v1148
  %3929 = vmatpush1.msra.mxu0 %v1147
  %3930 = vmatprep.subr.mxu0 %v1144
  %3931 = vmatpush1.msra.mxu0 %v1143
  %3932 = vmatprep.subr.mxu0 %v1140
  %3933 = vmatpush1.msra.mxu0 %v1139
  %3934 = vmatprep.subr.mxu0 %v1136
  %3935 = vmatpush1.msra.mxu0 %v1135
  %3936 = vmatprep.subr.mxu0 %v1132
  %3937 = vmatpush1.msra.mxu0 %v1131
  %3938 = vmatprep.subr.mxu0 %v1128
  %3939 = vmatpush1.msra.mxu0 %v1127
  %3940 = vmatprep.subr.mxu0 %v1124
  %3941 = vmatpush1.msra.mxu0 %v1123
  %3942 = vmatprep.subr.mxu0 %v1120
  %3943 = vmatpush1.msra.mxu0 %v1119
  %3944 = vmatprep.subr.mxu0 %v1116
  %3945 = vmatpush1.msra.mxu0 %v1115
  %3946 = vmatprep.subr.mxu0 %v1112
  %3947 = vmatpush1.msra.mxu0 %v1111
  %3948 = vmatprep.subr.mxu0 %v1108
  %3949 = vmatpush1.msra.mxu0 %v1107
  %3950 = vmatprep.subr.mxu0 %v1104
  %3951 = vmatpush1.msra.mxu0 %v1103
  %3952 = vmatprep.subr.mxu0 %v1100
  %3953 = vmatpush1.msra.mxu0 %v1099
  %3954 = vmatprep.subr.mxu0 %v1224
  %3955 = vmatpush2.msra.mxu0 %v1223
  %3956 = vmatprep.subr.mxu0 %v1220
  %3957 = vmatpush2.msra.mxu0 %v1219
  %3958 = vmatprep.subr.mxu0 %v1216
  %3959 = vmatpush2.msra.mxu0 %v1215
  %3960 = vmatprep.subr.mxu0 %v1212
  %3961 = vmatpush2.msra.mxu0 %v1211
  %3962 = vmatprep.subr.mxu0 %v1208
  %3963 = vmatpush2.msra.mxu0 %v1207
  %3964 = vmatprep.subr.mxu0 %v1204
  %3965 = vmatpush2.msra.mxu0 %v1203
  %3966 = vmatprep.subr.mxu0 %v1200
  %3967 = vmatpush2.msra.mxu0 %v1199
  %3968 = vmatprep.subr.mxu0 %v1196
  %3969 = vmatpush2.msra.mxu0 %v1195
  %3970 = vmatprep.subr.mxu0 %v1192
  %3971 = vmatpush2.msra.mxu0 %v1191
  %3972 = vmatprep.subr.mxu0 %v1188
  %3973 = vmatpush2.msra.mxu0 %v1187
  %3974 = vmatprep.subr.mxu0 %v1184
  %3975 = vmatpush2.msra.mxu0 %v1183
  %3976 = vmatprep.subr.mxu0 %v1180
  %3977 = vmatpush2.msra.mxu0 %v1179
  %3978 = vmatprep.subr.mxu0 %v1176
  %3979 = vmatpush2.msra.mxu0 %v1175
  %3980 = vmatprep.subr.mxu0 %v1172
  %3981 = vmatpush2.msra.mxu0 %v1171
  %3982 = vmatprep.subr.mxu0 %v1168
  %3983 = vmatpush2.msra.mxu0 %v1167
  %3984 = vmatprep.subr.mxu0 %v1164
  %3985 = vmatpush2.msra.mxu0 %v1163
  %3986 = vmatprep.mubr.f32.mxu0 %v3419
  %3987 = vmatmul.mubr.f32.gmra.mxu0 %v3921
  %v3988 = vpop.f32.mrf.mxu0
  %v3989 = vadd.f32 %v1233, %v3988
  %v3990 = vpop.f32.mrf.mxu0
  %v3991 = vadd.f32 %v1237, %v3990
  %3992 = vdwg.mxu0
  %3993 = vmatprep.subr.mxu0 %v1162
  %3994 = vmatpush1.msra.mxu0 %v1161
  %3995 = vmatprep.subr.mxu0 %v1158
  %3996 = vmatpush1.msra.mxu0 %v1157
  %3997 = vmatprep.subr.mxu0 %v1154
  %3998 = vmatpush1.msra.mxu0 %v1153
  %3999 = vmatprep.subr.mxu0 %v1150
  %4000 = vmatpush1.msra.mxu0 %v1149
  %4001 = vmatprep.subr.mxu0 %v1146
  %4002 = vmatpush1.msra.mxu0 %v1145
  %4003 = vmatprep.subr.mxu0 %v1142
  %4004 = vmatpush1.msra.mxu0 %v1141
  %4005 = vmatprep.subr.mxu0 %v1138
  %4006 = vmatpush1.msra.mxu0 %v1137
  %4007 = vmatprep.subr.mxu0 %v1134
  %4008 = vmatpush1.msra.mxu0 %v1133
  %4009 = vmatprep.subr.mxu0 %v1130
  %4010 = vmatpush1.msra.mxu0 %v1129
  %4011 = vmatprep.subr.mxu0 %v1126
  %4012 = vmatpush1.msra.mxu0 %v1125
  %4013 = vmatprep.subr.mxu0 %v1122
  %4014 = vmatpush1.msra.mxu0 %v1121
  %4015 = vmatprep.subr.mxu0 %v1118
  %4016 = vmatpush1.msra.mxu0 %v1117
  %4017 = vmatprep.subr.mxu0 %v1114
  %4018 = vmatpush1.msra.mxu0 %v1113
  %4019 = vmatprep.subr.mxu0 %v1110
  %4020 = vmatpush1.msra.mxu0 %v1109
  %4021 = vmatprep.subr.mxu0 %v1106
  %4022 = vmatpush1.msra.mxu0 %v1105
  %4023 = vmatprep.subr.mxu0 %v1102
  %4024 = vmatpush1.msra.mxu0 %v1101
  %4025 = vmatprep.subr.mxu0 %v1226
  %4026 = vmatpush2.msra.mxu0 %v1225
  %4027 = vmatprep.subr.mxu0 %v1222
  %4028 = vmatpush2.msra.mxu0 %v1221
  %4029 = vmatprep.subr.mxu0 %v1218
  %4030 = vmatpush2.msra.mxu0 %v1217
  %4031 = vmatprep.subr.mxu0 %v1214
  %4032 = vmatpush2.msra.mxu0 %v1213
  %4033 = vmatprep.subr.mxu0 %v1210
  %4034 = vmatpush2.msra.mxu0 %v1209
  %4035 = vmatprep.subr.mxu0 %v1206
  %4036 = vmatpush2.msra.mxu0 %v1205
  %4037 = vmatprep.subr.mxu0 %v1202
  %4038 = vmatpush2.msra.mxu0 %v1201
  %4039 = vmatprep.subr.mxu0 %v1198
  %4040 = vmatpush2.msra.mxu0 %v1197
  %4041 = vmatprep.subr.mxu0 %v1194
  %4042 = vmatpush2.msra.mxu0 %v1193
  %4043 = vmatprep.subr.mxu0 %v1190
  %4044 = vmatpush2.msra.mxu0 %v1189
  %4045 = vmatprep.subr.mxu0 %v1186
  %4046 = vmatpush2.msra.mxu0 %v1185
  %4047 = vmatprep.subr.mxu0 %v1182
  %4048 = vmatpush2.msra.mxu0 %v1181
  %4049 = vmatprep.subr.mxu0 %v1178
  %4050 = vmatpush2.msra.mxu0 %v1177
  %4051 = vmatprep.subr.mxu0 %v1174
  %4052 = vmatpush2.msra.mxu0 %v1173
  %4053 = vmatprep.subr.mxu0 %v1170
  %4054 = vmatpush2.msra.mxu0 %v1169
  %4055 = vmatprep.subr.mxu0 %v1166
  %4056 = vmatpush2.msra.mxu0 %v1165
  %4057 = vmatprep.mubr.f32.mxu0 %v3419
  %4058 = vmatmul.mubr.f32.gmra.mxu0 %v3921
  %v4059 = vpop.f32.mrf.mxu0
  %v4060 = vadd.f32 %v1241, %v4059
  %v4061 = vpop.f32.mrf.mxu0
  %v4062 = vadd.f32 %v1245, %v4061
  %4063 = vdwg.mxu0
  %v4064 = vxor.u32 %v3989, 2147483648
  %v4065 = vmul.f32 %v4064, 1.442695
  %v4066 = vpow.pop %v4065
  %v4067 = vadd.f32 %v4066, 1.0
  %v4068 = vrcp.pop %v4067
  %v4069 = vmul.f32 1.0, %v4068
  %v4070 = vxor.u32 %v3991, 2147483648
  %v4071 = vmul.f32 %v4070, 1.442695
  %v4072 = vpow.pop %v4071
  %v4073 = vadd.f32 %v4072, 1.0
  %v4074 = vrcp.pop %v4073
  %v4075 = vmul.f32 1.0, %v4074
  %v4076 = vtanh.pop %v4060
  %v4077 = vxor.u32 %v4062, 2147483648
  %v4078 = vmul.f32 %v4077, 1.442695
  %v4079 = vpow.pop %v4078
  %v4080 = vadd.f32 %v4079, 1.0
  %v4081 = vrcp.pop %v4080
  %v4082 = vmul.f32 1.0, %v4081
  %v4083 = vmul.f32 %v4075, %v3417
  %v4084 = vmul.f32 %v4069, %v4076
  %v4085 = vadd.f32 %v4083, %v4084
  %v4086 = vtanh.pop %v4085
  %v4087 = vmul.f32 %v4082, %v4086
  %4088 = vmatprep.subr.mxu0 %v291
  %4089 = vmatpush1.msra.mxu0 %v290
  %4090 = vmatprep.subr.mxu0 %v287
  %4091 = vmatpush1.msra.mxu0 %v286
  %4092 = vmatprep.subr.mxu0 %v283
  %4093 = vmatpush1.msra.mxu0 %v282
  %4094 = vmatprep.subr.mxu0 %v279
  %4095 = vmatpush1.msra.mxu0 %v278
  %4096 = vmatprep.subr.mxu0 %v275
  %4097 = vmatpush1.msra.mxu0 %v274
  %4098 = vmatprep.subr.mxu0 %v271
  %4099 = vmatpush1.msra.mxu0 %v270
  %4100 = vmatprep.subr.mxu0 %v267
  %4101 = vmatpush1.msra.mxu0 %v266
  %4102 = vmatprep.subr.mxu0 %v263
  %4103 = vmatpush1.msra.mxu0 %v262
  %4104 = vmatprep.subr.mxu0 %v259
  %4105 = vmatpush1.msra.mxu0 %v258
  %4106 = vmatprep.subr.mxu0 %v255
  %4107 = vmatpush1.msra.mxu0 %v254
  %4108 = vmatprep.subr.mxu0 %v251
  %4109 = vmatpush1.msra.mxu0 %v250
  %4110 = vmatprep.subr.mxu0 %v247
  %4111 = vmatpush1.msra.mxu0 %v246
  %4112 = vmatprep.subr.mxu0 %v243
  %4113 = vmatpush1.msra.mxu0 %v242
  %4114 = vmatprep.subr.mxu0 %v239
  %4115 = vmatpush1.msra.mxu0 %v238
  %4116 = vmatprep.subr.mxu0 %v235
  %4117 = vmatpush1.msra.mxu0 %v234
  %4118 = vmatprep.subr.mxu0 %v231
  %4119 = vmatpush1.msra.mxu0 %v230
  %4120 = vmatprep.subr.mxu0 0.0
  %4121 = vmatpush2.msra.mxu0 0.0
  %4122 = vmatprep.subr.mxu0 0.0
  %4123 = vmatpush2.msra.mxu0 0.0
  %4124 = vmatprep.subr.mxu0 0.0
  %4125 = vmatpush2.msra.mxu0 0.0
  %4126 = vmatprep.subr.mxu0 0.0
  %4127 = vmatpush2.msra.mxu0 0.0
  %4128 = vmatprep.subr.mxu0 0.0
  %4129 = vmatpush2.msra.mxu0 0.0
  %4130 = vmatprep.subr.mxu0 0.0
  %4131 = vmatpush2.msra.mxu0 0.0
  %4132 = vmatprep.subr.mxu0 0.0
  %4133 = vmatpush2.msra.mxu0 0.0
  %4134 = vmatprep.subr.mxu0 0.0
  %4135 = vmatpush2.msra.mxu0 0.0
  %4136 = vmatprep.subr.mxu0 0.0
  %4137 = vmatpush2.msra.mxu0 0.0
  %4138 = vmatprep.subr.mxu0 0.0
  %4139 = vmatpush2.msra.mxu0 0.0
  %4140 = vmatprep.subr.mxu0 0.0
  %4141 = vmatpush2.msra.mxu0 0.0
  %4142 = vmatprep.subr.mxu0 0.0
  %4143 = vmatpush2.msra.mxu0 0.0
  %4144 = vmatprep.subr.mxu0 0.0
  %4145 = vmatpush2.msra.mxu0 0.0
  %4146 = vmatprep.subr.mxu0 0.0
  %4147 = vmatpush2.msra.mxu0 0.0
  %4148 = vmatprep.subr.mxu0 0.0
  %4149 = vmatpush2.msra.mxu0 0.0
  %4150 = vmatprep.subr.mxu0 0.0
  %4151 = vmatpush2.msra.mxu0 0.0
  %4152 = vmatprep.mubr.f32.mxu0 0.0
  %4153 = vmatmul.mubr.f32.gmra.mxu0 %v3589
  %v4154 = vpop.f32.mrf.mxu0
  %v4155 = vadd.f32 0.0, %v4154
  %v4156 = vpop.f32.mrf.mxu0
  %v4157 = vadd.f32 0.0, %v4156
  %4158 = vdwg.mxu0
  %4159 = vmatprep.subr.mxu0 %v293
  %4160 = vmatpush1.msra.mxu0 %v292
  %4161 = vmatprep.subr.mxu0 %v289
  %4162 = vmatpush1.msra.mxu0 %v288
  %4163 = vmatprep.subr.mxu0 %v285
  %4164 = vmatpush1.msra.mxu0 %v284
  %4165 = vmatprep.subr.mxu0 %v281
  %4166 = vmatpush1.msra.mxu0 %v280
  %4167 = vmatprep.subr.mxu0 %v277
  %4168 = vmatpush1.msra.mxu0 %v276
  %4169 = vmatprep.subr.mxu0 %v273
  %4170 = vmatpush1.msra.mxu0 %v272
  %4171 = vmatprep.subr.mxu0 %v269
  %4172 = vmatpush1.msra.mxu0 %v268
  %4173 = vmatprep.subr.mxu0 %v265
  %4174 = vmatpush1.msra.mxu0 %v264
  %4175 = vmatprep.subr.mxu0 %v261
  %4176 = vmatpush1.msra.mxu0 %v260
  %4177 = vmatprep.subr.mxu0 %v257
  %4178 = vmatpush1.msra.mxu0 %v256
  %4179 = vmatprep.subr.mxu0 %v253
  %4180 = vmatpush1.msra.mxu0 %v252
  %4181 = vmatprep.subr.mxu0 %v249
  %4182 = vmatpush1.msra.mxu0 %v248
  %4183 = vmatprep.subr.mxu0 %v245
  %4184 = vmatpush1.msra.mxu0 %v244
  %4185 = vmatprep.subr.mxu0 %v241
  %4186 = vmatpush1.msra.mxu0 %v240
  %4187 = vmatprep.subr.mxu0 %v237
  %4188 = vmatpush1.msra.mxu0 %v236
  %4189 = vmatprep.subr.mxu0 %v233
  %4190 = vmatpush1.msra.mxu0 %v232
  %4191 = vmatprep.subr.mxu0 0.0
  %4192 = vmatpush2.msra.mxu0 0.0
  %4193 = vmatprep.subr.mxu0 0.0
  %4194 = vmatpush2.msra.mxu0 0.0
  %4195 = vmatprep.subr.mxu0 0.0
  %4196 = vmatpush2.msra.mxu0 0.0
  %4197 = vmatprep.subr.mxu0 0.0
  %4198 = vmatpush2.msra.mxu0 0.0
  %4199 = vmatprep.subr.mxu0 0.0
  %4200 = vmatpush2.msra.mxu0 0.0
  %4201 = vmatprep.subr.mxu0 0.0
  %4202 = vmatpush2.msra.mxu0 0.0
  %4203 = vmatprep.subr.mxu0 0.0
  %4204 = vmatpush2.msra.mxu0 0.0
  %4205 = vmatprep.subr.mxu0 0.0
  %4206 = vmatpush2.msra.mxu0 0.0
  %4207 = vmatprep.subr.mxu0 0.0
  %4208 = vmatpush2.msra.mxu0 0.0
  %4209 = vmatprep.subr.mxu0 0.0
  %4210 = vmatpush2.msra.mxu0 0.0
  %4211 = vmatprep.subr.mxu0 0.0
  %4212 = vmatpush2.msra.mxu0 0.0
  %4213 = vmatprep.subr.mxu0 0.0
  %4214 = vmatpush2.msra.mxu0 0.0
  %4215 = vmatprep.subr.mxu0 0.0
  %4216 = vmatpush2.msra.mxu0 0.0
  %4217 = vmatprep.subr.mxu0 0.0
  %4218 = vmatpush2.msra.mxu0 0.0
  %4219 = vmatprep.subr.mxu0 0.0
  %4220 = vmatpush2.msra.mxu0 0.0
  %4221 = vmatprep.subr.mxu0 0.0
  %4222 = vmatpush2.msra.mxu0 0.0
  %4223 = vmatprep.mubr.f32.mxu0 0.0
  %4224 = vmatmul.mubr.f32.gmra.mxu0 %v3589
  %v4225 = vpop.f32.mrf.mxu0
  %v4226 = vadd.f32 0.0, %v4225
  %v4227 = vpop.f32.mrf.mxu0
  %v4228 = vadd.f32 0.0, %v4227
  %4229 = vdwg.mxu0
  %v4230 = vadd.f32 %v155, %v4155
  %v4231 = vadd.f32 %v157, %v4157
  %v4232 = vadd.f32 %v226, %v4226
  %v4233 = vadd.f32 %v228, %v4228
  %v4234 = vxor.u32 %v4230, 2147483648
  %v4235 = vmul.f32 %v4234, 1.442695
  %v4236 = vpow.pop %v4235
  %v4237 = vadd.f32 %v4236, 1.0
  %v4238 = vrcp.pop %v4237
  %v4239 = vmul.f32 1.0, %v4238
  %v4240 = vxor.u32 %v4231, 2147483648
  %v4241 = vmul.f32 %v4240, 1.442695
  %v4242 = vpow.pop %v4241
  %v4243 = vadd.f32 %v4242, 1.0
  %v4244 = vrcp.pop %v4243
  %v4245 = vmul.f32 1.0, %v4244
  %v4246 = vtanh.pop %v4232
  %v4247 = vxor.u32 %v4233, 2147483648
  %v4248 = vmul.f32 %v4247, 1.442695
  %v4249 = vpow.pop %v4248
  %v4250 = vadd.f32 %v4249, 1.0
  %v4251 = vrcp.pop %v4250
  %v4252 = vmul.f32 1.0, %v4251
  %v4253 = vmul.f32 %v4245, %v3587
  %v4254 = vmul.f32 %v4239, %v4246
  %v4255 = vadd.f32 %v4253, %v4254
  %v4256 = vtanh.pop %v4255
  %v4257 = vmul.f32 %v4252, %v4256
  %4258 = vmatprep.subr.mxu0 %v525
  %4259 = vmatpush1.msra.mxu0 %v524
  %4260 = vmatprep.subr.mxu0 %v521
  %4261 = vmatpush1.msra.mxu0 %v520
  %4262 = vmatprep.subr.mxu0 %v517
  %4263 = vmatpush1.msra.mxu0 %v516
  %4264 = vmatprep.subr.mxu0 %v513
  %4265 = vmatpush1.msra.mxu0 %v512
  %4266 = vmatprep.subr.mxu0 %v509
  %4267 = vmatpush1.msra.mxu0 %v508
  %4268 = vmatprep.subr.mxu0 %v505
  %4269 = vmatpush1.msra.mxu0 %v504
  %4270 = vmatprep.subr.mxu0 %v501
  %4271 = vmatpush1.msra.mxu0 %v500
  %4272 = vmatprep.subr.mxu0 %v497
  %4273 = vmatpush1.msra.mxu0 %v496
  %4274 = vmatprep.subr.mxu0 %v493
  %4275 = vmatpush1.msra.mxu0 %v492
  %4276 = vmatprep.subr.mxu0 %v489
  %4277 = vmatpush1.msra.mxu0 %v488
  %4278 = vmatprep.subr.mxu0 %v485
  %4279 = vmatpush1.msra.mxu0 %v484
  %4280 = vmatprep.subr.mxu0 %v481
  %4281 = vmatpush1.msra.mxu0 %v480
  %4282 = vmatprep.subr.mxu0 %v477
  %4283 = vmatpush1.msra.mxu0 %v476
  %4284 = vmatprep.subr.mxu0 %v473
  %4285 = vmatpush1.msra.mxu0 %v472
  %4286 = vmatprep.subr.mxu0 %v469
  %4287 = vmatpush1.msra.mxu0 %v468
  %4288 = vmatprep.subr.mxu0 %v465
  %4289 = vmatpush1.msra.mxu0 %v464
  %4290 = vmatprep.subr.mxu0 %v589
  %4291 = vmatpush2.msra.mxu0 %v588
  %4292 = vmatprep.subr.mxu0 %v585
  %4293 = vmatpush2.msra.mxu0 %v584
  %4294 = vmatprep.subr.mxu0 %v581
  %4295 = vmatpush2.msra.mxu0 %v580
  %4296 = vmatprep.subr.mxu0 %v577
  %4297 = vmatpush2.msra.mxu0 %v576
  %4298 = vmatprep.subr.mxu0 %v573
  %4299 = vmatpush2.msra.mxu0 %v572
  %4300 = vmatprep.subr.mxu0 %v569
  %4301 = vmatpush2.msra.mxu0 %v568
  %4302 = vmatprep.subr.mxu0 %v565
  %4303 = vmatpush2.msra.mxu0 %v564
  %4304 = vmatprep.subr.mxu0 %v561
  %4305 = vmatpush2.msra.mxu0 %v560
  %4306 = vmatprep.subr.mxu0 %v557
  %4307 = vmatpush2.msra.mxu0 %v556
  %4308 = vmatprep.subr.mxu0 %v553
  %4309 = vmatpush2.msra.mxu0 %v552
  %4310 = vmatprep.subr.mxu0 %v549
  %4311 = vmatpush2.msra.mxu0 %v548
  %4312 = vmatprep.subr.mxu0 %v545
  %4313 = vmatpush2.msra.mxu0 %v544
  %4314 = vmatprep.subr.mxu0 %v541
  %4315 = vmatpush2.msra.mxu0 %v540
  %4316 = vmatprep.subr.mxu0 %v537
  %4317 = vmatpush2.msra.mxu0 %v536
  %4318 = vmatprep.subr.mxu0 %v533
  %4319 = vmatpush2.msra.mxu0 %v532
  %4320 = vmatprep.subr.mxu0 %v529
  %4321 = vmatpush2.msra.mxu0 %v528
  %4322 = vmatprep.mubr.f32.mxu0 %v3755
  %4323 = vmatmul.mubr.f32.gmra.mxu0 %v4257
  %v4324 = vpop.f32.mrf.mxu0
  %v4325 = vadd.f32 %v597, %v4324
  %v4326 = vpop.f32.mrf.mxu0
  %v4327 = vadd.f32 %v601, %v4326
  %4328 = vdwg.mxu0
  %4329 = vmatprep.subr.mxu0 %v527
  %4330 = vmatpush1.msra.mxu0 %v526
  %4331 = vmatprep.subr.mxu0 %v523
  %4332 = vmatpush1.msra.mxu0 %v522
  %4333 = vmatprep.subr.mxu0 %v519
  %4334 = vmatpush1.msra.mxu0 %v518
  %4335 = vmatprep.subr.mxu0 %v515
  %4336 = vmatpush1.msra.mxu0 %v514
  %4337 = vmatprep.subr.mxu0 %v511
  %4338 = vmatpush1.msra.mxu0 %v510
  %4339 = vmatprep.subr.mxu0 %v507
  %4340 = vmatpush1.msra.mxu0 %v506
  %4341 = vmatprep.subr.mxu0 %v503
  %4342 = vmatpush1.msra.mxu0 %v502
  %4343 = vmatprep.subr.mxu0 %v499
  %4344 = vmatpush1.msra.mxu0 %v498
  %4345 = vmatprep.subr.mxu0 %v495
  %4346 = vmatpush1.msra.mxu0 %v494
  %4347 = vmatprep.subr.mxu0 %v491
  %4348 = vmatpush1.msra.mxu0 %v490
  %4349 = vmatprep.subr.mxu0 %v487
  %4350 = vmatpush1.msra.mxu0 %v486
  %4351 = vmatprep.subr.mxu0 %v483
  %4352 = vmatpush1.msra.mxu0 %v482
  %4353 = vmatprep.subr.mxu0 %v479
  %4354 = vmatpush1.msra.mxu0 %v478
  %4355 = vmatprep.subr.mxu0 %v475
  %4356 = vmatpush1.msra.mxu0 %v474
  %4357 = vmatprep.subr.mxu0 %v471
  %4358 = vmatpush1.msra.mxu0 %v470
  %4359 = vmatprep.subr.mxu0 %v467
  %4360 = vmatpush1.msra.mxu0 %v466
  %4361 = vmatprep.subr.mxu0 %v591
  %4362 = vmatpush2.msra.mxu0 %v590
  %4363 = vmatprep.subr.mxu0 %v587
  %4364 = vmatpush2.msra.mxu0 %v586
  %4365 = vmatprep.subr.mxu0 %v583
  %4366 = vmatpush2.msra.mxu0 %v582
  %4367 = vmatprep.subr.mxu0 %v579
  %4368 = vmatpush2.msra.mxu0 %v578
  %4369 = vmatprep.subr.mxu0 %v575
  %4370 = vmatpush2.msra.mxu0 %v574
  %4371 = vmatprep.subr.mxu0 %v571
  %4372 = vmatpush2.msra.mxu0 %v570
  %4373 = vmatprep.subr.mxu0 %v567
  %4374 = vmatpush2.msra.mxu0 %v566
  %4375 = vmatprep.subr.mxu0 %v563
  %4376 = vmatpush2.msra.mxu0 %v562
  %4377 = vmatprep.subr.mxu0 %v559
  %4378 = vmatpush2.msra.mxu0 %v558
  %4379 = vmatprep.subr.mxu0 %v555
  %4380 = vmatpush2.msra.mxu0 %v554
  %4381 = vmatprep.subr.mxu0 %v551
  %4382 = vmatpush2.msra.mxu0 %v550
  %4383 = vmatprep.subr.mxu0 %v547
  %4384 = vmatpush2.msra.mxu0 %v546
  %4385 = vmatprep.subr.mxu0 %v543
  %4386 = vmatpush2.msra.mxu0 %v542
  %4387 = vmatprep.subr.mxu0 %v539
  %4388 = vmatpush2.msra.mxu0 %v538
  %4389 = vmatprep.subr.mxu0 %v535
  %4390 = vmatpush2.msra.mxu0 %v534
  %4391 = vmatprep.subr.mxu0 %v531
  %4392 = vmatpush2.msra.mxu0 %v530
  %4393 = vmatprep.mubr.f32.mxu0 %v3755
  %4394 = vmatmul.mubr.f32.gmra.mxu0 %v4257
  %v4395 = vpop.f32.mrf.mxu0
  %v4396 = vadd.f32 %v605, %v4395
  %v4397 = vpop.f32.mrf.mxu0
  %v4398 = vadd.f32 %v609, %v4397
  %4399 = vdwg.mxu0
  %v4400 = vxor.u32 %v4325, 2147483648
  %v4401 = vmul.f32 %v4400, 1.442695
  %v4402 = vpow.pop %v4401
  %v4403 = vadd.f32 %v4402, 1.0
  %v4404 = vrcp.pop %v4403
  %v4405 = vmul.f32 1.0, %v4404
  %v4406 = vxor.u32 %v4327, 2147483648
  %v4407 = vmul.f32 %v4406, 1.442695
  %v4408 = vpow.pop %v4407
  %v4409 = vadd.f32 %v4408, 1.0
  %v4410 = vrcp.pop %v4409
  %v4411 = vmul.f32 1.0, %v4410
  %v4412 = vtanh.pop %v4396
  %v4413 = vxor.u32 %v4398, 2147483648
  %v4414 = vmul.f32 %v4413, 1.442695
  %v4415 = vpow.pop %v4414
  %v4416 = vadd.f32 %v4415, 1.0
  %v4417 = vrcp.pop %v4416
  %v4418 = vmul.f32 1.0, %v4417
  %v4419 = vmul.f32 %v4411, %v3753
  %v4420 = vmul.f32 %v4405, %v4412
  %v4421 = vadd.f32 %v4419, %v4420
  %v4422 = vtanh.pop %v4421
  %v4423 = vmul.f32 %v4418, %v4422
  %4424 = vmatprep.subr.mxu0 %v842
  %4425 = vmatpush1.msra.mxu0 %v841
  %4426 = vmatprep.subr.mxu0 %v838
  %4427 = vmatpush1.msra.mxu0 %v837
  %4428 = vmatprep.subr.mxu0 %v834
  %4429 = vmatpush1.msra.mxu0 %v833
  %4430 = vmatprep.subr.mxu0 %v830
  %4431 = vmatpush1.msra.mxu0 %v829
  %4432 = vmatprep.subr.mxu0 %v826
  %4433 = vmatpush1.msra.mxu0 %v825
  %4434 = vmatprep.subr.mxu0 %v822
  %4435 = vmatpush1.msra.mxu0 %v821
  %4436 = vmatprep.subr.mxu0 %v818
  %4437 = vmatpush1.msra.mxu0 %v817
  %4438 = vmatprep.subr.mxu0 %v814
  %4439 = vmatpush1.msra.mxu0 %v813
  %4440 = vmatprep.subr.mxu0 %v810
  %4441 = vmatpush1.msra.mxu0 %v809
  %4442 = vmatprep.subr.mxu0 %v806
  %4443 = vmatpush1.msra.mxu0 %v805
  %4444 = vmatprep.subr.mxu0 %v802
  %4445 = vmatpush1.msra.mxu0 %v801
  %4446 = vmatprep.subr.mxu0 %v798
  %4447 = vmatpush1.msra.mxu0 %v797
  %4448 = vmatprep.subr.mxu0 %v794
  %4449 = vmatpush1.msra.mxu0 %v793
  %4450 = vmatprep.subr.mxu0 %v790
  %4451 = vmatpush1.msra.mxu0 %v789
  %4452 = vmatprep.subr.mxu0 %v786
  %4453 = vmatpush1.msra.mxu0 %v785
  %4454 = vmatprep.subr.mxu0 %v782
  %4455 = vmatpush1.msra.mxu0 %v781
  %4456 = vmatprep.subr.mxu0 %v906
  %4457 = vmatpush2.msra.mxu0 %v905
  %4458 = vmatprep.subr.mxu0 %v902
  %4459 = vmatpush2.msra.mxu0 %v901
  %4460 = vmatprep.subr.mxu0 %v898
  %4461 = vmatpush2.msra.mxu0 %v897
  %4462 = vmatprep.subr.mxu0 %v894
  %4463 = vmatpush2.msra.mxu0 %v893
  %4464 = vmatprep.subr.mxu0 %v890
  %4465 = vmatpush2.msra.mxu0 %v889
  %4466 = vmatprep.subr.mxu0 %v886
  %4467 = vmatpush2.msra.mxu0 %v885
  %4468 = vmatprep.subr.mxu0 %v882
  %4469 = vmatpush2.msra.mxu0 %v881
  %4470 = vmatprep.subr.mxu0 %v878
  %4471 = vmatpush2.msra.mxu0 %v877
  %4472 = vmatprep.subr.mxu0 %v874
  %4473 = vmatpush2.msra.mxu0 %v873
  %4474 = vmatprep.subr.mxu0 %v870
  %4475 = vmatpush2.msra.mxu0 %v869
  %4476 = vmatprep.subr.mxu0 %v866
  %4477 = vmatpush2.msra.mxu0 %v865
  %4478 = vmatprep.subr.mxu0 %v862
  %4479 = vmatpush2.msra.mxu0 %v861
  %4480 = vmatprep.subr.mxu0 %v858
  %4481 = vmatpush2.msra.mxu0 %v857
  %4482 = vmatprep.subr.mxu0 %v854
  %4483 = vmatpush2.msra.mxu0 %v853
  %4484 = vmatprep.subr.mxu0 %v850
  %4485 = vmatpush2.msra.mxu0 %v849
  %4486 = vmatprep.subr.mxu0 %v846
  %4487 = vmatpush2.msra.mxu0 %v845
  %4488 = vmatprep.mubr.f32.mxu0 %v3921
  %4489 = vmatmul.mubr.f32.gmra.mxu0 %v4423
  %v4490 = vpop.f32.mrf.mxu0
  %v4491 = vadd.f32 %v915, %v4490
  %v4492 = vpop.f32.mrf.mxu0
  %v4493 = vadd.f32 %v919, %v4492
  %4494 = vdwg.mxu0
  %4495 = vmatprep.subr.mxu0 %v844
  %4496 = vmatpush1.msra.mxu0 %v843
  %4497 = vmatprep.subr.mxu0 %v840
  %4498 = vmatpush1.msra.mxu0 %v839
  %4499 = vmatprep.subr.mxu0 %v836
  %4500 = vmatpush1.msra.mxu0 %v835
  %4501 = vmatprep.subr.mxu0 %v832
  %4502 = vmatpush1.msra.mxu0 %v831
  %4503 = vmatprep.subr.mxu0 %v828
  %4504 = vmatpush1.msra.mxu0 %v827
  %4505 = vmatprep.subr.mxu0 %v824
  %4506 = vmatpush1.msra.mxu0 %v823
  %4507 = vmatprep.subr.mxu0 %v820
  %4508 = vmatpush1.msra.mxu0 %v819
  %4509 = vmatprep.subr.mxu0 %v816
  %4510 = vmatpush1.msra.mxu0 %v815
  %4511 = vmatprep.subr.mxu0 %v812
  %4512 = vmatpush1.msra.mxu0 %v811
  %4513 = vmatprep.subr.mxu0 %v808
  %4514 = vmatpush1.msra.mxu0 %v807
  %4515 = vmatprep.subr.mxu0 %v804
  %4516 = vmatpush1.msra.mxu0 %v803
  %4517 = vmatprep.subr.mxu0 %v800
  %4518 = vmatpush1.msra.mxu0 %v799
  %4519 = vmatprep.subr.mxu0 %v796
  %4520 = vmatpush1.msra.mxu0 %v795
  %4521 = vmatprep.subr.mxu0 %v792
  %4522 = vmatpush1.msra.mxu0 %v791
  %4523 = vmatprep.subr.mxu0 %v788
  %4524 = vmatpush1.msra.mxu0 %v787
  %4525 = vmatprep.subr.mxu0 %v784
  %4526 = vmatpush1.msra.mxu0 %v783
  %4527 = vmatprep.subr.mxu0 %v908
  %4528 = vmatpush2.msra.mxu0 %v907
  %4529 = vmatprep.subr.mxu0 %v904
  %4530 = vmatpush2.msra.mxu0 %v903
  %4531 = vmatprep.subr.mxu0 %v900
  %4532 = vmatpush2.msra.mxu0 %v899
  %4533 = vmatprep.subr.mxu0 %v896
  %4534 = vmatpush2.msra.mxu0 %v895
  %4535 = vmatprep.subr.mxu0 %v892
  %4536 = vmatpush2.msra.mxu0 %v891
  %4537 = vmatprep.subr.mxu0 %v888
  %4538 = vmatpush2.msra.mxu0 %v887
  %4539 = vmatprep.subr.mxu0 %v884
  %4540 = vmatpush2.msra.mxu0 %v883
  %4541 = vmatprep.subr.mxu0 %v880
  %4542 = vmatpush2.msra.mxu0 %v879
  %4543 = vmatprep.subr.mxu0 %v876
  %4544 = vmatpush2.msra.mxu0 %v875
  %4545 = vmatprep.subr.mxu0 %v872
  %4546 = vmatpush2.msra.mxu0 %v871
  %4547 = vmatprep.subr.mxu0 %v868
  %4548 = vmatpush2.msra.mxu0 %v867
  %4549 = vmatprep.subr.mxu0 %v864
  %4550 = vmatpush2.msra.mxu0 %v863
  %4551 = vmatprep.subr.mxu0 %v860
  %4552 = vmatpush2.msra.mxu0 %v859
  %4553 = vmatprep.subr.mxu0 %v856
  %4554 = vmatpush2.msra.mxu0 %v855
  %4555 = vmatprep.subr.mxu0 %v852
  %4556 = vmatpush2.msra.mxu0 %v851
  %4557 = vmatprep.subr.mxu0 %v848
  %4558 = vmatpush2.msra.mxu0 %v847
  %4559 = vmatprep.mubr.f32.mxu0 %v3921
  %4560 = vmatmul.mubr.f32.gmra.mxu0 %v4423
  %v4561 = vpop.f32.mrf.mxu0
  %v4562 = vadd.f32 %v923, %v4561
  %v4563 = vpop.f32.mrf.mxu0
  %v4564 = vadd.f32 %v927, %v4563
  %4565 = vdwg.mxu0
  %v4566 = vxor.u32 %v4491, 2147483648
  %v4567 = vmul.f32 %v4566, 1.442695
  %v4568 = vpow.pop %v4567
  %v4569 = vadd.f32 %v4568, 1.0
  %v4570 = vrcp.pop %v4569
  %v4571 = vmul.f32 1.0, %v4570
  %v4572 = vxor.u32 %v4493, 2147483648
  %v4573 = vmul.f32 %v4572, 1.442695
  %v4574 = vpow.pop %v4573
  %v4575 = vadd.f32 %v4574, 1.0
  %v4576 = vrcp.pop %v4575
  %v4577 = vmul.f32 1.0, %v4576
  %v4578 = vtanh.pop %v4562
  %v4579 = vxor.u32 %v4564, 2147483648
  %v4580 = vmul.f32 %v4579, 1.442695
  %v4581 = vpow.pop %v4580
  %v4582 = vadd.f32 %v4581, 1.0
  %v4583 = vrcp.pop %v4582
  %v4584 = vmul.f32 1.0, %v4583
  %v4585 = vmul.f32 %v4577, %v3919
  %v4586 = vmul.f32 %v4571, %v4578
  %v4587 = vadd.f32 %v4585, %v4586
  %v4588 = vtanh.pop %v4587
  %v4589 = vmul.f32 %v4584, %v4588
  %4590 = vmatprep.subr.mxu0 %v1160
  %4591 = vmatpush1.msra.mxu0 %v1159
  %4592 = vmatprep.subr.mxu0 %v1156
  %4593 = vmatpush1.msra.mxu0 %v1155
  %4594 = vmatprep.subr.mxu0 %v1152
  %4595 = vmatpush1.msra.mxu0 %v1151
  %4596 = vmatprep.subr.mxu0 %v1148
  %4597 = vmatpush1.msra.mxu0 %v1147
  %4598 = vmatprep.subr.mxu0 %v1144
  %4599 = vmatpush1.msra.mxu0 %v1143
  %4600 = vmatprep.subr.mxu0 %v1140
  %4601 = vmatpush1.msra.mxu0 %v1139
  %4602 = vmatprep.subr.mxu0 %v1136
  %4603 = vmatpush1.msra.mxu0 %v1135
  %4604 = vmatprep.subr.mxu0 %v1132
  %4605 = vmatpush1.msra.mxu0 %v1131
  %4606 = vmatprep.subr.mxu0 %v1128
  %4607 = vmatpush1.msra.mxu0 %v1127
  %4608 = vmatprep.subr.mxu0 %v1124
  %4609 = vmatpush1.msra.mxu0 %v1123
  %4610 = vmatprep.subr.mxu0 %v1120
  %4611 = vmatpush1.msra.mxu0 %v1119
  %4612 = vmatprep.subr.mxu0 %v1116
  %4613 = vmatpush1.msra.mxu0 %v1115
  %4614 = vmatprep.subr.mxu0 %v1112
  %4615 = vmatpush1.msra.mxu0 %v1111
  %4616 = vmatprep.subr.mxu0 %v1108
  %4617 = vmatpush1.msra.mxu0 %v1107
  %4618 = vmatprep.subr.mxu0 %v1104
  %4619 = vmatpush1.msra.mxu0 %v1103
  %4620 = vmatprep.subr.mxu0 %v1100
  %4621 = vmatpush1.msra.mxu0 %v1099
  %4622 = vmatprep.subr.mxu0 %v1224
  %4623 = vmatpush2.msra.mxu0 %v1223
  %4624 = vmatprep.subr.mxu0 %v1220
  %4625 = vmatpush2.msra.mxu0 %v1219
  %4626 = vmatprep.subr.mxu0 %v1216
  %4627 = vmatpush2.msra.mxu0 %v1215
  %4628 = vmatprep.subr.mxu0 %v1212
  %4629 = vmatpush2.msra.mxu0 %v1211
  %4630 = vmatprep.subr.mxu0 %v1208
  %4631 = vmatpush2.msra.mxu0 %v1207
  %4632 = vmatprep.subr.mxu0 %v1204
  %4633 = vmatpush2.msra.mxu0 %v1203
  %4634 = vmatprep.subr.mxu0 %v1200
  %4635 = vmatpush2.msra.mxu0 %v1199
  %4636 = vmatprep.subr.mxu0 %v1196
  %4637 = vmatpush2.msra.mxu0 %v1195
  %4638 = vmatprep.subr.mxu0 %v1192
  %4639 = vmatpush2.msra.mxu0 %v1191
  %4640 = vmatprep.subr.mxu0 %v1188
  %4641 = vmatpush2.msra.mxu0 %v1187
  %4642 = vmatprep.subr.mxu0 %v1184
  %4643 = vmatpush2.msra.mxu0 %v1183
  %4644 = vmatprep.subr.mxu0 %v1180
  %4645 = vmatpush2.msra.mxu0 %v1179
  %4646 = vmatprep.subr.mxu0 %v1176
  %4647 = vmatpush2.msra.mxu0 %v1175
  %4648 = vmatprep.subr.mxu0 %v1172
  %4649 = vmatpush2.msra.mxu0 %v1171
  %4650 = vmatprep.subr.mxu0 %v1168
  %4651 = vmatpush2.msra.mxu0 %v1167
  %4652 = vmatprep.subr.mxu0 %v1164
  %4653 = vmatpush2.msra.mxu0 %v1163
  %4654 = vmatprep.mubr.f32.mxu0 %v4087
  %4655 = vmatmul.mubr.f32.gmra.mxu0 %v4589
  %v4656 = vpop.f32.mrf.mxu0
  %v4657 = vadd.f32 %v1233, %v4656
  %v4658 = vpop.f32.mrf.mxu0
  %v4659 = vadd.f32 %v1237, %v4658
  %4660 = vdwg.mxu0
  %4661 = vmatprep.subr.mxu0 %v1162
  %4662 = vmatpush1.msra.mxu0 %v1161
  %4663 = vmatprep.subr.mxu0 %v1158
  %4664 = vmatpush1.msra.mxu0 %v1157
  %4665 = vmatprep.subr.mxu0 %v1154
  %4666 = vmatpush1.msra.mxu0 %v1153
  %4667 = vmatprep.subr.mxu0 %v1150
  %4668 = vmatpush1.msra.mxu0 %v1149
  %4669 = vmatprep.subr.mxu0 %v1146
  %4670 = vmatpush1.msra.mxu0 %v1145
  %4671 = vmatprep.subr.mxu0 %v1142
  %4672 = vmatpush1.msra.mxu0 %v1141
  %4673 = vmatprep.subr.mxu0 %v1138
  %4674 = vmatpush1.msra.mxu0 %v1137
  %4675 = vmatprep.subr.mxu0 %v1134
  %4676 = vmatpush1.msra.mxu0 %v1133
  %4677 = vmatprep.subr.mxu0 %v1130
  %4678 = vmatpush1.msra.mxu0 %v1129
  %4679 = vmatprep.subr.mxu0 %v1126
  %4680 = vmatpush1.msra.mxu0 %v1125
  %4681 = vmatprep.subr.mxu0 %v1122
  %4682 = vmatpush1.msra.mxu0 %v1121
  %4683 = vmatprep.subr.mxu0 %v1118
  %4684 = vmatpush1.msra.mxu0 %v1117
  %4685 = vmatprep.subr.mxu0 %v1114
  %4686 = vmatpush1.msra.mxu0 %v1113
  %4687 = vmatprep.subr.mxu0 %v1110
  %4688 = vmatpush1.msra.mxu0 %v1109
  %4689 = vmatprep.subr.mxu0 %v1106
  %4690 = vmatpush1.msra.mxu0 %v1105
  %4691 = vmatprep.subr.mxu0 %v1102
  %4692 = vmatpush1.msra.mxu0 %v1101
  %4693 = vmatprep.subr.mxu0 %v1226
  %4694 = vmatpush2.msra.mxu0 %v1225
  %4695 = vmatprep.subr.mxu0 %v1222
  %4696 = vmatpush2.msra.mxu0 %v1221
  %4697 = vmatprep.subr.mxu0 %v1218
  %4698 = vmatpush2.msra.mxu0 %v1217
  %4699 = vmatprep.subr.mxu0 %v1214
  %4700 = vmatpush2.msra.mxu0 %v1213
  %4701 = vmatprep.subr.mxu0 %v1210
  %4702 = vmatpush2.msra.mxu0 %v1209
  %4703 = vmatprep.subr.mxu0 %v1206
  %4704 = vmatpush2.msra.mxu0 %v1205
  %4705 = vmatprep.subr.mxu0 %v1202
  %4706 = vmatpush2.msra.mxu0 %v1201
  %4707 = vmatprep.subr.mxu0 %v1198
  %4708 = vmatpush2.msra.mxu0 %v1197
  %4709 = vmatprep.subr.mxu0 %v1194
  %4710 = vmatpush2.msra.mxu0 %v1193
  %4711 = vmatprep.subr.mxu0 %v1190
  %4712 = vmatpush2.msra.mxu0 %v1189
  %4713 = vmatprep.subr.mxu0 %v1186
  %4714 = vmatpush2.msra.mxu0 %v1185
  %4715 = vmatprep.subr.mxu0 %v1182
  %4716 = vmatpush2.msra.mxu0 %v1181
  %4717 = vmatprep.subr.mxu0 %v1178
  %4718 = vmatpush2.msra.mxu0 %v1177
  %4719 = vmatprep.subr.mxu0 %v1174
  %4720 = vmatpush2.msra.mxu0 %v1173
  %4721 = vmatprep.subr.mxu0 %v1170
  %4722 = vmatpush2.msra.mxu0 %v1169
  %4723 = vmatprep.subr.mxu0 %v1166
  %4724 = vmatpush2.msra.mxu0 %v1165
  %4725 = vmatprep.mubr.f32.mxu0 %v4087
  %4726 = vmatmul.mubr.f32.gmra.mxu0 %v4589
  %v4727 = vpop.f32.mrf.mxu0
  %v4728 = vadd.f32 %v1241, %v4727
  %v4729 = vpop.f32.mrf.mxu0
  %v4730 = vadd.f32 %v1245, %v4729
  %4731 = vdwg.mxu0
  %v4732 = vxor.u32 %v4657, 2147483648
  %v4733 = vmul.f32 %v4732, 1.442695
  %v4734 = vpow.pop %v4733
  %v4735 = vadd.f32 %v4734, 1.0
  %v4736 = vrcp.pop %v4735
  %v4737 = vmul.f32 1.0, %v4736
  %v4738 = vxor.u32 %v4659, 2147483648
  %v4739 = vmul.f32 %v4738, 1.442695
  %v4740 = vpow.pop %v4739
  %v4741 = vadd.f32 %v4740, 1.0
  %v4742 = vrcp.pop %v4741
  %v4743 = vmul.f32 1.0, %v4742
  %v4744 = vtanh.pop %v4728
  %v4745 = vxor.u32 %v4730, 2147483648
  %v4746 = vmul.f32 %v4745, 1.442695
  %v4747 = vpow.pop %v4746
  %v4748 = vadd.f32 %v4747, 1.0
  %v4749 = vrcp.pop %v4748
  %v4750 = vmul.f32 1.0, %v4749
  %v4751 = vmul.f32 %v4743, %v4085
  %v4752 = vmul.f32 %v4737, %v4744
  %v4753 = vadd.f32 %v4751, %v4752
  %v4754 = vtanh.pop %v4753
  %v4755 = vmul.f32 %v4750, %v4754
  %4756 = vmatprep.subr.mxu0 %v291
  %4757 = vmatpush1.msra.mxu0 %v290
  %4758 = vmatprep.subr.mxu0 %v287
  %4759 = vmatpush1.msra.mxu0 %v286
  %4760 = vmatprep.subr.mxu0 %v283
  %4761 = vmatpush1.msra.mxu0 %v282
  %4762 = vmatprep.subr.mxu0 %v279
  %4763 = vmatpush1.msra.mxu0 %v278
  %4764 = vmatprep.subr.mxu0 %v275
  %4765 = vmatpush1.msra.mxu0 %v274
  %4766 = vmatprep.subr.mxu0 %v271
  %4767 = vmatpush1.msra.mxu0 %v270
  %4768 = vmatprep.subr.mxu0 %v267
  %4769 = vmatpush1.msra.mxu0 %v266
  %4770 = vmatprep.subr.mxu0 %v263
  %4771 = vmatpush1.msra.mxu0 %v262
  %4772 = vmatprep.subr.mxu0 %v259
  %4773 = vmatpush1.msra.mxu0 %v258
  %4774 = vmatprep.subr.mxu0 %v255
  %4775 = vmatpush1.msra.mxu0 %v254
  %4776 = vmatprep.subr.mxu0 %v251
  %4777 = vmatpush1.msra.mxu0 %v250
  %4778 = vmatprep.subr.mxu0 %v247
  %4779 = vmatpush1.msra.mxu0 %v246
  %4780 = vmatprep.subr.mxu0 %v243
  %4781 = vmatpush1.msra.mxu0 %v242
  %4782 = vmatprep.subr.mxu0 %v239
  %4783 = vmatpush1.msra.mxu0 %v238
  %4784 = vmatprep.subr.mxu0 %v235
  %4785 = vmatpush1.msra.mxu0 %v234
  %4786 = vmatprep.subr.mxu0 %v231
  %4787 = vmatpush1.msra.mxu0 %v230
  %4788 = vmatprep.subr.mxu0 0.0
  %4789 = vmatpush2.msra.mxu0 0.0
  %4790 = vmatprep.subr.mxu0 0.0
  %4791 = vmatpush2.msra.mxu0 0.0
  %4792 = vmatprep.subr.mxu0 0.0
  %4793 = vmatpush2.msra.mxu0 0.0
  %4794 = vmatprep.subr.mxu0 0.0
  %4795 = vmatpush2.msra.mxu0 0.0
  %4796 = vmatprep.subr.mxu0 0.0
  %4797 = vmatpush2.msra.mxu0 0.0
  %4798 = vmatprep.subr.mxu0 0.0
  %4799 = vmatpush2.msra.mxu0 0.0
  %4800 = vmatprep.subr.mxu0 0.0
  %4801 = vmatpush2.msra.mxu0 0.0
  %4802 = vmatprep.subr.mxu0 0.0
  %4803 = vmatpush2.msra.mxu0 0.0
  %4804 = vmatprep.subr.mxu0 0.0
  %4805 = vmatpush2.msra.mxu0 0.0
  %4806 = vmatprep.subr.mxu0 0.0
  %4807 = vmatpush2.msra.mxu0 0.0
  %4808 = vmatprep.subr.mxu0 0.0
  %4809 = vmatpush2.msra.mxu0 0.0
  %4810 = vmatprep.subr.mxu0 0.0
  %4811 = vmatpush2.msra.mxu0 0.0
  %4812 = vmatprep.subr.mxu0 0.0
  %4813 = vmatpush2.msra.mxu0 0.0
  %4814 = vmatprep.subr.mxu0 0.0
  %4815 = vmatpush2.msra.mxu0 0.0
  %4816 = vmatprep.subr.mxu0 0.0
  %4817 = vmatpush2.msra.mxu0 0.0
  %4818 = vmatprep.subr.mxu0 0.0
  %4819 = vmatpush2.msra.mxu0 0.0
  %4820 = vmatprep.mubr.f32.mxu0 0.0
  %4821 = vmatmul.mubr.f32.gmra.mxu0 %v4257
  %v4822 = vpop.f32.mrf.mxu0
  %v4823 = vadd.f32 0.0, %v4822
  %v4824 = vpop.f32.mrf.mxu0
  %v4825 = vadd.f32 0.0, %v4824
  %4826 = vdwg.mxu0
  %4827 = vmatprep.subr.mxu0 %v293
  %4828 = vmatpush1.msra.mxu0 %v292
  %4829 = vmatprep.subr.mxu0 %v289
  %4830 = vmatpush1.msra.mxu0 %v288
  %4831 = vmatprep.subr.mxu0 %v285
  %4832 = vmatpush1.msra.mxu0 %v284
  %4833 = vmatprep.subr.mxu0 %v281
  %4834 = vmatpush1.msra.mxu0 %v280
  %4835 = vmatprep.subr.mxu0 %v277
  %4836 = vmatpush1.msra.mxu0 %v276
  %4837 = vmatprep.subr.mxu0 %v273
  %4838 = vmatpush1.msra.mxu0 %v272
  %4839 = vmatprep.subr.mxu0 %v269
  %4840 = vmatpush1.msra.mxu0 %v268
  %4841 = vmatprep.subr.mxu0 %v265
  %4842 = vmatpush1.msra.mxu0 %v264
  %4843 = vmatprep.subr.mxu0 %v261
  %4844 = vmatpush1.msra.mxu0 %v260
  %4845 = vmatprep.subr.mxu0 %v257
  %4846 = vmatpush1.msra.mxu0 %v256
  %4847 = vmatprep.subr.mxu0 %v253
  %4848 = vmatpush1.msra.mxu0 %v252
  %4849 = vmatprep.subr.mxu0 %v249
  %4850 = vmatpush1.msra.mxu0 %v248
  %4851 = vmatprep.subr.mxu0 %v245
  %4852 = vmatpush1.msra.mxu0 %v244
  %4853 = vmatprep.subr.mxu0 %v241
  %4854 = vmatpush1.msra.mxu0 %v240
  %4855 = vmatprep.subr.mxu0 %v237
  %4856 = vmatpush1.msra.mxu0 %v236
  %4857 = vmatprep.subr.mxu0 %v233
  %4858 = vmatpush1.msra.mxu0 %v232
  %4859 = vmatprep.subr.mxu0 0.0
  %4860 = vmatpush2.msra.mxu0 0.0
  %4861 = vmatprep.subr.mxu0 0.0
  %4862 = vmatpush2.msra.mxu0 0.0
  %4863 = vmatprep.subr.mxu0 0.0
  %4864 = vmatpush2.msra.mxu0 0.0
  %4865 = vmatprep.subr.mxu0 0.0
  %4866 = vmatpush2.msra.mxu0 0.0
  %4867 = vmatprep.subr.mxu0 0.0
  %4868 = vmatpush2.msra.mxu0 0.0
  %4869 = vmatprep.subr.mxu0 0.0
  %4870 = vmatpush2.msra.mxu0 0.0
  %4871 = vmatprep.subr.mxu0 0.0
  %4872 = vmatpush2.msra.mxu0 0.0
  %4873 = vmatprep.subr.mxu0 0.0
  %4874 = vmatpush2.msra.mxu0 0.0
  %4875 = vmatprep.subr.mxu0 0.0
  %4876 = vmatpush2.msra.mxu0 0.0
  %4877 = vmatprep.subr.mxu0 0.0
  %4878 = vmatpush2.msra.mxu0 0.0
  %4879 = vmatprep.subr.mxu0 0.0
  %4880 = vmatpush2.msra.mxu0 0.0
  %4881 = vmatprep.subr.mxu0 0.0
  %4882 = vmatpush2.msra.mxu0 0.0
  %4883 = vmatprep.subr.mxu0 0.0
  %4884 = vmatpush2.msra.mxu0 0.0
  %4885 = vmatprep.subr.mxu0 0.0
  %4886 = vmatpush2.msra.mxu0 0.0
  %4887 = vmatprep.subr.mxu0 0.0
  %4888 = vmatpush2.msra.mxu0 0.0
  %4889 = vmatprep.subr.mxu0 0.0
  %4890 = vmatpush2.msra.mxu0 0.0
  %4891 = vmatprep.mubr.f32.mxu0 0.0
  %4892 = vmatmul.mubr.f32.gmra.mxu0 %v4257
  %v4893 = vpop.f32.mrf.mxu0
  %v4894 = vadd.f32 0.0, %v4893
  %v4895 = vpop.f32.mrf.mxu0
  %v4896 = vadd.f32 0.0, %v4895
  %4897 = vdwg.mxu0
  %v4898 = vadd.f32 %v155, %v4823
  %v4899 = vadd.f32 %v157, %v4825
  %v4900 = vadd.f32 %v226, %v4894
  %v4901 = vadd.f32 %v228, %v4896
  %v4902 = vxor.u32 %v4898, 2147483648
  %v4903 = vmul.f32 %v4902, 1.442695
  %v4904 = vpow.pop %v4903
  %v4905 = vadd.f32 %v4904, 1.0
  %v4906 = vrcp.pop %v4905
  %v4907 = vmul.f32 1.0, %v4906
  %v4908 = vxor.u32 %v4899, 2147483648
  %v4909 = vmul.f32 %v4908, 1.442695
  %v4910 = vpow.pop %v4909
  %v4911 = vadd.f32 %v4910, 1.0
  %v4912 = vrcp.pop %v4911
  %v4913 = vmul.f32 1.0, %v4912
  %v4914 = vtanh.pop %v4900
  %v4915 = vxor.u32 %v4901, 2147483648
  %v4916 = vmul.f32 %v4915, 1.442695
  %v4917 = vpow.pop %v4916
  %v4918 = vadd.f32 %v4917, 1.0
  %v4919 = vrcp.pop %v4918
  %v4920 = vmul.f32 1.0, %v4919
  %v4921 = vmul.f32 %v4913, %v4255
  %v4922 = vmul.f32 %v4907, %v4914
  %v4923 = vadd.f32 %v4921, %v4922
  %v4924 = vtanh.pop %v4923
  %v4925 = vmul.f32 %v4920, %v4924
  %4926 = vmatprep.subr.mxu0 %v525
  %4927 = vmatpush1.msra.mxu0 %v524
  %4928 = vmatprep.subr.mxu0 %v521
  %4929 = vmatpush1.msra.mxu0 %v520
  %4930 = vmatprep.subr.mxu0 %v517
  %4931 = vmatpush1.msra.mxu0 %v516
  %4932 = vmatprep.subr.mxu0 %v513
  %4933 = vmatpush1.msra.mxu0 %v512
  %4934 = vmatprep.subr.mxu0 %v509
  %4935 = vmatpush1.msra.mxu0 %v508
  %4936 = vmatprep.subr.mxu0 %v505
  %4937 = vmatpush1.msra.mxu0 %v504
  %4938 = vmatprep.subr.mxu0 %v501
  %4939 = vmatpush1.msra.mxu0 %v500
  %4940 = vmatprep.subr.mxu0 %v497
  %4941 = vmatpush1.msra.mxu0 %v496
  %4942 = vmatprep.subr.mxu0 %v493
  %4943 = vmatpush1.msra.mxu0 %v492
  %4944 = vmatprep.subr.mxu0 %v489
  %4945 = vmatpush1.msra.mxu0 %v488
  %4946 = vmatprep.subr.mxu0 %v485
  %4947 = vmatpush1.msra.mxu0 %v484
  %4948 = vmatprep.subr.mxu0 %v481
  %4949 = vmatpush1.msra.mxu0 %v480
  %4950 = vmatprep.subr.mxu0 %v477
  %4951 = vmatpush1.msra.mxu0 %v476
  %4952 = vmatprep.subr.mxu0 %v473
  %4953 = vmatpush1.msra.mxu0 %v472
  %4954 = vmatprep.subr.mxu0 %v469
  %4955 = vmatpush1.msra.mxu0 %v468
  %4956 = vmatprep.subr.mxu0 %v465
  %4957 = vmatpush1.msra.mxu0 %v464
  %4958 = vmatprep.subr.mxu0 %v589
  %4959 = vmatpush2.msra.mxu0 %v588
  %4960 = vmatprep.subr.mxu0 %v585
  %4961 = vmatpush2.msra.mxu0 %v584
  %4962 = vmatprep.subr.mxu0 %v581
  %4963 = vmatpush2.msra.mxu0 %v580
  %4964 = vmatprep.subr.mxu0 %v577
  %4965 = vmatpush2.msra.mxu0 %v576
  %4966 = vmatprep.subr.mxu0 %v573
  %4967 = vmatpush2.msra.mxu0 %v572
  %4968 = vmatprep.subr.mxu0 %v569
  %4969 = vmatpush2.msra.mxu0 %v568
  %4970 = vmatprep.subr.mxu0 %v565
  %4971 = vmatpush2.msra.mxu0 %v564
  %4972 = vmatprep.subr.mxu0 %v561
  %4973 = vmatpush2.msra.mxu0 %v560
  %4974 = vmatprep.subr.mxu0 %v557
  %4975 = vmatpush2.msra.mxu0 %v556
  %4976 = vmatprep.subr.mxu0 %v553
  %4977 = vmatpush2.msra.mxu0 %v552
  %4978 = vmatprep.subr.mxu0 %v549
  %4979 = vmatpush2.msra.mxu0 %v548
  %4980 = vmatprep.subr.mxu0 %v545
  %4981 = vmatpush2.msra.mxu0 %v544
  %4982 = vmatprep.subr.mxu0 %v541
  %4983 = vmatpush2.msra.mxu0 %v540
  %4984 = vmatprep.subr.mxu0 %v537
  %4985 = vmatpush2.msra.mxu0 %v536
  %4986 = vmatprep.subr.mxu0 %v533
  %4987 = vmatpush2.msra.mxu0 %v532
  %4988 = vmatprep.subr.mxu0 %v529
  %4989 = vmatpush2.msra.mxu0 %v528
  %4990 = vmatprep.mubr.f32.mxu0 %v4423
  %4991 = vmatmul.mubr.f32.gmra.mxu0 %v4925
  %v4992 = vpop.f32.mrf.mxu0
  %v4993 = vadd.f32 %v597, %v4992
  %v4994 = vpop.f32.mrf.mxu0
  %v4995 = vadd.f32 %v601, %v4994
  %4996 = vdwg.mxu0
  %4997 = vmatprep.subr.mxu0 %v527
  %4998 = vmatpush1.msra.mxu0 %v526
  %4999 = vmatprep.subr.mxu0 %v523
  %5000 = vmatpush1.msra.mxu0 %v522
  %5001 = vmatprep.subr.mxu0 %v519
  %5002 = vmatpush1.msra.mxu0 %v518
  %5003 = vmatprep.subr.mxu0 %v515
  %5004 = vmatpush1.msra.mxu0 %v514
  %5005 = vmatprep.subr.mxu0 %v511
  %5006 = vmatpush1.msra.mxu0 %v510
  %5007 = vmatprep.subr.mxu0 %v507
  %5008 = vmatpush1.msra.mxu0 %v506
  %5009 = vmatprep.subr.mxu0 %v503
  %5010 = vmatpush1.msra.mxu0 %v502
  %5011 = vmatprep.subr.mxu0 %v499
  %5012 = vmatpush1.msra.mxu0 %v498
  %5013 = vmatprep.subr.mxu0 %v495
  %5014 = vmatpush1.msra.mxu0 %v494
  %5015 = vmatprep.subr.mxu0 %v491
  %5016 = vmatpush1.msra.mxu0 %v490
  %5017 = vmatprep.subr.mxu0 %v487
  %5018 = vmatpush1.msra.mxu0 %v486
  %5019 = vmatprep.subr.mxu0 %v483
  %5020 = vmatpush1.msra.mxu0 %v482
  %5021 = vmatprep.subr.mxu0 %v479
  %5022 = vmatpush1.msra.mxu0 %v478
  %5023 = vmatprep.subr.mxu0 %v475
  %5024 = vmatpush1.msra.mxu0 %v474
  %5025 = vmatprep.subr.mxu0 %v471
  %5026 = vmatpush1.msra.mxu0 %v470
  %5027 = vmatprep.subr.mxu0 %v467
  %5028 = vmatpush1.msra.mxu0 %v466
  %5029 = vmatprep.subr.mxu0 %v591
  %5030 = vmatpush2.msra.mxu0 %v590
  %5031 = vmatprep.subr.mxu0 %v587
  %5032 = vmatpush2.msra.mxu0 %v586
  %5033 = vmatprep.subr.mxu0 %v583
  %5034 = vmatpush2.msra.mxu0 %v582
  %5035 = vmatprep.subr.mxu0 %v579
  %5036 = vmatpush2.msra.mxu0 %v578
  %5037 = vmatprep.subr.mxu0 %v575
  %5038 = vmatpush2.msra.mxu0 %v574
  %5039 = vmatprep.subr.mxu0 %v571
  %5040 = vmatpush2.msra.mxu0 %v570
  %5041 = vmatprep.subr.mxu0 %v567
  %5042 = vmatpush2.msra.mxu0 %v566
  %5043 = vmatprep.subr.mxu0 %v563
  %5044 = vmatpush2.msra.mxu0 %v562
  %5045 = vmatprep.subr.mxu0 %v559
  %5046 = vmatpush2.msra.mxu0 %v558
  %5047 = vmatprep.subr.mxu0 %v555
  %5048 = vmatpush2.msra.mxu0 %v554
  %5049 = vmatprep.subr.mxu0 %v551
  %5050 = vmatpush2.msra.mxu0 %v550
  %5051 = vmatprep.subr.mxu0 %v547
  %5052 = vmatpush2.msra.mxu0 %v546
  %5053 = vmatprep.subr.mxu0 %v543
  %5054 = vmatpush2.msra.mxu0 %v542
  %5055 = vmatprep.subr.mxu0 %v539
  %5056 = vmatpush2.msra.mxu0 %v538
  %5057 = vmatprep.subr.mxu0 %v535
  %5058 = vmatpush2.msra.mxu0 %v534
  %5059 = vmatprep.subr.mxu0 %v531
  %5060 = vmatpush2.msra.mxu0 %v530
  %5061 = vmatprep.mubr.f32.mxu0 %v4423
  %5062 = vmatmul.mubr.f32.gmra.mxu0 %v4925
  %v5063 = vpop.f32.mrf.mxu0
  %v5064 = vadd.f32 %v605, %v5063
  %v5065 = vpop.f32.mrf.mxu0
  %v5066 = vadd.f32 %v609, %v5065
  %5067 = vdwg.mxu0
  %v5068 = vxor.u32 %v4993, 2147483648
  %v5069 = vmul.f32 %v5068, 1.442695
  %v5070 = vpow.pop %v5069
  %v5071 = vadd.f32 %v5070, 1.0
  %v5072 = vrcp.pop %v5071
  %v5073 = vmul.f32 1.0, %v5072
  %v5074 = vxor.u32 %v4995, 2147483648
  %v5075 = vmul.f32 %v5074, 1.442695
  %v5076 = vpow.pop %v5075
  %v5077 = vadd.f32 %v5076, 1.0
  %v5078 = vrcp.pop %v5077
  %v5079 = vmul.f32 1.0, %v5078
  %v5080 = vtanh.pop %v5064
  %v5081 = vxor.u32 %v5066, 2147483648
  %v5082 = vmul.f32 %v5081, 1.442695
  %v5083 = vpow.pop %v5082
  %v5084 = vadd.f32 %v5083, 1.0
  %v5085 = vrcp.pop %v5084
  %v5086 = vmul.f32 1.0, %v5085
  %v5087 = vmul.f32 %v5079, %v4421
  %v5088 = vmul.f32 %v5073, %v5080
  %v5089 = vadd.f32 %v5087, %v5088
  %v5090 = vtanh.pop %v5089
  %v5091 = vmul.f32 %v5086, %v5090
  %5092 = vmatprep.subr.mxu0 %v842
  %5093 = vmatpush1.msra.mxu0 %v841
  %5094 = vmatprep.subr.mxu0 %v838
  %5095 = vmatpush1.msra.mxu0 %v837
  %5096 = vmatprep.subr.mxu0 %v834
  %5097 = vmatpush1.msra.mxu0 %v833
  %5098 = vmatprep.subr.mxu0 %v830
  %5099 = vmatpush1.msra.mxu0 %v829
  %5100 = vmatprep.subr.mxu0 %v826
  %5101 = vmatpush1.msra.mxu0 %v825
  %5102 = vmatprep.subr.mxu0 %v822
  %5103 = vmatpush1.msra.mxu0 %v821
  %5104 = vmatprep.subr.mxu0 %v818
  %5105 = vmatpush1.msra.mxu0 %v817
  %5106 = vmatprep.subr.mxu0 %v814
  %5107 = vmatpush1.msra.mxu0 %v813
  %5108 = vmatprep.subr.mxu0 %v810
  %5109 = vmatpush1.msra.mxu0 %v809
  %5110 = vmatprep.subr.mxu0 %v806
  %5111 = vmatpush1.msra.mxu0 %v805
  %5112 = vmatprep.subr.mxu0 %v802
  %5113 = vmatpush1.msra.mxu0 %v801
  %5114 = vmatprep.subr.mxu0 %v798
  %5115 = vmatpush1.msra.mxu0 %v797
  %5116 = vmatprep.subr.mxu0 %v794
  %5117 = vmatpush1.msra.mxu0 %v793
  %5118 = vmatprep.subr.mxu0 %v790
  %5119 = vmatpush1.msra.mxu0 %v789
  %5120 = vmatprep.subr.mxu0 %v786
  %5121 = vmatpush1.msra.mxu0 %v785
  %5122 = vmatprep.subr.mxu0 %v782
  %5123 = vmatpush1.msra.mxu0 %v781
  %5124 = vmatprep.subr.mxu0 %v906
  %5125 = vmatpush2.msra.mxu0 %v905
  %5126 = vmatprep.subr.mxu0 %v902
  %5127 = vmatpush2.msra.mxu0 %v901
  %5128 = vmatprep.subr.mxu0 %v898
  %5129 = vmatpush2.msra.mxu0 %v897
  %5130 = vmatprep.subr.mxu0 %v894
  %5131 = vmatpush2.msra.mxu0 %v893
  %5132 = vmatprep.subr.mxu0 %v890
  %5133 = vmatpush2.msra.mxu0 %v889
  %5134 = vmatprep.subr.mxu0 %v886
  %5135 = vmatpush2.msra.mxu0 %v885
  %5136 = vmatprep.subr.mxu0 %v882
  %5137 = vmatpush2.msra.mxu0 %v881
  %5138 = vmatprep.subr.mxu0 %v878
  %5139 = vmatpush2.msra.mxu0 %v877
  %5140 = vmatprep.subr.mxu0 %v874
  %5141 = vmatpush2.msra.mxu0 %v873
  %5142 = vmatprep.subr.mxu0 %v870
  %5143 = vmatpush2.msra.mxu0 %v869
  %5144 = vmatprep.subr.mxu0 %v866
  %5145 = vmatpush2.msra.mxu0 %v865
  %5146 = vmatprep.subr.mxu0 %v862
  %5147 = vmatpush2.msra.mxu0 %v861
  %5148 = vmatprep.subr.mxu0 %v858
  %5149 = vmatpush2.msra.mxu0 %v857
  %5150 = vmatprep.subr.mxu0 %v854
  %5151 = vmatpush2.msra.mxu0 %v853
  %5152 = vmatprep.subr.mxu0 %v850
  %5153 = vmatpush2.msra.mxu0 %v849
  %5154 = vmatprep.subr.mxu0 %v846
  %5155 = vmatpush2.msra.mxu0 %v845
  %5156 = vmatprep.mubr.f32.mxu0 %v4589
  %5157 = vmatmul.mubr.f32.gmra.mxu0 %v5091
  %v5158 = vpop.f32.mrf.mxu0
  %v5159 = vadd.f32 %v915, %v5158
  %v5160 = vpop.f32.mrf.mxu0
  %v5161 = vadd.f32 %v919, %v5160
  %5162 = vdwg.mxu0
  %5163 = vmatprep.subr.mxu0 %v844
  %5164 = vmatpush1.msra.mxu0 %v843
  %5165 = vmatprep.subr.mxu0 %v840
  %5166 = vmatpush1.msra.mxu0 %v839
  %5167 = vmatprep.subr.mxu0 %v836
  %5168 = vmatpush1.msra.mxu0 %v835
  %5169 = vmatprep.subr.mxu0 %v832
  %5170 = vmatpush1.msra.mxu0 %v831
  %5171 = vmatprep.subr.mxu0 %v828
  %5172 = vmatpush1.msra.mxu0 %v827
  %5173 = vmatprep.subr.mxu0 %v824
  %5174 = vmatpush1.msra.mxu0 %v823
  %5175 = vmatprep.subr.mxu0 %v820
  %5176 = vmatpush1.msra.mxu0 %v819
  %5177 = vmatprep.subr.mxu0 %v816
  %5178 = vmatpush1.msra.mxu0 %v815
  %5179 = vmatprep.subr.mxu0 %v812
  %5180 = vmatpush1.msra.mxu0 %v811
  %5181 = vmatprep.subr.mxu0 %v808
  %5182 = vmatpush1.msra.mxu0 %v807
  %5183 = vmatprep.subr.mxu0 %v804
  %5184 = vmatpush1.msra.mxu0 %v803
  %5185 = vmatprep.subr.mxu0 %v800
  %5186 = vmatpush1.msra.mxu0 %v799
  %5187 = vmatprep.subr.mxu0 %v796
  %5188 = vmatpush1.msra.mxu0 %v795
  %5189 = vmatprep.subr.mxu0 %v792
  %5190 = vmatpush1.msra.mxu0 %v791
  %5191 = vmatprep.subr.mxu0 %v788
  %5192 = vmatpush1.msra.mxu0 %v787
  %5193 = vmatprep.subr.mxu0 %v784
  %5194 = vmatpush1.msra.mxu0 %v783
  %5195 = vmatprep.subr.mxu0 %v908
  %5196 = vmatpush2.msra.mxu0 %v907
  %5197 = vmatprep.subr.mxu0 %v904
  %5198 = vmatpush2.msra.mxu0 %v903
  %5199 = vmatprep.subr.mxu0 %v900
  %5200 = vmatpush2.msra.mxu0 %v899
  %5201 = vmatprep.subr.mxu0 %v896
  %5202 = vmatpush2.msra.mxu0 %v895
  %5203 = vmatprep.subr.mxu0 %v892
  %5204 = vmatpush2.msra.mxu0 %v891
  %5205 = vmatprep.subr.mxu0 %v888
  %5206 = vmatpush2.msra.mxu0 %v887
  %5207 = vmatprep.subr.mxu0 %v884
  %5208 = vmatpush2.msra.mxu0 %v883
  %5209 = vmatprep.subr.mxu0 %v880
  %5210 = vmatpush2.msra.mxu0 %v879
  %5211 = vmatprep.subr.mxu0 %v876
  %5212 = vmatpush2.msra.mxu0 %v875
  %5213 = vmatprep.subr.mxu0 %v872
  %5214 = vmatpush2.msra.mxu0 %v871
  %5215 = vmatprep.subr.mxu0 %v868
  %5216 = vmatpush2.msra.mxu0 %v867
  %5217 = vmatprep.subr.mxu0 %v864
  %5218 = vmatpush2.msra.mxu0 %v863
  %5219 = vmatprep.subr.mxu0 %v860
  %5220 = vmatpush2.msra.mxu0 %v859
  %5221 = vmatprep.subr.mxu0 %v856
  %5222 = vmatpush2.msra.mxu0 %v855
  %5223 = vmatprep.subr.mxu0 %v852
  %5224 = vmatpush2.msra.mxu0 %v851
  %5225 = vmatprep.subr.mxu0 %v848
  %5226 = vmatpush2.msra.mxu0 %v847
  %5227 = vmatprep.mubr.f32.mxu0 %v4589
  %5228 = vmatmul.mubr.f32.gmra.mxu0 %v5091
  %v5229 = vpop.f32.mrf.mxu0
  %v5230 = vadd.f32 %v923, %v5229
  %v5231 = vpop.f32.mrf.mxu0
  %v5232 = vadd.f32 %v927, %v5231
  %5233 = vdwg.mxu0
  %v5234 = vxor.u32 %v5159, 2147483648
  %v5235 = vmul.f32 %v5234, 1.442695
  %v5236 = vpow.pop %v5235
  %v5237 = vadd.f32 %v5236, 1.0
  %v5238 = vrcp.pop %v5237
  %v5239 = vmul.f32 1.0, %v5238
  %v5240 = vxor.u32 %v5161, 2147483648
  %v5241 = vmul.f32 %v5240, 1.442695
  %v5242 = vpow.pop %v5241
  %v5243 = vadd.f32 %v5242, 1.0
  %v5244 = vrcp.pop %v5243
  %v5245 = vmul.f32 1.0, %v5244
  %v5246 = vtanh.pop %v5230
  %v5247 = vxor.u32 %v5232, 2147483648
  %v5248 = vmul.f32 %v5247, 1.442695
  %v5249 = vpow.pop %v5248
  %v5250 = vadd.f32 %v5249, 1.0
  %v5251 = vrcp.pop %v5250
  %v5252 = vmul.f32 1.0, %v5251
  %v5253 = vmul.f32 %v5245, %v4587
  %v5254 = vmul.f32 %v5239, %v5246
  %v5255 = vadd.f32 %v5253, %v5254
  %v5256 = vtanh.pop %v5255
  %v5257 = vmul.f32 %v5252, %v5256
  %5258 = vmatprep.subr.mxu0 %v1160
  %5259 = vmatpush1.msra.mxu0 %v1159
  %5260 = vmatprep.subr.mxu0 %v1156
  %5261 = vmatpush1.msra.mxu0 %v1155
  %5262 = vmatprep.subr.mxu0 %v1152
  %5263 = vmatpush1.msra.mxu0 %v1151
  %5264 = vmatprep.subr.mxu0 %v1148
  %5265 = vmatpush1.msra.mxu0 %v1147
  %5266 = vmatprep.subr.mxu0 %v1144
  %5267 = vmatpush1.msra.mxu0 %v1143
  %5268 = vmatprep.subr.mxu0 %v1140
  %5269 = vmatpush1.msra.mxu0 %v1139
  %5270 = vmatprep.subr.mxu0 %v1136
  %5271 = vmatpush1.msra.mxu0 %v1135
  %5272 = vmatprep.subr.mxu0 %v1132
  %5273 = vmatpush1.msra.mxu0 %v1131
  %5274 = vmatprep.subr.mxu0 %v1128
  %5275 = vmatpush1.msra.mxu0 %v1127
  %5276 = vmatprep.subr.mxu0 %v1124
  %5277 = vmatpush1.msra.mxu0 %v1123
  %5278 = vmatprep.subr.mxu0 %v1120
  %5279 = vmatpush1.msra.mxu0 %v1119
  %5280 = vmatprep.subr.mxu0 %v1116
  %5281 = vmatpush1.msra.mxu0 %v1115
  %5282 = vmatprep.subr.mxu0 %v1112
  %5283 = vmatpush1.msra.mxu0 %v1111
  %5284 = vmatprep.subr.mxu0 %v1108
  %5285 = vmatpush1.msra.mxu0 %v1107
  %5286 = vmatprep.subr.mxu0 %v1104
  %5287 = vmatpush1.msra.mxu0 %v1103
  %5288 = vmatprep.subr.mxu0 %v1100
  %5289 = vmatpush1.msra.mxu0 %v1099
  %5290 = vmatprep.subr.mxu0 %v1224
  %5291 = vmatpush2.msra.mxu0 %v1223
  %5292 = vmatprep.subr.mxu0 %v1220
  %5293 = vmatpush2.msra.mxu0 %v1219
  %5294 = vmatprep.subr.mxu0 %v1216
  %5295 = vmatpush2.msra.mxu0 %v1215
  %5296 = vmatprep.subr.mxu0 %v1212
  %5297 = vmatpush2.msra.mxu0 %v1211
  %5298 = vmatprep.subr.mxu0 %v1208
  %5299 = vmatpush2.msra.mxu0 %v1207
  %5300 = vmatprep.subr.mxu0 %v1204
  %5301 = vmatpush2.msra.mxu0 %v1203
  %5302 = vmatprep.subr.mxu0 %v1200
  %5303 = vmatpush2.msra.mxu0 %v1199
  %5304 = vmatprep.subr.mxu0 %v1196
  %5305 = vmatpush2.msra.mxu0 %v1195
  %5306 = vmatprep.subr.mxu0 %v1192
  %5307 = vmatpush2.msra.mxu0 %v1191
  %5308 = vmatprep.subr.mxu0 %v1188
  %5309 = vmatpush2.msra.mxu0 %v1187
  %5310 = vmatprep.subr.mxu0 %v1184
  %5311 = vmatpush2.msra.mxu0 %v1183
  %5312 = vmatprep.subr.mxu0 %v1180
  %5313 = vmatpush2.msra.mxu0 %v1179
  %5314 = vmatprep.subr.mxu0 %v1176
  %5315 = vmatpush2.msra.mxu0 %v1175
  %5316 = vmatprep.subr.mxu0 %v1172
  %5317 = vmatpush2.msra.mxu0 %v1171
  %5318 = vmatprep.subr.mxu0 %v1168
  %5319 = vmatpush2.msra.mxu0 %v1167
  %5320 = vmatprep.subr.mxu0 %v1164
  %5321 = vmatpush2.msra.mxu0 %v1163
  %5322 = vmatprep.mubr.f32.mxu0 %v4755
  %5323 = vmatmul.mubr.f32.gmra.mxu0 %v5257
  %v5324 = vpop.f32.mrf.mxu0
  %v5325 = vadd.f32 %v1233, %v5324
  %v5326 = vpop.f32.mrf.mxu0
  %v5327 = vadd.f32 %v1237, %v5326
  %5328 = vdwg.mxu0
  %5329 = vmatprep.subr.mxu0 %v1162
  %5330 = vmatpush1.msra.mxu0 %v1161
  %5331 = vmatprep.subr.mxu0 %v1158
  %5332 = vmatpush1.msra.mxu0 %v1157
  %5333 = vmatprep.subr.mxu0 %v1154
  %5334 = vmatpush1.msra.mxu0 %v1153
  %5335 = vmatprep.subr.mxu0 %v1150
  %5336 = vmatpush1.msra.mxu0 %v1149
  %5337 = vmatprep.subr.mxu0 %v1146
  %5338 = vmatpush1.msra.mxu0 %v1145
  %5339 = vmatprep.subr.mxu0 %v1142
  %5340 = vmatpush1.msra.mxu0 %v1141
  %5341 = vmatprep.subr.mxu0 %v1138
  %5342 = vmatpush1.msra.mxu0 %v1137
  %5343 = vmatprep.subr.mxu0 %v1134
  %5344 = vmatpush1.msra.mxu0 %v1133
  %5345 = vmatprep.subr.mxu0 %v1130
  %5346 = vmatpush1.msra.mxu0 %v1129
  %5347 = vmatprep.subr.mxu0 %v1126
  %5348 = vmatpush1.msra.mxu0 %v1125
  %5349 = vmatprep.subr.mxu0 %v1122
  %5350 = vmatpush1.msra.mxu0 %v1121
  %5351 = vmatprep.subr.mxu0 %v1118
  %5352 = vmatpush1.msra.mxu0 %v1117
  %5353 = vmatprep.subr.mxu0 %v1114
  %5354 = vmatpush1.msra.mxu0 %v1113
  %5355 = vmatprep.subr.mxu0 %v1110
  %5356 = vmatpush1.msra.mxu0 %v1109
  %5357 = vmatprep.subr.mxu0 %v1106
  %5358 = vmatpush1.msra.mxu0 %v1105
  %5359 = vmatprep.subr.mxu0 %v1102
  %5360 = vmatpush1.msra.mxu0 %v1101
  %5361 = vmatprep.subr.mxu0 %v1226
  %5362 = vmatpush2.msra.mxu0 %v1225
  %5363 = vmatprep.subr.mxu0 %v1222
  %5364 = vmatpush2.msra.mxu0 %v1221
  %5365 = vmatprep.subr.mxu0 %v1218
  %5366 = vmatpush2.msra.mxu0 %v1217
  %5367 = vmatprep.subr.mxu0 %v1214
  %5368 = vmatpush2.msra.mxu0 %v1213
  %5369 = vmatprep.subr.mxu0 %v1210
  %5370 = vmatpush2.msra.mxu0 %v1209
  %5371 = vmatprep.subr.mxu0 %v1206
  %5372 = vmatpush2.msra.mxu0 %v1205
  %5373 = vmatprep.subr.mxu0 %v1202
  %5374 = vmatpush2.msra.mxu0 %v1201
  %5375 = vmatprep.subr.mxu0 %v1198
  %5376 = vmatpush2.msra.mxu0 %v1197
  %5377 = vmatprep.subr.mxu0 %v1194
  %5378 = vmatpush2.msra.mxu0 %v1193
  %5379 = vmatprep.subr.mxu0 %v1190
  %5380 = vmatpush2.msra.mxu0 %v1189
  %5381 = vmatprep.subr.mxu0 %v1186
  %5382 = vmatpush2.msra.mxu0 %v1185
  %5383 = vmatprep.subr.mxu0 %v1182
  %5384 = vmatpush2.msra.mxu0 %v1181
  %5385 = vmatprep.subr.mxu0 %v1178
  %5386 = vmatpush2.msra.mxu0 %v1177
  %5387 = vmatprep.subr.mxu0 %v1174
  %5388 = vmatpush2.msra.mxu0 %v1173
  %5389 = vmatprep.subr.mxu0 %v1170
  %5390 = vmatpush2.msra.mxu0 %v1169
  %5391 = vmatprep.subr.mxu0 %v1166
  %5392 = vmatpush2.msra.mxu0 %v1165
  %5393 = vmatprep.mubr.f32.mxu0 %v4755
  %5394 = vmatmul.mubr.f32.gmra.mxu0 %v5257
  %v5395 = vpop.f32.mrf.mxu0
  %v5396 = vadd.f32 %v1241, %v5395
  %v5397 = vpop.f32.mrf.mxu0
  %v5398 = vadd.f32 %v1245, %v5397
  %5399 = vdwg.mxu0
  %v5400 = vxor.u32 %v5325, 2147483648
  %v5401 = vmul.f32 %v5400, 1.442695
  %v5402 = vpow.pop %v5401
  %v5403 = vadd.f32 %v5402, 1.0
  %v5404 = vrcp.pop %v5403
  %v5405 = vmul.f32 1.0, %v5404
  %v5406 = vxor.u32 %v5327, 2147483648
  %v5407 = vmul.f32 %v5406, 1.442695
  %v5408 = vpow.pop %v5407
  %v5409 = vadd.f32 %v5408, 1.0
  %v5410 = vrcp.pop %v5409
  %v5411 = vmul.f32 1.0, %v5410
  %v5412 = vtanh.pop %v5396
  %v5413 = vxor.u32 %v5398, 2147483648
  %v5414 = vmul.f32 %v5413, 1.442695
  %v5415 = vpow.pop %v5414
  %v5416 = vadd.f32 %v5415, 1.0
  %v5417 = vrcp.pop %v5416
  %v5418 = vmul.f32 1.0, %v5417
  %v5419 = vmul.f32 %v5411, %v4753
  %v5420 = vmul.f32 %v5405, %v5412
  %v5421 = vadd.f32 %v5419, %v5420
  %v5422 = vtanh.pop %v5421
  %v5423 = vmul.f32 %v5418, %v5422
  %5424 = vmatprep.subr.mxu0 %v291
  %5425 = vmatpush1.msra.mxu0 %v290
  %5426 = vmatprep.subr.mxu0 %v287
  %5427 = vmatpush1.msra.mxu0 %v286
  %5428 = vmatprep.subr.mxu0 %v283
  %5429 = vmatpush1.msra.mxu0 %v282
  %5430 = vmatprep.subr.mxu0 %v279
  %5431 = vmatpush1.msra.mxu0 %v278
  %5432 = vmatprep.subr.mxu0 %v275
  %5433 = vmatpush1.msra.mxu0 %v274
  %5434 = vmatprep.subr.mxu0 %v271
  %5435 = vmatpush1.msra.mxu0 %v270
  %5436 = vmatprep.subr.mxu0 %v267
  %5437 = vmatpush1.msra.mxu0 %v266
  %5438 = vmatprep.subr.mxu0 %v263
  %5439 = vmatpush1.msra.mxu0 %v262
  %5440 = vmatprep.subr.mxu0 %v259
  %5441 = vmatpush1.msra.mxu0 %v258
  %5442 = vmatprep.subr.mxu0 %v255
  %5443 = vmatpush1.msra.mxu0 %v254
  %5444 = vmatprep.subr.mxu0 %v251
  %5445 = vmatpush1.msra.mxu0 %v250
  %5446 = vmatprep.subr.mxu0 %v247
  %5447 = vmatpush1.msra.mxu0 %v246
  %5448 = vmatprep.subr.mxu0 %v243
  %5449 = vmatpush1.msra.mxu0 %v242
  %5450 = vmatprep.subr.mxu0 %v239
  %5451 = vmatpush1.msra.mxu0 %v238
  %5452 = vmatprep.subr.mxu0 %v235
  %5453 = vmatpush1.msra.mxu0 %v234
  %5454 = vmatprep.subr.mxu0 %v231
  %5455 = vmatpush1.msra.mxu0 %v230
  %5456 = vmatprep.subr.mxu0 0.0
  %5457 = vmatpush2.msra.mxu0 0.0
  %5458 = vmatprep.subr.mxu0 0.0
  %5459 = vmatpush2.msra.mxu0 0.0
  %5460 = vmatprep.subr.mxu0 0.0
  %5461 = vmatpush2.msra.mxu0 0.0
  %5462 = vmatprep.subr.mxu0 0.0
  %5463 = vmatpush2.msra.mxu0 0.0
  %5464 = vmatprep.subr.mxu0 0.0
  %5465 = vmatpush2.msra.mxu0 0.0
  %5466 = vmatprep.subr.mxu0 0.0
  %5467 = vmatpush2.msra.mxu0 0.0
  %5468 = vmatprep.subr.mxu0 0.0
  %5469 = vmatpush2.msra.mxu0 0.0
  %5470 = vmatprep.subr.mxu0 0.0
  %5471 = vmatpush2.msra.mxu0 0.0
  %5472 = vmatprep.subr.mxu0 0.0
  %5473 = vmatpush2.msra.mxu0 0.0
  %5474 = vmatprep.subr.mxu0 0.0
  %5475 = vmatpush2.msra.mxu0 0.0
  %5476 = vmatprep.subr.mxu0 0.0
  %5477 = vmatpush2.msra.mxu0 0.0
  %5478 = vmatprep.subr.mxu0 0.0
  %5479 = vmatpush2.msra.mxu0 0.0
  %5480 = vmatprep.subr.mxu0 0.0
  %5481 = vmatpush2.msra.mxu0 0.0
  %5482 = vmatprep.subr.mxu0 0.0
  %5483 = vmatpush2.msra.mxu0 0.0
  %5484 = vmatprep.subr.mxu0 0.0
  %5485 = vmatpush2.msra.mxu0 0.0
  %5486 = vmatprep.subr.mxu0 0.0
  %5487 = vmatpush2.msra.mxu0 0.0
  %5488 = vmatprep.mubr.f32.mxu0 0.0
  %5489 = vmatmul.mubr.f32.gmra.mxu0 %v4925
  %v5490 = vpop.f32.mrf.mxu0
  %v5491 = vadd.f32 0.0, %v5490
  %v5492 = vpop.f32.mrf.mxu0
  %v5493 = vadd.f32 0.0, %v5492
  %5494 = vdwg.mxu0
  %5495 = vmatprep.subr.mxu0 %v293
  %5496 = vmatpush1.msra.mxu0 %v292
  %5497 = vmatprep.subr.mxu0 %v289
  %5498 = vmatpush1.msra.mxu0 %v288
  %5499 = vmatprep.subr.mxu0 %v285
  %5500 = vmatpush1.msra.mxu0 %v284
  %5501 = vmatprep.subr.mxu0 %v281
  %5502 = vmatpush1.msra.mxu0 %v280
  %5503 = vmatprep.subr.mxu0 %v277
  %5504 = vmatpush1.msra.mxu0 %v276
  %5505 = vmatprep.subr.mxu0 %v273
  %5506 = vmatpush1.msra.mxu0 %v272
  %5507 = vmatprep.subr.mxu0 %v269
  %5508 = vmatpush1.msra.mxu0 %v268
  %5509 = vmatprep.subr.mxu0 %v265
  %5510 = vmatpush1.msra.mxu0 %v264
  %5511 = vmatprep.subr.mxu0 %v261
  %5512 = vmatpush1.msra.mxu0 %v260
  %5513 = vmatprep.subr.mxu0 %v257
  %5514 = vmatpush1.msra.mxu0 %v256
  %5515 = vmatprep.subr.mxu0 %v253
  %5516 = vmatpush1.msra.mxu0 %v252
  %5517 = vmatprep.subr.mxu0 %v249
  %5518 = vmatpush1.msra.mxu0 %v248
  %5519 = vmatprep.subr.mxu0 %v245
  %5520 = vmatpush1.msra.mxu0 %v244
  %5521 = vmatprep.subr.mxu0 %v241
  %5522 = vmatpush1.msra.mxu0 %v240
  %5523 = vmatprep.subr.mxu0 %v237
  %5524 = vmatpush1.msra.mxu0 %v236
  %5525 = vmatprep.subr.mxu0 %v233
  %5526 = vmatpush1.msra.mxu0 %v232
  %5527 = vmatprep.subr.mxu0 0.0
  %5528 = vmatpush2.msra.mxu0 0.0
  %5529 = vmatprep.subr.mxu0 0.0
  %5530 = vmatpush2.msra.mxu0 0.0
  %5531 = vmatprep.subr.mxu0 0.0
  %5532 = vmatpush2.msra.mxu0 0.0
  %5533 = vmatprep.subr.mxu0 0.0
  %5534 = vmatpush2.msra.mxu0 0.0
  %5535 = vmatprep.subr.mxu0 0.0
  %5536 = vmatpush2.msra.mxu0 0.0
  %5537 = vmatprep.subr.mxu0 0.0
  %5538 = vmatpush2.msra.mxu0 0.0
  %5539 = vmatprep.subr.mxu0 0.0
  %5540 = vmatpush2.msra.mxu0 0.0
  %5541 = vmatprep.subr.mxu0 0.0
  %5542 = vmatpush2.msra.mxu0 0.0
  %5543 = vmatprep.subr.mxu0 0.0
  %5544 = vmatpush2.msra.mxu0 0.0
  %5545 = vmatprep.subr.mxu0 0.0
  %5546 = vmatpush2.msra.mxu0 0.0
  %5547 = vmatprep.subr.mxu0 0.0
  %5548 = vmatpush2.msra.mxu0 0.0
  %5549 = vmatprep.subr.mxu0 0.0
  %5550 = vmatpush2.msra.mxu0 0.0
  %5551 = vmatprep.subr.mxu0 0.0
  %5552 = vmatpush2.msra.mxu0 0.0
  %5553 = vmatprep.subr.mxu0 0.0
  %5554 = vmatpush2.msra.mxu0 0.0
  %5555 = vmatprep.subr.mxu0 0.0
  %5556 = vmatpush2.msra.mxu0 0.0
  %5557 = vmatprep.subr.mxu0 0.0
  %5558 = vmatpush2.msra.mxu0 0.0
  %5559 = vmatprep.mubr.f32.mxu0 0.0
  %5560 = vmatmul.mubr.f32.gmra.mxu0 %v4925
  %v5561 = vpop.f32.mrf.mxu0
  %v5562 = vadd.f32 0.0, %v5561
  %v5563 = vpop.f32.mrf.mxu0
  %v5564 = vadd.f32 0.0, %v5563
  %5565 = vdwg.mxu0
  %v5566 = vadd.f32 %v155, %v5491
  %v5567 = vadd.f32 %v157, %v5493
  %v5568 = vadd.f32 %v226, %v5562
  %v5569 = vadd.f32 %v228, %v5564
  %v5570 = vxor.u32 %v5566, 2147483648
  %v5571 = vmul.f32 %v5570, 1.442695
  %v5572 = vpow.pop %v5571
  %v5573 = vadd.f32 %v5572, 1.0
  %v5574 = vrcp.pop %v5573
  %v5575 = vmul.f32 1.0, %v5574
  %v5576 = vxor.u32 %v5567, 2147483648
  %v5577 = vmul.f32 %v5576, 1.442695
  %v5578 = vpow.pop %v5577
  %v5579 = vadd.f32 %v5578, 1.0
  %v5580 = vrcp.pop %v5579
  %v5581 = vmul.f32 1.0, %v5580
  %v5582 = vtanh.pop %v5568
  %v5583 = vxor.u32 %v5569, 2147483648
  %v5584 = vmul.f32 %v5583, 1.442695
  %v5585 = vpow.pop %v5584
  %v5586 = vadd.f32 %v5585, 1.0
  %v5587 = vrcp.pop %v5586
  %v5588 = vmul.f32 1.0, %v5587
  %v5589 = vmul.f32 %v5581, %v4923
  %v5590 = vmul.f32 %v5575, %v5582
  %v5591 = vadd.f32 %v5589, %v5590
  %v5592 = vtanh.pop %v5591
  %v5593 = vmul.f32 %v5588, %v5592
  %5594 = vmatprep.subr.mxu0 %v525
  %5595 = vmatpush1.msra.mxu0 %v524
  %5596 = vmatprep.subr.mxu0 %v521
  %5597 = vmatpush1.msra.mxu0 %v520
  %5598 = vmatprep.subr.mxu0 %v517
  %5599 = vmatpush1.msra.mxu0 %v516
  %5600 = vmatprep.subr.mxu0 %v513
  %5601 = vmatpush1.msra.mxu0 %v512
  %5602 = vmatprep.subr.mxu0 %v509
  %5603 = vmatpush1.msra.mxu0 %v508
  %5604 = vmatprep.subr.mxu0 %v505
  %5605 = vmatpush1.msra.mxu0 %v504
  %5606 = vmatprep.subr.mxu0 %v501
  %5607 = vmatpush1.msra.mxu0 %v500
  %5608 = vmatprep.subr.mxu0 %v497
  %5609 = vmatpush1.msra.mxu0 %v496
  %5610 = vmatprep.subr.mxu0 %v493
  %5611 = vmatpush1.msra.mxu0 %v492
  %5612 = vmatprep.subr.mxu0 %v489
  %5613 = vmatpush1.msra.mxu0 %v488
  %5614 = vmatprep.subr.mxu0 %v485
  %5615 = vmatpush1.msra.mxu0 %v484
  %5616 = vmatprep.subr.mxu0 %v481
  %5617 = vmatpush1.msra.mxu0 %v480
  %5618 = vmatprep.subr.mxu0 %v477
  %5619 = vmatpush1.msra.mxu0 %v476
  %5620 = vmatprep.subr.mxu0 %v473
  %5621 = vmatpush1.msra.mxu0 %v472
  %5622 = vmatprep.subr.mxu0 %v469
  %5623 = vmatpush1.msra.mxu0 %v468
  %5624 = vmatprep.subr.mxu0 %v465
  %5625 = vmatpush1.msra.mxu0 %v464
  %5626 = vmatprep.subr.mxu0 %v589
  %5627 = vmatpush2.msra.mxu0 %v588
  %5628 = vmatprep.subr.mxu0 %v585
  %5629 = vmatpush2.msra.mxu0 %v584
  %5630 = vmatprep.subr.mxu0 %v581
  %5631 = vmatpush2.msra.mxu0 %v580
  %5632 = vmatprep.subr.mxu0 %v577
  %5633 = vmatpush2.msra.mxu0 %v576
  %5634 = vmatprep.subr.mxu0 %v573
  %5635 = vmatpush2.msra.mxu0 %v572
  %5636 = vmatprep.subr.mxu0 %v569
  %5637 = vmatpush2.msra.mxu0 %v568
  %5638 = vmatprep.subr.mxu0 %v565
  %5639 = vmatpush2.msra.mxu0 %v564
  %5640 = vmatprep.subr.mxu0 %v561
  %5641 = vmatpush2.msra.mxu0 %v560
  %5642 = vmatprep.subr.mxu0 %v557
  %5643 = vmatpush2.msra.mxu0 %v556
  %5644 = vmatprep.subr.mxu0 %v553
  %5645 = vmatpush2.msra.mxu0 %v552
  %5646 = vmatprep.subr.mxu0 %v549
  %5647 = vmatpush2.msra.mxu0 %v548
  %5648 = vmatprep.subr.mxu0 %v545
  %5649 = vmatpush2.msra.mxu0 %v544
  %5650 = vmatprep.subr.mxu0 %v541
  %5651 = vmatpush2.msra.mxu0 %v540
  %5652 = vmatprep.subr.mxu0 %v537
  %5653 = vmatpush2.msra.mxu0 %v536
  %5654 = vmatprep.subr.mxu0 %v533
  %5655 = vmatpush2.msra.mxu0 %v532
  %5656 = vmatprep.subr.mxu0 %v529
  %5657 = vmatpush2.msra.mxu0 %v528
  %5658 = vmatprep.mubr.f32.mxu0 %v5091
  %5659 = vmatmul.mubr.f32.gmra.mxu0 %v5593
  %v5660 = vpop.f32.mrf.mxu0
  %v5661 = vadd.f32 %v597, %v5660
  %v5662 = vpop.f32.mrf.mxu0
  %v5663 = vadd.f32 %v601, %v5662
  %5664 = vdwg.mxu0
  %5665 = vmatprep.subr.mxu0 %v527
  %5666 = vmatpush1.msra.mxu0 %v526
  %5667 = vmatprep.subr.mxu0 %v523
  %5668 = vmatpush1.msra.mxu0 %v522
  %5669 = vmatprep.subr.mxu0 %v519
  %5670 = vmatpush1.msra.mxu0 %v518
  %5671 = vmatprep.subr.mxu0 %v515
  %5672 = vmatpush1.msra.mxu0 %v514
  %5673 = vmatprep.subr.mxu0 %v511
  %5674 = vmatpush1.msra.mxu0 %v510
  %5675 = vmatprep.subr.mxu0 %v507
  %5676 = vmatpush1.msra.mxu0 %v506
  %5677 = vmatprep.subr.mxu0 %v503
  %5678 = vmatpush1.msra.mxu0 %v502
  %5679 = vmatprep.subr.mxu0 %v499
  %5680 = vmatpush1.msra.mxu0 %v498
  %5681 = vmatprep.subr.mxu0 %v495
  %5682 = vmatpush1.msra.mxu0 %v494
  %5683 = vmatprep.subr.mxu0 %v491
  %5684 = vmatpush1.msra.mxu0 %v490
  %5685 = vmatprep.subr.mxu0 %v487
  %5686 = vmatpush1.msra.mxu0 %v486
  %5687 = vmatprep.subr.mxu0 %v483
  %5688 = vmatpush1.msra.mxu0 %v482
  %5689 = vmatprep.subr.mxu0 %v479
  %5690 = vmatpush1.msra.mxu0 %v478
  %5691 = vmatprep.subr.mxu0 %v475
  %5692 = vmatpush1.msra.mxu0 %v474
  %5693 = vmatprep.subr.mxu0 %v471
  %5694 = vmatpush1.msra.mxu0 %v470
  %5695 = vmatprep.subr.mxu0 %v467
  %5696 = vmatpush1.msra.mxu0 %v466
  %5697 = vmatprep.subr.mxu0 %v591
  %5698 = vmatpush2.msra.mxu0 %v590
  %5699 = vmatprep.subr.mxu0 %v587
  %5700 = vmatpush2.msra.mxu0 %v586
  %5701 = vmatprep.subr.mxu0 %v583
  %5702 = vmatpush2.msra.mxu0 %v582
  %5703 = vmatprep.subr.mxu0 %v579
  %5704 = vmatpush2.msra.mxu0 %v578
  %5705 = vmatprep.subr.mxu0 %v575
  %5706 = vmatpush2.msra.mxu0 %v574
  %5707 = vmatprep.subr.mxu0 %v571
  %5708 = vmatpush2.msra.mxu0 %v570
  %5709 = vmatprep.subr.mxu0 %v567
  %5710 = vmatpush2.msra.mxu0 %v566
  %5711 = vmatprep.subr.mxu0 %v563
  %5712 = vmatpush2.msra.mxu0 %v562
  %5713 = vmatprep.subr.mxu0 %v559
  %5714 = vmatpush2.msra.mxu0 %v558
  %5715 = vmatprep.subr.mxu0 %v555
  %5716 = vmatpush2.msra.mxu0 %v554
  %5717 = vmatprep.subr.mxu0 %v551
  %5718 = vmatpush2.msra.mxu0 %v550
  %5719 = vmatprep.subr.mxu0 %v547
  %5720 = vmatpush2.msra.mxu0 %v546
  %5721 = vmatprep.subr.mxu0 %v543
  %5722 = vmatpush2.msra.mxu0 %v542
  %5723 = vmatprep.subr.mxu0 %v539
  %5724 = vmatpush2.msra.mxu0 %v538
  %5725 = vmatprep.subr.mxu0 %v535
  %5726 = vmatpush2.msra.mxu0 %v534
  %5727 = vmatprep.subr.mxu0 %v531
  %5728 = vmatpush2.msra.mxu0 %v530
  %5729 = vmatprep.mubr.f32.mxu0 %v5091
  %5730 = vmatmul.mubr.f32.gmra.mxu0 %v5593
  %v5731 = vpop.f32.mrf.mxu0
  %v5732 = vadd.f32 %v605, %v5731
  %v5733 = vpop.f32.mrf.mxu0
  %v5734 = vadd.f32 %v609, %v5733
  %5735 = vdwg.mxu0
  %v5736 = vxor.u32 %v5661, 2147483648
  %v5737 = vmul.f32 %v5736, 1.442695
  %v5738 = vpow.pop %v5737
  %v5739 = vadd.f32 %v5738, 1.0
  %v5740 = vrcp.pop %v5739
  %v5741 = vmul.f32 1.0, %v5740
  %v5742 = vxor.u32 %v5663, 2147483648
  %v5743 = vmul.f32 %v5742, 1.442695
  %v5744 = vpow.pop %v5743
  %v5745 = vadd.f32 %v5744, 1.0
  %v5746 = vrcp.pop %v5745
  %v5747 = vmul.f32 1.0, %v5746
  %v5748 = vtanh.pop %v5732
  %v5749 = vxor.u32 %v5734, 2147483648
  %v5750 = vmul.f32 %v5749, 1.442695
  %v5751 = vpow.pop %v5750
  %v5752 = vadd.f32 %v5751, 1.0
  %v5753 = vrcp.pop %v5752
  %v5754 = vmul.f32 1.0, %v5753
  %v5755 = vmul.f32 %v5747, %v5089
  %v5756 = vmul.f32 %v5741, %v5748
  %v5757 = vadd.f32 %v5755, %v5756
  %v5758 = vtanh.pop %v5757
  %v5759 = vmul.f32 %v5754, %v5758
  %5760 = vmatprep.subr.mxu0 %v842
  %5761 = vmatpush1.msra.mxu0 %v841
  %5762 = vmatprep.subr.mxu0 %v838
  %5763 = vmatpush1.msra.mxu0 %v837
  %5764 = vmatprep.subr.mxu0 %v834
  %5765 = vmatpush1.msra.mxu0 %v833
  %5766 = vmatprep.subr.mxu0 %v830
  %5767 = vmatpush1.msra.mxu0 %v829
  %5768 = vmatprep.subr.mxu0 %v826
  %5769 = vmatpush1.msra.mxu0 %v825
  %5770 = vmatprep.subr.mxu0 %v822
  %5771 = vmatpush1.msra.mxu0 %v821
  %5772 = vmatprep.subr.mxu0 %v818
  %5773 = vmatpush1.msra.mxu0 %v817
  %5774 = vmatprep.subr.mxu0 %v814
  %5775 = vmatpush1.msra.mxu0 %v813
  %5776 = vmatprep.subr.mxu0 %v810
  %5777 = vmatpush1.msra.mxu0 %v809
  %5778 = vmatprep.subr.mxu0 %v806
  %5779 = vmatpush1.msra.mxu0 %v805
  %5780 = vmatprep.subr.mxu0 %v802
  %5781 = vmatpush1.msra.mxu0 %v801
  %5782 = vmatprep.subr.mxu0 %v798
  %5783 = vmatpush1.msra.mxu0 %v797
  %5784 = vmatprep.subr.mxu0 %v794
  %5785 = vmatpush1.msra.mxu0 %v793
  %5786 = vmatprep.subr.mxu0 %v790
  %5787 = vmatpush1.msra.mxu0 %v789
  %5788 = vmatprep.subr.mxu0 %v786
  %5789 = vmatpush1.msra.mxu0 %v785
  %5790 = vmatprep.subr.mxu0 %v782
  %5791 = vmatpush1.msra.mxu0 %v781
  %5792 = vmatprep.subr.mxu0 %v906
  %5793 = vmatpush2.msra.mxu0 %v905
  %5794 = vmatprep.subr.mxu0 %v902
  %5795 = vmatpush2.msra.mxu0 %v901
  %5796 = vmatprep.subr.mxu0 %v898
  %5797 = vmatpush2.msra.mxu0 %v897
  %5798 = vmatprep.subr.mxu0 %v894
  %5799 = vmatpush2.msra.mxu0 %v893
  %5800 = vmatprep.subr.mxu0 %v890
  %5801 = vmatpush2.msra.mxu0 %v889
  %5802 = vmatprep.subr.mxu0 %v886
  %5803 = vmatpush2.msra.mxu0 %v885
  %5804 = vmatprep.subr.mxu0 %v882
  %5805 = vmatpush2.msra.mxu0 %v881
  %5806 = vmatprep.subr.mxu0 %v878
  %5807 = vmatpush2.msra.mxu0 %v877
  %5808 = vmatprep.subr.mxu0 %v874
  %5809 = vmatpush2.msra.mxu0 %v873
  %5810 = vmatprep.subr.mxu0 %v870
  %5811 = vmatpush2.msra.mxu0 %v869
  %5812 = vmatprep.subr.mxu0 %v866
  %5813 = vmatpush2.msra.mxu0 %v865
  %5814 = vmatprep.subr.mxu0 %v862
  %5815 = vmatpush2.msra.mxu0 %v861
  %5816 = vmatprep.subr.mxu0 %v858
  %5817 = vmatpush2.msra.mxu0 %v857
  %5818 = vmatprep.subr.mxu0 %v854
  %5819 = vmatpush2.msra.mxu0 %v853
  %5820 = vmatprep.subr.mxu0 %v850
  %5821 = vmatpush2.msra.mxu0 %v849
  %5822 = vmatprep.subr.mxu0 %v846
  %5823 = vmatpush2.msra.mxu0 %v845
  %5824 = vmatprep.mubr.f32.mxu0 %v5257
  %5825 = vmatmul.mubr.f32.gmra.mxu0 %v5759
  %v5826 = vpop.f32.mrf.mxu0
  %v5827 = vadd.f32 %v915, %v5826
  %v5828 = vpop.f32.mrf.mxu0
  %v5829 = vadd.f32 %v919, %v5828
  %5830 = vdwg.mxu0
  %5831 = vmatprep.subr.mxu0 %v844
  %5832 = vmatpush1.msra.mxu0 %v843
  %5833 = vmatprep.subr.mxu0 %v840
  %5834 = vmatpush1.msra.mxu0 %v839
  %5835 = vmatprep.subr.mxu0 %v836
  %5836 = vmatpush1.msra.mxu0 %v835
  %5837 = vmatprep.subr.mxu0 %v832
  %5838 = vmatpush1.msra.mxu0 %v831
  %5839 = vmatprep.subr.mxu0 %v828
  %5840 = vmatpush1.msra.mxu0 %v827
  %5841 = vmatprep.subr.mxu0 %v824
  %5842 = vmatpush1.msra.mxu0 %v823
  %5843 = vmatprep.subr.mxu0 %v820
  %5844 = vmatpush1.msra.mxu0 %v819
  %5845 = vmatprep.subr.mxu0 %v816
  %5846 = vmatpush1.msra.mxu0 %v815
  %5847 = vmatprep.subr.mxu0 %v812
  %5848 = vmatpush1.msra.mxu0 %v811
  %5849 = vmatprep.subr.mxu0 %v808
  %5850 = vmatpush1.msra.mxu0 %v807
  %5851 = vmatprep.subr.mxu0 %v804
  %5852 = vmatpush1.msra.mxu0 %v803
  %5853 = vmatprep.subr.mxu0 %v800
  %5854 = vmatpush1.msra.mxu0 %v799
  %5855 = vmatprep.subr.mxu0 %v796
  %5856 = vmatpush1.msra.mxu0 %v795
  %5857 = vmatprep.subr.mxu0 %v792
  %5858 = vmatpush1.msra.mxu0 %v791
  %5859 = vmatprep.subr.mxu0 %v788
  %5860 = vmatpush1.msra.mxu0 %v787
  %5861 = vmatprep.subr.mxu0 %v784
  %5862 = vmatpush1.msra.mxu0 %v783
  %5863 = vmatprep.subr.mxu0 %v908
  %5864 = vmatpush2.msra.mxu0 %v907
  %5865 = vmatprep.subr.mxu0 %v904
  %5866 = vmatpush2.msra.mxu0 %v903
  %5867 = vmatprep.subr.mxu0 %v900
  %5868 = vmatpush2.msra.mxu0 %v899
  %5869 = vmatprep.subr.mxu0 %v896
  %5870 = vmatpush2.msra.mxu0 %v895
  %5871 = vmatprep.subr.mxu0 %v892
  %5872 = vmatpush2.msra.mxu0 %v891
  %5873 = vmatprep.subr.mxu0 %v888
  %5874 = vmatpush2.msra.mxu0 %v887
  %5875 = vmatprep.subr.mxu0 %v884
  %5876 = vmatpush2.msra.mxu0 %v883
  %5877 = vmatprep.subr.mxu0 %v880
  %5878 = vmatpush2.msra.mxu0 %v879
  %5879 = vmatprep.subr.mxu0 %v876
  %5880 = vmatpush2.msra.mxu0 %v875
  %5881 = vmatprep.subr.mxu0 %v872
  %5882 = vmatpush2.msra.mxu0 %v871
  %5883 = vmatprep.subr.mxu0 %v868
  %5884 = vmatpush2.msra.mxu0 %v867
  %5885 = vmatprep.subr.mxu0 %v864
  %5886 = vmatpush2.msra.mxu0 %v863
  %5887 = vmatprep.subr.mxu0 %v860
  %5888 = vmatpush2.msra.mxu0 %v859
  %5889 = vmatprep.subr.mxu0 %v856
  %5890 = vmatpush2.msra.mxu0 %v855
  %5891 = vmatprep.subr.mxu0 %v852
  %5892 = vmatpush2.msra.mxu0 %v851
  %5893 = vmatprep.subr.mxu0 %v848
  %5894 = vmatpush2.msra.mxu0 %v847
  %5895 = vmatprep.mubr.f32.mxu0 %v5257
  %5896 = vmatmul.mubr.f32.gmra.mxu0 %v5759
  %v5897 = vpop.f32.mrf.mxu0
  %v5898 = vadd.f32 %v923, %v5897
  %v5899 = vpop.f32.mrf.mxu0
  %v5900 = vadd.f32 %v927, %v5899
  %5901 = vdwg.mxu0
  %v5902 = vxor.u32 %v5827, 2147483648
  %v5903 = vmul.f32 %v5902, 1.442695
  %v5904 = vpow.pop %v5903
  %v5905 = vadd.f32 %v5904, 1.0
  %v5906 = vrcp.pop %v5905
  %v5907 = vmul.f32 1.0, %v5906
  %v5908 = vxor.u32 %v5829, 2147483648
  %v5909 = vmul.f32 %v5908, 1.442695
  %v5910 = vpow.pop %v5909
  %v5911 = vadd.f32 %v5910, 1.0
  %v5912 = vrcp.pop %v5911
  %v5913 = vmul.f32 1.0, %v5912
  %v5914 = vtanh.pop %v5898
  %v5915 = vxor.u32 %v5900, 2147483648
  %v5916 = vmul.f32 %v5915, 1.442695
  %v5917 = vpow.pop %v5916
  %v5918 = vadd.f32 %v5917, 1.0
  %v5919 = vrcp.pop %v5918
  %v5920 = vmul.f32 1.0, %v5919
  %v5921 = vmul.f32 %v5913, %v5255
  %v5922 = vmul.f32 %v5907, %v5914
  %v5923 = vadd.f32 %v5921, %v5922
  %v5924 = vtanh.pop %v5923
  %v5925 = vmul.f32 %v5920, %v5924
  %5926 = vmatprep.subr.mxu0 %v1160
  %5927 = vmatpush1.msra.mxu0 %v1159
  %5928 = vmatprep.subr.mxu0 %v1156
  %5929 = vmatpush1.msra.mxu0 %v1155
  %5930 = vmatprep.subr.mxu0 %v1152
  %5931 = vmatpush1.msra.mxu0 %v1151
  %5932 = vmatprep.subr.mxu0 %v1148
  %5933 = vmatpush1.msra.mxu0 %v1147
  %5934 = vmatprep.subr.mxu0 %v1144
  %5935 = vmatpush1.msra.mxu0 %v1143
  %5936 = vmatprep.subr.mxu0 %v1140
  %5937 = vmatpush1.msra.mxu0 %v1139
  %5938 = vmatprep.subr.mxu0 %v1136
  %5939 = vmatpush1.msra.mxu0 %v1135
  %5940 = vmatprep.subr.mxu0 %v1132
  %5941 = vmatpush1.msra.mxu0 %v1131
  %5942 = vmatprep.subr.mxu0 %v1128
  %5943 = vmatpush1.msra.mxu0 %v1127
  %5944 = vmatprep.subr.mxu0 %v1124
  %5945 = vmatpush1.msra.mxu0 %v1123
  %5946 = vmatprep.subr.mxu0 %v1120
  %5947 = vmatpush1.msra.mxu0 %v1119
  %5948 = vmatprep.subr.mxu0 %v1116
  %5949 = vmatpush1.msra.mxu0 %v1115
  %5950 = vmatprep.subr.mxu0 %v1112
  %5951 = vmatpush1.msra.mxu0 %v1111
  %5952 = vmatprep.subr.mxu0 %v1108
  %5953 = vmatpush1.msra.mxu0 %v1107
  %5954 = vmatprep.subr.mxu0 %v1104
  %5955 = vmatpush1.msra.mxu0 %v1103
  %5956 = vmatprep.subr.mxu0 %v1100
  %5957 = vmatpush1.msra.mxu0 %v1099
  %5958 = vmatprep.subr.mxu0 %v1224
  %5959 = vmatpush2.msra.mxu0 %v1223
  %5960 = vmatprep.subr.mxu0 %v1220
  %5961 = vmatpush2.msra.mxu0 %v1219
  %5962 = vmatprep.subr.mxu0 %v1216
  %5963 = vmatpush2.msra.mxu0 %v1215
  %5964 = vmatprep.subr.mxu0 %v1212
  %5965 = vmatpush2.msra.mxu0 %v1211
  %5966 = vmatprep.subr.mxu0 %v1208
  %5967 = vmatpush2.msra.mxu0 %v1207
  %5968 = vmatprep.subr.mxu0 %v1204
  %5969 = vmatpush2.msra.mxu0 %v1203
  %5970 = vmatprep.subr.mxu0 %v1200
  %5971 = vmatpush2.msra.mxu0 %v1199
  %5972 = vmatprep.subr.mxu0 %v1196
  %5973 = vmatpush2.msra.mxu0 %v1195
  %5974 = vmatprep.subr.mxu0 %v1192
  %5975 = vmatpush2.msra.mxu0 %v1191
  %5976 = vmatprep.subr.mxu0 %v1188
  %5977 = vmatpush2.msra.mxu0 %v1187
  %5978 = vmatprep.subr.mxu0 %v1184
  %5979 = vmatpush2.msra.mxu0 %v1183
  %5980 = vmatprep.subr.mxu0 %v1180
  %5981 = vmatpush2.msra.mxu0 %v1179
  %5982 = vmatprep.subr.mxu0 %v1176
  %5983 = vmatpush2.msra.mxu0 %v1175
  %5984 = vmatprep.subr.mxu0 %v1172
  %5985 = vmatpush2.msra.mxu0 %v1171
  %5986 = vmatprep.subr.mxu0 %v1168
  %5987 = vmatpush2.msra.mxu0 %v1167
  %5988 = vmatprep.subr.mxu0 %v1164
  %5989 = vmatpush2.msra.mxu0 %v1163
  %5990 = vmatprep.mubr.f32.mxu0 %v5423
  %5991 = vmatmul.mubr.f32.gmra.mxu0 %v5925
  %v5992 = vpop.f32.mrf.mxu0
  %v5993 = vadd.f32 %v1233, %v5992
  %v5994 = vpop.f32.mrf.mxu0
  %v5995 = vadd.f32 %v1237, %v5994
  %5996 = vdwg.mxu0
  %5997 = vmatprep.subr.mxu0 %v1162
  %5998 = vmatpush1.msra.mxu0 %v1161
  %5999 = vmatprep.subr.mxu0 %v1158
  %6000 = vmatpush1.msra.mxu0 %v1157
  %6001 = vmatprep.subr.mxu0 %v1154
  %6002 = vmatpush1.msra.mxu0 %v1153
  %6003 = vmatprep.subr.mxu0 %v1150
  %6004 = vmatpush1.msra.mxu0 %v1149
  %6005 = vmatprep.subr.mxu0 %v1146
  %6006 = vmatpush1.msra.mxu0 %v1145
  %6007 = vmatprep.subr.mxu0 %v1142
  %6008 = vmatpush1.msra.mxu0 %v1141
  %6009 = vmatprep.subr.mxu0 %v1138
  %6010 = vmatpush1.msra.mxu0 %v1137
  %6011 = vmatprep.subr.mxu0 %v1134
  %6012 = vmatpush1.msra.mxu0 %v1133
  %6013 = vmatprep.subr.mxu0 %v1130
  %6014 = vmatpush1.msra.mxu0 %v1129
  %6015 = vmatprep.subr.mxu0 %v1126
  %6016 = vmatpush1.msra.mxu0 %v1125
  %6017 = vmatprep.subr.mxu0 %v1122
  %6018 = vmatpush1.msra.mxu0 %v1121
  %6019 = vmatprep.subr.mxu0 %v1118
  %6020 = vmatpush1.msra.mxu0 %v1117
  %6021 = vmatprep.subr.mxu0 %v1114
  %6022 = vmatpush1.msra.mxu0 %v1113
  %6023 = vmatprep.subr.mxu0 %v1110
  %6024 = vmatpush1.msra.mxu0 %v1109
  %6025 = vmatprep.subr.mxu0 %v1106
  %6026 = vmatpush1.msra.mxu0 %v1105
  %6027 = vmatprep.subr.mxu0 %v1102
  %6028 = vmatpush1.msra.mxu0 %v1101
  %6029 = vmatprep.subr.mxu0 %v1226
  %6030 = vmatpush2.msra.mxu0 %v1225
  %6031 = vmatprep.subr.mxu0 %v1222
  %6032 = vmatpush2.msra.mxu0 %v1221
  %6033 = vmatprep.subr.mxu0 %v1218
  %6034 = vmatpush2.msra.mxu0 %v1217
  %6035 = vmatprep.subr.mxu0 %v1214
  %6036 = vmatpush2.msra.mxu0 %v1213
  %6037 = vmatprep.subr.mxu0 %v1210
  %6038 = vmatpush2.msra.mxu0 %v1209
  %6039 = vmatprep.subr.mxu0 %v1206
  %6040 = vmatpush2.msra.mxu0 %v1205
  %6041 = vmatprep.subr.mxu0 %v1202
  %6042 = vmatpush2.msra.mxu0 %v1201
  %6043 = vmatprep.subr.mxu0 %v1198
  %6044 = vmatpush2.msra.mxu0 %v1197
  %6045 = vmatprep.subr.mxu0 %v1194
  %6046 = vmatpush2.msra.mxu0 %v1193
  %6047 = vmatprep.subr.mxu0 %v1190
  %6048 = vmatpush2.msra.mxu0 %v1189
  %6049 = vmatprep.subr.mxu0 %v1186
  %6050 = vmatpush2.msra.mxu0 %v1185
  %6051 = vmatprep.subr.mxu0 %v1182
  %6052 = vmatpush2.msra.mxu0 %v1181
  %6053 = vmatprep.subr.mxu0 %v1178
  %6054 = vmatpush2.msra.mxu0 %v1177
  %6055 = vmatprep.subr.mxu0 %v1174
  %6056 = vmatpush2.msra.mxu0 %v1173
  %6057 = vmatprep.subr.mxu0 %v1170
  %6058 = vmatpush2.msra.mxu0 %v1169
  %6059 = vmatprep.subr.mxu0 %v1166
  %6060 = vmatpush2.msra.mxu0 %v1165
  %6061 = vmatprep.mubr.f32.mxu0 %v5423
  %6062 = vmatmul.mubr.f32.gmra.mxu0 %v5925
  %v6063 = vpop.f32.mrf.mxu0
  %v6064 = vadd.f32 %v1241, %v6063
  %v6065 = vpop.f32.mrf.mxu0
  %v6066 = vadd.f32 %v1245, %v6065
  %6067 = vdwg.mxu0
  %v6068 = vxor.u32 %v5993, 2147483648
  %v6069 = vmul.f32 %v6068, 1.442695
  %v6070 = vpow.pop %v6069
  %v6071 = vadd.f32 %v6070, 1.0
  %v6072 = vrcp.pop %v6071
  %v6073 = vmul.f32 1.0, %v6072
  %v6074 = vxor.u32 %v5995, 2147483648
  %v6075 = vmul.f32 %v6074, 1.442695
  %v6076 = vpow.pop %v6075
  %v6077 = vadd.f32 %v6076, 1.0
  %v6078 = vrcp.pop %v6077
  %v6079 = vmul.f32 1.0, %v6078
  %v6080 = vtanh.pop %v6064
  %v6081 = vxor.u32 %v6066, 2147483648
  %v6082 = vmul.f32 %v6081, 1.442695
  %v6083 = vpow.pop %v6082
  %v6084 = vadd.f32 %v6083, 1.0
  %v6085 = vrcp.pop %v6084
  %v6086 = vmul.f32 1.0, %v6085
  %v6087 = vmul.f32 %v6079, %v5421
  %v6088 = vmul.f32 %v6073, %v6080
  %v6089 = vadd.f32 %v6087, %v6088
  %v6090 = vtanh.pop %v6089
  %v6091 = vmul.f32 %v6086, %v6090
  %v6093 = vrot.slane %v2083, 6
  %v6096 = vrot.slane %v2751, 4
  %v6099 = vrot.slane %v3419, 2
  %v6102 = vrot.slane %v4755, 6
  %v6105 = vrot.slane %v5423, 4
  %v6108 = vrot.slane %v6091, 2
  %vm6110 = vcmask 1041408
  %v6111 = vsel %vm6110, %v1415, %v6093
  %vm6112 = vcmask 1043456
  %v6113 = vsel %vm6112, %v6111, %v6096
  %vm6114 = vcmask 1045504
  %v6115 = vsel %vm6114, %v6113, %v6099
  %v6116 = vsel %vm6110, %v4087, %v6102
  %v6117 = vsel %vm6112, %v6116, %v6105
  %v6118 = vsel %vm6114, %v6117, %v6108
  %v6119 = vld [vmem:[%s6] sm:$0xff]
  %v6120 = vld [vmem:[%s6 + $0x8] sm:$0xff]
  %v6121 = vld [vmem:[%s6 + $0x10] sm:$0xff]
  %v6122 = vld [vmem:[%s6 + $0x18] sm:$0xff]
  %v6123 = vld [vmem:[%s6 + $0x20] sm:$0xff]
  %v6124 = vld [vmem:[%s6 + $0x28] sm:$0xff]
  %v6125 = vld [vmem:[%s6 + $0x30] sm:$0xff]
  %v6126 = vld [vmem:[%s6 + $0x38] sm:$0xff]
  %v6127 = vld [vmem:[%s6 + $0x40] sm:$0xff]
  %v6128 = vld [vmem:[%s6 + $0x48] sm:$0xff]
  %v6129 = vld [vmem:[%s6 + $0x50] sm:$0xff]
  %v6130 = vld [vmem:[%s6 + $0x58] sm:$0xff]
  %v6131 = vld [vmem:[%s6 + $0x60] sm:$0xff]
  %v6132 = vld [vmem:[%s6 + $0x68] sm:$0xff]
  %v6133 = vld [vmem:[%s6 + $0x70] sm:$0xff]
  %v6134 = vld [vmem:[%s6 + $0x78] sm:$0xff]
  %v6135 = vld [vmem:[%s7] sm:$0x1]
  %v6137 = vlaneseq
  %v6138 = vshrl.u32 %v6137, 7
  %v6139 = vsub.s32 0, %v6138
  %v6140 = vrot.slane %v6135, %v6139
  %6142 = vmatprep.subr.mxu0 0.0
  %6143 = vmatpush1.msra.mxu0 %v6134
  %6144 = vmatprep.subr.mxu0 0.0
  %6145 = vmatpush1.msra.mxu0 %v6133
  %6146 = vmatprep.subr.mxu0 0.0
  %6147 = vmatpush1.msra.mxu0 %v6132
  %6148 = vmatprep.subr.mxu0 0.0
  %6149 = vmatpush1.msra.mxu0 %v6131
  %6150 = vmatprep.subr.mxu0 0.0
  %6151 = vmatpush1.msra.mxu0 %v6130
  %6152 = vmatprep.subr.mxu0 0.0
  %6153 = vmatpush1.msra.mxu0 %v6129
  %6154 = vmatprep.subr.mxu0 0.0
  %6155 = vmatpush1.msra.mxu0 %v6128
  %6156 = vmatprep.subr.mxu0 0.0
  %6157 = vmatpush1.msra.mxu0 %v6127
  %6158 = vmatprep.subr.mxu0 0.0
  %6159 = vmatpush1.msra.mxu0 %v6126
  %6160 = vmatprep.subr.mxu0 0.0
  %6161 = vmatpush1.msra.mxu0 %v6125
  %6162 = vmatprep.subr.mxu0 0.0
  %6163 = vmatpush1.msra.mxu0 %v6124
  %6164 = vmatprep.subr.mxu0 0.0
  %6165 = vmatpush1.msra.mxu0 %v6123
  %6166 = vmatprep.subr.mxu0 0.0
  %6167 = vmatpush1.msra.mxu0 %v6122
  %6168 = vmatprep.subr.mxu0 0.0
  %6169 = vmatpush1.msra.mxu0 %v6121
  %6170 = vmatprep.subr.mxu0 0.0
  %6171 = vmatpush1.msra.mxu0 %v6120
  %6172 = vmatprep.subr.mxu0 0.0
  %6173 = vmatpush1.msra.mxu0 %v6119
  %6174 = vmatprep.subr.mxu0 0.0
  %6175 = vmatpush2.msra.mxu0 0.0
  %6176 = vmatprep.subr.mxu0 0.0
  %6177 = vmatpush2.msra.mxu0 0.0
  %6178 = vmatprep.subr.mxu0 0.0
  %6179 = vmatpush2.msra.mxu0 0.0
  %6180 = vmatprep.subr.mxu0 0.0
  %6181 = vmatpush2.msra.mxu0 0.0
  %6182 = vmatprep.subr.mxu0 0.0
  %6183 = vmatpush2.msra.mxu0 0.0
  %6184 = vmatprep.subr.mxu0 0.0
  %6185 = vmatpush2.msra.mxu0 0.0
  %6186 = vmatprep.subr.mxu0 0.0
  %6187 = vmatpush2.msra.mxu0 0.0
  %6188 = vmatprep.subr.mxu0 0.0
  %6189 = vmatpush2.msra.mxu0 0.0
  %6190 = vmatprep.subr.mxu0 0.0
  %6191 = vmatpush2.msra.mxu0 0.0
  %6192 = vmatprep.subr.mxu0 0.0
  %6193 = vmatpush2.msra.mxu0 0.0
  %6194 = vmatprep.subr.mxu0 0.0
  %6195 = vmatpush2.msra.mxu0 0.0
  %6196 = vmatprep.subr.mxu0 0.0
  %6197 = vmatpush2.msra.mxu0 0.0
  %6198 = vmatprep.subr.mxu0 0.0
  %6199 = vmatpush2.msra.mxu0 0.0
  %6200 = vmatprep.subr.mxu0 0.0
  %6201 = vmatpush2.msra.mxu0 0.0
  %6202 = vmatprep.subr.mxu0 0.0
  %6203 = vmatpush2.msra.mxu0 0.0
  %6204 = vmatprep.subr.mxu0 0.0
  %6205 = vmatpush2.msra.mxu0 0.0
  %6206 = vmatprep.mubr.f32.mxu0 0.0
  %6207 = vmatmul.mubr.f32.gmra.mxu0 %v6115
  %v6208 = vpop.f32.mrf.mxu0
  %v6209 = vadd.f32 %v6140, %v6208
  %v6210 = vpop.f32.mrf.mxu0
  %6211 = vmatprep.mubr.f32.mxu0 0.0
  %6212 = vmatmul.mubr.f32.gmra.mxu0 %v6118
  %v6213 = vpop.f32.mrf.mxu0
  %v6214 = vadd.f32 %v6140, %v6213
  %v6215 = vpop.f32.mrf.mxu0
  %6216 = vdwg.mxu0
  %6217 = vst [vmem:[%s8] sm:$0xff] %v6209
  %6218 = vst [vmem:[%s8 + $0x8] sm:$0xff] %v6214
  // Predicated region
  $region34: #{decoder_forward.1} parent=0 // pred_check
    _
  $region35: #{decoder_forward.1} parent=0 // pred_check_branch
    %6220 = sbr.rel (0) target = $region37
  $region36: #{decoder_forward.1} parent=0 // pred_region
    _
  $region37: #{decoder_forward.1} parent=0 // pred_fallthru
    _
  // Predicated region
  $region38: #{decoder_forward.1} parent=0 // pred_check
    _
  $region39: #{decoder_forward.1} parent=0 // pred_check_branch
    %6222 = sbr.rel (0) target = $region41
  $region40: #{decoder_forward.1} parent=0 // pred_region
    _
  $region41: #{decoder_forward.1} parent=0 // pred_fallthru
    _

</llo_original>
